<compile_context>
chip_gen: v5e
topology: v5e:2x2
jax: 0.10.0
libtpu: 0.0.40
codegen_flags: <defaults>
</compile_context>

<pallas_src>
import jax
import jax.numpy as jnp
from jax.experimental import pallas as pl
from jax.experimental.pallas import tpu as pltpu

NUMBER_CHANNELS = 4
NUMBER_OF_CLASSES = 2
SEQ_LEN = 20          # 20 -conv3-> 18 -pool/2-> 9 -conv2-> 8 -pool/2-> 4 -conv1x1-> 4 -pool(s1)-> 3 ; 200*3 = 600 = fc1a.in
VALUES_DIM = 8        # fc2 = nn.Linear(8, 2048)


# ----------------------------- kernel helpers -------------------------------

def _linear_relu(h, w_ref, b_ref):
    # h: (B, Fin) f32; w_ref: (Fin, Fout) f32 or bf16; b_ref: (1, Fout) f32
    w = w_ref[...]
    acc = jnp.dot(h.astype(w.dtype), w, preferred_element_type=jnp.float32)
    return jnp.maximum(acc + b_ref[...], 0.0)


def _conv1d_relu(x, w_ref, b_ref, ksize):
    # x: (B, L, Cin); w_ref: (K, Cin, Cout); b_ref: (1, Cout)
    bsz, l_in, cin = x.shape
    cout = w_ref.shape[2]
    l_out = l_in - ksize + 1
    acc = jnp.zeros((bsz * l_out, cout), jnp.float32)
    for kk in range(ksize):  # static unrolled taps
        patch = x[:, kk:kk + l_out, :].reshape(bsz * l_out, cin)
        acc = acc + jnp.dot(patch, w_ref[kk], preferred_element_type=jnp.float32)
    acc = acc + b_ref[...]
    return jnp.maximum(acc, 0.0).reshape(bsz, l_out, cout)


def _maxpool_k2_s2(x):
    # MaxPool1d(kernel_size=2, stride=2) along the length axis of (B, L, C)
    bsz, l_in, c = x.shape
    l_out = l_in // 2
    return jnp.max(x[:, :2 * l_out, :].reshape(bsz, l_out, 2, c), axis=2)


def _fc1a_relu(h, wa_ref, ba_ref):
    # h: (B, 3, 200); wa_ref: (3, 200, 300); ba_ref: (1, 300)
    # K-split across the 3 length taps — avoids the (B,3,200)->(B,600)
    # cross-lane relayout of a flatten.
    bsz = h.shape[0]
    fout = wa_ref.shape[2]
    acc = jnp.zeros((bsz, fout), jnp.float32)
    for t in range(h.shape[1]):
        w_t = wa_ref[t]                                   # (200, 300)
        acc = acc + jnp.dot(h[:, t, :].astype(w_t.dtype), w_t,
                            preferred_element_type=jnp.float32)
    return jnp.maximum(acc + ba_ref[...], 0.0)


# -------------------------------- fused kernel --------------------------------

def gmrt_fused_kernel(ts_ref, vals_ref,
                      w1_ref, b1_ref, w2_ref, b2_ref, w3_ref, b3_ref,
                      wa_ref, ba_ref, wb_ref, bb_ref,
                      wf2_ref, bf2_ref, wf3_ref, bf3_ref, wf4_ref, bf4_ref,
                      z_ref, x_ref):
    # ---- conv branch (dead w.r.t. z in the reference forward) ----
    h = ts_ref[...]                                   # (B, 20, 4)
    h = _conv1d_relu(h, w1_ref, b1_ref, 3)            # (B, 18, 50)
    h = _maxpool_k2_s2(h)                             # (B, 9, 50)
    h = _conv1d_relu(h, w2_ref, b2_ref, 2)            # (B, 8, 100)
    h = _maxpool_k2_s2(h)                             # (B, 4, 100)
    h = _conv1d_relu(h, w3_ref, b3_ref, 1)            # (B, 4, 200)
    h = jnp.maximum(h[:, :-1, :], h[:, 1:, :])        # MaxPool1d(2, stride=1) -> (B, 3, 200)
    # dropout(training=False) == identity
    a = _fc1a_relu(h, wa_ref, ba_ref)                 # (B, 300)
    x_ref[...] = _linear_relu(a, wb_ref, bb_ref)      # (B, 10)

    # ---- value MLP (this is what the reference returns as z) ----
    g = _linear_relu(vals_ref[...], wf2_ref, bf2_ref)  # (B, 2048)
    g = _linear_relu(g, wf3_ref, bf3_ref)              # (B, 1024)
    g = _linear_relu(g, wf4_ref, bf4_ref)              # (B, NUMBER_OF_CLASSES)
    z_ref[...] = jnp.tanh(g)


# ------------------------------- wrapper --------------------------------------

def gmrt_cnn_forward(params, input_data_ts, input_data_values):
    """Mirrors GmrtCNN.forward (eval mode).

    Returns (z, x): the reference module returns z only; x is the conv-branch
    activation it computes and then discards. We return it as well so the conv
    branch is not dead-code-eliminated under jit.
    """
    bsz = input_data_ts.shape[0]
    # Pad batch to a full f32 sublane tile (multiple of 8) -> no masked stores.
    bpad = max(8, ((bsz + 7) // 8) * 8)
    pad = bpad - bsz

    ts_nlc = jnp.transpose(input_data_ts, (0, 2, 1)).astype(jnp.float32)  # NCL -> NLC
    vals = input_data_values.astype(jnp.float32)
    if pad:
        ts_nlc = jnp.pad(ts_nlc, ((0, pad), (0, 0), (0, 0)))
        vals = jnp.pad(vals, ((0, pad), (0, 0)))

    cparams = pltpu.CompilerParams(vmem_limit_bytes=16 << 20)

    z, x = pl.pallas_call(
        gmrt_fused_kernel,
        out_shape=(jax.ShapeDtypeStruct((bpad, NUMBER_OF_CLASSES), jnp.float32),
                   jax.ShapeDtypeStruct((bpad, 10), jnp.float32)),
        compiler_params=cparams,
    )(ts_nlc, vals,
      params["w1t"], params["b1"], params["w2t"], params["b2"],
      params["w3t"], params["b3"], params["wat"], params["ba"],
      params["wbt"], params["bb"],
      params["wf2t"], params["bf2"], params["wf3t"], params["bf3"],
      params["wf4t"], params["bf4"])

    return z[:bsz], x[:bsz]


# ------------------------- deterministic parameters ---------------------------

def init_params(key):
    def dense(k, shape, fan_in):
        return jax.random.normal(k, shape, jnp.float32) / jnp.sqrt(float(fan_in))

    ks = jax.random.split(key, 16)
    # PyTorch-native shapes
    w1 = dense(ks[0], (50, NUMBER_CHANNELS, 3), NUMBER_CHANNELS * 3)
    b1 = dense(ks[1], (50,), NUMBER_CHANNELS * 3)
    w2 = dense(ks[2], (100, 50, 2), 50 * 2)
    b2 = dense(ks[3], (100,), 50 * 2)
    w3 = dense(ks[4], (200, 100, 1), 100)
    b3 = dense(ks[5], (200,), 100)
    wa = dense(ks[6], (300, 600), 600)
    ba = dense(ks[7], (300,), 600)
    wb = dense(ks[8], (10, 300), 300)
    bb = dense(ks[9], (10,), 300)
    wf2 = dense(ks[10], (2048, VALUES_DIM), VALUES_DIM)
    bf2 = dense(ks[11], (2048,), VALUES_DIM)
    wf3 = dense(ks[12], (1024, 2048), 2048)
    bf3 = dense(ks[13], (1024,), 2048)
    wf4 = dense(ks[14], (NUMBER_OF_CLASSES, 1024), 1024)
    bf4 = dense(ks[15], (NUMBER_OF_CLASSES,), 1024)

    # fc1a acts on features flattened as (channel, length) in PyTorch. The
    # kernel consumes it as 3 per-tap (200, 300) weights applied to the NLC
    # activation: wat[t, c, o] = wa[o, c*3 + t].
    wat3 = wa.reshape(300, 200, 3).transpose(2, 1, 0)     # (3, 200, 300)

    return dict(
        # conv weights as (K, Cin, Cout), f32 (tiny)
        w1t=jnp.transpose(w1, (2, 1, 0)), b1=b1.reshape(1, -1),
        w2t=jnp.transpose(w2, (2, 1, 0)), b2=b2.reshape(1, -1),
        w3t=jnp.transpose(w3, (2, 1, 0)), b3=b3.reshape(1, -1),
        # fc1a / fc1b as (Fin, Fout); fc1a in bf16 (largest conv-branch weight)
        wat=wat3.astype(jnp.bfloat16), ba=ba.reshape(1, -1),
        wbt=wb.T, bb=bb.reshape(1, -1),
        # value-MLP weights in bf16 (dominant HBM traffic), biases f32
        wf2t=wf2.T.astype(jnp.bfloat16), bf2=bf2.reshape(1, -1),
        wf3t=wf3.T.astype(jnp.bfloat16), bf3=bf3.reshape(1, -1),
        wf4t=wf4.T.astype(jnp.bfloat16), bf4=bf4.reshape(1, -1),
    )


if __name__ == "__main__":
    key = jax.random.PRNGKey(0)
    kp, kts, kv = jax.random.split(key, 3)
    params = init_params(kp)

    batch = 2
    input_data_ts = jax.random.normal(kts, (batch, NUMBER_CHANNELS, SEQ_LEN), jnp.float32)
    input_data_values = jax.random.normal(kv, (batch, VALUES_DIM), jnp.float32)

    z, x = jax.jit(gmrt_cnn_forward)(params, input_data_ts, input_data_values)
    jax.block_until_ready((z, x))

    assert z.shape == (batch, NUMBER_OF_CLASSES) and z.dtype == jnp.float32
    assert x.shape == (batch, 10)
    assert bool(jnp.all(jnp.isfinite(z))) and bool(jnp.all(jnp.isfinite(x)))
    print("KERNEL_OK")
</pallas_src>

<mosaic_0001>
module attributes {stable_mosaic.version = 11 : i64} {
  func.func @gmrt_fused_kernel(%arg0: memref<8x20x4xf32, #tpu.memory_space<vmem>>, %arg1: memref<8x8xf32, #tpu.memory_space<vmem>>, %arg2: memref<3x4x50xf32, #tpu.memory_space<vmem>>, %arg3: memref<1x50xf32, #tpu.memory_space<vmem>>, %arg4: memref<2x50x100xf32, #tpu.memory_space<vmem>>, %arg5: memref<1x100xf32, #tpu.memory_space<vmem>>, %arg6: memref<1x100x200xf32, #tpu.memory_space<vmem>>, %arg7: memref<1x200xf32, #tpu.memory_space<vmem>>, %arg8: memref<3x200x300xbf16, #tpu.memory_space<vmem>>, %arg9: memref<1x300xf32, #tpu.memory_space<vmem>>, %arg10: memref<300x10xf32, #tpu.memory_space<vmem>>, %arg11: memref<1x10xf32, #tpu.memory_space<vmem>>, %arg12: memref<8x2048xbf16, #tpu.memory_space<vmem>>, %arg13: memref<1x2048xf32, #tpu.memory_space<vmem>>, %arg14: memref<2048x1024xbf16, #tpu.memory_space<vmem>>, %arg15: memref<1x1024xf32, #tpu.memory_space<vmem>>, %arg16: memref<1024x2xbf16, #tpu.memory_space<vmem>>, %arg17: memref<1x2xf32, #tpu.memory_space<vmem>>, %arg18: memref<8x2xf32, #tpu.memory_space<vmem>>, %arg19: memref<8x10xf32, #tpu.memory_space<vmem>>) attributes {dimension_semantics = [], scalar_prefetch = 0 : i64, scratch_operands = 0 : i64, tpu.core_type = #tpu.core_type<tc>} {
    %c0 = arith.constant 0 : index
    %c0_0 = arith.constant 0 : index
    %c0_1 = arith.constant 0 : index
    %0 = vector.load %arg0[%c0, %c0_0, %c0_1] : memref<8x20x4xf32, #tpu.memory_space<vmem>>, vector<8x20x4xf32>
    %cst = arith.constant 0.000000e+00 : f32
    %1 = vector.broadcast %cst : f32 to vector<144x50xf32>
    %2 = vector.extract_strided_slice %0 {offsets = [0, 0, 0], sizes = [8, 18, 4], strides = [1, 1, 1]} : vector<8x20x4xf32> to vector<8x18x4xf32>
    %3 = vector.shape_cast %2 : vector<8x18x4xf32> to vector<144x4xf32>
    %c0_2 = arith.constant 0 : index
    %c0_3 = arith.constant 0 : index
    %c0_4 = arith.constant 0 : index
    %4 = vector.load %arg2[%c0_2, %c0_3, %c0_4] : memref<3x4x50xf32, #tpu.memory_space<vmem>>, vector<1x4x50xf32>
    %5 = vector.shape_cast %4 : vector<1x4x50xf32> to vector<4x50xf32>
    %cst_5 = arith.constant dense<0.000000e+00> : vector<144x50xf32>
    %6 = tpu.matmul %3, %5, %cst_5 {dimension_numbers = #tpu.dot_dimension_numbers<[1], [0], [0], [1], [0, 0, 1, 1], [], []>} : vector<144x4xf32>, vector<4x50xf32>, vector<144x50xf32> -> vector<144x50xf32>
    %7 = arith.addf %1, %6 : vector<144x50xf32>
    %8 = vector.extract_strided_slice %0 {offsets = [0, 1, 0], sizes = [8, 18, 4], strides = [1, 1, 1]} : vector<8x20x4xf32> to vector<8x18x4xf32>
    %9 = vector.shape_cast %8 : vector<8x18x4xf32> to vector<144x4xf32>
    %c1 = arith.constant 1 : index
    %c0_6 = arith.constant 0 : index
    %c0_7 = arith.constant 0 : index
    %10 = vector.load %arg2[%c1, %c0_6, %c0_7] : memref<3x4x50xf32, #tpu.memory_space<vmem>>, vector<1x4x50xf32>
    %11 = vector.shape_cast %10 : vector<1x4x50xf32> to vector<4x50xf32>
    %cst_8 = arith.constant dense<0.000000e+00> : vector<144x50xf32>
    %12 = tpu.matmul %9, %11, %cst_8 {dimension_numbers = #tpu.dot_dimension_numbers<[1], [0], [0], [1], [0, 0, 1, 1], [], []>} : vector<144x4xf32>, vector<4x50xf32>, vector<144x50xf32> -> vector<144x50xf32>
    %13 = arith.addf %7, %12 : vector<144x50xf32>
    %14 = vector.extract_strided_slice %0 {offsets = [0, 2, 0], sizes = [8, 18, 4], strides = [1, 1, 1]} : vector<8x20x4xf32> to vector<8x18x4xf32>
    %15 = vector.shape_cast %14 : vector<8x18x4xf32> to vector<144x4xf32>
    %c2 = arith.constant 2 : index
    %c0_9 = arith.constant 0 : index
    %c0_10 = arith.constant 0 : index
    %16 = vector.load %arg2[%c2, %c0_9, %c0_10] : memref<3x4x50xf32, #tpu.memory_space<vmem>>, vector<1x4x50xf32>
    %17 = vector.shape_cast %16 : vector<1x4x50xf32> to vector<4x50xf32>
    %cst_11 = arith.constant dense<0.000000e+00> : vector<144x50xf32>
    %18 = tpu.matmul %15, %17, %cst_11 {dimension_numbers = #tpu.dot_dimension_numbers<[1], [0], [0], [1], [0, 0, 1, 1], [], []>} : vector<144x4xf32>, vector<4x50xf32>, vector<144x50xf32> -> vector<144x50xf32>
    %19 = arith.addf %13, %18 : vector<144x50xf32>
    %c0_12 = arith.constant 0 : index
    %c0_13 = arith.constant 0 : index
    %20 = vector.load %arg3[%c0_12, %c0_13] : memref<1x50xf32, #tpu.memory_space<vmem>>, vector<1x50xf32>
    %21 = vector.broadcast %20 : vector<1x50xf32> to vector<144x50xf32>
    %22 = arith.addf %19, %21 : vector<144x50xf32>
    %cst_14 = arith.constant 0.000000e+00 : f32
    %23 = vector.broadcast %cst_14 : f32 to vector<144x50xf32>
    %24 = arith.maximumf %22, %23 : vector<144x50xf32>
    %25 = vector.shape_cast %24 : vector<144x50xf32> to vector<8x18x50xf32>
    %26 = vector.shape_cast %25 : vector<8x18x50xf32> to vector<8x9x2x50xf32>
    %cst_15 = arith.constant dense<0xFF800000> : vector<8x9x50xf32>
    %27 = vector.multi_reduction <maximumf>, %26, %cst_15 [2] : vector<8x9x2x50xf32> to vector<8x9x50xf32>
    %cst_16 = arith.constant 0.000000e+00 : f32
    %28 = vector.broadcast %cst_16 : f32 to vector<64x100xf32>
    %29 = vector.extract_strided_slice %27 {offsets = [0, 0, 0], sizes = [8, 8, 50], strides = [1, 1, 1]} : vector<8x9x50xf32> to vector<8x8x50xf32>
    %30 = vector.shape_cast %29 : vector<8x8x50xf32> to vector<64x50xf32>
    %c0_17 = arith.constant 0 : index
    %c0_18 = arith.constant 0 : index
    %c0_19 = arith.constant 0 : index
    %31 = vector.load %arg4[%c0_17, %c0_18, %c0_19] : memref<2x50x100xf32, #tpu.memory_space<vmem>>, vector<1x50x100xf32>
    %32 = vector.shape_cast %31 : vector<1x50x100xf32> to vector<50x100xf32>
    %cst_20 = arith.constant dense<0.000000e+00> : vector<64x100xf32>
    %33 = tpu.matmul %30, %32, %cst_20 {dimension_numbers = #tpu.dot_dimension_numbers<[1], [0], [0], [1], [0, 0, 1, 1], [], []>} : vector<64x50xf32>, vector<50x100xf32>, vector<64x100xf32> -> vector<64x100xf32>
    %34 = arith.addf %28, %33 : vector<64x100xf32>
    %35 = vector.extract_strided_slice %27 {offsets = [0, 1, 0], sizes = [8, 8, 50], strides = [1, 1, 1]} : vector<8x9x50xf32> to vector<8x8x50xf32>
    %36 = vector.shape_cast %35 : vector<8x8x50xf32> to vector<64x50xf32>
    %c1_21 = arith.constant 1 : index
    %c0_22 = arith.constant 0 : index
    %c0_23 = arith.constant 0 : index
    %37 = vector.load %arg4[%c1_21, %c0_22, %c0_23] : memref<2x50x100xf32, #tpu.memory_space<vmem>>, vector<1x50x100xf32>
    %38 = vector.shape_cast %37 : vector<1x50x100xf32> to vector<50x100xf32>
    %cst_24 = arith.constant dense<0.000000e+00> : vector<64x100xf32>
    %39 = tpu.matmul %36, %38, %cst_24 {dimension_numbers = #tpu.dot_dimension_numbers<[1], [0], [0], [1], [0, 0, 1, 1], [], []>} : vector<64x50xf32>, vector<50x100xf32>, vector<64x100xf32> -> vector<64x100xf32>
    %40 = arith.addf %34, %39 : vector<64x100xf32>
    %c0_25 = arith.constant 0 : index
    %c0_26 = arith.constant 0 : index
    %41 = vector.load %arg5[%c0_25, %c0_26] : memref<1x100xf32, #tpu.memory_space<vmem>>, vector<1x100xf32>
    %42 = vector.broadcast %41 : vector<1x100xf32> to vector<64x100xf32>
    %43 = arith.addf %40, %42 : vector<64x100xf32>
    %cst_27 = arith.constant 0.000000e+00 : f32
    %44 = vector.broadcast %cst_27 : f32 to vector<64x100xf32>
    %45 = arith.maximumf %43, %44 : vector<64x100xf32>
    %46 = vector.shape_cast %45 : vector<64x100xf32> to vector<8x8x100xf32>
    %47 = vector.shape_cast %46 : vector<8x8x100xf32> to vector<8x4x2x100xf32>
    %cst_28 = arith.constant dense<0xFF800000> : vector<8x4x100xf32>
    %48 = vector.multi_reduction <maximumf>, %47, %cst_28 [2] : vector<8x4x2x100xf32> to vector<8x4x100xf32>
    %cst_29 = arith.constant 0.000000e+00 : f32
    %49 = vector.broadcast %cst_29 : f32 to vector<32x200xf32>
    %50 = vector.shape_cast %48 : vector<8x4x100xf32> to vector<32x100xf32>
    %c0_30 = arith.constant 0 : index
    %c0_31 = arith.constant 0 : index
    %c0_32 = arith.constant 0 : index
    %51 = vector.load %arg6[%c0_30, %c0_31, %c0_32] : memref<1x100x200xf32, #tpu.memory_space<vmem>>, vector<1x100x200xf32>
    %52 = vector.shape_cast %51 : vector<1x100x200xf32> to vector<100x200xf32>
    %cst_33 = arith.constant dense<0.000000e+00> : vector<32x200xf32>
    %53 = tpu.matmul %50, %52, %cst_33 {dimension_numbers = #tpu.dot_dimension_numbers<[1], [0], [0], [1], [0, 0, 1, 1], [], []>} : vector<32x100xf32>, vector<100x200xf32>, vector<32x200xf32> -> vector<32x200xf32>
    %54 = arith.addf %49, %53 : vector<32x200xf32>
    %c0_34 = arith.constant 0 : index
    %c0_35 = arith.constant 0 : index
    %55 = vector.load %arg7[%c0_34, %c0_35] : memref<1x200xf32, #tpu.memory_space<vmem>>, vector<1x200xf32>
    %56 = vector.broadcast %55 : vector<1x200xf32> to vector<32x200xf32>
    %57 = arith.addf %54, %56 : vector<32x200xf32>
    %cst_36 = arith.constant 0.000000e+00 : f32
    %58 = vector.broadcast %cst_36 : f32 to vector<32x200xf32>
    %59 = arith.maximumf %57, %58 : vector<32x200xf32>
    %60 = vector.shape_cast %59 : vector<32x200xf32> to vector<8x4x200xf32>
    %61 = vector.extract_strided_slice %60 {offsets = [0, 0, 0], sizes = [8, 3, 200], strides = [1, 1, 1]} : vector<8x4x200xf32> to vector<8x3x200xf32>
    %62 = vector.extract_strided_slice %60 {offsets = [0, 1, 0], sizes = [8, 3, 200], strides = [1, 1, 1]} : vector<8x4x200xf32> to vector<8x3x200xf32>
    %63 = arith.maximumf %61, %62 : vector<8x3x200xf32>
    %cst_37 = arith.constant 0.000000e+00 : f32
    %64 = vector.broadcast %cst_37 : f32 to vector<8x300xf32>
    %c0_38 = arith.constant 0 : index
    %c0_39 = arith.constant 0 : index
    %c0_40 = arith.constant 0 : index
    %65 = vector.load %arg8[%c0_38, %c0_39, %c0_40] : memref<3x200x300xbf16, #tpu.memory_space<vmem>>, vector<1x200x300xbf16>
    %66 = vector.shape_cast %65 : vector<1x200x300xbf16> to vector<200x300xbf16>
    %67 = vector.extract_strided_slice %63 {offsets = [0, 0, 0], sizes = [8, 1, 200], strides = [1, 1, 1]} : vector<8x3x200xf32> to vector<8x1x200xf32>
    %68 = vector.shape_cast %67 : vector<8x1x200xf32> to vector<8x200xf32>
    %69 = arith.truncf %68 : vector<8x200xf32> to vector<8x200xbf16>
    %cst_41 = arith.constant dense<0.000000e+00> : vector<8x300xf32>
    %70 = tpu.matmul %69, %66, %cst_41 {dimension_numbers = #tpu.dot_dimension_numbers<[1], [0], [0], [1], [0, 0, 1, 1], [], []>} : vector<8x200xbf16>, vector<200x300xbf16>, vector<8x300xf32> -> vector<8x300xf32>
    %71 = arith.addf %64, %70 : vector<8x300xf32>
    %c1_42 = arith.constant 1 : index
    %c0_43 = arith.constant 0 : index
    %c0_44 = arith.constant 0 : index
    %72 = vector.load %arg8[%c1_42, %c0_43, %c0_44] : memref<3x200x300xbf16, #tpu.memory_space<vmem>>, vector<1x200x300xbf16>
    %73 = vector.shape_cast %72 : vector<1x200x300xbf16> to vector<200x300xbf16>
    %74 = vector.extract_strided_slice %63 {offsets = [0, 1, 0], sizes = [8, 1, 200], strides = [1, 1, 1]} : vector<8x3x200xf32> to vector<8x1x200xf32>
    %75 = vector.shape_cast %74 : vector<8x1x200xf32> to vector<8x200xf32>
    %76 = arith.truncf %75 : vector<8x200xf32> to vector<8x200xbf16>
    %cst_45 = arith.constant dense<0.000000e+00> : vector<8x300xf32>
    %77 = tpu.matmul %76, %73, %cst_45 {dimension_numbers = #tpu.dot_dimension_numbers<[1], [0], [0], [1], [0, 0, 1, 1], [], []>} : vector<8x200xbf16>, vector<200x300xbf16>, vector<8x300xf32> -> vector<8x300xf32>
    %78 = arith.addf %71, %77 : vector<8x300xf32>
    %c2_46 = arith.constant 2 : index
    %c0_47 = arith.constant 0 : index
    %c0_48 = arith.constant 0 : index
    %79 = vector.load %arg8[%c2_46, %c0_47, %c0_48] : memref<3x200x300xbf16, #tpu.memory_space<vmem>>, vector<1x200x300xbf16>
    %80 = vector.shape_cast %79 : vector<1x200x300xbf16> to vector<200x300xbf16>
    %81 = vector.extract_strided_slice %63 {offsets = [0, 2, 0], sizes = [8, 1, 200], strides = [1, 1, 1]} : vector<8x3x200xf32> to vector<8x1x200xf32>
    %82 = vector.shape_cast %81 : vector<8x1x200xf32> to vector<8x200xf32>
    %83 = arith.truncf %82 : vector<8x200xf32> to vector<8x200xbf16>
    %cst_49 = arith.constant dense<0.000000e+00> : vector<8x300xf32>
    %84 = tpu.matmul %83, %80, %cst_49 {dimension_numbers = #tpu.dot_dimension_numbers<[1], [0], [0], [1], [0, 0, 1, 1], [], []>} : vector<8x200xbf16>, vector<200x300xbf16>, vector<8x300xf32> -> vector<8x300xf32>
    %85 = arith.addf %78, %84 : vector<8x300xf32>
    %c0_50 = arith.constant 0 : index
    %c0_51 = arith.constant 0 : index
    %86 = vector.load %arg9[%c0_50, %c0_51] : memref<1x300xf32, #tpu.memory_space<vmem>>, vector<1x300xf32>
    %87 = vector.broadcast %86 : vector<1x300xf32> to vector<8x300xf32>
    %88 = arith.addf %85, %87 : vector<8x300xf32>
    %cst_52 = arith.constant 0.000000e+00 : f32
    %89 = vector.broadcast %cst_52 : f32 to vector<8x300xf32>
    %90 = arith.maximumf %88, %89 : vector<8x300xf32>
    %c0_53 = arith.constant 0 : index
    %c0_54 = arith.constant 0 : index
    %91 = vector.load %arg10[%c0_53, %c0_54] : memref<300x10xf32, #tpu.memory_space<vmem>>, vector<300x10xf32>
    %cst_55 = arith.constant dense<0.000000e+00> : vector<8x10xf32>
    %92 = tpu.matmul %90, %91, %cst_55 {dimension_numbers = #tpu.dot_dimension_numbers<[1], [0], [0], [1], [0, 0, 1, 1], [], []>} : vector<8x300xf32>, vector<300x10xf32>, vector<8x10xf32> -> vector<8x10xf32>
    %c0_56 = arith.constant 0 : index
    %c0_57 = arith.constant 0 : index
    %93 = vector.load %arg11[%c0_56, %c0_57] : memref<1x10xf32, #tpu.memory_space<vmem>>, vector<1x10xf32>
    %94 = vector.broadcast %93 : vector<1x10xf32> to vector<8x10xf32>
    %95 = arith.addf %92, %94 : vector<8x10xf32>
    %cst_58 = arith.constant 0.000000e+00 : f32
    %96 = vector.broadcast %cst_58 : f32 to vector<8x10xf32>
    %97 = arith.maximumf %95, %96 : vector<8x10xf32>
    %c0_59 = arith.constant 0 : index
    %c0_60 = arith.constant 0 : index
    %98 = vector.load %arg19[%c0_59, %c0_60] : memref<8x10xf32, #tpu.memory_space<vmem>>, vector<8x10xf32>
    tpu.vector_store %arg19[%c0_59, %c0_60], %97 {strides = array<i32>} : memref<8x10xf32, #tpu.memory_space<vmem>>, vector<8x10xf32>,
    %c0_61 = arith.constant 0 : index
    %c0_62 = arith.constant 0 : index
    %99 = vector.load %arg1[%c0_61, %c0_62] : memref<8x8xf32, #tpu.memory_space<vmem>>, vector<8x8xf32>
    %c0_63 = arith.constant 0 : index
    %c0_64 = arith.constant 0 : index
    %100 = vector.load %arg12[%c0_63, %c0_64] : memref<8x2048xbf16, #tpu.memory_space<vmem>>, vector<8x2048xbf16>
    %101 = arith.truncf %99 : vector<8x8xf32> to vector<8x8xbf16>
    %cst_65 = arith.constant dense<0.000000e+00> : vector<8x2048xf32>
    %102 = tpu.matmul %101, %100, %cst_65 {dimension_numbers = #tpu.dot_dimension_numbers<[1], [0], [0], [1], [0, 0, 1, 1], [], []>} : vector<8x8xbf16>, vector<8x2048xbf16>, vector<8x2048xf32> -> vector<8x2048xf32>
    %c0_66 = arith.constant 0 : index
    %c0_67 = arith.constant 0 : index
    %103 = vector.load %arg13[%c0_66, %c0_67] : memref<1x2048xf32, #tpu.memory_space<vmem>>, vector<1x2048xf32>
    %104 = vector.broadcast %103 : vector<1x2048xf32> to vector<8x2048xf32>
    %105 = arith.addf %102, %104 : vector<8x2048xf32>
    %cst_68 = arith.constant 0.000000e+00 : f32
    %106 = vector.broadcast %cst_68 : f32 to vector<8x2048xf32>
    %107 = arith.maximumf %105, %106 : vector<8x2048xf32>
    %c0_69 = arith.constant 0 : index
    %c0_70 = arith.constant 0 : index
    %108 = vector.load %arg14[%c0_69, %c0_70] : memref<2048x1024xbf16, #tpu.memory_space<vmem>>, vector<2048x1024xbf16>
    %109 = arith.truncf %107 : vector<8x2048xf32> to vector<8x2048xbf16>
    %cst_71 = arith.constant dense<0.000000e+00> : vector<8x1024xf32>
    %110 = tpu.matmul %109, %108, %cst_71 {dimension_numbers = #tpu.dot_dimension_numbers<[1], [0], [0], [1], [0, 0, 1, 1], [], []>} : vector<8x2048xbf16>, vector<2048x1024xbf16>, vector<8x1024xf32> -> vector<8x1024xf32>
    %c0_72 = arith.constant 0 : index
    %c0_73 = arith.constant 0 : index
    %111 = vector.load %arg15[%c0_72, %c0_73] : memref<1x1024xf32, #tpu.memory_space<vmem>>, vector<1x1024xf32>
    %112 = vector.broadcast %111 : vector<1x1024xf32> to vector<8x1024xf32>
    %113 = arith.addf %110, %112 : vector<8x1024xf32>
    %cst_74 = arith.constant 0.000000e+00 : f32
    %114 = vector.broadcast %cst_74 : f32 to vector<8x1024xf32>
    %115 = arith.maximumf %113, %114 : vector<8x1024xf32>
    %c0_75 = arith.constant 0 : index
    %c0_76 = arith.constant 0 : index
    %116 = vector.load %arg16[%c0_75, %c0_76] : memref<1024x2xbf16, #tpu.memory_space<vmem>>, vector<1024x2xbf16>
    %117 = arith.truncf %115 : vector<8x1024xf32> to vector<8x1024xbf16>
    %cst_77 = arith.constant dense<0.000000e+00> : vector<8x2xf32>
    %118 = tpu.matmul %117, %116, %cst_77 {dimension_numbers = #tpu.dot_dimension_numbers<[1], [0], [0], [1], [0, 0, 1, 1], [], []>} : vector<8x1024xbf16>, vector<1024x2xbf16>, vector<8x2xf32> -> vector<8x2xf32>
    %c0_78 = arith.constant 0 : index
    %c0_79 = arith.constant 0 : index
    %119 = vector.load %arg17[%c0_78, %c0_79] : memref<1x2xf32, #tpu.memory_space<vmem>>, vector<1x2xf32>
    %120 = vector.broadcast %119 : vector<1x2xf32> to vector<8x2xf32>
    %121 = arith.addf %118, %120 : vector<8x2xf32>
    %cst_80 = arith.constant 0.000000e+00 : f32
    %122 = vector.broadcast %cst_80 : f32 to vector<8x2xf32>
    %123 = arith.maximumf %121, %122 : vector<8x2xf32>
    %124 = math.tanh %123 : vector<8x2xf32>
    %c0_81 = arith.constant 0 : index
    %c0_82 = arith.constant 0 : index
    %125 = vector.load %arg18[%c0_81, %c0_82] : memref<8x2xf32, #tpu.memory_space<vmem>>, vector<8x2xf32>
    tpu.vector_store %arg18[%c0_81, %c0_82], %124 {strides = array<i32>} : memref<8x2xf32, #tpu.memory_space<vmem>>, vector<8x2xf32>,
    return
  }
}

</mosaic_0001>

<llo_original>
// kernel: gmrt_cnn_forward.1
$region0: #{gmrt_cnn_forward.1}
  #allocation0 [shape = 'u32[]', space=smem, size = 0x4, offset = 0x4, fixed_abs, tag = 'smem constant byte address 0x4 - core index']
  #allocation1 [shape = 'u32[72,128]{1,0:T(1,128)}', space=vmem, size = 0x9000, scoped, tag = 'internal scratch']
  %s0 = inlined_call_operand.vmem [shape: f32[8,20,4], index: 0, kind: input, shape index: {}]
  %s1 = inlined_call_operand.vmem [shape: f32[8,8], index: 1, kind: input, shape index: {}]
  %s2 = inlined_call_operand.hbm [shape: f32[3,4,50], index: 2, kind: input, shape index: {}]
  %s3 = inlined_call_operand.hbm [shape: f32[1,50], index: 3, kind: input, shape index: {}]
  %s4 = inlined_call_operand.vmem [shape: f32[2,50,100], index: 4, kind: input, shape index: {}]
  %s5 = inlined_call_operand.hbm [shape: f32[1,100], index: 5, kind: input, shape index: {}]
  %s6 = inlined_call_operand.vmem [shape: f32[1,100,200], index: 6, kind: input, shape index: {}]
  %s7 = inlined_call_operand.hbm [shape: f32[1,200], index: 7, kind: input, shape index: {}]
  %s8 = inlined_call_operand.hbm [shape: bf16[3,200,300], index: 8, kind: input, shape index: {}]
  %s9 = inlined_call_operand.hbm [shape: f32[1,300], index: 9, kind: input, shape index: {}]
  %s10 = inlined_call_operand.vmem [shape: f32[300,10], index: 10, kind: input, shape index: {}]
  %s11 = inlined_call_operand.hbm [shape: f32[1,10], index: 11, kind: input, shape index: {}]
  %s12 = inlined_call_operand.hbm [shape: bf16[8,2048], index: 12, kind: input, shape index: {}]
  %s13 = inlined_call_operand.hbm [shape: f32[1,2048], index: 13, kind: input, shape index: {}]
  %s14 = inlined_call_operand.hbm [shape: bf16[2048,1024], index: 14, kind: input, shape index: {}]
  %s15 = inlined_call_operand.hbm [shape: f32[1,1024], index: 15, kind: input, shape index: {}]
  %s16 = inlined_call_operand.vmem [shape: bf16[1024,2], index: 16, kind: input, shape index: {}]
  %s17 = inlined_call_operand.hbm [shape: f32[1,2], index: 17, kind: input, shape index: {}]
  %s18 = inlined_call_operand.vmem [shape: f32[8,2], index: 18, kind: output, shape index: {0}]
  %s19 = inlined_call_operand.vmem [shape: f32[8,10], index: 19, kind: output, shape index: {1}]
  %20 = xla_tuple %s18, %s19
  %s21 = sld [smem:[#allocation0]]
  $region138: #{gmrt_cnn_forward.1} parent=0
    _
  %s23 = ssub.s32 1, %s21
  %s24 = scalar_select 0, %s23, %s21
  $region1: #{gmrt_cnn_forward.1} parent=0
    #allocation2 [shape = 'u8[6144]{0}', space=vmem, size = 0x1800, scoped, tag = 'input window, operand 2, single buffered']
    #allocation3 [shape = 's32[1]{0}', space=sflag, size = 0x4, scoped, tag = 'scoped memory for gmrt_cnn_forward.1']
    #allocation4 [shape = 'u8[512]{0}', space=vmem, size = 0x400, scoped, tag = 'input window, operand 3, single buffered']
    #allocation5 [shape = 's32[1]{0}', space=sflag, size = 0x4, scoped, tag = 'scoped memory for gmrt_cnn_forward.1']
    #allocation6 [shape = 'u8[512]{0}', space=vmem, size = 0x400, scoped, tag = 'input window, operand 5, single buffered']
    #allocation7 [shape = 'u8[1024]{0}', space=vmem, size = 0x400, scoped, tag = 'input window, operand 7, single buffered']
    #allocation8 [shape = 's32[1]{0}', space=sflag, size = 0x4, scoped, tag = 'scoped memory for gmrt_cnn_forward.1']
    #allocation9 [shape = 'u8[460800]{0}', space=vmem, size = 0x70800, scoped, tag = 'input window, operand 8, single buffered']
    #allocation10 [shape = 'u8[1536]{0}', space=vmem, size = 0x800, scoped, tag = 'input window, operand 9, single buffered']
    #allocation11 [shape = 's32[1]{0}', space=sflag, size = 0x4, scoped, tag = 'scoped memory for gmrt_cnn_forward.1']
    #allocation12 [shape = 'u8[512]{0}', space=vmem, size = 0x400, scoped, tag = 'input window, operand 11, single buffered']
    #allocation13 [shape = 'u8[32768]{0}', space=vmem, size = 0x8000, scoped, tag = 'input window, operand 12, single buffered']
    #allocation14 [shape = 's32[1]{0}', space=sflag, size = 0x4, scoped, tag = 'scoped memory for gmrt_cnn_forward.1']
    #allocation15 [shape = 'u8[8192]{0}', space=vmem, size = 0x2000, scoped, tag = 'input window, operand 13, single buffered']
    #allocation16 [shape = 'u8[4194304]{0}', space=vmem, size = 0x400000, scoped, tag = 'input window, operand 14, single buffered']
    #allocation17 [shape = 's32[1]{0}', space=sflag, size = 0x4, scoped, tag = 'scoped memory for gmrt_cnn_forward.1']
    #allocation18 [shape = 'u8[4096]{0}', space=vmem, size = 0x1000, scoped, tag = 'input window, operand 15, single buffered']
    #allocation19 [shape = 'u8[512]{0}', space=vmem, size = 0x400, scoped, tag = 'input window, operand 17, single buffered']
    #allocation20 [shape = 's32[1]{0}', space=sflag, size = 0x4, scoped, tag = 'scoped memory for gmrt_cnn_forward.1']
    %25 = vsyncpa [#allocation3], 0
    %26 = vsyncpa [#allocation5], 0
    %27 = vsyncpa [#allocation8], 0
    %28 = vsyncpa [#allocation11], 0
    %29 = vsyncpa [#allocation14], 0
    %30 = vsyncpa [#allocation17], 0
    %31 = vsyncpa [#allocation20], 0
    // Predicated region
    $region2: #{gmrt_cnn_forward.1} parent=1 // pred_check
      _
    $region3: #{gmrt_cnn_forward.1} parent=1 // pred_check_branch
      %33 = sbr.rel (0) target = $region5
    $region4: #{gmrt_cnn_forward.1} parent=1 // pred_region
      _
    $region5: #{gmrt_cnn_forward.1} parent=1 // pred_fallthru
      _
    // Predicated region
    $region6: #{gmrt_cnn_forward.1} parent=1 // pred_check
      _
    $region7: #{gmrt_cnn_forward.1} parent=1 // pred_check_branch
      %35 = sbr.rel (0) target = $region9
    $region8: #{gmrt_cnn_forward.1} parent=1 // pred_region
      _
    $region9: #{gmrt_cnn_forward.1} parent=1 // pred_fallthru
      _
    // Predicated region
    $region10: #{gmrt_cnn_forward.1} parent=1 // pred_check
      _
    $region11: #{gmrt_cnn_forward.1} parent=1 // pred_check_branch
      %37 = sbr.rel (0) target = $region13
    $region12: #{gmrt_cnn_forward.1} parent=1 // pred_region
      %39 = vsyncadd [#allocation3], 0
      %s40 = sshll.u32 %s2, 4
      %s41 = int_to_ptr.hbm [resolvable:$true] %s40
      %s42 = sshll.u32 [#allocation2], 4
      %s43 = int_to_ptr.vmem [resolvable:$true] %s42
      %48 = dma.hbm_to_vmem [thread:$0]  %s41, 192, %s43, [#allocation3], 64, 64, 4
    $region13: #{gmrt_cnn_forward.1} parent=1 // pred_fallthru
      _
    // Predicated region
    $region14: #{gmrt_cnn_forward.1} parent=1 // pred_check
      _
    $region15: #{gmrt_cnn_forward.1} parent=1 // pred_check_branch
      %50 = sbr.rel (0) target = $region17
    $region16: #{gmrt_cnn_forward.1} parent=1 // pred_region
      %52 = vsyncadd [#allocation5], 0
      %s54 = sshll.u32 %s3, 4
      %s55 = int_to_ptr.hbm [resolvable:$true] %s54
      %s56 = sshll.u32 [#allocation4], 4
      %s57 = int_to_ptr.vmem [resolvable:$true] %s56
      %59 = dma.hbm_to_vmem [thread:$0]  %s55, 16, %s57, [#allocation5]
    $region17: #{gmrt_cnn_forward.1} parent=1 // pred_fallthru
      _
    // Predicated region
    $region18: #{gmrt_cnn_forward.1} parent=1 // pred_check
      _
    $region19: #{gmrt_cnn_forward.1} parent=1 // pred_check_branch
      %61 = sbr.rel (0) target = $region21
    $region20: #{gmrt_cnn_forward.1} parent=1 // pred_region
      _
    $region21: #{gmrt_cnn_forward.1} parent=1 // pred_fallthru
      _
    // Predicated region
    $region22: #{gmrt_cnn_forward.1} parent=1 // pred_check
      _
    $region23: #{gmrt_cnn_forward.1} parent=1 // pred_check_branch
      %63 = sbr.rel (0) target = $region25
    $region24: #{gmrt_cnn_forward.1} parent=1 // pred_region
      %65 = vsyncadd [#allocation5], 0
      %s67 = sshll.u32 %s5, 4
      %s68 = int_to_ptr.hbm [resolvable:$true] %s67
      %s69 = sshll.u32 [#allocation6], 4
      %s70 = int_to_ptr.vmem [resolvable:$true] %s69
      %72 = dma.hbm_to_vmem [thread:$0]  %s68, 16, %s70, [#allocation5]
    $region25: #{gmrt_cnn_forward.1} parent=1 // pred_fallthru
      _
    // Predicated region
    $region26: #{gmrt_cnn_forward.1} parent=1 // pred_check
      _
    $region27: #{gmrt_cnn_forward.1} parent=1 // pred_check_branch
      %74 = sbr.rel (0) target = $region29
    $region28: #{gmrt_cnn_forward.1} parent=1 // pred_region
      _
    $region29: #{gmrt_cnn_forward.1} parent=1 // pred_fallthru
      _
    // Predicated region
    $region30: #{gmrt_cnn_forward.1} parent=1 // pred_check
      _
    $region31: #{gmrt_cnn_forward.1} parent=1 // pred_check_branch
      %76 = sbr.rel (0) target = $region33
    $region32: #{gmrt_cnn_forward.1} parent=1 // pred_region
      %78 = vsyncadd [#allocation8], 0
      %s80 = sshll.u32 %s7, 4
      %s81 = int_to_ptr.hbm [resolvable:$true] %s80
      %s82 = sshll.u32 [#allocation7], 4
      %s83 = int_to_ptr.vmem [resolvable:$true] %s82
      %85 = dma.hbm_to_vmem [thread:$0]  %s81, 32, %s83, [#allocation8]
    $region33: #{gmrt_cnn_forward.1} parent=1 // pred_fallthru
      _
    // Predicated region
    $region34: #{gmrt_cnn_forward.1} parent=1 // pred_check
      _
    $region35: #{gmrt_cnn_forward.1} parent=1 // pred_check_branch
      %87 = sbr.rel (0) target = $region37
    $region36: #{gmrt_cnn_forward.1} parent=1 // pred_region
      %89 = vsyncadd [#allocation8], 0
      %s90 = sshll.u32 %s8, 4
      %s91 = int_to_ptr.hbm [resolvable:$true] %s90
      %s92 = sshll.u32 [#allocation9], 4
      %s93 = int_to_ptr.vmem [resolvable:$true] %s92
      %98 = dma.hbm_to_vmem [thread:$0]  %s91, 14400, %s93, [#allocation8], 192, 192, 12
    $region37: #{gmrt_cnn_forward.1} parent=1 // pred_fallthru
      _
    // Predicated region
    $region38: #{gmrt_cnn_forward.1} parent=1 // pred_check
      _
    $region39: #{gmrt_cnn_forward.1} parent=1 // pred_check_branch
      %100 = sbr.rel (0) target = $region41
    $region40: #{gmrt_cnn_forward.1} parent=1 // pred_region
      %102 = vsyncadd [#allocation11], 0
      %s104 = sshll.u32 %s9, 4
      %s105 = int_to_ptr.hbm [resolvable:$true] %s104
      %s106 = sshll.u32 [#allocation10], 4
      %s107 = int_to_ptr.vmem [resolvable:$true] %s106
      %109 = dma.hbm_to_vmem [thread:$0]  %s105, 48, %s107, [#allocation11]
    $region41: #{gmrt_cnn_forward.1} parent=1 // pred_fallthru
      _
    // Predicated region
    $region42: #{gmrt_cnn_forward.1} parent=1 // pred_check
      _
    $region43: #{gmrt_cnn_forward.1} parent=1 // pred_check_branch
      %111 = sbr.rel (0) target = $region45
    $region44: #{gmrt_cnn_forward.1} parent=1 // pred_region
      _
    $region45: #{gmrt_cnn_forward.1} parent=1 // pred_fallthru
      _
    // Predicated region
    $region46: #{gmrt_cnn_forward.1} parent=1 // pred_check
      _
    $region47: #{gmrt_cnn_forward.1} parent=1 // pred_check_branch
      %113 = sbr.rel (0) target = $region49
    $region48: #{gmrt_cnn_forward.1} parent=1 // pred_region
      %115 = vsyncadd [#allocation11], 0
      %s117 = sshll.u32 %s11, 4
      %s118 = int_to_ptr.hbm [resolvable:$true] %s117
      %s119 = sshll.u32 [#allocation12], 4
      %s120 = int_to_ptr.vmem [resolvable:$true] %s119
      %122 = dma.hbm_to_vmem [thread:$0]  %s118, 16, %s120, [#allocation11]
    $region49: #{gmrt_cnn_forward.1} parent=1 // pred_fallthru
      _
    // Predicated region
    $region50: #{gmrt_cnn_forward.1} parent=1 // pred_check
      _
    $region51: #{gmrt_cnn_forward.1} parent=1 // pred_check_branch
      %124 = sbr.rel (0) target = $region53
    $region52: #{gmrt_cnn_forward.1} parent=1 // pred_region
      %126 = vsyncadd [#allocation14], 0
      %s128 = sshll.u32 %s12, 4
      %s129 = int_to_ptr.hbm [resolvable:$true] %s128
      %s130 = sshll.u32 [#allocation13], 4
      %s131 = int_to_ptr.vmem [resolvable:$true] %s130
      %133 = dma.hbm_to_vmem [thread:$0]  %s129, 1024, %s131, [#allocation14]
    $region53: #{gmrt_cnn_forward.1} parent=1 // pred_fallthru
      _
    // Predicated region
    $region54: #{gmrt_cnn_forward.1} parent=1 // pred_check
      _
    $region55: #{gmrt_cnn_forward.1} parent=1 // pred_check_branch
      %135 = sbr.rel (0) target = $region57
    $region56: #{gmrt_cnn_forward.1} parent=1 // pred_region
      %137 = vsyncadd [#allocation14], 0
      %s139 = sshll.u32 %s13, 4
      %s140 = int_to_ptr.hbm [resolvable:$true] %s139
      %s141 = sshll.u32 [#allocation15], 4
      %s142 = int_to_ptr.vmem [resolvable:$true] %s141
      %144 = dma.hbm_to_vmem [thread:$0]  %s140, 256, %s142, [#allocation14]
    $region57: #{gmrt_cnn_forward.1} parent=1 // pred_fallthru
      _
    // Predicated region
    $region58: #{gmrt_cnn_forward.1} parent=1 // pred_check
      _
    $region59: #{gmrt_cnn_forward.1} parent=1 // pred_check_branch
      %146 = sbr.rel (0) target = $region61
    $region60: #{gmrt_cnn_forward.1} parent=1 // pred_region
      %148 = vsyncadd [#allocation17], 0
      %s149 = sshll.u32 %s14, 4
      %s150 = int_to_ptr.hbm [resolvable:$true] %s149
      %s151 = sshll.u32 [#allocation16], 4
      %s152 = int_to_ptr.vmem [resolvable:$true] %s151
      %157 = dma.hbm_to_vmem [thread:$0]  %s150, 131072, %s152, [#allocation17], 512, 512, 32
    $region61: #{gmrt_cnn_forward.1} parent=1 // pred_fallthru
      _
    // Predicated region
    $region62: #{gmrt_cnn_forward.1} parent=1 // pred_check
      _
    $region63: #{gmrt_cnn_forward.1} parent=1 // pred_check_branch
      %159 = sbr.rel (0) target = $region65
    $region64: #{gmrt_cnn_forward.1} parent=1 // pred_region
      %161 = vsyncadd [#allocation17], 0
      %s163 = sshll.u32 %s15, 4
      %s164 = int_to_ptr.hbm [resolvable:$true] %s163
      %s165 = sshll.u32 [#allocation18], 4
      %s166 = int_to_ptr.vmem [resolvable:$true] %s165
      %168 = dma.hbm_to_vmem [thread:$0]  %s164, 128, %s166, [#allocation17]
    $region65: #{gmrt_cnn_forward.1} parent=1 // pred_fallthru
      _
    // Predicated region
    $region66: #{gmrt_cnn_forward.1} parent=1 // pred_check
      _
    $region67: #{gmrt_cnn_forward.1} parent=1 // pred_check_branch
      %170 = sbr.rel (0) target = $region69
    $region68: #{gmrt_cnn_forward.1} parent=1 // pred_region
      _
    $region69: #{gmrt_cnn_forward.1} parent=1 // pred_fallthru
      _
    // Predicated region
    $region70: #{gmrt_cnn_forward.1} parent=1 // pred_check
      _
    $region71: #{gmrt_cnn_forward.1} parent=1 // pred_check_branch
      %172 = sbr.rel (0) target = $region73
    $region72: #{gmrt_cnn_forward.1} parent=1 // pred_region
      %174 = vsyncadd [#allocation20], 0
      %s176 = sshll.u32 %s17, 4
      %s177 = int_to_ptr.hbm [resolvable:$true] %s176
      %s178 = sshll.u32 [#allocation19], 4
      %s179 = int_to_ptr.vmem [resolvable:$true] %s178
      %181 = dma.hbm_to_vmem [thread:$0]  %s177, 16, %s179, [#allocation20]
    $region73: #{gmrt_cnn_forward.1} parent=1 // pred_fallthru
      _
    // Predicated region
    $region74: #{gmrt_cnn_forward.1} parent=1 // pred_check
      _
    $region75: #{gmrt_cnn_forward.1} parent=1 // pred_check_branch
      %183 = sbr.rel (0) target = $region77
    $region76: #{gmrt_cnn_forward.1} parent=1 // pred_region
      %185 = dma.done [#allocation3], 192
    $region77: #{gmrt_cnn_forward.1} parent=1 // pred_fallthru
      _
    // Predicated region
    $region78: #{gmrt_cnn_forward.1} parent=1 // pred_check
      _
    $region79: #{gmrt_cnn_forward.1} parent=1 // pred_check_branch
      %187 = sbr.rel (0) target = $region81
    $region80: #{gmrt_cnn_forward.1} parent=1 // pred_region
      %189 = dma.done [#allocation5], 16
    $region81: #{gmrt_cnn_forward.1} parent=1 // pred_fallthru
      _
    // Predicated region
    $region82: #{gmrt_cnn_forward.1} parent=1 // pred_check
      _
    $region83: #{gmrt_cnn_forward.1} parent=1 // pred_check_branch
      %191 = sbr.rel (0) target = $region85
    $region84: #{gmrt_cnn_forward.1} parent=1 // pred_region
      %193 = dma.done [#allocation5], 16
    $region85: #{gmrt_cnn_forward.1} parent=1 // pred_fallthru
      _
    // Predicated region
    $region86: #{gmrt_cnn_forward.1} parent=1 // pred_check
      _
    $region87: #{gmrt_cnn_forward.1} parent=1 // pred_check_branch
      %195 = sbr.rel (0) target = $region89
    $region88: #{gmrt_cnn_forward.1} parent=1 // pred_region
      %197 = dma.done [#allocation8], 32
    $region89: #{gmrt_cnn_forward.1} parent=1 // pred_fallthru
      _
    // Predicated region
    $region90: #{gmrt_cnn_forward.1} parent=1 // pred_check
      _
    $region91: #{gmrt_cnn_forward.1} parent=1 // pred_check_branch
      %199 = sbr.rel (0) target = $region93
    $region92: #{gmrt_cnn_forward.1} parent=1 // pred_region
      %201 = dma.done [#allocation8], 14400
    $region93: #{gmrt_cnn_forward.1} parent=1 // pred_fallthru
      _
    // Predicated region
    $region94: #{gmrt_cnn_forward.1} parent=1 // pred_check
      _
    $region95: #{gmrt_cnn_forward.1} parent=1 // pred_check_branch
      %203 = sbr.rel (0) target = $region97
    $region96: #{gmrt_cnn_forward.1} parent=1 // pred_region
      %205 = dma.done [#allocation11], 48
    $region97: #{gmrt_cnn_forward.1} parent=1 // pred_fallthru
      _
    // Predicated region
    $region98: #{gmrt_cnn_forward.1} parent=1 // pred_check
      _
    $region99: #{gmrt_cnn_forward.1} parent=1 // pred_check_branch
      %207 = sbr.rel (0) target = $region101
    $region100: #{gmrt_cnn_forward.1} parent=1 // pred_region
      %209 = dma.done [#allocation11], 16
    $region101: #{gmrt_cnn_forward.1} parent=1 // pred_fallthru
      _
    // Predicated region
    $region102: #{gmrt_cnn_forward.1} parent=1 // pred_check
      _
    $region103: #{gmrt_cnn_forward.1} parent=1 // pred_check_branch
      %211 = sbr.rel (0) target = $region105
    $region104: #{gmrt_cnn_forward.1} parent=1 // pred_region
      %213 = dma.done [#allocation14], 1024
    $region105: #{gmrt_cnn_forward.1} parent=1 // pred_fallthru
      _
    // Predicated region
    $region106: #{gmrt_cnn_forward.1} parent=1 // pred_check
      _
    $region107: #{gmrt_cnn_forward.1} parent=1 // pred_check_branch
      %215 = sbr.rel (0) target = $region109
    $region108: #{gmrt_cnn_forward.1} parent=1 // pred_region
      %217 = dma.done [#allocation14], 256
    $region109: #{gmrt_cnn_forward.1} parent=1 // pred_fallthru
      _
    // Predicated region
    $region110: #{gmrt_cnn_forward.1} parent=1 // pred_check
      _
    $region111: #{gmrt_cnn_forward.1} parent=1 // pred_check_branch
      %219 = sbr.rel (0) target = $region113
    $region112: #{gmrt_cnn_forward.1} parent=1 // pred_region
      %221 = dma.done [#allocation17], 131072
    $region113: #{gmrt_cnn_forward.1} parent=1 // pred_fallthru
      _
    // Predicated region
    $region114: #{gmrt_cnn_forward.1} parent=1 // pred_check
      _
    $region115: #{gmrt_cnn_forward.1} parent=1 // pred_check_branch
      %223 = sbr.rel (0) target = $region117
    $region116: #{gmrt_cnn_forward.1} parent=1 // pred_region
      %225 = dma.done [#allocation17], 128
    $region117: #{gmrt_cnn_forward.1} parent=1 // pred_fallthru
      _
    // Predicated region
    $region118: #{gmrt_cnn_forward.1} parent=1 // pred_check
      _
    $region119: #{gmrt_cnn_forward.1} parent=1 // pred_check_branch
      %227 = sbr.rel (0) target = $region121
    $region120: #{gmrt_cnn_forward.1} parent=1 // pred_region
      %229 = dma.done [#allocation20], 16
    $region121: #{gmrt_cnn_forward.1} parent=1 // pred_fallthru
      _
    %v231 = vld [vmem:[%s0] sm:$0xff]
    %v232 = vld [vmem:[%s0 + $0x8] sm:$0xff]
    %v233 = vld [vmem:[%s0 + $0x10] sm:$0xf]
    %v234 = vld [vmem:[%s0 + $0x18] sm:$0xff]
    %v235 = vld [vmem:[%s0 + $0x20] sm:$0xff]
    %v236 = vld [vmem:[%s0 + $0x28] sm:$0xf]
    %v237 = vld [vmem:[%s0 + $0x30] sm:$0xff]
    %v238 = vld [vmem:[%s0 + $0x38] sm:$0xff]
    %v239 = vld [vmem:[%s0 + $0x40] sm:$0xf]
    %v240 = vld [vmem:[%s0 + $0x48] sm:$0xff]
    %v241 = vld [vmem:[%s0 + $0x50] sm:$0xff]
    %v242 = vld [vmem:[%s0 + $0x58] sm:$0xf]
    %v243 = vld [vmem:[%s0 + $0x60] sm:$0xff]
    %v244 = vld [vmem:[%s0 + $0x68] sm:$0xff]
    %v245 = vld [vmem:[%s0 + $0x70] sm:$0xf]
    %v246 = vld [vmem:[%s0 + $0x78] sm:$0xff]
    %v247 = vld [vmem:[%s0 + $0x80] sm:$0xff]
    %v248 = vld [vmem:[%s0 + $0x88] sm:$0xf]
    %v249 = vld [vmem:[%s0 + $0x90] sm:$0xff]
    %v250 = vld [vmem:[%s0 + $0x98] sm:$0xff]
    %v251 = vld [vmem:[%s0 + $0xa0] sm:$0xf]
    %v252 = vld [vmem:[%s0 + $0xa8] sm:$0xff]
    %v253 = vld [vmem:[%s0 + $0xb0] sm:$0xff]
    %v254 = vld [vmem:[%s0 + $0xb8] sm:$0xf]
    %v279 = vrot.slane %v231, 2
    %v280 = vrot.slane %v231, 4
    %v281 = vrot.slane %v231, 6
    %v282 = vrot.slane %v232, 2
    %v283 = vrot.slane %v232, 4
    %v284 = vrot.slane %v232, 6
    %v285 = vrot.slane %v234, 2
    %v286 = vrot.slane %v234, 4
    %v287 = vrot.slane %v234, 6
    %v288 = vrot.slane %v235, 2
    %v289 = vrot.slane %v235, 4
    %v290 = vrot.slane %v235, 6
    %v291 = vrot.slane %v237, 2
    %v292 = vrot.slane %v237, 4
    %v293 = vrot.slane %v237, 6
    %v294 = vrot.slane %v238, 2
    %v295 = vrot.slane %v238, 4
    %v296 = vrot.slane %v238, 6
    %v297 = vrot.slane %v240, 2
    %v298 = vrot.slane %v240, 4
    %v299 = vrot.slane %v240, 6
    %v300 = vrot.slane %v241, 2
    %v301 = vrot.slane %v241, 4
    %v302 = vrot.slane %v241, 6
    %v303 = vrot.slane %v243, 2
    %v304 = vrot.slane %v243, 4
    %v305 = vrot.slane %v243, 6
    %v306 = vrot.slane %v244, 2
    %v307 = vrot.slane %v244, 4
    %v308 = vrot.slane %v244, 6
    %v309 = vrot.slane %v246, 2
    %v310 = vrot.slane %v246, 4
    %v311 = vrot.slane %v246, 6
    %v312 = vrot.slane %v247, 2
    %v313 = vrot.slane %v247, 4
    %v314 = vrot.slane %v247, 6
    %v315 = vrot.slane %v249, 2
    %v316 = vrot.slane %v249, 4
    %v317 = vrot.slane %v249, 6
    %v318 = vrot.slane %v250, 2
    %v319 = vrot.slane %v250, 4
    %v320 = vrot.slane %v250, 6
    %v321 = vrot.slane %v252, 2
    %v322 = vrot.slane %v252, 4
    %v323 = vrot.slane %v252, 6
    %v324 = vrot.slane %v253, 2
    %v325 = vrot.slane %v253, 4
    %v326 = vrot.slane %v253, 6
    %v327 = vld [vmem:[#allocation2] sm:$0xf]
    %v328 = vrot.slane %v233, 2
    %v329 = vrot.slane %v236, 2
    %v330 = vrot.slane %v239, 2
    %v331 = vrot.slane %v242, 2
    %v332 = vrot.slane %v245, 2
    %v333 = vrot.slane %v248, 2
    %v334 = vrot.slane %v251, 2
    %v335 = vrot.slane %v254, 2
    %vm336 = vcmask 1040384
    %vm337 = vcmask 1042434
    %vm338 = vmor %vm336, %vm337
    %vm339 = vcmask 1044484
    %vm340 = vmor %vm338, %vm339
    %vm341 = vcmask 1046534
    %vm342 = vmor %vm340, %vm341
    %v343 = vrot.slane %v231, 7
    %v344 = vrot.slane %v343, 2
    %v345 = vrot.slane %v279, 7
    %v346 = vsel %vm342, %v344, %v345
    %v347 = vrot.slane %v345, 2
    %v348 = vrot.slane %v280, 7
    %v349 = vsel %vm342, %v347, %v348
    %v350 = vrot.slane %v348, 2
    %v351 = vrot.slane %v281, 7
    %v352 = vsel %vm342, %v350, %v351
    %v353 = vrot.slane %v351, 2
    %v354 = vrot.slane %v232, 7
    %v355 = vsel %vm342, %v353, %v354
    %v356 = vrot.slane %v354, 2
    %v357 = vrot.slane %v282, 7
    %v358 = vsel %vm342, %v356, %v357
    %v359 = vrot.slane %v357, 2
    %v360 = vrot.slane %v283, 7
    %v361 = vsel %vm342, %v359, %v360
    %v362 = vrot.slane %v360, 2
    %v363 = vrot.slane %v284, 7
    %v364 = vsel %vm342, %v362, %v363
    %v365 = vrot.slane %v363, 2
    %v366 = vrot.slane %v233, 7
    %v367 = vsel %vm342, %v365, %v366
    %v368 = vrot.slane %v366, 2
    %v369 = vrot.slane %v328, 7
    %v370 = vsel %vm342, %v368, %v369
    %v371 = vrot.slane %v234, 7
    %v372 = vrot.slane %v371, 2
    %v373 = vrot.slane %v285, 7
    %v374 = vsel %vm342, %v372, %v373
    %v375 = vrot.slane %v373, 2
    %v376 = vrot.slane %v286, 7
    %v377 = vsel %vm342, %v375, %v376
    %v378 = vrot.slane %v376, 2
    %v379 = vrot.slane %v287, 7
    %v380 = vsel %vm342, %v378, %v379
    %v381 = vrot.slane %v379, 2
    %v382 = vrot.slane %v235, 7
    %v383 = vsel %vm342, %v381, %v382
    %v384 = vrot.slane %v382, 2
    %v385 = vrot.slane %v288, 7
    %v386 = vsel %vm342, %v384, %v385
    %v387 = vrot.slane %v385, 2
    %v388 = vrot.slane %v289, 7
    %v389 = vsel %vm342, %v387, %v388
    %v390 = vrot.slane %v388, 2
    %v391 = vrot.slane %v290, 7
    %v392 = vsel %vm342, %v390, %v391
    %v393 = vrot.slane %v391, 2
    %v394 = vrot.slane %v236, 7
    %v395 = vsel %vm342, %v393, %v394
    %v396 = vrot.slane %v394, 2
    %v397 = vrot.slane %v329, 7
    %v398 = vsel %vm342, %v396, %v397
    %v399 = vrot.slane %v237, 7
    %v400 = vrot.slane %v399, 2
    %v401 = vrot.slane %v291, 7
    %v402 = vsel %vm342, %v400, %v401
    %v403 = vrot.slane %v401, 2
    %v404 = vrot.slane %v292, 7
    %v405 = vsel %vm342, %v403, %v404
    %v406 = vrot.slane %v404, 2
    %v407 = vrot.slane %v293, 7
    %v408 = vsel %vm342, %v406, %v407
    %v409 = vrot.slane %v407, 2
    %v410 = vrot.slane %v238, 7
    %v411 = vsel %vm342, %v409, %v410
    %v412 = vrot.slane %v410, 2
    %v413 = vrot.slane %v294, 7
    %v414 = vsel %vm342, %v412, %v413
    %v415 = vrot.slane %v413, 2
    %v416 = vrot.slane %v295, 7
    %v417 = vsel %vm342, %v415, %v416
    %v418 = vrot.slane %v416, 2
    %v419 = vrot.slane %v296, 7
    %v420 = vsel %vm342, %v418, %v419
    %v421 = vrot.slane %v419, 2
    %v422 = vrot.slane %v239, 7
    %v423 = vsel %vm342, %v421, %v422
    %v424 = vrot.slane %v422, 2
    %v425 = vrot.slane %v330, 7
    %v426 = vsel %vm342, %v424, %v425
    %v427 = vrot.slane %v240, 7
    %v428 = vrot.slane %v427, 2
    %v429 = vrot.slane %v297, 7
    %v430 = vsel %vm342, %v428, %v429
    %v431 = vrot.slane %v429, 2
    %v432 = vrot.slane %v298, 7
    %v433 = vsel %vm342, %v431, %v432
    %v434 = vrot.slane %v432, 2
    %v435 = vrot.slane %v299, 7
    %v436 = vsel %vm342, %v434, %v435
    %v437 = vrot.slane %v435, 2
    %v438 = vrot.slane %v241, 7
    %v439 = vsel %vm342, %v437, %v438
    %v440 = vrot.slane %v438, 2
    %v441 = vrot.slane %v300, 7
    %v442 = vsel %vm342, %v440, %v441
    %v443 = vrot.slane %v441, 2
    %v444 = vrot.slane %v301, 7
    %v445 = vsel %vm342, %v443, %v444
    %v446 = vrot.slane %v444, 2
    %v447 = vrot.slane %v302, 7
    %v448 = vsel %vm342, %v446, %v447
    %v449 = vrot.slane %v447, 2
    %v450 = vrot.slane %v242, 7
    %v451 = vsel %vm342, %v449, %v450
    %v452 = vrot.slane %v450, 2
    %v453 = vrot.slane %v331, 7
    %v454 = vsel %vm342, %v452, %v453
    %v455 = vrot.slane %v243, 7
    %v456 = vrot.slane %v455, 2
    %v457 = vrot.slane %v303, 7
    %v458 = vsel %vm342, %v456, %v457
    %v459 = vrot.slane %v457, 2
    %v460 = vrot.slane %v304, 7
    %v461 = vsel %vm342, %v459, %v460
    %v462 = vrot.slane %v460, 2
    %v463 = vrot.slane %v305, 7
    %v464 = vsel %vm342, %v462, %v463
    %v465 = vrot.slane %v463, 2
    %v466 = vrot.slane %v244, 7
    %v467 = vsel %vm342, %v465, %v466
    %v468 = vrot.slane %v466, 2
    %v469 = vrot.slane %v306, 7
    %v470 = vsel %vm342, %v468, %v469
    %v471 = vrot.slane %v469, 2
    %v472 = vrot.slane %v307, 7
    %v473 = vsel %vm342, %v471, %v472
    %v474 = vrot.slane %v472, 2
    %v475 = vrot.slane %v308, 7
    %v476 = vsel %vm342, %v474, %v475
    %v477 = vrot.slane %v475, 2
    %v478 = vrot.slane %v245, 7
    %v479 = vsel %vm342, %v477, %v478
    %v480 = vrot.slane %v478, 2
    %v481 = vrot.slane %v332, 7
    %v482 = vsel %vm342, %v480, %v481
    %v483 = vrot.slane %v246, 7
    %v484 = vrot.slane %v483, 2
    %v485 = vrot.slane %v309, 7
    %v486 = vsel %vm342, %v484, %v485
    %v487 = vrot.slane %v485, 2
    %v488 = vrot.slane %v310, 7
    %v489 = vsel %vm342, %v487, %v488
    %v490 = vrot.slane %v488, 2
    %v491 = vrot.slane %v311, 7
    %v492 = vsel %vm342, %v490, %v491
    %v493 = vrot.slane %v491, 2
    %v494 = vrot.slane %v247, 7
    %v495 = vsel %vm342, %v493, %v494
    %v496 = vrot.slane %v494, 2
    %v497 = vrot.slane %v312, 7
    %v498 = vsel %vm342, %v496, %v497
    %v499 = vrot.slane %v497, 2
    %v500 = vrot.slane %v313, 7
    %v501 = vsel %vm342, %v499, %v500
    %v502 = vrot.slane %v500, 2
    %v503 = vrot.slane %v314, 7
    %v504 = vsel %vm342, %v502, %v503
    %v505 = vrot.slane %v503, 2
    %v506 = vrot.slane %v248, 7
    %v507 = vsel %vm342, %v505, %v506
    %v508 = vrot.slane %v506, 2
    %v509 = vrot.slane %v333, 7
    %v510 = vsel %vm342, %v508, %v509
    %v511 = vrot.slane %v249, 7
    %v512 = vrot.slane %v511, 2
    %v513 = vrot.slane %v315, 7
    %v514 = vsel %vm342, %v512, %v513
    %v515 = vrot.slane %v513, 2
    %v516 = vrot.slane %v316, 7
    %v517 = vsel %vm342, %v515, %v516
    %v518 = vrot.slane %v516, 2
    %v519 = vrot.slane %v317, 7
    %v520 = vsel %vm342, %v518, %v519
    %v521 = vrot.slane %v519, 2
    %v522 = vrot.slane %v250, 7
    %v523 = vsel %vm342, %v521, %v522
    %v524 = vrot.slane %v522, 2
    %v525 = vrot.slane %v318, 7
    %v526 = vsel %vm342, %v524, %v525
    %v527 = vrot.slane %v525, 2
    %v528 = vrot.slane %v319, 7
    %v529 = vsel %vm342, %v527, %v528
    %v530 = vrot.slane %v528, 2
    %v531 = vrot.slane %v320, 7
    %v532 = vsel %vm342, %v530, %v531
    %v533 = vrot.slane %v531, 2
    %v534 = vrot.slane %v251, 7
    %v535 = vsel %vm342, %v533, %v534
    %v536 = vrot.slane %v534, 2
    %v537 = vrot.slane %v334, 7
    %v538 = vsel %vm342, %v536, %v537
    %v539 = vrot.slane %v252, 7
    %v540 = vrot.slane %v539, 2
    %v541 = vrot.slane %v321, 7
    %v542 = vsel %vm342, %v540, %v541
    %v543 = vrot.slane %v541, 2
    %v544 = vrot.slane %v322, 7
    %v545 = vsel %vm342, %v543, %v544
    %v546 = vrot.slane %v544, 2
    %v547 = vrot.slane %v323, 7
    %v548 = vsel %vm342, %v546, %v547
    %v549 = vrot.slane %v547, 2
    %v550 = vrot.slane %v253, 7
    %v551 = vsel %vm342, %v549, %v550
    %v552 = vrot.slane %v550, 2
    %v553 = vrot.slane %v324, 7
    %v554 = vsel %vm342, %v552, %v553
    %v555 = vrot.slane %v553, 2
    %v556 = vrot.slane %v325, 7
    %v557 = vsel %vm342, %v555, %v556
    %v558 = vrot.slane %v556, 2
    %v559 = vrot.slane %v326, 7
    %v560 = vsel %vm342, %v558, %v559
    %v561 = vrot.slane %v559, 2
    %v562 = vrot.slane %v254, 7
    %v563 = vsel %vm342, %v561, %v562
    %v564 = vrot.slane %v562, 2
    %v565 = vrot.slane %v335, 7
    %v566 = vsel %vm342, %v564, %v565
    %s567 = scalar_lea.vmem [#allocation2], 4
    %v568 = vld [vmem:[%s567] sm:$0xf]
    %569 = vst [vmem:[#allocation1] ss:$4 sm:$0xff] %v346
    %s570 = scalar_lea.vmem [#allocation1], 1
    %571 = vst [vmem:[%s570] ss:$4 sm:$0xff] %v349
    %s572 = scalar_lea.vmem [#allocation1], 2
    %573 = vst [vmem:[%s572] ss:$4 sm:$0xff] %v352
    %s574 = scalar_lea.vmem [#allocation1], 3
    %575 = vst [vmem:[%s574] ss:$4 sm:$0xff] %v355
    %s576 = scalar_lea.vmem [#allocation1], 32
    %577 = vst [vmem:[%s576] ss:$4 sm:$0xff] %v358
    %s578 = scalar_lea.vmem [#allocation1], 33
    %579 = vst [vmem:[%s578] ss:$4 sm:$0xff] %v361
    %s580 = scalar_lea.vmem [#allocation1], 34
    %581 = vst [vmem:[%s580] ss:$4 sm:$0xff] %v364
    %s582 = scalar_lea.vmem [#allocation1], 35
    %583 = vst [vmem:[%s582] ss:$4 sm:$0xff] %v367
    %v584 = vld.sshfl [vmem:[#allocation1] sm:$0xff pattern:$0x73625140]
    %v585 = vld.sshfl [vmem:[#allocation1 + $0x20] sm:$0xff pattern:$0x73625140]
    %586 = vst [vmem:[#allocation1] ss:$4 sm:$0xff] %v370
    %587 = vst [vmem:[%s570] ss:$4 sm:$0xff] %v374
    %588 = vst [vmem:[%s572] ss:$4 sm:$0xff] %v377
    %589 = vst [vmem:[%s574] ss:$4 sm:$0xff] %v380
    %590 = vst [vmem:[%s576] ss:$4 sm:$0xff] %v383
    %591 = vst [vmem:[%s578] ss:$4 sm:$0xff] %v386
    %592 = vst [vmem:[%s580] ss:$4 sm:$0xff] %v389
    %593 = vst [vmem:[%s582] ss:$4 sm:$0xff] %v392
    %v594 = vld.sshfl [vmem:[#allocation1] sm:$0xff pattern:$0x73625140]
    %v595 = vld.sshfl [vmem:[#allocation1 + $0x20] sm:$0xff pattern:$0x73625140]
    %596 = vst [vmem:[#allocation1] ss:$4 sm:$0xff] %v395
    %597 = vst [vmem:[%s570] ss:$4 sm:$0xff] %v398
    %598 = vst [vmem:[%s572] ss:$4 sm:$0xff] %v402
    %599 = vst [vmem:[%s574] ss:$4 sm:$0xff] %v405
    %600 = vst [vmem:[%s576] ss:$4 sm:$0xff] %v408
    %601 = vst [vmem:[%s578] ss:$4 sm:$0xff] %v411
    %602 = vst [vmem:[%s580] ss:$4 sm:$0xff] %v414
    %603 = vst [vmem:[%s582] ss:$4 sm:$0xff] %v417
    %v604 = vld.sshfl [vmem:[#allocation1] sm:$0xff pattern:$0x73625140]
    %v605 = vld.sshfl [vmem:[#allocation1 + $0x20] sm:$0xff pattern:$0x73625140]
    %606 = vst [vmem:[#allocation1] ss:$4 sm:$0xff] %v420
    %607 = vst [vmem:[%s570] ss:$4 sm:$0xff] %v423
    %608 = vst [vmem:[%s572] ss:$4 sm:$0xff] %v426
    %609 = vst [vmem:[%s574] ss:$4 sm:$0xff] %v430
    %610 = vst [vmem:[%s576] ss:$4 sm:$0xff] %v433
    %611 = vst [vmem:[%s578] ss:$4 sm:$0xff] %v436
    %612 = vst [vmem:[%s580] ss:$4 sm:$0xff] %v439
    %613 = vst [vmem:[%s582] ss:$4 sm:$0xff] %v442
    %v614 = vld.sshfl [vmem:[#allocation1] sm:$0xff pattern:$0x73625140]
    %v615 = vld.sshfl [vmem:[#allocation1 + $0x20] sm:$0xff pattern:$0x73625140]
    %616 = vst [vmem:[#allocation1] ss:$4 sm:$0xff] %v445
    %617 = vst [vmem:[%s570] ss:$4 sm:$0xff] %v448
    %618 = vst [vmem:[%s572] ss:$4 sm:$0xff] %v451
    %619 = vst [vmem:[%s574] ss:$4 sm:$0xff] %v454
    %620 = vst [vmem:[%s576] ss:$4 sm:$0xff] %v458
    %621 = vst [vmem:[%s578] ss:$4 sm:$0xff] %v461
    %622 = vst [vmem:[%s580] ss:$4 sm:$0xff] %v464
    %623 = vst [vmem:[%s582] ss:$4 sm:$0xff] %v467
    %v624 = vld.sshfl [vmem:[#allocation1] sm:$0xff pattern:$0x73625140]
    %v625 = vld.sshfl [vmem:[#allocation1 + $0x20] sm:$0xff pattern:$0x73625140]
    %626 = vst [vmem:[#allocation1] ss:$4 sm:$0xff] %v470
    %627 = vst [vmem:[%s570] ss:$4 sm:$0xff] %v473
    %628 = vst [vmem:[%s572] ss:$4 sm:$0xff] %v476
    %629 = vst [vmem:[%s574] ss:$4 sm:$0xff] %v479
    %630 = vst [vmem:[%s576] ss:$4 sm:$0xff] %v482
    %631 = vst [vmem:[%s578] ss:$4 sm:$0xff] %v486
    %632 = vst [vmem:[%s580] ss:$4 sm:$0xff] %v489
    %633 = vst [vmem:[%s582] ss:$4 sm:$0xff] %v492
    %v634 = vld.sshfl [vmem:[#allocation1] sm:$0xff pattern:$0x73625140]
    %v635 = vld.sshfl [vmem:[#allocation1 + $0x20] sm:$0xff pattern:$0x73625140]
    %636 = vst [vmem:[#allocation1] ss:$4 sm:$0xff] %v495
    %637 = vst [vmem:[%s570] ss:$4 sm:$0xff] %v498
    %638 = vst [vmem:[%s572] ss:$4 sm:$0xff] %v501
    %639 = vst [vmem:[%s574] ss:$4 sm:$0xff] %v504
    %640 = vst [vmem:[%s576] ss:$4 sm:$0xff] %v507
    %641 = vst [vmem:[%s578] ss:$4 sm:$0xff] %v510
    %642 = vst [vmem:[%s580] ss:$4 sm:$0xff] %v514
    %643 = vst [vmem:[%s582] ss:$4 sm:$0xff] %v517
    %v644 = vld.sshfl [vmem:[#allocation1] sm:$0xff pattern:$0x73625140]
    %v645 = vld.sshfl [vmem:[#allocation1 + $0x20] sm:$0xff pattern:$0x73625140]
    %646 = vst [vmem:[#allocation1] ss:$4 sm:$0xff] %v520
    %647 = vst [vmem:[%s570] ss:$4 sm:$0xff] %v523
    %648 = vst [vmem:[%s572] ss:$4 sm:$0xff] %v526
    %649 = vst [vmem:[%s574] ss:$4 sm:$0xff] %v529
    %650 = vst [vmem:[%s576] ss:$4 sm:$0xff] %v532
    %651 = vst [vmem:[%s578] ss:$4 sm:$0xff] %v535
    %652 = vst [vmem:[%s580] ss:$4 sm:$0xff] %v538
    %653 = vst [vmem:[%s582] ss:$4 sm:$0xff] %v542
    %v654 = vld.sshfl [vmem:[#allocation1] sm:$0xff pattern:$0x73625140]
    %v655 = vld.sshfl [vmem:[#allocation1 + $0x20] sm:$0xff pattern:$0x73625140]
    %656 = vst [vmem:[#allocation1] ss:$4 sm:$0xff] %v545
    %657 = vst [vmem:[%s570] ss:$4 sm:$0xff] %v548
    %658 = vst [vmem:[%s572] ss:$4 sm:$0xff] %v551
    %659 = vst [vmem:[%s574] ss:$4 sm:$0xff] %v554
    %660 = vst [vmem:[%s576] ss:$4 sm:$0xff] %v557
    %661 = vst [vmem:[%s578] ss:$4 sm:$0xff] %v560
    %662 = vst [vmem:[%s580] ss:$4 sm:$0xff] %v563
    %663 = vst [vmem:[%s582] ss:$4 sm:$0xff] %v566
    %v664 = vld.sshfl [vmem:[#allocation1] sm:$0xff pattern:$0x73625140]
    %v665 = vld.sshfl [vmem:[#allocation1 + $0x20] sm:$0xff pattern:$0x73625140]
    %vm666 = vcmask 31744
    %v667 = vsel %vm666, %v584, 0
    %v669 = vsel %vm666, %v585, 0
    %v671 = vsel %vm666, %v594, 0
    %v673 = vsel %vm666, %v595, 0
    %v675 = vsel %vm666, %v604, 0
    %v677 = vsel %vm666, %v605, 0
    %v679 = vsel %vm666, %v614, 0
    %v681 = vsel %vm666, %v615, 0
    %v683 = vsel %vm666, %v624, 0
    %v685 = vsel %vm666, %v625, 0
    %v687 = vsel %vm666, %v634, 0
    %v689 = vsel %vm666, %v635, 0
    %v691 = vsel %vm666, %v644, 0
    %v693 = vsel %vm666, %v645, 0
    %v695 = vsel %vm666, %v654, 0
    %v697 = vsel %vm666, %v655, 0
    %v699 = vsel %vm666, %v664, 0
    %v701 = vsel %vm666, %v665, 0
    %vm703 = vcmask 1043456
    %v705 = vsel %vm703, %v568, 0
    %707 = vmatpush.msra.mxu0 0.0
    %708 = vmatpush.msra.mxu0 0.0
    %709 = vmatpush.msra.mxu0 0.0
    %710 = vmatpush.msra.mxu0 0.0
    %711 = vmatpush.msra.mxu0 0.0
    %712 = vmatpush.msra.mxu0 0.0
    %713 = vmatpush.msra.mxu0 0.0
    %714 = vmatpush.msra.mxu0 0.0
    %715 = vmatpush.msra.mxu0 0.0
    %716 = vmatpush.msra.mxu0 0.0
    %717 = vmatpush.msra.mxu0 0.0
    %718 = vmatpush.msra.mxu0 0.0
    %719 = vmatpush.msra.mxu0 0.0
    %720 = vmatpush.msra.mxu0 0.0
    %721 = vmatpush.msra.mxu0 0.0
    %722 = vmatpush.msra.mxu0 %v705
    %723 = vmatmul.f32.gmra.mxu0 %v667
    %v724 = vpop.f32.mrf.mxu0
    %v725 = vadd.f32 0.0, %v724
    %726 = vmatmul.f32.gmra.mxu0 %v669
    %v727 = vpop.f32.mrf.mxu0
    %v728 = vadd.f32 0.0, %v727
    %729 = vmatmul.f32.gmra.mxu0 %v671
    %v730 = vpop.f32.mrf.mxu0
    %v731 = vadd.f32 0.0, %v730
    %732 = vmatmul.f32.gmra.mxu0 %v673
    %v733 = vpop.f32.mrf.mxu0
    %v734 = vadd.f32 0.0, %v733
    %735 = vmatmul.f32.gmra.mxu0 %v675
    %v736 = vpop.f32.mrf.mxu0
    %v737 = vadd.f32 0.0, %v736
    %738 = vmatmul.f32.gmra.mxu0 %v677
    %v739 = vpop.f32.mrf.mxu0
    %v740 = vadd.f32 0.0, %v739
    %741 = vmatmul.f32.gmra.mxu0 %v679
    %v742 = vpop.f32.mrf.mxu0
    %v743 = vadd.f32 0.0, %v742
    %744 = vmatmul.f32.gmra.mxu0 %v681
    %v745 = vpop.f32.mrf.mxu0
    %v746 = vadd.f32 0.0, %v745
    %747 = vmatmul.f32.gmra.mxu0 %v683
    %v748 = vpop.f32.mrf.mxu0
    %v749 = vadd.f32 0.0, %v748
    %750 = vmatmul.f32.gmra.mxu0 %v685
    %v751 = vpop.f32.mrf.mxu0
    %v752 = vadd.f32 0.0, %v751
    %753 = vmatmul.f32.gmra.mxu0 %v687
    %v754 = vpop.f32.mrf.mxu0
    %v755 = vadd.f32 0.0, %v754
    %756 = vmatmul.f32.gmra.mxu0 %v689
    %v757 = vpop.f32.mrf.mxu0
    %v758 = vadd.f32 0.0, %v757
    %759 = vmatmul.f32.gmra.mxu0 %v691
    %v760 = vpop.f32.mrf.mxu0
    %v761 = vadd.f32 0.0, %v760
    %762 = vmatmul.f32.gmra.mxu0 %v693
    %v763 = vpop.f32.mrf.mxu0
    %v764 = vadd.f32 0.0, %v763
    %765 = vmatmul.f32.gmra.mxu0 %v695
    %v766 = vpop.f32.mrf.mxu0
    %v767 = vadd.f32 0.0, %v766
    %768 = vmatmul.f32.gmra.mxu0 %v697
    %v769 = vpop.f32.mrf.mxu0
    %v770 = vadd.f32 0.0, %v769
    %771 = vmatmul.f32.gmra.mxu0 %v699
    %v772 = vpop.f32.mrf.mxu0
    %v773 = vadd.f32 0.0, %v772
    %774 = vmatmul.f32.gmra.mxu0 %v701
    %v775 = vpop.f32.mrf.mxu0
    %v776 = vadd.f32 0.0, %v775
    %777 = vdwg.mxu0
    %778 = vst [vmem:[#allocation1] ss:$4 sm:$0xff] %v231
    %s779 = scalar_lea.vmem [#allocation1], 1
    %780 = vst [vmem:[%s779] ss:$4 sm:$0xff] %v279
    %s781 = scalar_lea.vmem [#allocation1], 2
    %782 = vst [vmem:[%s781] ss:$4 sm:$0xff] %v280
    %s783 = scalar_lea.vmem [#allocation1], 3
    %784 = vst [vmem:[%s783] ss:$4 sm:$0xff] %v281
    %s785 = scalar_lea.vmem [#allocation1], 32
    %786 = vst [vmem:[%s785] ss:$4 sm:$0xff] %v232
    %s787 = scalar_lea.vmem [#allocation1], 33
    %788 = vst [vmem:[%s787] ss:$4 sm:$0xff] %v282
    %s789 = scalar_lea.vmem [#allocation1], 34
    %790 = vst [vmem:[%s789] ss:$4 sm:$0xff] %v283
    %s791 = scalar_lea.vmem [#allocation1], 35
    %792 = vst [vmem:[%s791] ss:$4 sm:$0xff] %v284
    %v793 = vld.sshfl [vmem:[#allocation1] sm:$0xff pattern:$0x73625140]
    %v794 = vld.sshfl [vmem:[#allocation1 + $0x20] sm:$0xff pattern:$0x73625140]
    %795 = vst [vmem:[#allocation1] ss:$4 sm:$0xff] %v233
    %796 = vst [vmem:[%s779] ss:$4 sm:$0xff] %v234
    %797 = vst [vmem:[%s781] ss:$4 sm:$0xff] %v285
    %798 = vst [vmem:[%s783] ss:$4 sm:$0xff] %v286
    %799 = vst [vmem:[%s785] ss:$4 sm:$0xff] %v287
    %800 = vst [vmem:[%s787] ss:$4 sm:$0xff] %v235
    %801 = vst [vmem:[%s789] ss:$4 sm:$0xff] %v288
    %802 = vst [vmem:[%s791] ss:$4 sm:$0xff] %v289
    %v803 = vld.sshfl [vmem:[#allocation1] sm:$0xff pattern:$0x73625140]
    %v804 = vld.sshfl [vmem:[#allocation1 + $0x20] sm:$0xff pattern:$0x73625140]
    %805 = vst [vmem:[#allocation1] ss:$4 sm:$0xff] %v290
    %806 = vst [vmem:[%s779] ss:$4 sm:$0xff] %v236
    %807 = vst [vmem:[%s781] ss:$4 sm:$0xff] %v237
    %808 = vst [vmem:[%s783] ss:$4 sm:$0xff] %v291
    %809 = vst [vmem:[%s785] ss:$4 sm:$0xff] %v292
    %810 = vst [vmem:[%s787] ss:$4 sm:$0xff] %v293
    %811 = vst [vmem:[%s789] ss:$4 sm:$0xff] %v238
    %812 = vst [vmem:[%s791] ss:$4 sm:$0xff] %v294
    %v813 = vld.sshfl [vmem:[#allocation1] sm:$0xff pattern:$0x73625140]
    %v814 = vld.sshfl [vmem:[#allocation1 + $0x20] sm:$0xff pattern:$0x73625140]
    %815 = vst [vmem:[#allocation1] ss:$4 sm:$0xff] %v295
    %816 = vst [vmem:[%s779] ss:$4 sm:$0xff] %v296
    %817 = vst [vmem:[%s781] ss:$4 sm:$0xff] %v239
    %818 = vst [vmem:[%s783] ss:$4 sm:$0xff] %v240
    %819 = vst [vmem:[%s785] ss:$4 sm:$0xff] %v297
    %820 = vst [vmem:[%s787] ss:$4 sm:$0xff] %v298
    %821 = vst [vmem:[%s789] ss:$4 sm:$0xff] %v299
    %822 = vst [vmem:[%s791] ss:$4 sm:$0xff] %v241
    %v823 = vld.sshfl [vmem:[#allocation1] sm:$0xff pattern:$0x73625140]
    %v824 = vld.sshfl [vmem:[#allocation1 + $0x20] sm:$0xff pattern:$0x73625140]
    %825 = vst [vmem:[#allocation1] ss:$4 sm:$0xff] %v300
    %826 = vst [vmem:[%s779] ss:$4 sm:$0xff] %v301
    %827 = vst [vmem:[%s781] ss:$4 sm:$0xff] %v302
    %828 = vst [vmem:[%s783] ss:$4 sm:$0xff] %v242
    %829 = vst [vmem:[%s785] ss:$4 sm:$0xff] %v243
    %830 = vst [vmem:[%s787] ss:$4 sm:$0xff] %v303
    %831 = vst [vmem:[%s789] ss:$4 sm:$0xff] %v304
    %832 = vst [vmem:[%s791] ss:$4 sm:$0xff] %v305
    %v833 = vld.sshfl [vmem:[#allocation1] sm:$0xff pattern:$0x73625140]
    %v834 = vld.sshfl [vmem:[#allocation1 + $0x20] sm:$0xff pattern:$0x73625140]
    %835 = vst [vmem:[#allocation1] ss:$4 sm:$0xff] %v244
    %836 = vst [vmem:[%s779] ss:$4 sm:$0xff] %v306
    %837 = vst [vmem:[%s781] ss:$4 sm:$0xff] %v307
    %838 = vst [vmem:[%s783] ss:$4 sm:$0xff] %v308
    %839 = vst [vmem:[%s785] ss:$4 sm:$0xff] %v245
    %840 = vst [vmem:[%s787] ss:$4 sm:$0xff] %v246
    %841 = vst [vmem:[%s789] ss:$4 sm:$0xff] %v309
    %842 = vst [vmem:[%s791] ss:$4 sm:$0xff] %v310
    %v843 = vld.sshfl [vmem:[#allocation1] sm:$0xff pattern:$0x73625140]
    %v844 = vld.sshfl [vmem:[#allocation1 + $0x20] sm:$0xff pattern:$0x73625140]
    %845 = vst [vmem:[#allocation1] ss:$4 sm:$0xff] %v311
    %846 = vst [vmem:[%s779] ss:$4 sm:$0xff] %v247
    %847 = vst [vmem:[%s781] ss:$4 sm:$0xff] %v312
    %848 = vst [vmem:[%s783] ss:$4 sm:$0xff] %v313
    %849 = vst [vmem:[%s785] ss:$4 sm:$0xff] %v314
    %850 = vst [vmem:[%s787] ss:$4 sm:$0xff] %v248
    %851 = vst [vmem:[%s789] ss:$4 sm:$0xff] %v249
    %852 = vst [vmem:[%s791] ss:$4 sm:$0xff] %v315
    %v853 = vld.sshfl [vmem:[#allocation1] sm:$0xff pattern:$0x73625140]
    %v854 = vld.sshfl [vmem:[#allocation1 + $0x20] sm:$0xff pattern:$0x73625140]
    %855 = vst [vmem:[#allocation1] ss:$4 sm:$0xff] %v316
    %856 = vst [vmem:[%s779] ss:$4 sm:$0xff] %v317
    %857 = vst [vmem:[%s781] ss:$4 sm:$0xff] %v250
    %858 = vst [vmem:[%s783] ss:$4 sm:$0xff] %v318
    %859 = vst [vmem:[%s785] ss:$4 sm:$0xff] %v319
    %860 = vst [vmem:[%s787] ss:$4 sm:$0xff] %v320
    %861 = vst [vmem:[%s789] ss:$4 sm:$0xff] %v251
    %862 = vst [vmem:[%s791] ss:$4 sm:$0xff] %v252
    %v863 = vld.sshfl [vmem:[#allocation1] sm:$0xff pattern:$0x73625140]
    %v864 = vld.sshfl [vmem:[#allocation1 + $0x20] sm:$0xff pattern:$0x73625140]
    %865 = vst [vmem:[#allocation1] ss:$4 sm:$0xff] %v321
    %866 = vst [vmem:[%s779] ss:$4 sm:$0xff] %v322
    %867 = vst [vmem:[%s781] ss:$4 sm:$0xff] %v323
    %868 = vst [vmem:[%s783] ss:$4 sm:$0xff] %v253
    %869 = vst [vmem:[%s785] ss:$4 sm:$0xff] %v324
    %870 = vst [vmem:[%s787] ss:$4 sm:$0xff] %v325
    %871 = vst [vmem:[%s789] ss:$4 sm:$0xff] %v326
    %872 = vst [vmem:[%s791] ss:$4 sm:$0xff] %v254
    %v873 = vld.sshfl [vmem:[#allocation1] sm:$0xff pattern:$0x73625140]
    %v874 = vld.sshfl [vmem:[#allocation1 + $0x20] sm:$0xff pattern:$0x73625140]
    %v875 = vsel %vm666, %v793, 0
    %v877 = vsel %vm666, %v794, 0
    %v879 = vsel %vm666, %v803, 0
    %v881 = vsel %vm666, %v804, 0
    %v883 = vsel %vm666, %v813, 0
    %v885 = vsel %vm666, %v814, 0
    %v887 = vsel %vm666, %v823, 0
    %v889 = vsel %vm666, %v824, 0
    %v891 = vsel %vm666, %v833, 0
    %v893 = vsel %vm666, %v834, 0
    %v895 = vsel %vm666, %v843, 0
    %v897 = vsel %vm666, %v844, 0
    %v899 = vsel %vm666, %v853, 0
    %v901 = vsel %vm666, %v854, 0
    %v903 = vsel %vm666, %v863, 0
    %v905 = vsel %vm666, %v864, 0
    %v907 = vsel %vm666, %v873, 0
    %v909 = vsel %vm666, %v874, 0
    %v912 = vsel %vm703, %v327, 0
    %914 = vmatpush.msra.mxu0 0.0
    %915 = vmatpush.msra.mxu0 0.0
    %916 = vmatpush.msra.mxu0 0.0
    %917 = vmatpush.msra.mxu0 0.0
    %918 = vmatpush.msra.mxu0 0.0
    %919 = vmatpush.msra.mxu0 0.0
    %920 = vmatpush.msra.mxu0 0.0
    %921 = vmatpush.msra.mxu0 0.0
    %922 = vmatpush.msra.mxu0 0.0
    %923 = vmatpush.msra.mxu0 0.0
    %924 = vmatpush.msra.mxu0 0.0
    %925 = vmatpush.msra.mxu0 0.0
    %926 = vmatpush.msra.mxu0 0.0
    %927 = vmatpush.msra.mxu0 0.0
    %928 = vmatpush.msra.mxu0 0.0
    %929 = vmatpush.msra.mxu0 %v912
    %930 = vmatmul.f32.gmra.mxu0 %v875
    %v931 = vpop.f32.mrf.mxu0
    %v932 = vadd.f32 %v725, %v931
    %933 = vmatmul.f32.gmra.mxu0 %v877
    %v934 = vpop.f32.mrf.mxu0
    %v935 = vadd.f32 %v728, %v934
    %936 = vmatmul.f32.gmra.mxu0 %v879
    %v937 = vpop.f32.mrf.mxu0
    %v938 = vadd.f32 %v731, %v937
    %939 = vmatmul.f32.gmra.mxu0 %v881
    %v940 = vpop.f32.mrf.mxu0
    %v941 = vadd.f32 %v734, %v940
    %942 = vmatmul.f32.gmra.mxu0 %v883
    %v943 = vpop.f32.mrf.mxu0
    %v944 = vadd.f32 %v737, %v943
    %945 = vmatmul.f32.gmra.mxu0 %v885
    %v946 = vpop.f32.mrf.mxu0
    %v947 = vadd.f32 %v740, %v946
    %948 = vmatmul.f32.gmra.mxu0 %v887
    %v949 = vpop.f32.mrf.mxu0
    %v950 = vadd.f32 %v743, %v949
    %951 = vmatmul.f32.gmra.mxu0 %v889
    %v952 = vpop.f32.mrf.mxu0
    %v953 = vadd.f32 %v746, %v952
    %954 = vmatmul.f32.gmra.mxu0 %v891
    %v955 = vpop.f32.mrf.mxu0
    %v956 = vadd.f32 %v749, %v955
    %957 = vmatmul.f32.gmra.mxu0 %v893
    %v958 = vpop.f32.mrf.mxu0
    %v959 = vadd.f32 %v752, %v958
    %960 = vmatmul.f32.gmra.mxu0 %v895
    %v961 = vpop.f32.mrf.mxu0
    %v962 = vadd.f32 %v755, %v961
    %963 = vmatmul.f32.gmra.mxu0 %v897
    %v964 = vpop.f32.mrf.mxu0
    %v965 = vadd.f32 %v758, %v964
    %966 = vmatmul.f32.gmra.mxu0 %v899
    %v967 = vpop.f32.mrf.mxu0
    %v968 = vadd.f32 %v761, %v967
    %969 = vmatmul.f32.gmra.mxu0 %v901
    %v970 = vpop.f32.mrf.mxu0
    %v971 = vadd.f32 %v764, %v970
    %972 = vmatmul.f32.gmra.mxu0 %v903
    %v973 = vpop.f32.mrf.mxu0
    %v974 = vadd.f32 %v767, %v973
    %975 = vmatmul.f32.gmra.mxu0 %v905
    %v976 = vpop.f32.mrf.mxu0
    %v977 = vadd.f32 %v770, %v976
    %978 = vmatmul.f32.gmra.mxu0 %v907
    %v979 = vpop.f32.mrf.mxu0
    %v980 = vadd.f32 %v773, %v979
    %981 = vmatmul.f32.gmra.mxu0 %v909
    %v982 = vpop.f32.mrf.mxu0
    %v983 = vadd.f32 %v776, %v982
    %984 = vdwg.mxu0
    %985 = vst.sshfl [vmem:[#allocation1] sm:$0xff pattern:$0x73625140] %v231
    %986 = vst.sshfl [vmem:[#allocation1 + $0x20] sm:$0xff pattern:$0x73625140] %v232
    %s987 = scalar_lea.vmem [#allocation1], 1
    %v988 = vld [vmem:[%s987] ss:$4 sm:$0xff]
    %s989 = scalar_lea.vmem [#allocation1], 2
    %v990 = vld [vmem:[%s989] ss:$4 sm:$0xff]
    %s991 = scalar_lea.vmem [#allocation1], 3
    %v992 = vld [vmem:[%s991] ss:$4 sm:$0xff]
    %s993 = scalar_lea.vmem [#allocation1], 32
    %v994 = vld [vmem:[%s993] ss:$4 sm:$0xff]
    %s995 = scalar_lea.vmem [#allocation1], 33
    %v996 = vld [vmem:[%s995] ss:$4 sm:$0xff]
    %s997 = scalar_lea.vmem [#allocation1], 34
    %v998 = vld [vmem:[%s997] ss:$4 sm:$0xff]
    %s999 = scalar_lea.vmem [#allocation1], 35
    %v1000 = vld [vmem:[%s999] ss:$4 sm:$0xff]
    %1001 = vst.sshfl [vmem:[#allocation1] sm:$0xff pattern:$0x73625140] %v233
    %v1002 = vld [vmem:[#allocation1] ss:$4 sm:$0xff]
    %v1003 = vld [vmem:[%s987] ss:$4 sm:$0xff]
    %1004 = vst.sshfl [vmem:[#allocation1 + $0x20] sm:$0xff pattern:$0x73625140] %v234
    %v1005 = vld [vmem:[%s995] ss:$4 sm:$0xff]
    %v1006 = vld [vmem:[%s997] ss:$4 sm:$0xff]
    %v1007 = vld [vmem:[%s999] ss:$4 sm:$0xff]
    %1008 = vst.sshfl [vmem:[#allocation1] sm:$0xff pattern:$0x73625140] %v235
    %1009 = vst.sshfl [vmem:[#allocation1 + $0x20] sm:$0xff pattern:$0x73625140] %v236
    %v1010 = vld [vmem:[#allocation1] ss:$4 sm:$0xff]
    %v1011 = vld [vmem:[%s987] ss:$4 sm:$0xff]
    %v1012 = vld [vmem:[%s989] ss:$4 sm:$0xff]
    %v1013 = vld [vmem:[%s991] ss:$4 sm:$0xff]
    %v1014 = vld [vmem:[%s993] ss:$4 sm:$0xff]
    %v1015 = vld [vmem:[%s995] ss:$4 sm:$0xff]
    %1016 = vst.sshfl [vmem:[#allocation1] sm:$0xff pattern:$0x73625140] %v237
    %1017 = vst.sshfl [vmem:[#allocation1 + $0x20] sm:$0xff pattern:$0x73625140] %v238
    %v1018 = vld [vmem:[%s987] ss:$4 sm:$0xff]
    %v1019 = vld [vmem:[%s989] ss:$4 sm:$0xff]
    %v1020 = vld [vmem:[%s991] ss:$4 sm:$0xff]
    %v1021 = vld [vmem:[%s993] ss:$4 sm:$0xff]
    %v1022 = vld [vmem:[%s995] ss:$4 sm:$0xff]
    %v1023 = vld [vmem:[%s997] ss:$4 sm:$0xff]
    %v1024 = vld [vmem:[%s999] ss:$4 sm:$0xff]
    %1025 = vst.sshfl [vmem:[#allocation1] sm:$0xff pattern:$0x73625140] %v239
    %v1026 = vld [vmem:[#allocation1] ss:$4 sm:$0xff]
    %v1027 = vld [vmem:[%s987] ss:$4 sm:$0xff]
    %1028 = vst.sshfl [vmem:[#allocation1 + $0x20] sm:$0xff pattern:$0x73625140] %v240
    %v1029 = vld [vmem:[%s995] ss:$4 sm:$0xff]
    %v1030 = vld [vmem:[%s997] ss:$4 sm:$0xff]
    %v1031 = vld [vmem:[%s999] ss:$4 sm:$0xff]
    %1032 = vst.sshfl [vmem:[#allocation1] sm:$0xff pattern:$0x73625140] %v241
    %1033 = vst.sshfl [vmem:[#allocation1 + $0x20] sm:$0xff pattern:$0x73625140] %v242
    %v1034 = vld [vmem:[#allocation1] ss:$4 sm:$0xff]
    %v1035 = vld [vmem:[%s987] ss:$4 sm:$0xff]
    %v1036 = vld [vmem:[%s989] ss:$4 sm:$0xff]
    %v1037 = vld [vmem:[%s991] ss:$4 sm:$0xff]
    %v1038 = vld [vmem:[%s993] ss:$4 sm:$0xff]
    %v1039 = vld [vmem:[%s995] ss:$4 sm:$0xff]
    %1040 = vst.sshfl [vmem:[#allocation1] sm:$0xff pattern:$0x73625140] %v243
    %1041 = vst.sshfl [vmem:[#allocation1 + $0x20] sm:$0xff pattern:$0x73625140] %v244
    %v1042 = vld [vmem:[%s987] ss:$4 sm:$0xff]
    %v1043 = vld [vmem:[%s989] ss:$4 sm:$0xff]
    %v1044 = vld [vmem:[%s991] ss:$4 sm:$0xff]
    %v1045 = vld [vmem:[%s993] ss:$4 sm:$0xff]
    %v1046 = vld [vmem:[%s995] ss:$4 sm:$0xff]
    %v1047 = vld [vmem:[%s997] ss:$4 sm:$0xff]
    %v1048 = vld [vmem:[%s999] ss:$4 sm:$0xff]
    %1049 = vst.sshfl [vmem:[#allocation1] sm:$0xff pattern:$0x73625140] %v245
    %v1050 = vld [vmem:[#allocation1] ss:$4 sm:$0xff]
    %v1051 = vld [vmem:[%s987] ss:$4 sm:$0xff]
    %1052 = vst.sshfl [vmem:[#allocation1 + $0x20] sm:$0xff pattern:$0x73625140] %v246
    %v1053 = vld [vmem:[%s995] ss:$4 sm:$0xff]
    %v1054 = vld [vmem:[%s997] ss:$4 sm:$0xff]
    %v1055 = vld [vmem:[%s999] ss:$4 sm:$0xff]
    %1056 = vst.sshfl [vmem:[#allocation1] sm:$0xff pattern:$0x73625140] %v247
    %1057 = vst.sshfl [vmem:[#allocation1 + $0x20] sm:$0xff pattern:$0x73625140] %v248
    %v1058 = vld [vmem:[#allocation1] ss:$4 sm:$0xff]
    %v1059 = vld [vmem:[%s987] ss:$4 sm:$0xff]
    %v1060 = vld [vmem:[%s989] ss:$4 sm:$0xff]
    %v1061 = vld [vmem:[%s991] ss:$4 sm:$0xff]
    %v1062 = vld [vmem:[%s993] ss:$4 sm:$0xff]
    %v1063 = vld [vmem:[%s995] ss:$4 sm:$0xff]
    %1064 = vst.sshfl [vmem:[#allocation1] sm:$0xff pattern:$0x73625140] %v249
    %1065 = vst.sshfl [vmem:[#allocation1 + $0x20] sm:$0xff pattern:$0x73625140] %v250
    %v1066 = vld [vmem:[%s987] ss:$4 sm:$0xff]
    %v1067 = vld [vmem:[%s989] ss:$4 sm:$0xff]
    %v1068 = vld [vmem:[%s991] ss:$4 sm:$0xff]
    %v1069 = vld [vmem:[%s993] ss:$4 sm:$0xff]
    %v1070 = vld [vmem:[%s995] ss:$4 sm:$0xff]
    %v1071 = vld [vmem:[%s997] ss:$4 sm:$0xff]
    %v1072 = vld [vmem:[%s999] ss:$4 sm:$0xff]
    %1073 = vst.sshfl [vmem:[#allocation1] sm:$0xff pattern:$0x73625140] %v251
    %v1074 = vld [vmem:[#allocation1] ss:$4 sm:$0xff]
    %v1075 = vld [vmem:[%s987] ss:$4 sm:$0xff]
    %1076 = vst.sshfl [vmem:[#allocation1 + $0x20] sm:$0xff pattern:$0x73625140] %v252
    %v1077 = vld [vmem:[%s995] ss:$4 sm:$0xff]
    %v1078 = vld [vmem:[%s997] ss:$4 sm:$0xff]
    %v1079 = vld [vmem:[%s999] ss:$4 sm:$0xff]
    %1080 = vst.sshfl [vmem:[#allocation1] sm:$0xff pattern:$0x73625140] %v253
    %1081 = vst.sshfl [vmem:[#allocation1 + $0x20] sm:$0xff pattern:$0x73625140] %v254
    %v1082 = vld [vmem:[#allocation1] ss:$4 sm:$0xff]
    %v1083 = vld [vmem:[%s987] ss:$4 sm:$0xff]
    %v1084 = vld [vmem:[%s989] ss:$4 sm:$0xff]
    %v1085 = vld [vmem:[%s991] ss:$4 sm:$0xff]
    %v1086 = vld [vmem:[%s993] ss:$4 sm:$0xff]
    %v1087 = vld [vmem:[%s995] ss:$4 sm:$0xff]
    %s1088 = scalar_lea.vmem [#allocation2], 8
    %v1089 = vld [vmem:[%s1088] sm:$0xf]
    %1090 = vst [vmem:[#allocation1] ss:$4 sm:$0xff] %v988
    %s1091 = scalar_lea.vmem [#allocation1], 1
    %1092 = vst [vmem:[%s1091] ss:$4 sm:$0xff] %v990
    %s1093 = scalar_lea.vmem [#allocation1], 2
    %1094 = vst [vmem:[%s1093] ss:$4 sm:$0xff] %v992
    %s1095 = scalar_lea.vmem [#allocation1], 3
    %1096 = vst [vmem:[%s1095] ss:$4 sm:$0xff] %v994
    %s1097 = scalar_lea.vmem [#allocation1], 32
    %1098 = vst [vmem:[%s1097] ss:$4 sm:$0xff] %v996
    %s1099 = scalar_lea.vmem [#allocation1], 33
    %1100 = vst [vmem:[%s1099] ss:$4 sm:$0xff] %v998
    %s1101 = scalar_lea.vmem [#allocation1], 34
    %1102 = vst [vmem:[%s1101] ss:$4 sm:$0xff] %v1000
    %s1103 = scalar_lea.vmem [#allocation1], 35
    %1104 = vst [vmem:[%s1103] ss:$4 sm:$0xff] %v1002
    %v1105 = vld.sshfl [vmem:[#allocation1] sm:$0xff pattern:$0x73625140]
    %v1106 = vld.sshfl [vmem:[#allocation1 + $0x20] sm:$0xff pattern:$0x73625140]
    %1107 = vst [vmem:[#allocation1] ss:$4 sm:$0xff] %v1003
    %1108 = vst [vmem:[%s1091] ss:$4 sm:$0xff] %v1005
    %1109 = vst [vmem:[%s1093] ss:$4 sm:$0xff] %v1006
    %1110 = vst [vmem:[%s1095] ss:$4 sm:$0xff] %v1007
    %1111 = vst [vmem:[%s1097] ss:$4 sm:$0xff] %v1010
    %1112 = vst [vmem:[%s1099] ss:$4 sm:$0xff] %v1011
    %1113 = vst [vmem:[%s1101] ss:$4 sm:$0xff] %v1012
    %1114 = vst [vmem:[%s1103] ss:$4 sm:$0xff] %v1013
    %v1115 = vld.sshfl [vmem:[#allocation1] sm:$0xff pattern:$0x73625140]
    %v1116 = vld.sshfl [vmem:[#allocation1 + $0x20] sm:$0xff pattern:$0x73625140]
    %1117 = vst [vmem:[#allocation1] ss:$4 sm:$0xff] %v1014
    %1118 = vst [vmem:[%s1091] ss:$4 sm:$0xff] %v1015
    %1119 = vst [vmem:[%s1093] ss:$4 sm:$0xff] %v1018
    %1120 = vst [vmem:[%s1095] ss:$4 sm:$0xff] %v1019
    %1121 = vst [vmem:[%s1097] ss:$4 sm:$0xff] %v1020
    %1122 = vst [vmem:[%s1099] ss:$4 sm:$0xff] %v1021
    %1123 = vst [vmem:[%s1101] ss:$4 sm:$0xff] %v1022
    %1124 = vst [vmem:[%s1103] ss:$4 sm:$0xff] %v1023
    %v1125 = vld.sshfl [vmem:[#allocation1] sm:$0xff pattern:$0x73625140]
    %v1126 = vld.sshfl [vmem:[#allocation1 + $0x20] sm:$0xff pattern:$0x73625140]
    %1127 = vst [vmem:[#allocation1] ss:$4 sm:$0xff] %v1024
    %1128 = vst [vmem:[%s1091] ss:$4 sm:$0xff] %v1026
    %1129 = vst [vmem:[%s1093] ss:$4 sm:$0xff] %v1027
    %1130 = vst [vmem:[%s1095] ss:$4 sm:$0xff] %v1029
    %1131 = vst [vmem:[%s1097] ss:$4 sm:$0xff] %v1030
    %1132 = vst [vmem:[%s1099] ss:$4 sm:$0xff] %v1031
    %1133 = vst [vmem:[%s1101] ss:$4 sm:$0xff] %v1034
    %1134 = vst [vmem:[%s1103] ss:$4 sm:$0xff] %v1035
    %v1135 = vld.sshfl [vmem:[#allocation1] sm:$0xff pattern:$0x73625140]
    %v1136 = vld.sshfl [vmem:[#allocation1 + $0x20] sm:$0xff pattern:$0x73625140]
    %1137 = vst [vmem:[#allocation1] ss:$4 sm:$0xff] %v1036
    %1138 = vst [vmem:[%s1091] ss:$4 sm:$0xff] %v1037
    %1139 = vst [vmem:[%s1093] ss:$4 sm:$0xff] %v1038
    %1140 = vst [vmem:[%s1095] ss:$4 sm:$0xff] %v1039
    %1141 = vst [vmem:[%s1097] ss:$4 sm:$0xff] %v1042
    %1142 = vst [vmem:[%s1099] ss:$4 sm:$0xff] %v1043
    %1143 = vst [vmem:[%s1101] ss:$4 sm:$0xff] %v1044
    %1144 = vst [vmem:[%s1103] ss:$4 sm:$0xff] %v1045
    %v1145 = vld.sshfl [vmem:[#allocation1] sm:$0xff pattern:$0x73625140]
    %v1146 = vld.sshfl [vmem:[#allocation1 + $0x20] sm:$0xff pattern:$0x73625140]
    %1147 = vst [vmem:[#allocation1] ss:$4 sm:$0xff] %v1046
    %1148 = vst [vmem:[%s1091] ss:$4 sm:$0xff] %v1047
    %1149 = vst [vmem:[%s1093] ss:$4 sm:$0xff] %v1048
    %1150 = vst [vmem:[%s1095] ss:$4 sm:$0xff] %v1050
    %1151 = vst [vmem:[%s1097] ss:$4 sm:$0xff] %v1051
    %1152 = vst [vmem:[%s1099] ss:$4 sm:$0xff] %v1053
    %1153 = vst [vmem:[%s1101] ss:$4 sm:$0xff] %v1054
    %1154 = vst [vmem:[%s1103] ss:$4 sm:$0xff] %v1055
    %v1155 = vld.sshfl [vmem:[#allocation1] sm:$0xff pattern:$0x73625140]
    %v1156 = vld.sshfl [vmem:[#allocation1 + $0x20] sm:$0xff pattern:$0x73625140]
    %1157 = vst [vmem:[#allocation1] ss:$4 sm:$0xff] %v1058
    %1158 = vst [vmem:[%s1091] ss:$4 sm:$0xff] %v1059
    %1159 = vst [vmem:[%s1093] ss:$4 sm:$0xff] %v1060
    %1160 = vst [vmem:[%s1095] ss:$4 sm:$0xff] %v1061
    %1161 = vst [vmem:[%s1097] ss:$4 sm:$0xff] %v1062
    %1162 = vst [vmem:[%s1099] ss:$4 sm:$0xff] %v1063
    %1163 = vst [vmem:[%s1101] ss:$4 sm:$0xff] %v1066
    %1164 = vst [vmem:[%s1103] ss:$4 sm:$0xff] %v1067
    %v1165 = vld.sshfl [vmem:[#allocation1] sm:$0xff pattern:$0x73625140]
    %v1166 = vld.sshfl [vmem:[#allocation1 + $0x20] sm:$0xff pattern:$0x73625140]
    %1167 = vst [vmem:[#allocation1] ss:$4 sm:$0xff] %v1068
    %1168 = vst [vmem:[%s1091] ss:$4 sm:$0xff] %v1069
    %1169 = vst [vmem:[%s1093] ss:$4 sm:$0xff] %v1070
    %1170 = vst [vmem:[%s1095] ss:$4 sm:$0xff] %v1071
    %1171 = vst [vmem:[%s1097] ss:$4 sm:$0xff] %v1072
    %1172 = vst [vmem:[%s1099] ss:$4 sm:$0xff] %v1074
    %1173 = vst [vmem:[%s1101] ss:$4 sm:$0xff] %v1075
    %1174 = vst [vmem:[%s1103] ss:$4 sm:$0xff] %v1077
    %v1175 = vld.sshfl [vmem:[#allocation1] sm:$0xff pattern:$0x73625140]
    %v1176 = vld.sshfl [vmem:[#allocation1 + $0x20] sm:$0xff pattern:$0x73625140]
    %1177 = vst [vmem:[#allocation1] ss:$4 sm:$0xff] %v1078
    %1178 = vst [vmem:[%s1091] ss:$4 sm:$0xff] %v1079
    %1179 = vst [vmem:[%s1093] ss:$4 sm:$0xff] %v1082
    %1180 = vst [vmem:[%s1095] ss:$4 sm:$0xff] %v1083
    %1181 = vst [vmem:[%s1097] ss:$4 sm:$0xff] %v1084
    %1182 = vst [vmem:[%s1099] ss:$4 sm:$0xff] %v1085
    %1183 = vst [vmem:[%s1101] ss:$4 sm:$0xff] %v1086
    %1184 = vst [vmem:[%s1103] ss:$4 sm:$0xff] %v1087
    %v1185 = vld.sshfl [vmem:[#allocation1] sm:$0xff pattern:$0x73625140]
    %v1186 = vld.sshfl [vmem:[#allocation1 + $0x20] sm:$0xff pattern:$0x73625140]
    %v1187 = vsel %vm666, %v1105, 0
    %v1189 = vsel %vm666, %v1106, 0
    %v1191 = vsel %vm666, %v1115, 0
    %v1193 = vsel %vm666, %v1116, 0
    %v1195 = vsel %vm666, %v1125, 0
    %v1197 = vsel %vm666, %v1126, 0
    %v1199 = vsel %vm666, %v1135, 0
    %v1201 = vsel %vm666, %v1136, 0
    %v1203 = vsel %vm666, %v1145, 0
    %v1205 = vsel %vm666, %v1146, 0
    %v1207 = vsel %vm666, %v1155, 0
    %v1209 = vsel %vm666, %v1156, 0
    %v1211 = vsel %vm666, %v1165, 0
    %v1213 = vsel %vm666, %v1166, 0
    %v1215 = vsel %vm666, %v1175, 0
    %v1217 = vsel %vm666, %v1176, 0
    %v1219 = vsel %vm666, %v1185, 0
    %v1221 = vsel %vm666, %v1186, 0
    %v1224 = vsel %vm703, %v1089, 0
    %1226 = vmatpush.msra.mxu0 0.0
    %1227 = vmatpush.msra.mxu0 0.0
    %1228 = vmatpush.msra.mxu0 0.0
    %1229 = vmatpush.msra.mxu0 0.0
    %1230 = vmatpush.msra.mxu0 0.0
    %1231 = vmatpush.msra.mxu0 0.0
    %1232 = vmatpush.msra.mxu0 0.0
    %1233 = vmatpush.msra.mxu0 0.0
    %1234 = vmatpush.msra.mxu0 0.0
    %1235 = vmatpush.msra.mxu0 0.0
    %1236 = vmatpush.msra.mxu0 0.0
    %1237 = vmatpush.msra.mxu0 0.0
    %1238 = vmatpush.msra.mxu0 0.0
    %1239 = vmatpush.msra.mxu0 0.0
    %1240 = vmatpush.msra.mxu0 0.0
    %1241 = vmatpush.msra.mxu0 %v1224
    %1242 = vmatmul.f32.gmra.mxu0 %v1187
    %v1243 = vpop.f32.mrf.mxu0
    %v1244 = vadd.f32 0.0, %v1243
    %1245 = vmatmul.f32.gmra.mxu0 %v1189
    %v1246 = vpop.f32.mrf.mxu0
    %v1247 = vadd.f32 0.0, %v1246
    %1248 = vmatmul.f32.gmra.mxu0 %v1191
    %v1249 = vpop.f32.mrf.mxu0
    %v1250 = vadd.f32 0.0, %v1249
    %1251 = vmatmul.f32.gmra.mxu0 %v1193
    %v1252 = vpop.f32.mrf.mxu0
    %v1253 = vadd.f32 0.0, %v1252
    %1254 = vmatmul.f32.gmra.mxu0 %v1195
    %v1255 = vpop.f32.mrf.mxu0
    %v1256 = vadd.f32 0.0, %v1255
    %1257 = vmatmul.f32.gmra.mxu0 %v1197
    %v1258 = vpop.f32.mrf.mxu0
    %v1259 = vadd.f32 0.0, %v1258
    %1260 = vmatmul.f32.gmra.mxu0 %v1199
    %v1261 = vpop.f32.mrf.mxu0
    %v1262 = vadd.f32 0.0, %v1261
    %1263 = vmatmul.f32.gmra.mxu0 %v1201
    %v1264 = vpop.f32.mrf.mxu0
    %v1265 = vadd.f32 0.0, %v1264
    %1266 = vmatmul.f32.gmra.mxu0 %v1203
    %v1267 = vpop.f32.mrf.mxu0
    %v1268 = vadd.f32 0.0, %v1267
    %1269 = vmatmul.f32.gmra.mxu0 %v1205
    %v1270 = vpop.f32.mrf.mxu0
    %v1271 = vadd.f32 0.0, %v1270
    %1272 = vmatmul.f32.gmra.mxu0 %v1207
    %v1273 = vpop.f32.mrf.mxu0
    %v1274 = vadd.f32 0.0, %v1273
    %1275 = vmatmul.f32.gmra.mxu0 %v1209
    %v1276 = vpop.f32.mrf.mxu0
    %v1277 = vadd.f32 0.0, %v1276
    %1278 = vmatmul.f32.gmra.mxu0 %v1211
    %v1279 = vpop.f32.mrf.mxu0
    %v1280 = vadd.f32 0.0, %v1279
    %1281 = vmatmul.f32.gmra.mxu0 %v1213
    %v1282 = vpop.f32.mrf.mxu0
    %v1283 = vadd.f32 0.0, %v1282
    %1284 = vmatmul.f32.gmra.mxu0 %v1215
    %v1285 = vpop.f32.mrf.mxu0
    %v1286 = vadd.f32 0.0, %v1285
    %1287 = vmatmul.f32.gmra.mxu0 %v1217
    %v1288 = vpop.f32.mrf.mxu0
    %v1289 = vadd.f32 0.0, %v1288
    %1290 = vmatmul.f32.gmra.mxu0 %v1219
    %v1291 = vpop.f32.mrf.mxu0
    %v1292 = vadd.f32 0.0, %v1291
    %1293 = vmatmul.f32.gmra.mxu0 %v1221
    %v1294 = vpop.f32.mrf.mxu0
    %v1295 = vadd.f32 0.0, %v1294
    %1296 = vdwg.mxu0
    %v1297 = vadd.f32 %v932, %v1244
    %v1298 = vadd.f32 %v935, %v1247
    %v1299 = vadd.f32 %v938, %v1250
    %v1300 = vadd.f32 %v941, %v1253
    %v1301 = vadd.f32 %v944, %v1256
    %v1302 = vadd.f32 %v947, %v1259
    %v1303 = vadd.f32 %v950, %v1262
    %v1304 = vadd.f32 %v953, %v1265
    %v1305 = vadd.f32 %v956, %v1268
    %v1306 = vadd.f32 %v959, %v1271
    %v1307 = vadd.f32 %v962, %v1274
    %v1308 = vadd.f32 %v965, %v1277
    %v1309 = vadd.f32 %v968, %v1280
    %v1310 = vadd.f32 %v971, %v1283
    %v1311 = vadd.f32 %v974, %v1286
    %v1312 = vadd.f32 %v977, %v1289
    %v1313 = vadd.f32 %v980, %v1292
    %v1314 = vadd.f32 %v983, %v1295
    %v1315 = vld [vmem:[#allocation4] sm:$0x1]
    %v1317 = vperm.slane %v1315, 0
    %v1319 = vadd.f32 %v1297, %v1317
    %v1320 = vadd.f32 %v1298, %v1317
    %v1321 = vadd.f32 %v1299, %v1317
    %v1322 = vadd.f32 %v1300, %v1317
    %v1323 = vadd.f32 %v1301, %v1317
    %v1324 = vadd.f32 %v1302, %v1317
    %v1325 = vadd.f32 %v1303, %v1317
    %v1326 = vadd.f32 %v1304, %v1317
    %v1327 = vadd.f32 %v1305, %v1317
    %v1328 = vadd.f32 %v1306, %v1317
    %v1329 = vadd.f32 %v1307, %v1317
    %v1330 = vadd.f32 %v1308, %v1317
    %v1331 = vadd.f32 %v1309, %v1317
    %v1332 = vadd.f32 %v1310, %v1317
    %v1333 = vadd.f32 %v1311, %v1317
    %v1334 = vadd.f32 %v1312, %v1317
    %v1335 = vadd.f32 %v1313, %v1317
    %v1336 = vadd.f32 %v1314, %v1317
    %v1337 = vmax.f32 %v1319, 0.0
    %v1338 = vmax.f32 %v1320, 0.0
    %v1339 = vmax.f32 %v1321, 0.0
    %v1340 = vmax.f32 %v1322, 0.0
    %v1341 = vmax.f32 %v1323, 0.0
    %v1342 = vmax.f32 %v1324, 0.0
    %v1343 = vmax.f32 %v1325, 0.0
    %v1344 = vmax.f32 %v1326, 0.0
    %v1345 = vmax.f32 %v1327, 0.0
    %v1346 = vmax.f32 %v1328, 0.0
    %v1347 = vmax.f32 %v1329, 0.0
    %v1348 = vmax.f32 %v1330, 0.0
    %v1349 = vmax.f32 %v1331, 0.0
    %v1350 = vmax.f32 %v1332, 0.0
    %v1351 = vmax.f32 %v1333, 0.0
    %v1352 = vmax.f32 %v1334, 0.0
    %v1353 = vmax.f32 %v1335, 0.0
    %v1354 = vmax.f32 %v1336, 0.0
    %v1373 = vrot.slane %v1337, 2
    %v1374 = vrot.slane %v1337, 4
    %v1375 = vrot.slane %v1337, 6
    %v1376 = vrot.slane %v1338, 2
    %v1377 = vrot.slane %v1338, 4
    %v1378 = vrot.slane %v1338, 6
    %v1379 = vrot.slane %v1339, 2
    %v1380 = vrot.slane %v1339, 4
    %v1381 = vrot.slane %v1339, 6
    %v1382 = vrot.slane %v1340, 2
    %v1383 = vrot.slane %v1340, 4
    %v1384 = vrot.slane %v1340, 6
    %v1385 = vrot.slane %v1341, 2
    %v1386 = vrot.slane %v1341, 4
    %v1387 = vrot.slane %v1341, 6
    %v1388 = vrot.slane %v1342, 2
    %v1389 = vrot.slane %v1342, 4
    %v1390 = vrot.slane %v1342, 6
    %v1391 = vrot.slane %v1343, 2
    %v1392 = vrot.slane %v1343, 4
    %v1393 = vrot.slane %v1343, 6
    %v1394 = vrot.slane %v1344, 2
    %v1395 = vrot.slane %v1344, 4
    %v1396 = vrot.slane %v1344, 6
    %v1397 = vrot.slane %v1345, 2
    %v1398 = vrot.slane %v1345, 4
    %v1399 = vrot.slane %v1345, 6
    %v1400 = vrot.slane %v1346, 2
    %v1401 = vrot.slane %v1346, 4
    %v1402 = vrot.slane %v1346, 6
    %v1403 = vrot.slane %v1347, 2
    %v1404 = vrot.slane %v1347, 4
    %v1405 = vrot.slane %v1347, 6
    %v1406 = vrot.slane %v1348, 2
    %v1407 = vrot.slane %v1348, 4
    %v1408 = vrot.slane %v1348, 6
    %v1409 = vrot.slane %v1349, 2
    %v1410 = vrot.slane %v1349, 4
    %v1411 = vrot.slane %v1349, 6
    %v1412 = vrot.slane %v1350, 2
    %v1413 = vrot.slane %v1350, 4
    %v1414 = vrot.slane %v1350, 6
    %v1415 = vrot.slane %v1351, 2
    %v1416 = vrot.slane %v1351, 4
    %v1417 = vrot.slane %v1351, 6
    %v1418 = vrot.slane %v1352, 2
    %v1419 = vrot.slane %v1352, 4
    %v1420 = vrot.slane %v1352, 6
    %v1421 = vrot.slane %v1353, 2
    %v1422 = vrot.slane %v1353, 4
    %v1423 = vrot.slane %v1353, 6
    %v1424 = vrot.slane %v1354, 2
    %v1425 = vrot.slane %v1354, 4
    %v1426 = vrot.slane %v1354, 6
    %vm1481 = vcmask 402432
    %v1482 = vsel %vm1481, %v1337, -inf
    %v1483 = vrot.slane %v1482, 4
    %v1484 = vmax.f32 %v1482, %v1483
    %v1485 = vrot.slane %v1484, 2
    %v1486 = vmax.f32 %v1484, %v1485
    %v1487 = vrot.slane %v1486, 1
    %v1488 = vmax.f32 %v1486, %v1487
    %v1489 = vsel %vm1481, %v1373, -inf
    %v1490 = vrot.slane %v1489, 4
    %v1491 = vmax.f32 %v1489, %v1490
    %v1492 = vrot.slane %v1491, 2
    %v1493 = vmax.f32 %v1491, %v1492
    %v1494 = vrot.slane %v1493, 1
    %v1495 = vmax.f32 %v1493, %v1494
    %v1496 = vsel %vm1481, %v1374, -inf
    %v1497 = vrot.slane %v1496, 4
    %v1498 = vmax.f32 %v1496, %v1497
    %v1499 = vrot.slane %v1498, 2
    %v1500 = vmax.f32 %v1498, %v1499
    %v1501 = vrot.slane %v1500, 1
    %v1502 = vmax.f32 %v1500, %v1501
    %v1503 = vsel %vm1481, %v1375, -inf
    %v1504 = vrot.slane %v1503, 4
    %v1505 = vmax.f32 %v1503, %v1504
    %v1506 = vrot.slane %v1505, 2
    %v1507 = vmax.f32 %v1505, %v1506
    %v1508 = vrot.slane %v1507, 1
    %v1509 = vmax.f32 %v1507, %v1508
    %v1510 = vsel %vm1481, %v1338, -inf
    %v1511 = vrot.slane %v1510, 4
    %v1512 = vmax.f32 %v1510, %v1511
    %v1513 = vrot.slane %v1512, 2
    %v1514 = vmax.f32 %v1512, %v1513
    %v1515 = vrot.slane %v1514, 1
    %v1516 = vmax.f32 %v1514, %v1515
    %v1517 = vsel %vm1481, %v1376, -inf
    %v1518 = vrot.slane %v1517, 4
    %v1519 = vmax.f32 %v1517, %v1518
    %v1520 = vrot.slane %v1519, 2
    %v1521 = vmax.f32 %v1519, %v1520
    %v1522 = vrot.slane %v1521, 1
    %v1523 = vmax.f32 %v1521, %v1522
    %v1524 = vsel %vm1481, %v1377, -inf
    %v1525 = vrot.slane %v1524, 4
    %v1526 = vmax.f32 %v1524, %v1525
    %v1527 = vrot.slane %v1526, 2
    %v1528 = vmax.f32 %v1526, %v1527
    %v1529 = vrot.slane %v1528, 1
    %v1530 = vmax.f32 %v1528, %v1529
    %v1531 = vsel %vm1481, %v1378, -inf
    %v1532 = vrot.slane %v1531, 4
    %v1533 = vmax.f32 %v1531, %v1532
    %v1534 = vrot.slane %v1533, 2
    %v1535 = vmax.f32 %v1533, %v1534
    %v1536 = vrot.slane %v1535, 1
    %v1537 = vmax.f32 %v1535, %v1536
    %v1538 = vsel %vm1481, %v1339, -inf
    %v1539 = vrot.slane %v1538, 4
    %v1540 = vmax.f32 %v1538, %v1539
    %v1541 = vrot.slane %v1540, 2
    %v1542 = vmax.f32 %v1540, %v1541
    %v1543 = vrot.slane %v1542, 1
    %v1544 = vmax.f32 %v1542, %v1543
    %v1545 = vsel %vm1481, %v1379, -inf
    %v1546 = vrot.slane %v1545, 4
    %v1547 = vmax.f32 %v1545, %v1546
    %v1548 = vrot.slane %v1547, 2
    %v1549 = vmax.f32 %v1547, %v1548
    %v1550 = vrot.slane %v1549, 1
    %v1551 = vmax.f32 %v1549, %v1550
    %v1552 = vsel %vm1481, %v1380, -inf
    %v1553 = vrot.slane %v1552, 4
    %v1554 = vmax.f32 %v1552, %v1553
    %v1555 = vrot.slane %v1554, 2
    %v1556 = vmax.f32 %v1554, %v1555
    %v1557 = vrot.slane %v1556, 1
    %v1558 = vmax.f32 %v1556, %v1557
    %v1559 = vsel %vm1481, %v1381, -inf
    %v1560 = vrot.slane %v1559, 4
    %v1561 = vmax.f32 %v1559, %v1560
    %v1562 = vrot.slane %v1561, 2
    %v1563 = vmax.f32 %v1561, %v1562
    %v1564 = vrot.slane %v1563, 1
    %v1565 = vmax.f32 %v1563, %v1564
    %v1566 = vsel %vm1481, %v1340, -inf
    %v1567 = vrot.slane %v1566, 4
    %v1568 = vmax.f32 %v1566, %v1567
    %v1569 = vrot.slane %v1568, 2
    %v1570 = vmax.f32 %v1568, %v1569
    %v1571 = vrot.slane %v1570, 1
    %v1572 = vmax.f32 %v1570, %v1571
    %v1573 = vsel %vm1481, %v1382, -inf
    %v1574 = vrot.slane %v1573, 4
    %v1575 = vmax.f32 %v1573, %v1574
    %v1576 = vrot.slane %v1575, 2
    %v1577 = vmax.f32 %v1575, %v1576
    %v1578 = vrot.slane %v1577, 1
    %v1579 = vmax.f32 %v1577, %v1578
    %v1580 = vsel %vm1481, %v1383, -inf
    %v1581 = vrot.slane %v1580, 4
    %v1582 = vmax.f32 %v1580, %v1581
    %v1583 = vrot.slane %v1582, 2
    %v1584 = vmax.f32 %v1582, %v1583
    %v1585 = vrot.slane %v1584, 1
    %v1586 = vmax.f32 %v1584, %v1585
    %v1587 = vsel %vm1481, %v1384, -inf
    %v1588 = vrot.slane %v1587, 4
    %v1589 = vmax.f32 %v1587, %v1588
    %v1590 = vrot.slane %v1589, 2
    %v1591 = vmax.f32 %v1589, %v1590
    %v1592 = vrot.slane %v1591, 1
    %v1593 = vmax.f32 %v1591, %v1592
    %v1594 = vsel %vm1481, %v1341, -inf
    %v1595 = vrot.slane %v1594, 4
    %v1596 = vmax.f32 %v1594, %v1595
    %v1597 = vrot.slane %v1596, 2
    %v1598 = vmax.f32 %v1596, %v1597
    %v1599 = vrot.slane %v1598, 1
    %v1600 = vmax.f32 %v1598, %v1599
    %v1601 = vsel %vm1481, %v1385, -inf
    %v1602 = vrot.slane %v1601, 4
    %v1603 = vmax.f32 %v1601, %v1602
    %v1604 = vrot.slane %v1603, 2
    %v1605 = vmax.f32 %v1603, %v1604
    %v1606 = vrot.slane %v1605, 1
    %v1607 = vmax.f32 %v1605, %v1606
    %v1608 = vsel %vm1481, %v1386, -inf
    %v1609 = vrot.slane %v1608, 4
    %v1610 = vmax.f32 %v1608, %v1609
    %v1611 = vrot.slane %v1610, 2
    %v1612 = vmax.f32 %v1610, %v1611
    %v1613 = vrot.slane %v1612, 1
    %v1614 = vmax.f32 %v1612, %v1613
    %v1615 = vsel %vm1481, %v1387, -inf
    %v1616 = vrot.slane %v1615, 4
    %v1617 = vmax.f32 %v1615, %v1616
    %v1618 = vrot.slane %v1617, 2
    %v1619 = vmax.f32 %v1617, %v1618
    %v1620 = vrot.slane %v1619, 1
    %v1621 = vmax.f32 %v1619, %v1620
    %v1622 = vsel %vm1481, %v1342, -inf
    %v1623 = vrot.slane %v1622, 4
    %v1624 = vmax.f32 %v1622, %v1623
    %v1625 = vrot.slane %v1624, 2
    %v1626 = vmax.f32 %v1624, %v1625
    %v1627 = vrot.slane %v1626, 1
    %v1628 = vmax.f32 %v1626, %v1627
    %v1629 = vsel %vm1481, %v1388, -inf
    %v1630 = vrot.slane %v1629, 4
    %v1631 = vmax.f32 %v1629, %v1630
    %v1632 = vrot.slane %v1631, 2
    %v1633 = vmax.f32 %v1631, %v1632
    %v1634 = vrot.slane %v1633, 1
    %v1635 = vmax.f32 %v1633, %v1634
    %v1636 = vsel %vm1481, %v1389, -inf
    %v1637 = vrot.slane %v1636, 4
    %v1638 = vmax.f32 %v1636, %v1637
    %v1639 = vrot.slane %v1638, 2
    %v1640 = vmax.f32 %v1638, %v1639
    %v1641 = vrot.slane %v1640, 1
    %v1642 = vmax.f32 %v1640, %v1641
    %v1643 = vsel %vm1481, %v1390, -inf
    %v1644 = vrot.slane %v1643, 4
    %v1645 = vmax.f32 %v1643, %v1644
    %v1646 = vrot.slane %v1645, 2
    %v1647 = vmax.f32 %v1645, %v1646
    %v1648 = vrot.slane %v1647, 1
    %v1649 = vmax.f32 %v1647, %v1648
    %v1650 = vsel %vm1481, %v1343, -inf
    %v1651 = vrot.slane %v1650, 4
    %v1652 = vmax.f32 %v1650, %v1651
    %v1653 = vrot.slane %v1652, 2
    %v1654 = vmax.f32 %v1652, %v1653
    %v1655 = vrot.slane %v1654, 1
    %v1656 = vmax.f32 %v1654, %v1655
    %v1657 = vsel %vm1481, %v1391, -inf
    %v1658 = vrot.slane %v1657, 4
    %v1659 = vmax.f32 %v1657, %v1658
    %v1660 = vrot.slane %v1659, 2
    %v1661 = vmax.f32 %v1659, %v1660
    %v1662 = vrot.slane %v1661, 1
    %v1663 = vmax.f32 %v1661, %v1662
    %v1664 = vsel %vm1481, %v1392, -inf
    %v1665 = vrot.slane %v1664, 4
    %v1666 = vmax.f32 %v1664, %v1665
    %v1667 = vrot.slane %v1666, 2
    %v1668 = vmax.f32 %v1666, %v1667
    %v1669 = vrot.slane %v1668, 1
    %v1670 = vmax.f32 %v1668, %v1669
    %v1671 = vsel %vm1481, %v1393, -inf
    %v1672 = vrot.slane %v1671, 4
    %v1673 = vmax.f32 %v1671, %v1672
    %v1674 = vrot.slane %v1673, 2
    %v1675 = vmax.f32 %v1673, %v1674
    %v1676 = vrot.slane %v1675, 1
    %v1677 = vmax.f32 %v1675, %v1676
    %v1678 = vsel %vm1481, %v1344, -inf
    %v1679 = vrot.slane %v1678, 4
    %v1680 = vmax.f32 %v1678, %v1679
    %v1681 = vrot.slane %v1680, 2
    %v1682 = vmax.f32 %v1680, %v1681
    %v1683 = vrot.slane %v1682, 1
    %v1684 = vmax.f32 %v1682, %v1683
    %v1685 = vsel %vm1481, %v1394, -inf
    %v1686 = vrot.slane %v1685, 4
    %v1687 = vmax.f32 %v1685, %v1686
    %v1688 = vrot.slane %v1687, 2
    %v1689 = vmax.f32 %v1687, %v1688
    %v1690 = vrot.slane %v1689, 1
    %v1691 = vmax.f32 %v1689, %v1690
    %v1692 = vsel %vm1481, %v1395, -inf
    %v1693 = vrot.slane %v1692, 4
    %v1694 = vmax.f32 %v1692, %v1693
    %v1695 = vrot.slane %v1694, 2
    %v1696 = vmax.f32 %v1694, %v1695
    %v1697 = vrot.slane %v1696, 1
    %v1698 = vmax.f32 %v1696, %v1697
    %v1699 = vsel %vm1481, %v1396, -inf
    %v1700 = vrot.slane %v1699, 4
    %v1701 = vmax.f32 %v1699, %v1700
    %v1702 = vrot.slane %v1701, 2
    %v1703 = vmax.f32 %v1701, %v1702
    %v1704 = vrot.slane %v1703, 1
    %v1705 = vmax.f32 %v1703, %v1704
    %v1706 = vsel %vm1481, %v1345, -inf
    %v1707 = vrot.slane %v1706, 4
    %v1708 = vmax.f32 %v1706, %v1707
    %v1709 = vrot.slane %v1708, 2
    %v1710 = vmax.f32 %v1708, %v1709
    %v1711 = vrot.slane %v1710, 1
    %v1712 = vmax.f32 %v1710, %v1711
    %v1713 = vsel %vm1481, %v1397, -inf
    %v1714 = vrot.slane %v1713, 4
    %v1715 = vmax.f32 %v1713, %v1714
    %v1716 = vrot.slane %v1715, 2
    %v1717 = vmax.f32 %v1715, %v1716
    %v1718 = vrot.slane %v1717, 1
    %v1719 = vmax.f32 %v1717, %v1718
    %v1720 = vsel %vm1481, %v1398, -inf
    %v1721 = vrot.slane %v1720, 4
    %v1722 = vmax.f32 %v1720, %v1721
    %v1723 = vrot.slane %v1722, 2
    %v1724 = vmax.f32 %v1722, %v1723
    %v1725 = vrot.slane %v1724, 1
    %v1726 = vmax.f32 %v1724, %v1725
    %v1727 = vsel %vm1481, %v1399, -inf
    %v1728 = vrot.slane %v1727, 4
    %v1729 = vmax.f32 %v1727, %v1728
    %v1730 = vrot.slane %v1729, 2
    %v1731 = vmax.f32 %v1729, %v1730
    %v1732 = vrot.slane %v1731, 1
    %v1733 = vmax.f32 %v1731, %v1732
    %v1734 = vsel %vm1481, %v1346, -inf
    %v1735 = vrot.slane %v1734, 4
    %v1736 = vmax.f32 %v1734, %v1735
    %v1737 = vrot.slane %v1736, 2
    %v1738 = vmax.f32 %v1736, %v1737
    %v1739 = vrot.slane %v1738, 1
    %v1740 = vmax.f32 %v1738, %v1739
    %v1741 = vsel %vm1481, %v1400, -inf
    %v1742 = vrot.slane %v1741, 4
    %v1743 = vmax.f32 %v1741, %v1742
    %v1744 = vrot.slane %v1743, 2
    %v1745 = vmax.f32 %v1743, %v1744
    %v1746 = vrot.slane %v1745, 1
    %v1747 = vmax.f32 %v1745, %v1746
    %v1748 = vsel %vm1481, %v1401, -inf
    %v1749 = vrot.slane %v1748, 4
    %v1750 = vmax.f32 %v1748, %v1749
    %v1751 = vrot.slane %v1750, 2
    %v1752 = vmax.f32 %v1750, %v1751
    %v1753 = vrot.slane %v1752, 1
    %v1754 = vmax.f32 %v1752, %v1753
    %v1755 = vsel %vm1481, %v1402, -inf
    %v1756 = vrot.slane %v1755, 4
    %v1757 = vmax.f32 %v1755, %v1756
    %v1758 = vrot.slane %v1757, 2
    %v1759 = vmax.f32 %v1757, %v1758
    %v1760 = vrot.slane %v1759, 1
    %v1761 = vmax.f32 %v1759, %v1760
    %v1762 = vsel %vm1481, %v1347, -inf
    %v1763 = vrot.slane %v1762, 4
    %v1764 = vmax.f32 %v1762, %v1763
    %v1765 = vrot.slane %v1764, 2
    %v1766 = vmax.f32 %v1764, %v1765
    %v1767 = vrot.slane %v1766, 1
    %v1768 = vmax.f32 %v1766, %v1767
    %v1769 = vsel %vm1481, %v1403, -inf
    %v1770 = vrot.slane %v1769, 4
    %v1771 = vmax.f32 %v1769, %v1770
    %v1772 = vrot.slane %v1771, 2
    %v1773 = vmax.f32 %v1771, %v1772
    %v1774 = vrot.slane %v1773, 1
    %v1775 = vmax.f32 %v1773, %v1774
    %v1776 = vsel %vm1481, %v1404, -inf
    %v1777 = vrot.slane %v1776, 4
    %v1778 = vmax.f32 %v1776, %v1777
    %v1779 = vrot.slane %v1778, 2
    %v1780 = vmax.f32 %v1778, %v1779
    %v1781 = vrot.slane %v1780, 1
    %v1782 = vmax.f32 %v1780, %v1781
    %v1783 = vsel %vm1481, %v1405, -inf
    %v1784 = vrot.slane %v1783, 4
    %v1785 = vmax.f32 %v1783, %v1784
    %v1786 = vrot.slane %v1785, 2
    %v1787 = vmax.f32 %v1785, %v1786
    %v1788 = vrot.slane %v1787, 1
    %v1789 = vmax.f32 %v1787, %v1788
    %v1790 = vsel %vm1481, %v1348, -inf
    %v1791 = vrot.slane %v1790, 4
    %v1792 = vmax.f32 %v1790, %v1791
    %v1793 = vrot.slane %v1792, 2
    %v1794 = vmax.f32 %v1792, %v1793
    %v1795 = vrot.slane %v1794, 1
    %v1796 = vmax.f32 %v1794, %v1795
    %v1797 = vsel %vm1481, %v1406, -inf
    %v1798 = vrot.slane %v1797, 4
    %v1799 = vmax.f32 %v1797, %v1798
    %v1800 = vrot.slane %v1799, 2
    %v1801 = vmax.f32 %v1799, %v1800
    %v1802 = vrot.slane %v1801, 1
    %v1803 = vmax.f32 %v1801, %v1802
    %v1804 = vsel %vm1481, %v1407, -inf
    %v1805 = vrot.slane %v1804, 4
    %v1806 = vmax.f32 %v1804, %v1805
    %v1807 = vrot.slane %v1806, 2
    %v1808 = vmax.f32 %v1806, %v1807
    %v1809 = vrot.slane %v1808, 1
    %v1810 = vmax.f32 %v1808, %v1809
    %v1811 = vsel %vm1481, %v1408, -inf
    %v1812 = vrot.slane %v1811, 4
    %v1813 = vmax.f32 %v1811, %v1812
    %v1814 = vrot.slane %v1813, 2
    %v1815 = vmax.f32 %v1813, %v1814
    %v1816 = vrot.slane %v1815, 1
    %v1817 = vmax.f32 %v1815, %v1816
    %v1818 = vsel %vm1481, %v1349, -inf
    %v1819 = vrot.slane %v1818, 4
    %v1820 = vmax.f32 %v1818, %v1819
    %v1821 = vrot.slane %v1820, 2
    %v1822 = vmax.f32 %v1820, %v1821
    %v1823 = vrot.slane %v1822, 1
    %v1824 = vmax.f32 %v1822, %v1823
    %v1825 = vsel %vm1481, %v1409, -inf
    %v1826 = vrot.slane %v1825, 4
    %v1827 = vmax.f32 %v1825, %v1826
    %v1828 = vrot.slane %v1827, 2
    %v1829 = vmax.f32 %v1827, %v1828
    %v1830 = vrot.slane %v1829, 1
    %v1831 = vmax.f32 %v1829, %v1830
    %v1832 = vsel %vm1481, %v1410, -inf
    %v1833 = vrot.slane %v1832, 4
    %v1834 = vmax.f32 %v1832, %v1833
    %v1835 = vrot.slane %v1834, 2
    %v1836 = vmax.f32 %v1834, %v1835
    %v1837 = vrot.slane %v1836, 1
    %v1838 = vmax.f32 %v1836, %v1837
    %v1839 = vsel %vm1481, %v1411, -inf
    %v1840 = vrot.slane %v1839, 4
    %v1841 = vmax.f32 %v1839, %v1840
    %v1842 = vrot.slane %v1841, 2
    %v1843 = vmax.f32 %v1841, %v1842
    %v1844 = vrot.slane %v1843, 1
    %v1845 = vmax.f32 %v1843, %v1844
    %v1846 = vsel %vm1481, %v1350, -inf
    %v1847 = vrot.slane %v1846, 4
    %v1848 = vmax.f32 %v1846, %v1847
    %v1849 = vrot.slane %v1848, 2
    %v1850 = vmax.f32 %v1848, %v1849
    %v1851 = vrot.slane %v1850, 1
    %v1852 = vmax.f32 %v1850, %v1851
    %v1853 = vsel %vm1481, %v1412, -inf
    %v1854 = vrot.slane %v1853, 4
    %v1855 = vmax.f32 %v1853, %v1854
    %v1856 = vrot.slane %v1855, 2
    %v1857 = vmax.f32 %v1855, %v1856
    %v1858 = vrot.slane %v1857, 1
    %v1859 = vmax.f32 %v1857, %v1858
    %v1860 = vsel %vm1481, %v1413, -inf
    %v1861 = vrot.slane %v1860, 4
    %v1862 = vmax.f32 %v1860, %v1861
    %v1863 = vrot.slane %v1862, 2
    %v1864 = vmax.f32 %v1862, %v1863
    %v1865 = vrot.slane %v1864, 1
    %v1866 = vmax.f32 %v1864, %v1865
    %v1867 = vsel %vm1481, %v1414, -inf
    %v1868 = vrot.slane %v1867, 4
    %v1869 = vmax.f32 %v1867, %v1868
    %v1870 = vrot.slane %v1869, 2
    %v1871 = vmax.f32 %v1869, %v1870
    %v1872 = vrot.slane %v1871, 1
    %v1873 = vmax.f32 %v1871, %v1872
    %v1874 = vsel %vm1481, %v1351, -inf
    %v1875 = vrot.slane %v1874, 4
    %v1876 = vmax.f32 %v1874, %v1875
    %v1877 = vrot.slane %v1876, 2
    %v1878 = vmax.f32 %v1876, %v1877
    %v1879 = vrot.slane %v1878, 1
    %v1880 = vmax.f32 %v1878, %v1879
    %v1881 = vsel %vm1481, %v1415, -inf
    %v1882 = vrot.slane %v1881, 4
    %v1883 = vmax.f32 %v1881, %v1882
    %v1884 = vrot.slane %v1883, 2
    %v1885 = vmax.f32 %v1883, %v1884
    %v1886 = vrot.slane %v1885, 1
    %v1887 = vmax.f32 %v1885, %v1886
    %v1888 = vsel %vm1481, %v1416, -inf
    %v1889 = vrot.slane %v1888, 4
    %v1890 = vmax.f32 %v1888, %v1889
    %v1891 = vrot.slane %v1890, 2
    %v1892 = vmax.f32 %v1890, %v1891
    %v1893 = vrot.slane %v1892, 1
    %v1894 = vmax.f32 %v1892, %v1893
    %v1895 = vsel %vm1481, %v1417, -inf
    %v1896 = vrot.slane %v1895, 4
    %v1897 = vmax.f32 %v1895, %v1896
    %v1898 = vrot.slane %v1897, 2
    %v1899 = vmax.f32 %v1897, %v1898
    %v1900 = vrot.slane %v1899, 1
    %v1901 = vmax.f32 %v1899, %v1900
    %v1902 = vsel %vm1481, %v1352, -inf
    %v1903 = vrot.slane %v1902, 4
    %v1904 = vmax.f32 %v1902, %v1903
    %v1905 = vrot.slane %v1904, 2
    %v1906 = vmax.f32 %v1904, %v1905
    %v1907 = vrot.slane %v1906, 1
    %v1908 = vmax.f32 %v1906, %v1907
    %v1909 = vsel %vm1481, %v1418, -inf
    %v1910 = vrot.slane %v1909, 4
    %v1911 = vmax.f32 %v1909, %v1910
    %v1912 = vrot.slane %v1911, 2
    %v1913 = vmax.f32 %v1911, %v1912
    %v1914 = vrot.slane %v1913, 1
    %v1915 = vmax.f32 %v1913, %v1914
    %v1916 = vsel %vm1481, %v1419, -inf
    %v1917 = vrot.slane %v1916, 4
    %v1918 = vmax.f32 %v1916, %v1917
    %v1919 = vrot.slane %v1918, 2
    %v1920 = vmax.f32 %v1918, %v1919
    %v1921 = vrot.slane %v1920, 1
    %v1922 = vmax.f32 %v1920, %v1921
    %v1923 = vsel %vm1481, %v1420, -inf
    %v1924 = vrot.slane %v1923, 4
    %v1925 = vmax.f32 %v1923, %v1924
    %v1926 = vrot.slane %v1925, 2
    %v1927 = vmax.f32 %v1925, %v1926
    %v1928 = vrot.slane %v1927, 1
    %v1929 = vmax.f32 %v1927, %v1928
    %v1930 = vsel %vm1481, %v1353, -inf
    %v1931 = vrot.slane %v1930, 4
    %v1932 = vmax.f32 %v1930, %v1931
    %v1933 = vrot.slane %v1932, 2
    %v1934 = vmax.f32 %v1932, %v1933
    %v1935 = vrot.slane %v1934, 1
    %v1936 = vmax.f32 %v1934, %v1935
    %v1937 = vsel %vm1481, %v1421, -inf
    %v1938 = vrot.slane %v1937, 4
    %v1939 = vmax.f32 %v1937, %v1938
    %v1940 = vrot.slane %v1939, 2
    %v1941 = vmax.f32 %v1939, %v1940
    %v1942 = vrot.slane %v1941, 1
    %v1943 = vmax.f32 %v1941, %v1942
    %v1944 = vsel %vm1481, %v1422, -inf
    %v1945 = vrot.slane %v1944, 4
    %v1946 = vmax.f32 %v1944, %v1945
    %v1947 = vrot.slane %v1946, 2
    %v1948 = vmax.f32 %v1946, %v1947
    %v1949 = vrot.slane %v1948, 1
    %v1950 = vmax.f32 %v1948, %v1949
    %v1951 = vsel %vm1481, %v1423, -inf
    %v1952 = vrot.slane %v1951, 4
    %v1953 = vmax.f32 %v1951, %v1952
    %v1954 = vrot.slane %v1953, 2
    %v1955 = vmax.f32 %v1953, %v1954
    %v1956 = vrot.slane %v1955, 1
    %v1957 = vmax.f32 %v1955, %v1956
    %v1958 = vsel %vm1481, %v1354, -inf
    %v1959 = vrot.slane %v1958, 4
    %v1960 = vmax.f32 %v1958, %v1959
    %v1961 = vrot.slane %v1960, 2
    %v1962 = vmax.f32 %v1960, %v1961
    %v1963 = vrot.slane %v1962, 1
    %v1964 = vmax.f32 %v1962, %v1963
    %v1965 = vsel %vm1481, %v1424, -inf
    %v1966 = vrot.slane %v1965, 4
    %v1967 = vmax.f32 %v1965, %v1966
    %v1968 = vrot.slane %v1967, 2
    %v1969 = vmax.f32 %v1967, %v1968
    %v1970 = vrot.slane %v1969, 1
    %v1971 = vmax.f32 %v1969, %v1970
    %v1972 = vsel %vm1481, %v1425, -inf
    %v1973 = vrot.slane %v1972, 4
    %v1974 = vmax.f32 %v1972, %v1973
    %v1975 = vrot.slane %v1974, 2
    %v1976 = vmax.f32 %v1974, %v1975
    %v1977 = vrot.slane %v1976, 1
    %v1978 = vmax.f32 %v1976, %v1977
    %v1979 = vsel %vm1481, %v1426, -inf
    %v1980 = vrot.slane %v1979, 4
    %v1981 = vmax.f32 %v1979, %v1980
    %v1982 = vrot.slane %v1981, 2
    %v1983 = vmax.f32 %v1981, %v1982
    %v1984 = vrot.slane %v1983, 1
    %v1985 = vmax.f32 %v1983, %v1984
    %v1986 = vld [vmem:[%s4] sm:$0xff]
    %v1987 = vld [vmem:[%s4 + $0x8] sm:$0xff]
    %v1988 = vld [vmem:[%s4 + $0x10] sm:$0xff]
    %v1989 = vld [vmem:[%s4 + $0x18] sm:$0xff]
    %v1990 = vld [vmem:[%s4 + $0x20] sm:$0xff]
    %v1991 = vld [vmem:[%s4 + $0x28] sm:$0xff]
    %v1992 = vld [vmem:[%s4 + $0x30] sm:$0x3]
    %s1993 = scalar_lea.vmem %s4, 56
    %v1994 = vld [vmem:[%s1993] sm:$0xff]
    %v1995 = vld [vmem:[%s1993 + $0x8] sm:$0xff]
    %v1996 = vld [vmem:[%s1993 + $0x10] sm:$0xff]
    %v1997 = vld [vmem:[%s1993 + $0x18] sm:$0xff]
    %v1998 = vld [vmem:[%s1993 + $0x20] sm:$0xff]
    %v1999 = vld [vmem:[%s1993 + $0x28] sm:$0xff]
    %v2000 = vld [vmem:[%s1993 + $0x30] sm:$0x3]
    %vm2065 = vcmask 1041409
    %v2066 = vsel %vm2065, %v1502, %v1495
    %v2067 = vsel %vm337, %v1509, %v2066
    %vm2068 = vcmask 1043459
    %v2069 = vsel %vm2068, %v1516, %v2067
    %v2070 = vsel %vm339, %v1523, %v2069
    %vm2071 = vcmask 1045509
    %v2072 = vsel %vm2071, %v1530, %v2070
    %v2073 = vsel %vm341, %v1537, %v2072
    %vm2074 = vcmask 1047559
    %v2075 = vsel %vm2074, %v1544, %v2073
    %v2076 = vsel %vm2065, %v1565, %v1558
    %v2077 = vsel %vm337, %v1572, %v2076
    %v2078 = vsel %vm2068, %v1579, %v2077
    %v2079 = vsel %vm339, %v1586, %v2078
    %v2080 = vsel %vm2071, %v1593, %v2079
    %v2081 = vsel %vm341, %v1600, %v2080
    %v2082 = vsel %vm2074, %v1607, %v2081
    %v2083 = vsel %vm2065, %v1628, %v1621
    %v2084 = vsel %vm337, %v1635, %v2083
    %v2085 = vsel %vm2068, %v1642, %v2084
    %v2086 = vsel %vm339, %v1649, %v2085
    %v2087 = vsel %vm2071, %v1656, %v2086
    %v2088 = vsel %vm341, %v1663, %v2087
    %v2089 = vsel %vm2074, %v1670, %v2088
    %v2090 = vsel %vm2065, %v1691, %v1684
    %v2091 = vsel %vm337, %v1698, %v2090
    %v2092 = vsel %vm2068, %v1705, %v2091
    %v2093 = vsel %vm339, %v1712, %v2092
    %v2094 = vsel %vm2071, %v1719, %v2093
    %v2095 = vsel %vm341, %v1726, %v2094
    %v2096 = vsel %vm2074, %v1733, %v2095
    %v2097 = vsel %vm2065, %v1754, %v1747
    %v2098 = vsel %vm337, %v1761, %v2097
    %v2099 = vsel %vm2068, %v1768, %v2098
    %v2100 = vsel %vm339, %v1775, %v2099
    %v2101 = vsel %vm2071, %v1782, %v2100
    %v2102 = vsel %vm341, %v1789, %v2101
    %v2103 = vsel %vm2074, %v1796, %v2102
    %v2104 = vsel %vm2065, %v1817, %v1810
    %v2105 = vsel %vm337, %v1824, %v2104
    %v2106 = vsel %vm2068, %v1831, %v2105
    %v2107 = vsel %vm339, %v1838, %v2106
    %v2108 = vsel %vm2071, %v1845, %v2107
    %v2109 = vsel %vm341, %v1852, %v2108
    %v2110 = vsel %vm2074, %v1859, %v2109
    %v2111 = vsel %vm2065, %v1880, %v1873
    %v2112 = vsel %vm337, %v1887, %v2111
    %v2113 = vsel %vm2068, %v1894, %v2112
    %v2114 = vsel %vm339, %v1901, %v2113
    %v2115 = vsel %vm2071, %v1908, %v2114
    %v2116 = vsel %vm341, %v1915, %v2115
    %v2117 = vsel %vm2074, %v1922, %v2116
    %v2118 = vsel %vm2065, %v1943, %v1936
    %v2119 = vsel %vm337, %v1950, %v2118
    %v2120 = vsel %vm2068, %v1957, %v2119
    %v2121 = vsel %vm339, %v1964, %v2120
    %v2122 = vsel %vm2071, %v1971, %v2121
    %v2123 = vsel %vm341, %v1978, %v2122
    %v2124 = vsel %vm2074, %v1985, %v2123
    %vm2125 = vcmask 408576
    %v2126 = vsel %vm2125, %v2075, 0
    %v2128 = vsel %vm2125, %v2082, 0
    %v2130 = vsel %vm2125, %v2089, 0
    %v2132 = vsel %vm2125, %v2096, 0
    %v2134 = vsel %vm2125, %v2103, 0
    %v2136 = vsel %vm2125, %v2110, 0
    %v2138 = vsel %vm2125, %v2117, 0
    %v2140 = vsel %vm2125, %v2124, 0
    %vm2142 = vcmask 1041408
    %v2144 = vsel %vm2142, %v2000, 0
    %2146 = vmatpush.msra.mxu0 0.0
    %2147 = vmatpush.msra.mxu0 0.0
    %2148 = vmatpush.msra.mxu0 0.0
    %2149 = vmatpush.msra.mxu0 0.0
    %2150 = vmatpush.msra.mxu0 0.0
    %2151 = vmatpush.msra.mxu0 0.0
    %2152 = vmatpush.msra.mxu0 0.0
    %2153 = vmatpush.msra.mxu0 0.0
    %2154 = vmatpush.msra.mxu0 0.0
    %2155 = vmatpush.msra.mxu0 %v2144
    %2156 = vmatpush.msra.mxu0 %v1999
    %2157 = vmatpush.msra.mxu0 %v1998
    %2158 = vmatpush.msra.mxu0 %v1997
    %2159 = vmatpush.msra.mxu0 %v1996
    %2160 = vmatpush.msra.mxu0 %v1995
    %2161 = vmatpush.msra.mxu0 %v1994
    %2162 = vmatmul.f32.gmra.mxu0 %v2126
    %v2163 = vpop.f32.mrf.mxu0
    %v2164 = vadd.f32 0.0, %v2163
    %2165 = vmatmul.f32.gmra.mxu0 %v2128
    %v2166 = vpop.f32.mrf.mxu0
    %v2167 = vadd.f32 0.0, %v2166
    %2168 = vmatmul.f32.gmra.mxu0 %v2130
    %v2169 = vpop.f32.mrf.mxu0
    %v2170 = vadd.f32 0.0, %v2169
    %2171 = vmatmul.f32.gmra.mxu0 %v2132
    %v2172 = vpop.f32.mrf.mxu0
    %v2173 = vadd.f32 0.0, %v2172
    %2174 = vmatmul.f32.gmra.mxu0 %v2134
    %v2175 = vpop.f32.mrf.mxu0
    %v2176 = vadd.f32 0.0, %v2175
    %2177 = vmatmul.f32.gmra.mxu0 %v2136
    %v2178 = vpop.f32.mrf.mxu0
    %v2179 = vadd.f32 0.0, %v2178
    %2180 = vmatmul.f32.gmra.mxu0 %v2138
    %v2181 = vpop.f32.mrf.mxu0
    %v2182 = vadd.f32 0.0, %v2181
    %2183 = vmatmul.f32.gmra.mxu0 %v2140
    %v2184 = vpop.f32.mrf.mxu0
    %v2185 = vadd.f32 0.0, %v2184
    %2186 = vdwg.mxu0
    %v2195 = vsel %vm2065, %v1495, %v1488
    %v2196 = vsel %vm337, %v1502, %v2195
    %v2197 = vsel %vm2068, %v1509, %v2196
    %v2198 = vsel %vm339, %v1516, %v2197
    %v2199 = vsel %vm2071, %v1523, %v2198
    %v2200 = vsel %vm341, %v1530, %v2199
    %v2201 = vsel %vm2074, %v1537, %v2200
    %v2202 = vsel %vm2065, %v1558, %v1551
    %v2203 = vsel %vm337, %v1565, %v2202
    %v2204 = vsel %vm2068, %v1572, %v2203
    %v2205 = vsel %vm339, %v1579, %v2204
    %v2206 = vsel %vm2071, %v1586, %v2205
    %v2207 = vsel %vm341, %v1593, %v2206
    %v2208 = vsel %vm2074, %v1600, %v2207
    %v2209 = vsel %vm2065, %v1621, %v1614
    %v2210 = vsel %vm337, %v1628, %v2209
    %v2211 = vsel %vm2068, %v1635, %v2210
    %v2212 = vsel %vm339, %v1642, %v2211
    %v2213 = vsel %vm2071, %v1649, %v2212
    %v2214 = vsel %vm341, %v1656, %v2213
    %v2215 = vsel %vm2074, %v1663, %v2214
    %v2216 = vsel %vm2065, %v1684, %v1677
    %v2217 = vsel %vm337, %v1691, %v2216
    %v2218 = vsel %vm2068, %v1698, %v2217
    %v2219 = vsel %vm339, %v1705, %v2218
    %v2220 = vsel %vm2071, %v1712, %v2219
    %v2221 = vsel %vm341, %v1719, %v2220
    %v2222 = vsel %vm2074, %v1726, %v2221
    %v2223 = vsel %vm2065, %v1747, %v1740
    %v2224 = vsel %vm337, %v1754, %v2223
    %v2225 = vsel %vm2068, %v1761, %v2224
    %v2226 = vsel %vm339, %v1768, %v2225
    %v2227 = vsel %vm2071, %v1775, %v2226
    %v2228 = vsel %vm341, %v1782, %v2227
    %v2229 = vsel %vm2074, %v1789, %v2228
    %v2230 = vsel %vm2065, %v1810, %v1803
    %v2231 = vsel %vm337, %v1817, %v2230
    %v2232 = vsel %vm2068, %v1824, %v2231
    %v2233 = vsel %vm339, %v1831, %v2232
    %v2234 = vsel %vm2071, %v1838, %v2233
    %v2235 = vsel %vm341, %v1845, %v2234
    %v2236 = vsel %vm2074, %v1852, %v2235
    %v2237 = vsel %vm2065, %v1873, %v1866
    %v2238 = vsel %vm337, %v1880, %v2237
    %v2239 = vsel %vm2068, %v1887, %v2238
    %v2240 = vsel %vm339, %v1894, %v2239
    %v2241 = vsel %vm2071, %v1901, %v2240
    %v2242 = vsel %vm341, %v1908, %v2241
    %v2243 = vsel %vm2074, %v1915, %v2242
    %v2244 = vsel %vm2065, %v1936, %v1929
    %v2245 = vsel %vm337, %v1943, %v2244
    %v2246 = vsel %vm2068, %v1950, %v2245
    %v2247 = vsel %vm339, %v1957, %v2246
    %v2248 = vsel %vm2071, %v1964, %v2247
    %v2249 = vsel %vm341, %v1971, %v2248
    %v2250 = vsel %vm2074, %v1978, %v2249
    %v2251 = vsel %vm2125, %v2201, 0
    %v2253 = vsel %vm2125, %v2208, 0
    %v2255 = vsel %vm2125, %v2215, 0
    %v2257 = vsel %vm2125, %v2222, 0
    %v2259 = vsel %vm2125, %v2229, 0
    %v2261 = vsel %vm2125, %v2236, 0
    %v2263 = vsel %vm2125, %v2243, 0
    %v2265 = vsel %vm2125, %v2250, 0
    %v2268 = vsel %vm2142, %v1992, 0
    %2270 = vmatpush.msra.mxu0 0.0
    %2271 = vmatpush.msra.mxu0 0.0
    %2272 = vmatpush.msra.mxu0 0.0
    %2273 = vmatpush.msra.mxu0 0.0
    %2274 = vmatpush.msra.mxu0 0.0
    %2275 = vmatpush.msra.mxu0 0.0
    %2276 = vmatpush.msra.mxu0 0.0
    %2277 = vmatpush.msra.mxu0 0.0
    %2278 = vmatpush.msra.mxu0 0.0
    %2279 = vmatpush.msra.mxu0 %v2268
    %2280 = vmatpush.msra.mxu0 %v1991
    %2281 = vmatpush.msra.mxu0 %v1990
    %2282 = vmatpush.msra.mxu0 %v1989
    %2283 = vmatpush.msra.mxu0 %v1988
    %2284 = vmatpush.msra.mxu0 %v1987
    %2285 = vmatpush.msra.mxu0 %v1986
    %2286 = vmatmul.f32.gmra.mxu0 %v2251
    %v2287 = vpop.f32.mrf.mxu0
    %v2288 = vadd.f32 %v2164, %v2287
    %2289 = vmatmul.f32.gmra.mxu0 %v2253
    %v2290 = vpop.f32.mrf.mxu0
    %v2291 = vadd.f32 %v2167, %v2290
    %2292 = vmatmul.f32.gmra.mxu0 %v2255
    %v2293 = vpop.f32.mrf.mxu0
    %v2294 = vadd.f32 %v2170, %v2293
    %2295 = vmatmul.f32.gmra.mxu0 %v2257
    %v2296 = vpop.f32.mrf.mxu0
    %v2297 = vadd.f32 %v2173, %v2296
    %2298 = vmatmul.f32.gmra.mxu0 %v2259
    %v2299 = vpop.f32.mrf.mxu0
    %v2300 = vadd.f32 %v2176, %v2299
    %2301 = vmatmul.f32.gmra.mxu0 %v2261
    %v2302 = vpop.f32.mrf.mxu0
    %v2303 = vadd.f32 %v2179, %v2302
    %2304 = vmatmul.f32.gmra.mxu0 %v2263
    %v2305 = vpop.f32.mrf.mxu0
    %v2306 = vadd.f32 %v2182, %v2305
    %2307 = vmatmul.f32.gmra.mxu0 %v2265
    %v2308 = vpop.f32.mrf.mxu0
    %v2309 = vadd.f32 %v2185, %v2308
    %2310 = vdwg.mxu0
    %v2311 = vld [vmem:[#allocation6] sm:$0x1]
    %v2313 = vperm.slane %v2311, 0
    %v2315 = vadd.f32 %v2288, %v2313
    %v2316 = vadd.f32 %v2291, %v2313
    %v2317 = vadd.f32 %v2294, %v2313
    %v2318 = vadd.f32 %v2297, %v2313
    %v2319 = vadd.f32 %v2300, %v2313
    %v2320 = vadd.f32 %v2303, %v2313
    %v2321 = vadd.f32 %v2306, %v2313
    %v2322 = vadd.f32 %v2309, %v2313
    %v2323 = vmax.f32 %v2315, 0.0
    %v2324 = vmax.f32 %v2316, 0.0
    %v2325 = vmax.f32 %v2317, 0.0
    %v2326 = vmax.f32 %v2318, 0.0
    %v2327 = vmax.f32 %v2319, 0.0
    %v2328 = vmax.f32 %v2320, 0.0
    %v2329 = vmax.f32 %v2321, 0.0
    %v2330 = vmax.f32 %v2322, 0.0
    %v2339 = vrot.slane %v2323, 2
    %v2340 = vrot.slane %v2323, 4
    %v2341 = vrot.slane %v2323, 6
    %v2342 = vrot.slane %v2324, 2
    %v2343 = vrot.slane %v2324, 4
    %v2344 = vrot.slane %v2324, 6
    %v2345 = vrot.slane %v2325, 2
    %v2346 = vrot.slane %v2325, 4
    %v2347 = vrot.slane %v2325, 6
    %v2348 = vrot.slane %v2326, 2
    %v2349 = vrot.slane %v2326, 4
    %v2350 = vrot.slane %v2326, 6
    %v2351 = vrot.slane %v2327, 2
    %v2352 = vrot.slane %v2327, 4
    %v2353 = vrot.slane %v2327, 6
    %v2354 = vrot.slane %v2328, 2
    %v2355 = vrot.slane %v2328, 4
    %v2356 = vrot.slane %v2328, 6
    %v2357 = vrot.slane %v2329, 2
    %v2358 = vrot.slane %v2329, 4
    %v2359 = vrot.slane %v2329, 6
    %v2360 = vrot.slane %v2330, 2
    %v2361 = vrot.slane %v2330, 4
    %v2362 = vrot.slane %v2330, 6
    %vm2387 = vcmask 812032
    %v2388 = vsel %vm2387, %v2323, -inf
    %v2389 = vrot.slane %v2388, 4
    %v2390 = vmax.f32 %v2388, %v2389
    %v2391 = vrot.slane %v2390, 2
    %v2392 = vmax.f32 %v2390, %v2391
    %v2393 = vrot.slane %v2392, 1
    %v2394 = vmax.f32 %v2392, %v2393
    %v2395 = vsel %vm2387, %v2339, -inf
    %v2396 = vrot.slane %v2395, 4
    %v2397 = vmax.f32 %v2395, %v2396
    %v2398 = vrot.slane %v2397, 2
    %v2399 = vmax.f32 %v2397, %v2398
    %v2400 = vrot.slane %v2399, 1
    %v2401 = vmax.f32 %v2399, %v2400
    %v2402 = vsel %vm2387, %v2340, -inf
    %v2403 = vrot.slane %v2402, 4
    %v2404 = vmax.f32 %v2402, %v2403
    %v2405 = vrot.slane %v2404, 2
    %v2406 = vmax.f32 %v2404, %v2405
    %v2407 = vrot.slane %v2406, 1
    %v2408 = vmax.f32 %v2406, %v2407
    %v2409 = vsel %vm2387, %v2341, -inf
    %v2410 = vrot.slane %v2409, 4
    %v2411 = vmax.f32 %v2409, %v2410
    %v2412 = vrot.slane %v2411, 2
    %v2413 = vmax.f32 %v2411, %v2412
    %v2414 = vrot.slane %v2413, 1
    %v2415 = vmax.f32 %v2413, %v2414
    %v2416 = vsel %vm2387, %v2324, -inf
    %v2417 = vrot.slane %v2416, 4
    %v2418 = vmax.f32 %v2416, %v2417
    %v2419 = vrot.slane %v2418, 2
    %v2420 = vmax.f32 %v2418, %v2419
    %v2421 = vrot.slane %v2420, 1
    %v2422 = vmax.f32 %v2420, %v2421
    %v2423 = vsel %vm2387, %v2342, -inf
    %v2424 = vrot.slane %v2423, 4
    %v2425 = vmax.f32 %v2423, %v2424
    %v2426 = vrot.slane %v2425, 2
    %v2427 = vmax.f32 %v2425, %v2426
    %v2428 = vrot.slane %v2427, 1
    %v2429 = vmax.f32 %v2427, %v2428
    %v2430 = vsel %vm2387, %v2343, -inf
    %v2431 = vrot.slane %v2430, 4
    %v2432 = vmax.f32 %v2430, %v2431
    %v2433 = vrot.slane %v2432, 2
    %v2434 = vmax.f32 %v2432, %v2433
    %v2435 = vrot.slane %v2434, 1
    %v2436 = vmax.f32 %v2434, %v2435
    %v2437 = vsel %vm2387, %v2344, -inf
    %v2438 = vrot.slane %v2437, 4
    %v2439 = vmax.f32 %v2437, %v2438
    %v2440 = vrot.slane %v2439, 2
    %v2441 = vmax.f32 %v2439, %v2440
    %v2442 = vrot.slane %v2441, 1
    %v2443 = vmax.f32 %v2441, %v2442
    %v2444 = vsel %vm2387, %v2325, -inf
    %v2445 = vrot.slane %v2444, 4
    %v2446 = vmax.f32 %v2444, %v2445
    %v2447 = vrot.slane %v2446, 2
    %v2448 = vmax.f32 %v2446, %v2447
    %v2449 = vrot.slane %v2448, 1
    %v2450 = vmax.f32 %v2448, %v2449
    %v2451 = vsel %vm2387, %v2345, -inf
    %v2452 = vrot.slane %v2451, 4
    %v2453 = vmax.f32 %v2451, %v2452
    %v2454 = vrot.slane %v2453, 2
    %v2455 = vmax.f32 %v2453, %v2454
    %v2456 = vrot.slane %v2455, 1
    %v2457 = vmax.f32 %v2455, %v2456
    %v2458 = vsel %vm2387, %v2346, -inf
    %v2459 = vrot.slane %v2458, 4
    %v2460 = vmax.f32 %v2458, %v2459
    %v2461 = vrot.slane %v2460, 2
    %v2462 = vmax.f32 %v2460, %v2461
    %v2463 = vrot.slane %v2462, 1
    %v2464 = vmax.f32 %v2462, %v2463
    %v2465 = vsel %vm2387, %v2347, -inf
    %v2466 = vrot.slane %v2465, 4
    %v2467 = vmax.f32 %v2465, %v2466
    %v2468 = vrot.slane %v2467, 2
    %v2469 = vmax.f32 %v2467, %v2468
    %v2470 = vrot.slane %v2469, 1
    %v2471 = vmax.f32 %v2469, %v2470
    %v2472 = vsel %vm2387, %v2326, -inf
    %v2473 = vrot.slane %v2472, 4
    %v2474 = vmax.f32 %v2472, %v2473
    %v2475 = vrot.slane %v2474, 2
    %v2476 = vmax.f32 %v2474, %v2475
    %v2477 = vrot.slane %v2476, 1
    %v2478 = vmax.f32 %v2476, %v2477
    %v2479 = vsel %vm2387, %v2348, -inf
    %v2480 = vrot.slane %v2479, 4
    %v2481 = vmax.f32 %v2479, %v2480
    %v2482 = vrot.slane %v2481, 2
    %v2483 = vmax.f32 %v2481, %v2482
    %v2484 = vrot.slane %v2483, 1
    %v2485 = vmax.f32 %v2483, %v2484
    %v2486 = vsel %vm2387, %v2349, -inf
    %v2487 = vrot.slane %v2486, 4
    %v2488 = vmax.f32 %v2486, %v2487
    %v2489 = vrot.slane %v2488, 2
    %v2490 = vmax.f32 %v2488, %v2489
    %v2491 = vrot.slane %v2490, 1
    %v2492 = vmax.f32 %v2490, %v2491
    %v2493 = vsel %vm2387, %v2350, -inf
    %v2494 = vrot.slane %v2493, 4
    %v2495 = vmax.f32 %v2493, %v2494
    %v2496 = vrot.slane %v2495, 2
    %v2497 = vmax.f32 %v2495, %v2496
    %v2498 = vrot.slane %v2497, 1
    %v2499 = vmax.f32 %v2497, %v2498
    %v2500 = vsel %vm2387, %v2327, -inf
    %v2501 = vrot.slane %v2500, 4
    %v2502 = vmax.f32 %v2500, %v2501
    %v2503 = vrot.slane %v2502, 2
    %v2504 = vmax.f32 %v2502, %v2503
    %v2505 = vrot.slane %v2504, 1
    %v2506 = vmax.f32 %v2504, %v2505
    %v2507 = vsel %vm2387, %v2351, -inf
    %v2508 = vrot.slane %v2507, 4
    %v2509 = vmax.f32 %v2507, %v2508
    %v2510 = vrot.slane %v2509, 2
    %v2511 = vmax.f32 %v2509, %v2510
    %v2512 = vrot.slane %v2511, 1
    %v2513 = vmax.f32 %v2511, %v2512
    %v2514 = vsel %vm2387, %v2352, -inf
    %v2515 = vrot.slane %v2514, 4
    %v2516 = vmax.f32 %v2514, %v2515
    %v2517 = vrot.slane %v2516, 2
    %v2518 = vmax.f32 %v2516, %v2517
    %v2519 = vrot.slane %v2518, 1
    %v2520 = vmax.f32 %v2518, %v2519
    %v2521 = vsel %vm2387, %v2353, -inf
    %v2522 = vrot.slane %v2521, 4
    %v2523 = vmax.f32 %v2521, %v2522
    %v2524 = vrot.slane %v2523, 2
    %v2525 = vmax.f32 %v2523, %v2524
    %v2526 = vrot.slane %v2525, 1
    %v2527 = vmax.f32 %v2525, %v2526
    %v2528 = vsel %vm2387, %v2328, -inf
    %v2529 = vrot.slane %v2528, 4
    %v2530 = vmax.f32 %v2528, %v2529
    %v2531 = vrot.slane %v2530, 2
    %v2532 = vmax.f32 %v2530, %v2531
    %v2533 = vrot.slane %v2532, 1
    %v2534 = vmax.f32 %v2532, %v2533
    %v2535 = vsel %vm2387, %v2354, -inf
    %v2536 = vrot.slane %v2535, 4
    %v2537 = vmax.f32 %v2535, %v2536
    %v2538 = vrot.slane %v2537, 2
    %v2539 = vmax.f32 %v2537, %v2538
    %v2540 = vrot.slane %v2539, 1
    %v2541 = vmax.f32 %v2539, %v2540
    %v2542 = vsel %vm2387, %v2355, -inf
    %v2543 = vrot.slane %v2542, 4
    %v2544 = vmax.f32 %v2542, %v2543
    %v2545 = vrot.slane %v2544, 2
    %v2546 = vmax.f32 %v2544, %v2545
    %v2547 = vrot.slane %v2546, 1
    %v2548 = vmax.f32 %v2546, %v2547
    %v2549 = vsel %vm2387, %v2356, -inf
    %v2550 = vrot.slane %v2549, 4
    %v2551 = vmax.f32 %v2549, %v2550
    %v2552 = vrot.slane %v2551, 2
    %v2553 = vmax.f32 %v2551, %v2552
    %v2554 = vrot.slane %v2553, 1
    %v2555 = vmax.f32 %v2553, %v2554
    %v2556 = vsel %vm2387, %v2329, -inf
    %v2557 = vrot.slane %v2556, 4
    %v2558 = vmax.f32 %v2556, %v2557
    %v2559 = vrot.slane %v2558, 2
    %v2560 = vmax.f32 %v2558, %v2559
    %v2561 = vrot.slane %v2560, 1
    %v2562 = vmax.f32 %v2560, %v2561
    %v2563 = vsel %vm2387, %v2357, -inf
    %v2564 = vrot.slane %v2563, 4
    %v2565 = vmax.f32 %v2563, %v2564
    %v2566 = vrot.slane %v2565, 2
    %v2567 = vmax.f32 %v2565, %v2566
    %v2568 = vrot.slane %v2567, 1
    %v2569 = vmax.f32 %v2567, %v2568
    %v2570 = vsel %vm2387, %v2358, -inf
    %v2571 = vrot.slane %v2570, 4
    %v2572 = vmax.f32 %v2570, %v2571
    %v2573 = vrot.slane %v2572, 2
    %v2574 = vmax.f32 %v2572, %v2573
    %v2575 = vrot.slane %v2574, 1
    %v2576 = vmax.f32 %v2574, %v2575
    %v2577 = vsel %vm2387, %v2359, -inf
    %v2578 = vrot.slane %v2577, 4
    %v2579 = vmax.f32 %v2577, %v2578
    %v2580 = vrot.slane %v2579, 2
    %v2581 = vmax.f32 %v2579, %v2580
    %v2582 = vrot.slane %v2581, 1
    %v2583 = vmax.f32 %v2581, %v2582
    %v2584 = vsel %vm2387, %v2330, -inf
    %v2585 = vrot.slane %v2584, 4
    %v2586 = vmax.f32 %v2584, %v2585
    %v2587 = vrot.slane %v2586, 2
    %v2588 = vmax.f32 %v2586, %v2587
    %v2589 = vrot.slane %v2588, 1
    %v2590 = vmax.f32 %v2588, %v2589
    %v2591 = vsel %vm2387, %v2360, -inf
    %v2592 = vrot.slane %v2591, 4
    %v2593 = vmax.f32 %v2591, %v2592
    %v2594 = vrot.slane %v2593, 2
    %v2595 = vmax.f32 %v2593, %v2594
    %v2596 = vrot.slane %v2595, 1
    %v2597 = vmax.f32 %v2595, %v2596
    %v2598 = vsel %vm2387, %v2361, -inf
    %v2599 = vrot.slane %v2598, 4
    %v2600 = vmax.f32 %v2598, %v2599
    %v2601 = vrot.slane %v2600, 2
    %v2602 = vmax.f32 %v2600, %v2601
    %v2603 = vrot.slane %v2602, 1
    %v2604 = vmax.f32 %v2602, %v2603
    %v2605 = vsel %vm2387, %v2362, -inf
    %v2606 = vrot.slane %v2605, 4
    %v2607 = vmax.f32 %v2605, %v2606
    %v2608 = vrot.slane %v2607, 2
    %v2609 = vmax.f32 %v2607, %v2608
    %v2610 = vrot.slane %v2609, 1
    %v2611 = vmax.f32 %v2609, %v2610
    %v2612 = vld [vmem:[%s6] sm:$0xff]
    %v2613 = vld [vmem:[%s6 + $0x8] sm:$0xff]
    %v2614 = vld [vmem:[%s6 + $0x10] sm:$0xff]
    %v2615 = vld [vmem:[%s6 + $0x18] sm:$0xff]
    %v2616 = vld [vmem:[%s6 + $0x20] sm:$0xff]
    %v2617 = vld [vmem:[%s6 + $0x28] sm:$0xff]
    %v2618 = vld [vmem:[%s6 + $0x30] sm:$0xff]
    %v2619 = vld [vmem:[%s6 + $0x38] sm:$0xff]
    %v2620 = vld [vmem:[%s6 + $0x40] sm:$0xff]
    %v2621 = vld [vmem:[%s6 + $0x48] sm:$0xff]
    %v2622 = vld [vmem:[%s6 + $0x50] sm:$0xff]
    %v2623 = vld [vmem:[%s6 + $0x58] sm:$0xff]
    %v2624 = vld [vmem:[%s6 + $0x60] sm:$0xff]
    %v2625 = vld [vmem:[%s6 + $0x68] sm:$0xff]
    %v2626 = vld [vmem:[%s6 + $0x70] sm:$0xff]
    %v2627 = vld [vmem:[%s6 + $0x78] sm:$0xff]
    %v2628 = vld [vmem:[%s6 + $0x80] sm:$0xff]
    %v2629 = vld [vmem:[%s6 + $0x88] sm:$0xff]
    %v2630 = vld [vmem:[%s6 + $0x90] sm:$0xff]
    %v2631 = vld [vmem:[%s6 + $0x98] sm:$0xff]
    %v2632 = vld [vmem:[%s6 + $0xa0] sm:$0xff]
    %v2633 = vld [vmem:[%s6 + $0xa8] sm:$0xff]
    %v2634 = vld [vmem:[%s6 + $0xb0] sm:$0xff]
    %v2635 = vld [vmem:[%s6 + $0xb8] sm:$0xff]
    %v2636 = vld [vmem:[%s6 + $0xc0] sm:$0xf]
    %v2637 = vld [vmem:[%s6 + $0xc8] sm:$0xf]
    %v2638 = vld [vmem:[#allocation7] sm:$0x3]
    %v2640 = vperm.slane %v2638, 0
    %v2641 = vperm.slane %v2638, 1
    %v2676 = vsel %vm2065, %v2401, %v2394
    %v2677 = vsel %vm337, %v2408, %v2676
    %v2678 = vsel %vm2068, %v2415, %v2677
    %v2679 = vsel %vm339, %v2422, %v2678
    %v2680 = vsel %vm2071, %v2429, %v2679
    %v2681 = vsel %vm341, %v2436, %v2680
    %v2682 = vsel %vm2074, %v2443, %v2681
    %v2683 = vsel %vm2065, %v2457, %v2450
    %v2684 = vsel %vm337, %v2464, %v2683
    %v2685 = vsel %vm2068, %v2471, %v2684
    %v2686 = vsel %vm339, %v2478, %v2685
    %v2687 = vsel %vm2071, %v2485, %v2686
    %v2688 = vsel %vm341, %v2492, %v2687
    %v2689 = vsel %vm2074, %v2499, %v2688
    %v2690 = vsel %vm2065, %v2513, %v2506
    %v2691 = vsel %vm337, %v2520, %v2690
    %v2692 = vsel %vm2068, %v2527, %v2691
    %v2693 = vsel %vm339, %v2534, %v2692
    %v2694 = vsel %vm2071, %v2541, %v2693
    %v2695 = vsel %vm341, %v2548, %v2694
    %v2696 = vsel %vm2074, %v2555, %v2695
    %v2697 = vsel %vm2065, %v2569, %v2562
    %v2698 = vsel %vm337, %v2576, %v2697
    %v2699 = vsel %vm2068, %v2583, %v2698
    %v2700 = vsel %vm339, %v2590, %v2699
    %v2701 = vsel %vm2071, %v2597, %v2700
    %v2702 = vsel %vm341, %v2604, %v2701
    %v2703 = vsel %vm2074, %v2611, %v2702
    %vm2704 = vcmask 818176
    %v2705 = vsel %vm2704, %v2682, 0
    %v2707 = vsel %vm2704, %v2689, 0
    %v2709 = vsel %vm2704, %v2696, 0
    %v2711 = vsel %vm2704, %v2703, 0
    %v2714 = vsel %vm703, %v2636, 0
    %v2717 = vsel %vm703, %v2637, 0
    %2719 = vmatpush.msra.mxu0 0.0
    %2720 = vmatpush.msra.mxu0 0.0
    %2721 = vmatpush.msra.mxu0 0.0
    %2722 = vmatpush.msra.mxu0 %v2714
    %2723 = vmatpush.msra.mxu0 %v2634
    %2724 = vmatpush.msra.mxu0 %v2632
    %2725 = vmatpush.msra.mxu0 %v2630
    %2726 = vmatpush.msra.mxu0 %v2628
    %2727 = vmatpush.msra.mxu0 %v2626
    %2728 = vmatpush.msra.mxu0 %v2624
    %2729 = vmatpush.msra.mxu0 %v2622
    %2730 = vmatpush.msra.mxu0 %v2620
    %2731 = vmatpush.msra.mxu0 %v2618
    %2732 = vmatpush.msra.mxu0 %v2616
    %2733 = vmatpush.msra.mxu0 %v2614
    %2734 = vmatpush.msra.mxu0 %v2612
    %2735 = vmatmul.f32.gmra.mxu0 %v2705
    %v2736 = vpop.f32.mrf.mxu0
    %v2737 = vadd.f32 %v2640, %v2736
    %2738 = vmatmul.f32.gmra.mxu0 %v2707
    %v2739 = vpop.f32.mrf.mxu0
    %v2740 = vadd.f32 %v2640, %v2739
    %2741 = vmatmul.f32.gmra.mxu0 %v2709
    %v2742 = vpop.f32.mrf.mxu0
    %v2743 = vadd.f32 %v2640, %v2742
    %2744 = vmatmul.f32.gmra.mxu0 %v2711
    %v2745 = vpop.f32.mrf.mxu0
    %v2746 = vadd.f32 %v2640, %v2745
    %2747 = vdwg.mxu0
    %2748 = vmatpush.msra.mxu0 0.0
    %2749 = vmatpush.msra.mxu0 0.0
    %2750 = vmatpush.msra.mxu0 0.0
    %2751 = vmatpush.msra.mxu0 %v2717
    %2752 = vmatpush.msra.mxu0 %v2635
    %2753 = vmatpush.msra.mxu0 %v2633
    %2754 = vmatpush.msra.mxu0 %v2631
    %2755 = vmatpush.msra.mxu0 %v2629
    %2756 = vmatpush.msra.mxu0 %v2627
    %2757 = vmatpush.msra.mxu0 %v2625
    %2758 = vmatpush.msra.mxu0 %v2623
    %2759 = vmatpush.msra.mxu0 %v2621
    %2760 = vmatpush.msra.mxu0 %v2619
    %2761 = vmatpush.msra.mxu0 %v2617
    %2762 = vmatpush.msra.mxu0 %v2615
    %2763 = vmatpush.msra.mxu0 %v2613
    %2764 = vmatmul.f32.gmra.mxu0 %v2705
    %v2765 = vpop.f32.mrf.mxu0
    %v2766 = vadd.f32 %v2641, %v2765
    %2767 = vmatmul.f32.gmra.mxu0 %v2707
    %v2768 = vpop.f32.mrf.mxu0
    %v2769 = vadd.f32 %v2641, %v2768
    %2770 = vmatmul.f32.gmra.mxu0 %v2709
    %v2771 = vpop.f32.mrf.mxu0
    %v2772 = vadd.f32 %v2641, %v2771
    %2773 = vmatmul.f32.gmra.mxu0 %v2711
    %v2774 = vpop.f32.mrf.mxu0
    %v2775 = vadd.f32 %v2641, %v2774
    %2776 = vdwg.mxu0
    %v2777 = vmax.f32 %v2737, 0.0
    %v2778 = vmax.f32 %v2766, 0.0
    %v2779 = vmax.f32 %v2740, 0.0
    %v2780 = vmax.f32 %v2769, 0.0
    %v2781 = vmax.f32 %v2743, 0.0
    %v2782 = vmax.f32 %v2772, 0.0
    %v2783 = vmax.f32 %v2746, 0.0
    %v2784 = vmax.f32 %v2775, 0.0
    %v2793 = vrot.slane %v2778, 4
    %v2794 = vrot.slane %v2780, 4
    %v2795 = vrot.slane %v2782, 4
    %v2796 = vrot.slane %v2784, 4
    %v2797 = vsel %vm703, %v2777, %v2793
    %v2798 = vsel %vm703, %v2793, %v2777
    %v2799 = vrot.slane %v2798, 4
    %v2800 = vsel %vm703, %v2779, %v2794
    %v2801 = vsel %vm703, %v2794, %v2779
    %v2802 = vrot.slane %v2801, 4
    %v2803 = vsel %vm703, %v2781, %v2795
    %v2804 = vsel %vm703, %v2795, %v2781
    %v2805 = vrot.slane %v2804, 4
    %v2806 = vsel %vm703, %v2783, %v2796
    %v2807 = vsel %vm703, %v2796, %v2783
    %v2808 = vrot.slane %v2807, 4
    %v2817 = vrot.slane %v2797, 5
    %v2818 = vrot.slane %v2817, 4
    %v2819 = vrot.slane %v2799, 5
    %v2820 = vrot.slane %v2819, 4
    %v2821 = vrot.slane %v2800, 5
    %v2822 = vrot.slane %v2821, 4
    %v2823 = vrot.slane %v2802, 5
    %v2824 = vrot.slane %v2823, 4
    %v2825 = vrot.slane %v2803, 5
    %v2826 = vrot.slane %v2825, 4
    %v2827 = vrot.slane %v2805, 5
    %v2828 = vrot.slane %v2827, 4
    %v2829 = vrot.slane %v2806, 5
    %v2830 = vrot.slane %v2829, 4
    %v2831 = vrot.slane %v2808, 5
    %v2832 = vrot.slane %v2831, 4
    %v2841 = vmax.f32 %v2797, %v2818
    %v2842 = vmax.f32 %v2799, %v2820
    %v2843 = vmax.f32 %v2800, %v2822
    %v2844 = vmax.f32 %v2802, %v2824
    %v2845 = vmax.f32 %v2803, %v2826
    %v2846 = vmax.f32 %v2805, %v2828
    %v2847 = vmax.f32 %v2806, %v2830
    %v2848 = vmax.f32 %v2808, %v2832
    %v2849 = vld [vmem:[#allocation9] sm:$0xff]
    %v2850 = vld [vmem:[#allocation9 + $0x8] sm:$0xf]
    %v2851 = vld [vmem:[#allocation9 + $0xc] sm:$0xff]
    %v2852 = vld [vmem:[#allocation9 + $0x14] sm:$0xf]
    %v2853 = vld [vmem:[#allocation9 + $0x18] sm:$0xff]
    %v2854 = vld [vmem:[#allocation9 + $0x20] sm:$0xf]
    %v2855 = vld [vmem:[#allocation9 + $0x24] sm:$0xff]
    %v2856 = vld [vmem:[#allocation9 + $0x2c] sm:$0xf]
    %v2857 = vld [vmem:[#allocation9 + $0x30] sm:$0xff]
    %v2858 = vld [vmem:[#allocation9 + $0x38] sm:$0xf]
    %v2859 = vld [vmem:[#allocation9 + $0x3c] sm:$0xff]
    %v2860 = vld [vmem:[#allocation9 + $0x44] sm:$0xf]
    %v2861 = vld [vmem:[#allocation9 + $0x48] sm:$0xff]
    %v2862 = vld [vmem:[#allocation9 + $0x50] sm:$0xf]
    %v2863 = vld [vmem:[#allocation9 + $0x54] sm:$0xff]
    %v2864 = vld [vmem:[#allocation9 + $0x5c] sm:$0xf]
    %v2865 = vld [vmem:[#allocation9 + $0x60] sm:$0xff]
    %v2866 = vld [vmem:[#allocation9 + $0x68] sm:$0xf]
    %v2867 = vld [vmem:[#allocation9 + $0x6c] sm:$0xff]
    %v2868 = vld [vmem:[#allocation9 + $0x74] sm:$0xf]
    %v2869 = vld [vmem:[#allocation9 + $0x78] sm:$0xff]
    %v2870 = vld [vmem:[#allocation9 + $0x80] sm:$0xf]
    %v2871 = vld [vmem:[#allocation9 + $0x84] sm:$0xff]
    %v2872 = vld [vmem:[#allocation9 + $0x8c] sm:$0xf]
    %v2873 = vld [vmem:[#allocation9 + $0x90] sm:$0xff]
    %v2874 = vld [vmem:[#allocation9 + $0x98] sm:$0xf]
    %v2875 = vld [vmem:[#allocation9 + $0x9c] sm:$0xff]
    %v2876 = vld [vmem:[#allocation9 + $0xa4] sm:$0xf]
    %v2877 = vld [vmem:[#allocation9 + $0xa8] sm:$0xff]
    %v2878 = vld [vmem:[#allocation9 + $0xb0] sm:$0xf]
    %v2879 = vld [vmem:[#allocation9 + $0xb4] sm:$0xff]
    %v2880 = vld [vmem:[#allocation9 + $0xbc] sm:$0xf]
    %v2881 = vld [vmem:[#allocation9 + $0xc0] sm:$0xff]
    %v2882 = vld [vmem:[#allocation9 + $0xc8] sm:$0xf]
    %v2883 = vld [vmem:[#allocation9 + $0xcc] sm:$0xff]
    %v2884 = vld [vmem:[#allocation9 + $0xd4] sm:$0xf]
    %v2885 = vld [vmem:[#allocation9 + $0xd8] sm:$0xff]
    %v2886 = vld [vmem:[#allocation9 + $0xe0] sm:$0xf]
    %v2887 = vld [vmem:[#allocation9 + $0xe4] sm:$0xff]
    %v2888 = vld [vmem:[#allocation9 + $0xec] sm:$0xf]
    %v2889 = vld [vmem:[#allocation9 + $0xf0] sm:$0xff]
    %v2890 = vld [vmem:[#allocation9 + $0xf8] sm:$0xf]
    %v2891 = vld [vmem:[#allocation9 + $0xfc] sm:$0xff]
    %v2892 = vld [vmem:[#allocation9 + $0x104] sm:$0xf]
    %v2893 = vld [vmem:[#allocation9 + $0x108] sm:$0xff]
    %v2894 = vld [vmem:[#allocation9 + $0x110] sm:$0xf]
    %v2895 = vld [vmem:[#allocation9 + $0x114] sm:$0xff]
    %v2896 = vld [vmem:[#allocation9 + $0x11c] sm:$0xf]
    %v2897 = vld [vmem:[#allocation9 + $0x120] sm:$0xff]
    %v2898 = vld [vmem:[#allocation9 + $0x128] sm:$0xf]
    %v2907 = vperm.slane %v2841, 0
    %v2908 = vperm.slane %v2841, 4
    %v2909 = vperm.slane %v2842, 0
    %v2910 = vperm.slane %v2842, 4
    %v2911 = vperm.slane %v2843, 0
    %v2912 = vperm.slane %v2843, 4
    %v2913 = vperm.slane %v2844, 0
    %v2914 = vperm.slane %v2844, 4
    %v2915 = vperm.slane %v2845, 0
    %v2916 = vperm.slane %v2845, 4
    %v2917 = vperm.slane %v2846, 0
    %v2918 = vperm.slane %v2846, 4
    %v2919 = vperm.slane %v2847, 0
    %v2920 = vperm.slane %v2847, 4
    %v2921 = vperm.slane %v2848, 0
    %v2922 = vperm.slane %v2848, 4
    %v2939 = vpack.c.bf16 %v2907, %v2907
    %v2940 = vpack.c.bf16 %v2908, %v2908
    %v2941 = vpack.c.bf16 %v2909, %v2909
    %v2942 = vpack.c.bf16 %v2910, %v2910
    %v2943 = vpack.c.bf16 %v2911, %v2911
    %v2944 = vpack.c.bf16 %v2912, %v2912
    %v2945 = vpack.c.bf16 %v2913, %v2913
    %v2946 = vpack.c.bf16 %v2914, %v2914
    %v2947 = vpack.c.bf16 %v2915, %v2915
    %v2948 = vpack.c.bf16 %v2916, %v2916
    %v2949 = vpack.c.bf16 %v2917, %v2917
    %v2950 = vpack.c.bf16 %v2918, %v2918
    %v2951 = vpack.c.bf16 %v2919, %v2919
    %v2952 = vpack.c.bf16 %v2920, %v2920
    %v2953 = vpack.c.bf16 %v2921, %v2921
    %v2954 = vpack.c.bf16 %v2922, %v2922
    %s2955 = scalar_lea.vmem [#allocation9], 300
    %v2956 = vld [vmem:[%s2955] sm:$0xff]
    %v2957 = vld [vmem:[%s2955 + $0x8] sm:$0xf]
    %v2958 = vld [vmem:[%s2955 + $0xc] sm:$0xff]
    %v2959 = vld [vmem:[%s2955 + $0x14] sm:$0xf]
    %v2960 = vld [vmem:[%s2955 + $0x18] sm:$0xff]
    %v2961 = vld [vmem:[%s2955 + $0x20] sm:$0xf]
    %v2962 = vld [vmem:[%s2955 + $0x24] sm:$0xff]
    %v2963 = vld [vmem:[%s2955 + $0x2c] sm:$0xf]
    %v2964 = vld [vmem:[%s2955 + $0x30] sm:$0xff]
    %v2965 = vld [vmem:[%s2955 + $0x38] sm:$0xf]
    %v2966 = vld [vmem:[%s2955 + $0x3c] sm:$0xff]
    %v2967 = vld [vmem:[%s2955 + $0x44] sm:$0xf]
    %v2968 = vld [vmem:[%s2955 + $0x48] sm:$0xff]
    %v2969 = vld [vmem:[%s2955 + $0x50] sm:$0xf]
    %v2970 = vld [vmem:[%s2955 + $0x54] sm:$0xff]
    %v2971 = vld [vmem:[%s2955 + $0x5c] sm:$0xf]
    %v2972 = vld [vmem:[%s2955 + $0x60] sm:$0xff]
    %v2973 = vld [vmem:[%s2955 + $0x68] sm:$0xf]
    %v2974 = vld [vmem:[%s2955 + $0x6c] sm:$0xff]
    %v2975 = vld [vmem:[%s2955 + $0x74] sm:$0xf]
    %v2976 = vld [vmem:[%s2955 + $0x78] sm:$0xff]
    %v2977 = vld [vmem:[%s2955 + $0x80] sm:$0xf]
    %v2978 = vld [vmem:[%s2955 + $0x84] sm:$0xff]
    %v2979 = vld [vmem:[%s2955 + $0x8c] sm:$0xf]
    %v2980 = vld [vmem:[%s2955 + $0x90] sm:$0xff]
    %v2981 = vld [vmem:[%s2955 + $0x98] sm:$0xf]
    %v2982 = vld [vmem:[%s2955 + $0x9c] sm:$0xff]
    %v2983 = vld [vmem:[%s2955 + $0xa4] sm:$0xf]
    %v2984 = vld [vmem:[%s2955 + $0xa8] sm:$0xff]
    %v2985 = vld [vmem:[%s2955 + $0xb0] sm:$0xf]
    %v2986 = vld [vmem:[%s2955 + $0xb4] sm:$0xff]
    %v2987 = vld [vmem:[%s2955 + $0xbc] sm:$0xf]
    %v2988 = vld [vmem:[%s2955 + $0xc0] sm:$0xff]
    %v2989 = vld [vmem:[%s2955 + $0xc8] sm:$0xf]
    %v2990 = vld [vmem:[%s2955 + $0xcc] sm:$0xff]
    %v2991 = vld [vmem:[%s2955 + $0xd4] sm:$0xf]
    %v2992 = vld [vmem:[%s2955 + $0xd8] sm:$0xff]
    %v2993 = vld [vmem:[%s2955 + $0xe0] sm:$0xf]
    %v2994 = vld [vmem:[%s2955 + $0xe4] sm:$0xff]
    %v2995 = vld [vmem:[%s2955 + $0xec] sm:$0xf]
    %v2996 = vld [vmem:[%s2955 + $0xf0] sm:$0xff]
    %v2997 = vld [vmem:[%s2955 + $0xf8] sm:$0xf]
    %v2998 = vld [vmem:[%s2955 + $0xfc] sm:$0xff]
    %v2999 = vld [vmem:[%s2955 + $0x104] sm:$0xf]
    %v3000 = vld [vmem:[%s2955 + $0x108] sm:$0xff]
    %v3001 = vld [vmem:[%s2955 + $0x110] sm:$0xf]
    %v3002 = vld [vmem:[%s2955 + $0x114] sm:$0xff]
    %v3003 = vld [vmem:[%s2955 + $0x11c] sm:$0xf]
    %v3004 = vld [vmem:[%s2955 + $0x120] sm:$0xff]
    %v3005 = vld [vmem:[%s2955 + $0x128] sm:$0xf]
    %v3006 = vperm.slane %v2841, 1
    %v3007 = vperm.slane %v2841, 5
    %v3008 = vperm.slane %v2842, 1
    %v3009 = vperm.slane %v2842, 5
    %v3010 = vperm.slane %v2843, 1
    %v3011 = vperm.slane %v2843, 5
    %v3012 = vperm.slane %v2844, 1
    %v3013 = vperm.slane %v2844, 5
    %v3014 = vperm.slane %v2845, 1
    %v3015 = vperm.slane %v2845, 5
    %v3016 = vperm.slane %v2846, 1
    %v3017 = vperm.slane %v2846, 5
    %v3018 = vperm.slane %v2847, 1
    %v3019 = vperm.slane %v2847, 5
    %v3020 = vperm.slane %v2848, 1
    %v3021 = vperm.slane %v2848, 5
    %v3038 = vpack.c.bf16 %v3006, %v3006
    %v3039 = vpack.c.bf16 %v3007, %v3007
    %v3040 = vpack.c.bf16 %v3008, %v3008
    %v3041 = vpack.c.bf16 %v3009, %v3009
    %v3042 = vpack.c.bf16 %v3010, %v3010
    %v3043 = vpack.c.bf16 %v3011, %v3011
    %v3044 = vpack.c.bf16 %v3012, %v3012
    %v3045 = vpack.c.bf16 %v3013, %v3013
    %v3046 = vpack.c.bf16 %v3014, %v3014
    %v3047 = vpack.c.bf16 %v3015, %v3015
    %v3048 = vpack.c.bf16 %v3016, %v3016
    %v3049 = vpack.c.bf16 %v3017, %v3017
    %v3050 = vpack.c.bf16 %v3018, %v3018
    %v3051 = vpack.c.bf16 %v3019, %v3019
    %v3052 = vpack.c.bf16 %v3020, %v3020
    %v3053 = vpack.c.bf16 %v3021, %v3021
    %v3070 = vunpack.c.l.b16 %v3038
    %v3071 = vunpack.c.l.b16 %v3039
    %v3072 = vunpack.c.l.b16 %v3040
    %v3073 = vunpack.c.l.b16 %v3041
    %v3074 = vunpack.c.l.b16 %v3042
    %v3075 = vunpack.c.l.b16 %v3043
    %v3076 = vunpack.c.l.b16 %v3044
    %v3077 = vunpack.c.l.b16 %v3045
    %v3078 = vunpack.c.l.b16 %v3046
    %v3079 = vunpack.c.l.b16 %v3047
    %v3080 = vunpack.c.l.b16 %v3048
    %v3081 = vunpack.c.l.b16 %v3049
    %v3082 = vunpack.c.l.b16 %v3050
    %v3083 = vunpack.c.l.b16 %v3051
    %v3084 = vunpack.c.l.b16 %v3052
    %v3085 = vunpack.c.l.b16 %v3053
    %v3086 = vrot.slane %v3070, 1
    %v3087 = vsel %vm2065, %v3072, %v3086
    %v3088 = vrot.slane %v3074, 7
    %v3089 = vsel %vm337, %v3088, %v3087
    %v3090 = vrot.slane %v3076, 6
    %v3091 = vsel %vm2068, %v3090, %v3089
    %v3092 = vrot.slane %v3078, 5
    %v3093 = vsel %vm339, %v3092, %v3091
    %v3094 = vrot.slane %v3080, 4
    %v3095 = vsel %vm2071, %v3094, %v3093
    %v3096 = vrot.slane %v3082, 3
    %v3097 = vsel %vm341, %v3096, %v3095
    %v3098 = vrot.slane %v3084, 2
    %v3099 = vsel %vm2074, %v3098, %v3097
    %v3100 = vrot.slane %v3071, 1
    %v3101 = vsel %vm2065, %v3073, %v3100
    %v3102 = vrot.slane %v3075, 7
    %v3103 = vsel %vm337, %v3102, %v3101
    %v3104 = vrot.slane %v3077, 6
    %v3105 = vsel %vm2068, %v3104, %v3103
    %v3106 = vrot.slane %v3079, 5
    %v3107 = vsel %vm339, %v3106, %v3105
    %v3108 = vrot.slane %v3081, 4
    %v3109 = vsel %vm2071, %v3108, %v3107
    %v3110 = vrot.slane %v3083, 3
    %v3111 = vsel %vm341, %v3110, %v3109
    %v3112 = vrot.slane %v3085, 2
    %v3113 = vsel %vm2074, %v3112, %v3111
    %v3114 = vpack.c.b16 %v3099, %v3099
    %v3115 = vpack.c.b16 %v3113, %v3113
    %v3167 = vunpack.c.l.b16 %v2956
    %v3168 = vunpack.c.h.b16 %v2956
    %v3169 = vunpack.c.l.b16 %v2957
    %v3170 = vunpack.c.l.b16 %v2958
    %v3171 = vunpack.c.h.b16 %v2958
    %v3172 = vunpack.c.l.b16 %v2959
    %v3173 = vunpack.c.l.b16 %v2960
    %v3174 = vunpack.c.h.b16 %v2960
    %v3175 = vunpack.c.l.b16 %v2961
    %v3176 = vunpack.c.l.b16 %v2962
    %v3177 = vunpack.c.h.b16 %v2962
    %v3178 = vunpack.c.l.b16 %v2963
    %v3179 = vunpack.c.l.b16 %v2964
    %v3180 = vunpack.c.h.b16 %v2964
    %v3181 = vunpack.c.l.b16 %v2965
    %v3182 = vunpack.c.l.b16 %v2966
    %v3183 = vunpack.c.h.b16 %v2966
    %v3184 = vunpack.c.l.b16 %v2967
    %v3185 = vunpack.c.l.b16 %v2968
    %v3186 = vunpack.c.h.b16 %v2968
    %v3187 = vunpack.c.l.b16 %v2969
    %v3188 = vunpack.c.l.b16 %v2970
    %v3189 = vunpack.c.h.b16 %v2970
    %v3190 = vunpack.c.l.b16 %v2971
    %v3191 = vunpack.c.l.b16 %v2972
    %v3192 = vunpack.c.h.b16 %v2972
    %v3193 = vunpack.c.l.b16 %v2973
    %v3194 = vunpack.c.l.b16 %v2974
    %v3195 = vunpack.c.h.b16 %v2974
    %v3196 = vunpack.c.l.b16 %v2975
    %v3197 = vunpack.c.l.b16 %v2976
    %v3198 = vunpack.c.h.b16 %v2976
    %v3199 = vunpack.c.l.b16 %v2977
    %v3200 = vunpack.c.l.b16 %v2978
    %v3201 = vunpack.c.h.b16 %v2978
    %v3202 = vunpack.c.l.b16 %v2979
    %v3203 = vunpack.c.l.b16 %v2980
    %v3204 = vunpack.c.h.b16 %v2980
    %v3205 = vunpack.c.l.b16 %v2981
    %v3206 = vunpack.c.l.b16 %v2982
    %v3207 = vunpack.c.h.b16 %v2982
    %v3208 = vunpack.c.l.b16 %v2983
    %v3209 = vunpack.c.l.b16 %v2984
    %v3210 = vunpack.c.h.b16 %v2984
    %v3211 = vunpack.c.l.b16 %v2985
    %v3212 = vunpack.c.l.b16 %v2986
    %v3213 = vunpack.c.h.b16 %v2986
    %v3214 = vunpack.c.l.b16 %v2987
    %v3215 = vunpack.c.l.b16 %v2988
    %v3216 = vunpack.c.h.b16 %v2988
    %v3217 = vunpack.c.l.b16 %v2989
    %v3218 = vunpack.c.l.b16 %v2990
    %v3219 = vunpack.c.h.b16 %v2990
    %v3220 = vunpack.c.l.b16 %v2991
    %v3221 = vunpack.c.l.b16 %v2992
    %v3222 = vunpack.c.h.b16 %v2992
    %v3223 = vunpack.c.l.b16 %v2993
    %v3224 = vunpack.c.l.b16 %v2994
    %v3225 = vunpack.c.h.b16 %v2994
    %v3226 = vunpack.c.l.b16 %v2995
    %v3227 = vunpack.c.l.b16 %v2996
    %v3228 = vunpack.c.h.b16 %v2996
    %v3229 = vunpack.c.l.b16 %v2997
    %v3230 = vunpack.c.l.b16 %v2998
    %v3231 = vunpack.c.h.b16 %v2998
    %v3232 = vunpack.c.l.b16 %v2999
    %v3233 = vunpack.c.l.b16 %v3000
    %v3234 = vunpack.c.h.b16 %v3000
    %v3235 = vunpack.c.l.b16 %v3001
    %v3236 = vunpack.c.l.b16 %v3002
    %v3237 = vunpack.c.h.b16 %v3002
    %v3238 = vunpack.c.l.b16 %v3003
    %v3239 = vunpack.c.l.b16 %v3004
    %v3240 = vunpack.c.h.b16 %v3004
    %v3241 = vunpack.c.l.b16 %v3005
    %v3242 = vpack.c.b16 %v3170, %v3167
    %v3243 = vpack.c.b16 %v3171, %v3168
    %v3244 = vpack.c.b16 %v3172, %v3169
    %v3245 = vpack.c.b16 %v3176, %v3173
    %v3246 = vpack.c.b16 %v3177, %v3174
    %v3247 = vpack.c.b16 %v3178, %v3175
    %v3248 = vpack.c.b16 %v3182, %v3179
    %v3249 = vpack.c.b16 %v3183, %v3180
    %v3250 = vpack.c.b16 %v3184, %v3181
    %v3251 = vpack.c.b16 %v3188, %v3185
    %v3252 = vpack.c.b16 %v3189, %v3186
    %v3253 = vpack.c.b16 %v3190, %v3187
    %v3254 = vpack.c.b16 %v3194, %v3191
    %v3255 = vpack.c.b16 %v3195, %v3192
    %v3256 = vpack.c.b16 %v3196, %v3193
    %v3257 = vpack.c.b16 %v3200, %v3197
    %v3258 = vpack.c.b16 %v3201, %v3198
    %v3259 = vpack.c.b16 %v3202, %v3199
    %v3260 = vpack.c.b16 %v3206, %v3203
    %v3261 = vpack.c.b16 %v3207, %v3204
    %v3262 = vpack.c.b16 %v3208, %v3205
    %v3263 = vpack.c.b16 %v3212, %v3209
    %v3264 = vpack.c.b16 %v3213, %v3210
    %v3265 = vpack.c.b16 %v3214, %v3211
    %v3266 = vpack.c.b16 %v3218, %v3215
    %v3267 = vpack.c.b16 %v3219, %v3216
    %v3268 = vpack.c.b16 %v3220, %v3217
    %v3269 = vpack.c.b16 %v3224, %v3221
    %v3270 = vpack.c.b16 %v3225, %v3222
    %v3271 = vpack.c.b16 %v3226, %v3223
    %v3272 = vpack.c.b16 %v3230, %v3227
    %v3273 = vpack.c.b16 %v3231, %v3228
    %v3274 = vpack.c.b16 %v3232, %v3229
    %v3275 = vpack.c.b16 %v3236, %v3233
    %v3276 = vpack.c.b16 %v3237, %v3234
    %v3277 = vpack.c.b16 %v3238, %v3235
    %v3278 = vpack.c.b16 %v3239, %v3239
    %v3279 = vpack.c.b16 %v3240, %v3240
    %v3280 = vpack.c.b16 %v3241, %v3241
    %vm3317 = vcmask 588800
    %v3319 = vsel %vm3317, %v3115, 0
    %v3322 = vsel %vm703, %v3278, 0
    %v3325 = vsel %vm703, %v3279, 0
    %v3328 = vsel %vm703, %v3280, 0
    %3330 = vmatpush.bf16.msra.mxu0 %v3263
    %3331 = vmatpush.bf16.msra.mxu0 %v3260
    %3332 = vmatpush.bf16.msra.mxu0 %v3257
    %3333 = vmatpush.bf16.msra.mxu0 %v3254
    %3334 = vmatpush.bf16.msra.mxu0 %v3251
    %3335 = vmatpush.bf16.msra.mxu0 %v3248
    %3336 = vmatpush.bf16.msra.mxu0 %v3245
    %3337 = vmatpush.bf16.msra.mxu0 %v3242
    %3338 = vmatmul.bf16.gmra.mxu0 %v3114
    %v3339 = vpop.f32.mrf.mxu0
    %v3340 = vadd.f32 0.0, %v3339
    %v3341 = vpop.f32.mrf.mxu0
    %3342 = vdwg.mxu0
    %3343 = vmatpush.bf16.msra.mxu0 0
    %3344 = vmatpush.bf16.msra.mxu0 0
    %3345 = vmatpush.bf16.msra.mxu0 0
    %3346 = vmatpush.bf16.msra.mxu0 %v3322
    %3347 = vmatpush.bf16.msra.mxu0 %v3275
    %3348 = vmatpush.bf16.msra.mxu0 %v3272
    %3349 = vmatpush.bf16.msra.mxu0 %v3269
    %3350 = vmatpush.bf16.msra.mxu0 %v3266
    %3351 = vmatmul.bf16.gmra.mxu0 %v3319
    %v3352 = vpop.f32.mrf.mxu0
    %v3353 = vadd.f32 %v3340, %v3352
    %v3354 = vpop.f32.mrf.mxu0
    %3355 = vdwg.mxu0
    %3356 = vmatpush.bf16.msra.mxu0 %v3264
    %3357 = vmatpush.bf16.msra.mxu0 %v3261
    %3358 = vmatpush.bf16.msra.mxu0 %v3258
    %3359 = vmatpush.bf16.msra.mxu0 %v3255
    %3360 = vmatpush.bf16.msra.mxu0 %v3252
    %3361 = vmatpush.bf16.msra.mxu0 %v3249
    %3362 = vmatpush.bf16.msra.mxu0 %v3246
    %3363 = vmatpush.bf16.msra.mxu0 %v3243
    %3364 = vmatmul.bf16.gmra.mxu0 %v3114
    %v3365 = vpop.f32.mrf.mxu0
    %v3366 = vadd.f32 0.0, %v3365
    %v3367 = vpop.f32.mrf.mxu0
    %3368 = vdwg.mxu0
    %3369 = vmatpush.bf16.msra.mxu0 0
    %3370 = vmatpush.bf16.msra.mxu0 0
    %3371 = vmatpush.bf16.msra.mxu0 0
    %3372 = vmatpush.bf16.msra.mxu0 %v3325
    %3373 = vmatpush.bf16.msra.mxu0 %v3276
    %3374 = vmatpush.bf16.msra.mxu0 %v3273
    %3375 = vmatpush.bf16.msra.mxu0 %v3270
    %3376 = vmatpush.bf16.msra.mxu0 %v3267
    %3377 = vmatmul.bf16.gmra.mxu0 %v3319
    %v3378 = vpop.f32.mrf.mxu0
    %v3379 = vadd.f32 %v3366, %v3378
    %v3380 = vpop.f32.mrf.mxu0
    %3381 = vdwg.mxu0
    %3382 = vmatpush.bf16.msra.mxu0 %v3265
    %3383 = vmatpush.bf16.msra.mxu0 %v3262
    %3384 = vmatpush.bf16.msra.mxu0 %v3259
    %3385 = vmatpush.bf16.msra.mxu0 %v3256
    %3386 = vmatpush.bf16.msra.mxu0 %v3253
    %3387 = vmatpush.bf16.msra.mxu0 %v3250
    %3388 = vmatpush.bf16.msra.mxu0 %v3247
    %3389 = vmatpush.bf16.msra.mxu0 %v3244
    %3390 = vmatmul.bf16.gmra.mxu0 %v3114
    %v3391 = vpop.f32.mrf.mxu0
    %v3392 = vadd.f32 0.0, %v3391
    %v3393 = vpop.f32.mrf.mxu0
    %3394 = vdwg.mxu0
    %3395 = vmatpush.bf16.msra.mxu0 0
    %3396 = vmatpush.bf16.msra.mxu0 0
    %3397 = vmatpush.bf16.msra.mxu0 0
    %3398 = vmatpush.bf16.msra.mxu0 %v3328
    %3399 = vmatpush.bf16.msra.mxu0 %v3277
    %3400 = vmatpush.bf16.msra.mxu0 %v3274
    %3401 = vmatpush.bf16.msra.mxu0 %v3271
    %3402 = vmatpush.bf16.msra.mxu0 %v3268
    %3403 = vmatmul.bf16.gmra.mxu0 %v3319
    %v3404 = vpop.f32.mrf.mxu0
    %v3405 = vadd.f32 %v3392, %v3404
    %v3406 = vpop.f32.mrf.mxu0
    %3407 = vdwg.mxu0
    %v3424 = vunpack.c.l.b16 %v2939
    %v3425 = vunpack.c.l.b16 %v2940
    %v3426 = vunpack.c.l.b16 %v2941
    %v3427 = vunpack.c.l.b16 %v2942
    %v3428 = vunpack.c.l.b16 %v2943
    %v3429 = vunpack.c.l.b16 %v2944
    %v3430 = vunpack.c.l.b16 %v2945
    %v3431 = vunpack.c.l.b16 %v2946
    %v3432 = vunpack.c.l.b16 %v2947
    %v3433 = vunpack.c.l.b16 %v2948
    %v3434 = vunpack.c.l.b16 %v2949
    %v3435 = vunpack.c.l.b16 %v2950
    %v3436 = vunpack.c.l.b16 %v2951
    %v3437 = vunpack.c.l.b16 %v2952
    %v3438 = vunpack.c.l.b16 %v2953
    %v3439 = vunpack.c.l.b16 %v2954
    %v3440 = vrot.slane %v3426, 7
    %v3441 = vsel %vm2065, %v3440, %v3424
    %v3442 = vrot.slane %v3428, 6
    %v3443 = vsel %vm337, %v3442, %v3441
    %v3444 = vrot.slane %v3430, 5
    %v3445 = vsel %vm2068, %v3444, %v3443
    %v3446 = vrot.slane %v3432, 4
    %v3447 = vsel %vm339, %v3446, %v3445
    %v3448 = vrot.slane %v3434, 3
    %v3449 = vsel %vm2071, %v3448, %v3447
    %v3450 = vrot.slane %v3436, 2
    %v3451 = vsel %vm341, %v3450, %v3449
    %v3452 = vrot.slane %v3438, 1
    %v3453 = vsel %vm2074, %v3452, %v3451
    %v3454 = vrot.slane %v3427, 7
    %v3455 = vsel %vm2065, %v3454, %v3425
    %v3456 = vrot.slane %v3429, 6
    %v3457 = vsel %vm337, %v3456, %v3455
    %v3458 = vrot.slane %v3431, 5
    %v3459 = vsel %vm2068, %v3458, %v3457
    %v3460 = vrot.slane %v3433, 4
    %v3461 = vsel %vm339, %v3460, %v3459
    %v3462 = vrot.slane %v3435, 3
    %v3463 = vsel %vm2071, %v3462, %v3461
    %v3464 = vrot.slane %v3437, 2
    %v3465 = vsel %vm341, %v3464, %v3463
    %v3466 = vrot.slane %v3439, 1
    %v3467 = vsel %vm2074, %v3466, %v3465
    %v3468 = vpack.c.b16 %v3453, %v3453
    %v3469 = vpack.c.b16 %v3467, %v3467
    %v3521 = vunpack.c.l.b16 %v2849
    %v3522 = vunpack.c.h.b16 %v2849
    %v3523 = vunpack.c.l.b16 %v2850
    %v3524 = vunpack.c.l.b16 %v2851
    %v3525 = vunpack.c.h.b16 %v2851
    %v3526 = vunpack.c.l.b16 %v2852
    %v3527 = vunpack.c.l.b16 %v2853
    %v3528 = vunpack.c.h.b16 %v2853
    %v3529 = vunpack.c.l.b16 %v2854
    %v3530 = vunpack.c.l.b16 %v2855
    %v3531 = vunpack.c.h.b16 %v2855
    %v3532 = vunpack.c.l.b16 %v2856
    %v3533 = vunpack.c.l.b16 %v2857
    %v3534 = vunpack.c.h.b16 %v2857
    %v3535 = vunpack.c.l.b16 %v2858
    %v3536 = vunpack.c.l.b16 %v2859
    %v3537 = vunpack.c.h.b16 %v2859
    %v3538 = vunpack.c.l.b16 %v2860
    %v3539 = vunpack.c.l.b16 %v2861
    %v3540 = vunpack.c.h.b16 %v2861
    %v3541 = vunpack.c.l.b16 %v2862
    %v3542 = vunpack.c.l.b16 %v2863
    %v3543 = vunpack.c.h.b16 %v2863
    %v3544 = vunpack.c.l.b16 %v2864
    %v3545 = vunpack.c.l.b16 %v2865
    %v3546 = vunpack.c.h.b16 %v2865
    %v3547 = vunpack.c.l.b16 %v2866
    %v3548 = vunpack.c.l.b16 %v2867
    %v3549 = vunpack.c.h.b16 %v2867
    %v3550 = vunpack.c.l.b16 %v2868
    %v3551 = vunpack.c.l.b16 %v2869
    %v3552 = vunpack.c.h.b16 %v2869
    %v3553 = vunpack.c.l.b16 %v2870
    %v3554 = vunpack.c.l.b16 %v2871
    %v3555 = vunpack.c.h.b16 %v2871
    %v3556 = vunpack.c.l.b16 %v2872
    %v3557 = vunpack.c.l.b16 %v2873
    %v3558 = vunpack.c.h.b16 %v2873
    %v3559 = vunpack.c.l.b16 %v2874
    %v3560 = vunpack.c.l.b16 %v2875
    %v3561 = vunpack.c.h.b16 %v2875
    %v3562 = vunpack.c.l.b16 %v2876
    %v3563 = vunpack.c.l.b16 %v2877
    %v3564 = vunpack.c.h.b16 %v2877
    %v3565 = vunpack.c.l.b16 %v2878
    %v3566 = vunpack.c.l.b16 %v2879
    %v3567 = vunpack.c.h.b16 %v2879
    %v3568 = vunpack.c.l.b16 %v2880
    %v3569 = vunpack.c.l.b16 %v2881
    %v3570 = vunpack.c.h.b16 %v2881
    %v3571 = vunpack.c.l.b16 %v2882
    %v3572 = vunpack.c.l.b16 %v2883
    %v3573 = vunpack.c.h.b16 %v2883
    %v3574 = vunpack.c.l.b16 %v2884
    %v3575 = vunpack.c.l.b16 %v2885
    %v3576 = vunpack.c.h.b16 %v2885
    %v3577 = vunpack.c.l.b16 %v2886
    %v3578 = vunpack.c.l.b16 %v2887
    %v3579 = vunpack.c.h.b16 %v2887
    %v3580 = vunpack.c.l.b16 %v2888
    %v3581 = vunpack.c.l.b16 %v2889
    %v3582 = vunpack.c.h.b16 %v2889
    %v3583 = vunpack.c.l.b16 %v2890
    %v3584 = vunpack.c.l.b16 %v2891
    %v3585 = vunpack.c.h.b16 %v2891
    %v3586 = vunpack.c.l.b16 %v2892
    %v3587 = vunpack.c.l.b16 %v2893
    %v3588 = vunpack.c.h.b16 %v2893
    %v3589 = vunpack.c.l.b16 %v2894
    %v3590 = vunpack.c.l.b16 %v2895
    %v3591 = vunpack.c.h.b16 %v2895
    %v3592 = vunpack.c.l.b16 %v2896
    %v3593 = vunpack.c.l.b16 %v2897
    %v3594 = vunpack.c.h.b16 %v2897
    %v3595 = vunpack.c.l.b16 %v2898
    %v3596 = vpack.c.b16 %v3524, %v3521
    %v3597 = vpack.c.b16 %v3525, %v3522
    %v3598 = vpack.c.b16 %v3526, %v3523
    %v3599 = vpack.c.b16 %v3530, %v3527
    %v3600 = vpack.c.b16 %v3531, %v3528
    %v3601 = vpack.c.b16 %v3532, %v3529
    %v3602 = vpack.c.b16 %v3536, %v3533
    %v3603 = vpack.c.b16 %v3537, %v3534
    %v3604 = vpack.c.b16 %v3538, %v3535
    %v3605 = vpack.c.b16 %v3542, %v3539
    %v3606 = vpack.c.b16 %v3543, %v3540
    %v3607 = vpack.c.b16 %v3544, %v3541
    %v3608 = vpack.c.b16 %v3548, %v3545
    %v3609 = vpack.c.b16 %v3549, %v3546
    %v3610 = vpack.c.b16 %v3550, %v3547
    %v3611 = vpack.c.b16 %v3554, %v3551
    %v3612 = vpack.c.b16 %v3555, %v3552
    %v3613 = vpack.c.b16 %v3556, %v3553
    %v3614 = vpack.c.b16 %v3560, %v3557
    %v3615 = vpack.c.b16 %v3561, %v3558
    %v3616 = vpack.c.b16 %v3562, %v3559
    %v3617 = vpack.c.b16 %v3566, %v3563
    %v3618 = vpack.c.b16 %v3567, %v3564
    %v3619 = vpack.c.b16 %v3568, %v3565
    %v3620 = vpack.c.b16 %v3572, %v3569
    %v3621 = vpack.c.b16 %v3573, %v3570
    %v3622 = vpack.c.b16 %v3574, %v3571
    %v3623 = vpack.c.b16 %v3578, %v3575
    %v3624 = vpack.c.b16 %v3579, %v3576
    %v3625 = vpack.c.b16 %v3580, %v3577
    %v3626 = vpack.c.b16 %v3584, %v3581
    %v3627 = vpack.c.b16 %v3585, %v3582
    %v3628 = vpack.c.b16 %v3586, %v3583
    %v3629 = vpack.c.b16 %v3590, %v3587
    %v3630 = vpack.c.b16 %v3591, %v3588
    %v3631 = vpack.c.b16 %v3592, %v3589
    %v3632 = vpack.c.b16 %v3593, %v3593
    %v3633 = vpack.c.b16 %v3594, %v3594
    %v3634 = vpack.c.b16 %v3595, %v3595
    %v3672 = vsel %vm3317, %v3469, 0
    %v3675 = vsel %vm703, %v3632, 0
    %v3678 = vsel %vm703, %v3633, 0
    %v3681 = vsel %vm703, %v3634, 0
    %3683 = vmatpush.bf16.msra.mxu0 %v3617
    %3684 = vmatpush.bf16.msra.mxu0 %v3614
    %3685 = vmatpush.bf16.msra.mxu0 %v3611
    %3686 = vmatpush.bf16.msra.mxu0 %v3608
    %3687 = vmatpush.bf16.msra.mxu0 %v3605
    %3688 = vmatpush.bf16.msra.mxu0 %v3602
    %3689 = vmatpush.bf16.msra.mxu0 %v3599
    %3690 = vmatpush.bf16.msra.mxu0 %v3596
    %3691 = vmatmul.bf16.gmra.mxu0 %v3468
    %v3692 = vpop.f32.mrf.mxu0
    %v3693 = vadd.f32 %v3353, %v3692
    %v3694 = vpop.f32.mrf.mxu0
    %3695 = vdwg.mxu0
    %3696 = vmatpush.bf16.msra.mxu0 0
    %3697 = vmatpush.bf16.msra.mxu0 0
    %3698 = vmatpush.bf16.msra.mxu0 0
    %3699 = vmatpush.bf16.msra.mxu0 %v3675
    %3700 = vmatpush.bf16.msra.mxu0 %v3629
    %3701 = vmatpush.bf16.msra.mxu0 %v3626
    %3702 = vmatpush.bf16.msra.mxu0 %v3623
    %3703 = vmatpush.bf16.msra.mxu0 %v3620
    %3704 = vmatmul.bf16.gmra.mxu0 %v3672
    %v3705 = vpop.f32.mrf.mxu0
    %v3706 = vadd.f32 %v3693, %v3705
    %v3707 = vpop.f32.mrf.mxu0
    %3708 = vdwg.mxu0
    %3709 = vmatpush.bf16.msra.mxu0 %v3618
    %3710 = vmatpush.bf16.msra.mxu0 %v3615
    %3711 = vmatpush.bf16.msra.mxu0 %v3612
    %3712 = vmatpush.bf16.msra.mxu0 %v3609
    %3713 = vmatpush.bf16.msra.mxu0 %v3606
    %3714 = vmatpush.bf16.msra.mxu0 %v3603
    %3715 = vmatpush.bf16.msra.mxu0 %v3600
    %3716 = vmatpush.bf16.msra.mxu0 %v3597
    %3717 = vmatmul.bf16.gmra.mxu0 %v3468
    %v3718 = vpop.f32.mrf.mxu0
    %v3719 = vadd.f32 %v3379, %v3718
    %v3720 = vpop.f32.mrf.mxu0
    %3721 = vdwg.mxu0
    %3722 = vmatpush.bf16.msra.mxu0 0
    %3723 = vmatpush.bf16.msra.mxu0 0
    %3724 = vmatpush.bf16.msra.mxu0 0
    %3725 = vmatpush.bf16.msra.mxu0 %v3678
    %3726 = vmatpush.bf16.msra.mxu0 %v3630
    %3727 = vmatpush.bf16.msra.mxu0 %v3627
    %3728 = vmatpush.bf16.msra.mxu0 %v3624
    %3729 = vmatpush.bf16.msra.mxu0 %v3621
    %3730 = vmatmul.bf16.gmra.mxu0 %v3672
    %v3731 = vpop.f32.mrf.mxu0
    %v3732 = vadd.f32 %v3719, %v3731
    %v3733 = vpop.f32.mrf.mxu0
    %3734 = vdwg.mxu0
    %3735 = vmatpush.bf16.msra.mxu0 %v3619
    %3736 = vmatpush.bf16.msra.mxu0 %v3616
    %3737 = vmatpush.bf16.msra.mxu0 %v3613
    %3738 = vmatpush.bf16.msra.mxu0 %v3610
    %3739 = vmatpush.bf16.msra.mxu0 %v3607
    %3740 = vmatpush.bf16.msra.mxu0 %v3604
    %3741 = vmatpush.bf16.msra.mxu0 %v3601
    %3742 = vmatpush.bf16.msra.mxu0 %v3598
    %3743 = vmatmul.bf16.gmra.mxu0 %v3468
    %v3744 = vpop.f32.mrf.mxu0
    %v3745 = vadd.f32 %v3405, %v3744
    %v3746 = vpop.f32.mrf.mxu0
    %3747 = vdwg.mxu0
    %3748 = vmatpush.bf16.msra.mxu0 0
    %3749 = vmatpush.bf16.msra.mxu0 0
    %3750 = vmatpush.bf16.msra.mxu0 0
    %3751 = vmatpush.bf16.msra.mxu0 %v3681
    %3752 = vmatpush.bf16.msra.mxu0 %v3631
    %3753 = vmatpush.bf16.msra.mxu0 %v3628
    %3754 = vmatpush.bf16.msra.mxu0 %v3625
    %3755 = vmatpush.bf16.msra.mxu0 %v3622
    %3756 = vmatmul.bf16.gmra.mxu0 %v3672
    %v3757 = vpop.f32.mrf.mxu0
    %v3758 = vadd.f32 %v3745, %v3757
    %v3759 = vpop.f32.mrf.mxu0
    %3760 = vdwg.mxu0
    %s3761 = scalar_lea.vmem [#allocation9], 600
    %v3762 = vld [vmem:[%s3761] sm:$0xff]
    %v3763 = vld [vmem:[%s3761 + $0x8] sm:$0xf]
    %v3764 = vld [vmem:[%s3761 + $0xc] sm:$0xff]
    %v3765 = vld [vmem:[%s3761 + $0x14] sm:$0xf]
    %v3766 = vld [vmem:[%s3761 + $0x18] sm:$0xff]
    %v3767 = vld [vmem:[%s3761 + $0x20] sm:$0xf]
    %v3768 = vld [vmem:[%s3761 + $0x24] sm:$0xff]
    %v3769 = vld [vmem:[%s3761 + $0x2c] sm:$0xf]
    %v3770 = vld [vmem:[%s3761 + $0x30] sm:$0xff]
    %v3771 = vld [vmem:[%s3761 + $0x38] sm:$0xf]
    %v3772 = vld [vmem:[%s3761 + $0x3c] sm:$0xff]
    %v3773 = vld [vmem:[%s3761 + $0x44] sm:$0xf]
    %v3774 = vld [vmem:[%s3761 + $0x48] sm:$0xff]
    %v3775 = vld [vmem:[%s3761 + $0x50] sm:$0xf]
    %v3776 = vld [vmem:[%s3761 + $0x54] sm:$0xff]
    %v3777 = vld [vmem:[%s3761 + $0x5c] sm:$0xf]
    %v3778 = vld [vmem:[%s3761 + $0x60] sm:$0xff]
    %v3779 = vld [vmem:[%s3761 + $0x68] sm:$0xf]
    %v3780 = vld [vmem:[%s3761 + $0x6c] sm:$0xff]
    %v3781 = vld [vmem:[%s3761 + $0x74] sm:$0xf]
    %v3782 = vld [vmem:[%s3761 + $0x78] sm:$0xff]
    %v3783 = vld [vmem:[%s3761 + $0x80] sm:$0xf]
    %v3784 = vld [vmem:[%s3761 + $0x84] sm:$0xff]
    %v3785 = vld [vmem:[%s3761 + $0x8c] sm:$0xf]
    %v3786 = vld [vmem:[%s3761 + $0x90] sm:$0xff]
    %v3787 = vld [vmem:[%s3761 + $0x98] sm:$0xf]
    %v3788 = vld [vmem:[%s3761 + $0x9c] sm:$0xff]
    %v3789 = vld [vmem:[%s3761 + $0xa4] sm:$0xf]
    %v3790 = vld [vmem:[%s3761 + $0xa8] sm:$0xff]
    %v3791 = vld [vmem:[%s3761 + $0xb0] sm:$0xf]
    %v3792 = vld [vmem:[%s3761 + $0xb4] sm:$0xff]
    %v3793 = vld [vmem:[%s3761 + $0xbc] sm:$0xf]
    %v3794 = vld [vmem:[%s3761 + $0xc0] sm:$0xff]
    %v3795 = vld [vmem:[%s3761 + $0xc8] sm:$0xf]
    %v3796 = vld [vmem:[%s3761 + $0xcc] sm:$0xff]
    %v3797 = vld [vmem:[%s3761 + $0xd4] sm:$0xf]
    %v3798 = vld [vmem:[%s3761 + $0xd8] sm:$0xff]
    %v3799 = vld [vmem:[%s3761 + $0xe0] sm:$0xf]
    %v3800 = vld [vmem:[%s3761 + $0xe4] sm:$0xff]
    %v3801 = vld [vmem:[%s3761 + $0xec] sm:$0xf]
    %v3802 = vld [vmem:[%s3761 + $0xf0] sm:$0xff]
    %v3803 = vld [vmem:[%s3761 + $0xf8] sm:$0xf]
    %v3804 = vld [vmem:[%s3761 + $0xfc] sm:$0xff]
    %v3805 = vld [vmem:[%s3761 + $0x104] sm:$0xf]
    %v3806 = vld [vmem:[%s3761 + $0x108] sm:$0xff]
    %v3807 = vld [vmem:[%s3761 + $0x110] sm:$0xf]
    %v3808 = vld [vmem:[%s3761 + $0x114] sm:$0xff]
    %v3809 = vld [vmem:[%s3761 + $0x11c] sm:$0xf]
    %v3810 = vld [vmem:[%s3761 + $0x120] sm:$0xff]
    %v3811 = vld [vmem:[%s3761 + $0x128] sm:$0xf]
    %v3812 = vperm.slane %v2841, 2
    %v3813 = vperm.slane %v2841, 6
    %v3814 = vperm.slane %v2842, 2
    %v3815 = vperm.slane %v2842, 6
    %v3816 = vperm.slane %v2843, 2
    %v3817 = vperm.slane %v2843, 6
    %v3818 = vperm.slane %v2844, 2
    %v3819 = vperm.slane %v2844, 6
    %v3820 = vperm.slane %v2845, 2
    %v3821 = vperm.slane %v2845, 6
    %v3822 = vperm.slane %v2846, 2
    %v3823 = vperm.slane %v2846, 6
    %v3824 = vperm.slane %v2847, 2
    %v3825 = vperm.slane %v2847, 6
    %v3826 = vperm.slane %v2848, 2
    %v3827 = vperm.slane %v2848, 6
    %v3844 = vpack.c.bf16 %v3812, %v3812
    %v3845 = vpack.c.bf16 %v3813, %v3813
    %v3846 = vpack.c.bf16 %v3814, %v3814
    %v3847 = vpack.c.bf16 %v3815, %v3815
    %v3848 = vpack.c.bf16 %v3816, %v3816
    %v3849 = vpack.c.bf16 %v3817, %v3817
    %v3850 = vpack.c.bf16 %v3818, %v3818
    %v3851 = vpack.c.bf16 %v3819, %v3819
    %v3852 = vpack.c.bf16 %v3820, %v3820
    %v3853 = vpack.c.bf16 %v3821, %v3821
    %v3854 = vpack.c.bf16 %v3822, %v3822
    %v3855 = vpack.c.bf16 %v3823, %v3823
    %v3856 = vpack.c.bf16 %v3824, %v3824
    %v3857 = vpack.c.bf16 %v3825, %v3825
    %v3858 = vpack.c.bf16 %v3826, %v3826
    %v3859 = vpack.c.bf16 %v3827, %v3827
    %v3876 = vunpack.c.l.b16 %v3844
    %v3877 = vunpack.c.l.b16 %v3845
    %v3878 = vunpack.c.l.b16 %v3846
    %v3879 = vunpack.c.l.b16 %v3847
    %v3880 = vunpack.c.l.b16 %v3848
    %v3881 = vunpack.c.l.b16 %v3849
    %v3882 = vunpack.c.l.b16 %v3850
    %v3883 = vunpack.c.l.b16 %v3851
    %v3884 = vunpack.c.l.b16 %v3852
    %v3885 = vunpack.c.l.b16 %v3853
    %v3886 = vunpack.c.l.b16 %v3854
    %v3887 = vunpack.c.l.b16 %v3855
    %v3888 = vunpack.c.l.b16 %v3856
    %v3889 = vunpack.c.l.b16 %v3857
    %v3890 = vunpack.c.l.b16 %v3858
    %v3891 = vunpack.c.l.b16 %v3859
    %v3892 = vrot.slane %v3876, 2
    %v3893 = vrot.slane %v3878, 1
    %v3894 = vsel %vm2065, %v3893, %v3892
    %v3895 = vsel %vm337, %v3880, %v3894
    %v3896 = vrot.slane %v3882, 7
    %v3897 = vsel %vm2068, %v3896, %v3895
    %v3898 = vrot.slane %v3884, 6
    %v3899 = vsel %vm339, %v3898, %v3897
    %v3900 = vrot.slane %v3886, 5
    %v3901 = vsel %vm2071, %v3900, %v3899
    %v3902 = vrot.slane %v3888, 4
    %v3903 = vsel %vm341, %v3902, %v3901
    %v3904 = vrot.slane %v3890, 3
    %v3905 = vsel %vm2074, %v3904, %v3903
    %v3906 = vrot.slane %v3877, 2
    %v3907 = vrot.slane %v3879, 1
    %v3908 = vsel %vm2065, %v3907, %v3906
    %v3909 = vsel %vm337, %v3881, %v3908
    %v3910 = vrot.slane %v3883, 7
    %v3911 = vsel %vm2068, %v3910, %v3909
    %v3912 = vrot.slane %v3885, 6
    %v3913 = vsel %vm339, %v3912, %v3911
    %v3914 = vrot.slane %v3887, 5
    %v3915 = vsel %vm2071, %v3914, %v3913
    %v3916 = vrot.slane %v3889, 4
    %v3917 = vsel %vm341, %v3916, %v3915
    %v3918 = vrot.slane %v3891, 3
    %v3919 = vsel %vm2074, %v3918, %v3917
    %v3920 = vpack.c.b16 %v3905, %v3905
    %v3921 = vpack.c.b16 %v3919, %v3919
    %v3973 = vunpack.c.l.b16 %v3762
    %v3974 = vunpack.c.h.b16 %v3762
    %v3975 = vunpack.c.l.b16 %v3763
    %v3976 = vunpack.c.l.b16 %v3764
    %v3977 = vunpack.c.h.b16 %v3764
    %v3978 = vunpack.c.l.b16 %v3765
    %v3979 = vunpack.c.l.b16 %v3766
    %v3980 = vunpack.c.h.b16 %v3766
    %v3981 = vunpack.c.l.b16 %v3767
    %v3982 = vunpack.c.l.b16 %v3768
    %v3983 = vunpack.c.h.b16 %v3768
    %v3984 = vunpack.c.l.b16 %v3769
    %v3985 = vunpack.c.l.b16 %v3770
    %v3986 = vunpack.c.h.b16 %v3770
    %v3987 = vunpack.c.l.b16 %v3771
    %v3988 = vunpack.c.l.b16 %v3772
    %v3989 = vunpack.c.h.b16 %v3772
    %v3990 = vunpack.c.l.b16 %v3773
    %v3991 = vunpack.c.l.b16 %v3774
    %v3992 = vunpack.c.h.b16 %v3774
    %v3993 = vunpack.c.l.b16 %v3775
    %v3994 = vunpack.c.l.b16 %v3776
    %v3995 = vunpack.c.h.b16 %v3776
    %v3996 = vunpack.c.l.b16 %v3777
    %v3997 = vunpack.c.l.b16 %v3778
    %v3998 = vunpack.c.h.b16 %v3778
    %v3999 = vunpack.c.l.b16 %v3779
    %v4000 = vunpack.c.l.b16 %v3780
    %v4001 = vunpack.c.h.b16 %v3780
    %v4002 = vunpack.c.l.b16 %v3781
    %v4003 = vunpack.c.l.b16 %v3782
    %v4004 = vunpack.c.h.b16 %v3782
    %v4005 = vunpack.c.l.b16 %v3783
    %v4006 = vunpack.c.l.b16 %v3784
    %v4007 = vunpack.c.h.b16 %v3784
    %v4008 = vunpack.c.l.b16 %v3785
    %v4009 = vunpack.c.l.b16 %v3786
    %v4010 = vunpack.c.h.b16 %v3786
    %v4011 = vunpack.c.l.b16 %v3787
    %v4012 = vunpack.c.l.b16 %v3788
    %v4013 = vunpack.c.h.b16 %v3788
    %v4014 = vunpack.c.l.b16 %v3789
    %v4015 = vunpack.c.l.b16 %v3790
    %v4016 = vunpack.c.h.b16 %v3790
    %v4017 = vunpack.c.l.b16 %v3791
    %v4018 = vunpack.c.l.b16 %v3792
    %v4019 = vunpack.c.h.b16 %v3792
    %v4020 = vunpack.c.l.b16 %v3793
    %v4021 = vunpack.c.l.b16 %v3794
    %v4022 = vunpack.c.h.b16 %v3794
    %v4023 = vunpack.c.l.b16 %v3795
    %v4024 = vunpack.c.l.b16 %v3796
    %v4025 = vunpack.c.h.b16 %v3796
    %v4026 = vunpack.c.l.b16 %v3797
    %v4027 = vunpack.c.l.b16 %v3798
    %v4028 = vunpack.c.h.b16 %v3798
    %v4029 = vunpack.c.l.b16 %v3799
    %v4030 = vunpack.c.l.b16 %v3800
    %v4031 = vunpack.c.h.b16 %v3800
    %v4032 = vunpack.c.l.b16 %v3801
    %v4033 = vunpack.c.l.b16 %v3802
    %v4034 = vunpack.c.h.b16 %v3802
    %v4035 = vunpack.c.l.b16 %v3803
    %v4036 = vunpack.c.l.b16 %v3804
    %v4037 = vunpack.c.h.b16 %v3804
    %v4038 = vunpack.c.l.b16 %v3805
    %v4039 = vunpack.c.l.b16 %v3806
    %v4040 = vunpack.c.h.b16 %v3806
    %v4041 = vunpack.c.l.b16 %v3807
    %v4042 = vunpack.c.l.b16 %v3808
    %v4043 = vunpack.c.h.b16 %v3808
    %v4044 = vunpack.c.l.b16 %v3809
    %v4045 = vunpack.c.l.b16 %v3810
    %v4046 = vunpack.c.h.b16 %v3810
    %v4047 = vunpack.c.l.b16 %v3811
    %v4048 = vpack.c.b16 %v3976, %v3973
    %v4049 = vpack.c.b16 %v3977, %v3974
    %v4050 = vpack.c.b16 %v3978, %v3975
    %v4051 = vpack.c.b16 %v3982, %v3979
    %v4052 = vpack.c.b16 %v3983, %v3980
    %v4053 = vpack.c.b16 %v3984, %v3981
    %v4054 = vpack.c.b16 %v3988, %v3985
    %v4055 = vpack.c.b16 %v3989, %v3986
    %v4056 = vpack.c.b16 %v3990, %v3987
    %v4057 = vpack.c.b16 %v3994, %v3991
    %v4058 = vpack.c.b16 %v3995, %v3992
    %v4059 = vpack.c.b16 %v3996, %v3993
    %v4060 = vpack.c.b16 %v4000, %v3997
    %v4061 = vpack.c.b16 %v4001, %v3998
    %v4062 = vpack.c.b16 %v4002, %v3999
    %v4063 = vpack.c.b16 %v4006, %v4003
    %v4064 = vpack.c.b16 %v4007, %v4004
    %v4065 = vpack.c.b16 %v4008, %v4005
    %v4066 = vpack.c.b16 %v4012, %v4009
    %v4067 = vpack.c.b16 %v4013, %v4010
    %v4068 = vpack.c.b16 %v4014, %v4011
    %v4069 = vpack.c.b16 %v4018, %v4015
    %v4070 = vpack.c.b16 %v4019, %v4016
    %v4071 = vpack.c.b16 %v4020, %v4017
    %v4072 = vpack.c.b16 %v4024, %v4021
    %v4073 = vpack.c.b16 %v4025, %v4022
    %v4074 = vpack.c.b16 %v4026, %v4023
    %v4075 = vpack.c.b16 %v4030, %v4027
    %v4076 = vpack.c.b16 %v4031, %v4028
    %v4077 = vpack.c.b16 %v4032, %v4029
    %v4078 = vpack.c.b16 %v4036, %v4033
    %v4079 = vpack.c.b16 %v4037, %v4034
    %v4080 = vpack.c.b16 %v4038, %v4035
    %v4081 = vpack.c.b16 %v4042, %v4039
    %v4082 = vpack.c.b16 %v4043, %v4040
    %v4083 = vpack.c.b16 %v4044, %v4041
    %v4084 = vpack.c.b16 %v4045, %v4045
    %v4085 = vpack.c.b16 %v4046, %v4046
    %v4086 = vpack.c.b16 %v4047, %v4047
    %v4124 = vsel %vm3317, %v3921, 0
    %v4127 = vsel %vm703, %v4084, 0
    %v4130 = vsel %vm703, %v4085, 0
    %v4133 = vsel %vm703, %v4086, 0
    %4135 = vmatpush.bf16.msra.mxu0 %v4069
    %4136 = vmatpush.bf16.msra.mxu0 %v4066
    %4137 = vmatpush.bf16.msra.mxu0 %v4063
    %4138 = vmatpush.bf16.msra.mxu0 %v4060
    %4139 = vmatpush.bf16.msra.mxu0 %v4057
    %4140 = vmatpush.bf16.msra.mxu0 %v4054
    %4141 = vmatpush.bf16.msra.mxu0 %v4051
    %4142 = vmatpush.bf16.msra.mxu0 %v4048
    %4143 = vmatmul.bf16.gmra.mxu0 %v3920
    %v4144 = vpop.f32.mrf.mxu0
    %v4145 = vadd.f32 0.0, %v4144
    %v4146 = vpop.f32.mrf.mxu0
    %4147 = vdwg.mxu0
    %4148 = vmatpush.bf16.msra.mxu0 0
    %4149 = vmatpush.bf16.msra.mxu0 0
    %4150 = vmatpush.bf16.msra.mxu0 0
    %4151 = vmatpush.bf16.msra.mxu0 %v4127
    %4152 = vmatpush.bf16.msra.mxu0 %v4081
    %4153 = vmatpush.bf16.msra.mxu0 %v4078
    %4154 = vmatpush.bf16.msra.mxu0 %v4075
    %4155 = vmatpush.bf16.msra.mxu0 %v4072
    %4156 = vmatmul.bf16.gmra.mxu0 %v4124
    %v4157 = vpop.f32.mrf.mxu0
    %v4158 = vadd.f32 %v4145, %v4157
    %v4159 = vpop.f32.mrf.mxu0
    %4160 = vdwg.mxu0
    %4161 = vmatpush.bf16.msra.mxu0 %v4070
    %4162 = vmatpush.bf16.msra.mxu0 %v4067
    %4163 = vmatpush.bf16.msra.mxu0 %v4064
    %4164 = vmatpush.bf16.msra.mxu0 %v4061
    %4165 = vmatpush.bf16.msra.mxu0 %v4058
    %4166 = vmatpush.bf16.msra.mxu0 %v4055
    %4167 = vmatpush.bf16.msra.mxu0 %v4052
    %4168 = vmatpush.bf16.msra.mxu0 %v4049
    %4169 = vmatmul.bf16.gmra.mxu0 %v3920
    %v4170 = vpop.f32.mrf.mxu0
    %v4171 = vadd.f32 0.0, %v4170
    %v4172 = vpop.f32.mrf.mxu0
    %4173 = vdwg.mxu0
    %4174 = vmatpush.bf16.msra.mxu0 0
    %4175 = vmatpush.bf16.msra.mxu0 0
    %4176 = vmatpush.bf16.msra.mxu0 0
    %4177 = vmatpush.bf16.msra.mxu0 %v4130
    %4178 = vmatpush.bf16.msra.mxu0 %v4082
    %4179 = vmatpush.bf16.msra.mxu0 %v4079
    %4180 = vmatpush.bf16.msra.mxu0 %v4076
    %4181 = vmatpush.bf16.msra.mxu0 %v4073
    %4182 = vmatmul.bf16.gmra.mxu0 %v4124
    %v4183 = vpop.f32.mrf.mxu0
    %v4184 = vadd.f32 %v4171, %v4183
    %v4185 = vpop.f32.mrf.mxu0
    %4186 = vdwg.mxu0
    %4187 = vmatpush.bf16.msra.mxu0 %v4071
    %4188 = vmatpush.bf16.msra.mxu0 %v4068
    %4189 = vmatpush.bf16.msra.mxu0 %v4065
    %4190 = vmatpush.bf16.msra.mxu0 %v4062
    %4191 = vmatpush.bf16.msra.mxu0 %v4059
    %4192 = vmatpush.bf16.msra.mxu0 %v4056
    %4193 = vmatpush.bf16.msra.mxu0 %v4053
    %4194 = vmatpush.bf16.msra.mxu0 %v4050
    %4195 = vmatmul.bf16.gmra.mxu0 %v3920
    %v4196 = vpop.f32.mrf.mxu0
    %v4197 = vadd.f32 0.0, %v4196
    %v4198 = vpop.f32.mrf.mxu0
    %4199 = vdwg.mxu0
    %4200 = vmatpush.bf16.msra.mxu0 0
    %4201 = vmatpush.bf16.msra.mxu0 0
    %4202 = vmatpush.bf16.msra.mxu0 0
    %4203 = vmatpush.bf16.msra.mxu0 %v4133
    %4204 = vmatpush.bf16.msra.mxu0 %v4083
    %4205 = vmatpush.bf16.msra.mxu0 %v4080
    %4206 = vmatpush.bf16.msra.mxu0 %v4077
    %4207 = vmatpush.bf16.msra.mxu0 %v4074
    %4208 = vmatmul.bf16.gmra.mxu0 %v4124
    %v4209 = vpop.f32.mrf.mxu0
    %v4210 = vadd.f32 %v4197, %v4209
    %v4211 = vpop.f32.mrf.mxu0
    %4212 = vdwg.mxu0
    %v4213 = vadd.f32 %v3706, %v4158
    %v4214 = vadd.f32 %v3732, %v4184
    %v4215 = vadd.f32 %v3758, %v4210
    %v4216 = vld [vmem:[#allocation10] sm:$0x7]
    %v4218 = vperm.slane %v4216, 0
    %v4219 = vperm.slane %v4216, 1
    %v4220 = vperm.slane %v4216, 2
    %v4224 = vadd.f32 %v4213, %v4218
    %v4225 = vadd.f32 %v4214, %v4219
    %v4226 = vadd.f32 %v4215, %v4220
    %v4227 = vmax.f32 %v4224, 0.0
    %v4228 = vmax.f32 %v4225, 0.0
    %v4229 = vmax.f32 %v4226, 0.0
    %v4230 = vld [vmem:[%s10] sm:$0xff]
    %v4231 = vld [vmem:[%s10 + $0x8] sm:$0xff]
    %v4232 = vld [vmem:[%s10 + $0x10] sm:$0xff]
    %v4233 = vld [vmem:[%s10 + $0x18] sm:$0xff]
    %v4234 = vld [vmem:[%s10 + $0x20] sm:$0xff]
    %v4235 = vld [vmem:[%s10 + $0x28] sm:$0xff]
    %v4236 = vld [vmem:[%s10 + $0x30] sm:$0xff]
    %v4237 = vld [vmem:[%s10 + $0x38] sm:$0xff]
    %v4238 = vld [vmem:[%s10 + $0x40] sm:$0xff]
    %v4239 = vld [vmem:[%s10 + $0x48] sm:$0xff]
    %v4240 = vld [vmem:[%s10 + $0x50] sm:$0xff]
    %v4241 = vld [vmem:[%s10 + $0x58] sm:$0xff]
    %v4242 = vld [vmem:[%s10 + $0x60] sm:$0xff]
    %v4243 = vld [vmem:[%s10 + $0x68] sm:$0xff]
    %v4244 = vld [vmem:[%s10 + $0x70] sm:$0xff]
    %v4245 = vld [vmem:[%s10 + $0x78] sm:$0xff]
    %v4246 = vld [vmem:[%s10 + $0x80] sm:$0xff]
    %v4247 = vld [vmem:[%s10 + $0x88] sm:$0xff]
    %v4248 = vld [vmem:[%s10 + $0x90] sm:$0xff]
    %v4249 = vld [vmem:[%s10 + $0x98] sm:$0xff]
    %v4250 = vld [vmem:[%s10 + $0xa0] sm:$0xff]
    %v4251 = vld [vmem:[%s10 + $0xa8] sm:$0xff]
    %v4252 = vld [vmem:[%s10 + $0xb0] sm:$0xff]
    %v4253 = vld [vmem:[%s10 + $0xb8] sm:$0xff]
    %v4254 = vld [vmem:[%s10 + $0xc0] sm:$0xff]
    %v4255 = vld [vmem:[%s10 + $0xc8] sm:$0xff]
    %v4256 = vld [vmem:[%s10 + $0xd0] sm:$0xff]
    %v4257 = vld [vmem:[%s10 + $0xd8] sm:$0xff]
    %v4258 = vld [vmem:[%s10 + $0xe0] sm:$0xff]
    %v4259 = vld [vmem:[%s10 + $0xe8] sm:$0xff]
    %v4260 = vld [vmem:[%s10 + $0xf0] sm:$0xff]
    %v4261 = vld [vmem:[%s10 + $0xf8] sm:$0xff]
    %v4262 = vld [vmem:[%s10 + $0x100] sm:$0xff]
    %v4263 = vld [vmem:[%s10 + $0x108] sm:$0xff]
    %v4264 = vld [vmem:[%s10 + $0x110] sm:$0xff]
    %v4265 = vld [vmem:[%s10 + $0x118] sm:$0xff]
    %v4266 = vld [vmem:[%s10 + $0x120] sm:$0xff]
    %v4267 = vld [vmem:[%s10 + $0x128] sm:$0xf]
    %v4268 = vld [vmem:[#allocation12] sm:$0x1]
    %v4270 = vperm.slane %v4268, 0
    %vm4272 = vcmask 359424
    %v4274 = vsel %vm4272, %v4229, 0
    %v4277 = vsel %vm703, %v4267, 0
    %4279 = vmatpush.msra.mxu0 %v4245
    %4280 = vmatpush.msra.mxu0 %v4244
    %4281 = vmatpush.msra.mxu0 %v4243
    %4282 = vmatpush.msra.mxu0 %v4242
    %4283 = vmatpush.msra.mxu0 %v4241
    %4284 = vmatpush.msra.mxu0 %v4240
    %4285 = vmatpush.msra.mxu0 %v4239
    %4286 = vmatpush.msra.mxu0 %v4238
    %4287 = vmatpush.msra.mxu0 %v4237
    %4288 = vmatpush.msra.mxu0 %v4236
    %4289 = vmatpush.msra.mxu0 %v4235
    %4290 = vmatpush.msra.mxu0 %v4234
    %4291 = vmatpush.msra.mxu0 %v4233
    %4292 = vmatpush.msra.mxu0 %v4232
    %4293 = vmatpush.msra.mxu0 %v4231
    %4294 = vmatpush.msra.mxu0 %v4230
    %4295 = vmatmul.f32.gmra.mxu0 %v4227
    %v4296 = vpop.f32.mrf.mxu0
    %v4297 = vadd.f32 %v4270, %v4296
    %4298 = vdwg.mxu0
    %4299 = vmatpush.msra.mxu0 %v4261
    %4300 = vmatpush.msra.mxu0 %v4260
    %4301 = vmatpush.msra.mxu0 %v4259
    %4302 = vmatpush.msra.mxu0 %v4258
    %4303 = vmatpush.msra.mxu0 %v4257
    %4304 = vmatpush.msra.mxu0 %v4256
    %4305 = vmatpush.msra.mxu0 %v4255
    %4306 = vmatpush.msra.mxu0 %v4254
    %4307 = vmatpush.msra.mxu0 %v4253
    %4308 = vmatpush.msra.mxu0 %v4252
    %4309 = vmatpush.msra.mxu0 %v4251
    %4310 = vmatpush.msra.mxu0 %v4250
    %4311 = vmatpush.msra.mxu0 %v4249
    %4312 = vmatpush.msra.mxu0 %v4248
    %4313 = vmatpush.msra.mxu0 %v4247
    %4314 = vmatpush.msra.mxu0 %v4246
    %4315 = vmatmul.f32.gmra.mxu0 %v4228
    %v4316 = vpop.f32.mrf.mxu0
    %v4317 = vadd.f32 %v4297, %v4316
    %4318 = vdwg.mxu0
    %4319 = vmatpush.msra.mxu0 0.0
    %4320 = vmatpush.msra.mxu0 0.0
    %4321 = vmatpush.msra.mxu0 0.0
    %4322 = vmatpush.msra.mxu0 0.0
    %4323 = vmatpush.msra.mxu0 0.0
    %4324 = vmatpush.msra.mxu0 0.0
    %4325 = vmatpush.msra.mxu0 0.0
    %4326 = vmatpush.msra.mxu0 0.0
    %4327 = vmatpush.msra.mxu0 0.0
    %4328 = vmatpush.msra.mxu0 0.0
    %4329 = vmatpush.msra.mxu0 %v4277
    %4330 = vmatpush.msra.mxu0 %v4266
    %4331 = vmatpush.msra.mxu0 %v4265
    %4332 = vmatpush.msra.mxu0 %v4264
    %4333 = vmatpush.msra.mxu0 %v4263
    %4334 = vmatpush.msra.mxu0 %v4262
    %4335 = vmatmul.f32.gmra.mxu0 %v4274
    %v4336 = vpop.f32.mrf.mxu0
    %v4337 = vadd.f32 %v4317, %v4336
    %4338 = vdwg.mxu0
    %v4339 = vmax.f32 %v4337, 0.0
    %vm4340 = vcmask 80896
    %4341 = vst.msk [vmem:[%s19] sm:$0xff] %vm4340, %v4339
    %v4342 = vld [vmem:[%s1] sm:$0xff]
    %v4343 = vld [vmem:[#allocation13] sm:$0xff]
    %v4344 = vld [vmem:[#allocation13 + $0x8] sm:$0xff]
    %v4345 = vld [vmem:[#allocation13 + $0x10] sm:$0xff]
    %v4346 = vld [vmem:[#allocation13 + $0x18] sm:$0xff]
    %v4347 = vld [vmem:[#allocation13 + $0x20] sm:$0xff]
    %v4348 = vld [vmem:[#allocation13 + $0x28] sm:$0xff]
    %v4349 = vld [vmem:[#allocation13 + $0x30] sm:$0xff]
    %v4350 = vld [vmem:[#allocation13 + $0x38] sm:$0xff]
    %v4351 = vpack.c.bf16 %v4342, %v4342
    %v4352 = vld [vmem:[#allocation15] sm:$0xff]
    %v4353 = vld [vmem:[#allocation15 + $0x8] sm:$0xff]
    %v4356 = vperm.slane %v4352, 0
    %v4357 = vperm.slane %v4352, 1
    %v4358 = vperm.slane %v4352, 2
    %v4359 = vperm.slane %v4352, 3
    %v4360 = vperm.slane %v4352, 4
    %v4361 = vperm.slane %v4352, 5
    %v4362 = vperm.slane %v4352, 6
    %v4363 = vperm.slane %v4352, 7
    %v4364 = vperm.slane %v4353, 0
    %v4365 = vperm.slane %v4353, 1
    %v4366 = vperm.slane %v4353, 2
    %v4367 = vperm.slane %v4353, 3
    %v4368 = vperm.slane %v4353, 4
    %v4369 = vperm.slane %v4353, 5
    %v4370 = vperm.slane %v4353, 6
    %v4371 = vperm.slane %v4353, 7
    %v4396 = vunpack.c.l.b16 %v4343
    %v4397 = vunpack.c.h.b16 %v4343
    %v4398 = vunpack.c.l.b16 %v4344
    %v4399 = vunpack.c.h.b16 %v4344
    %v4400 = vunpack.c.l.b16 %v4345
    %v4401 = vunpack.c.h.b16 %v4345
    %v4402 = vunpack.c.l.b16 %v4346
    %v4403 = vunpack.c.h.b16 %v4346
    %v4404 = vunpack.c.l.b16 %v4347
    %v4405 = vunpack.c.h.b16 %v4347
    %v4406 = vunpack.c.l.b16 %v4348
    %v4407 = vunpack.c.h.b16 %v4348
    %v4408 = vunpack.c.l.b16 %v4349
    %v4409 = vunpack.c.h.b16 %v4349
    %v4410 = vunpack.c.l.b16 %v4350
    %v4411 = vunpack.c.h.b16 %v4350
    %v4412 = vpack.c.b16 %v4396, %v4396
    %v4413 = vpack.c.b16 %v4397, %v4397
    %v4414 = vpack.c.b16 %v4398, %v4398
    %v4415 = vpack.c.b16 %v4399, %v4399
    %v4416 = vpack.c.b16 %v4400, %v4400
    %v4417 = vpack.c.b16 %v4401, %v4401
    %v4418 = vpack.c.b16 %v4402, %v4402
    %v4419 = vpack.c.b16 %v4403, %v4403
    %v4420 = vpack.c.b16 %v4404, %v4404
    %v4421 = vpack.c.b16 %v4405, %v4405
    %v4422 = vpack.c.b16 %v4406, %v4406
    %v4423 = vpack.c.b16 %v4407, %v4407
    %v4424 = vpack.c.b16 %v4408, %v4408
    %v4425 = vpack.c.b16 %v4409, %v4409
    %v4426 = vpack.c.b16 %v4410, %v4410
    %v4427 = vpack.c.b16 %v4411, %v4411
    %vm4428 = vcmask 64512
    %v4430 = vsel %vm4428, %v4351, 0
    %v4433 = vsel %vm703, %v4412, 0
    %v4436 = vsel %vm703, %v4413, 0
    %v4439 = vsel %vm703, %v4414, 0
    %v4442 = vsel %vm703, %v4415, 0
    %v4445 = vsel %vm703, %v4416, 0
    %v4448 = vsel %vm703, %v4417, 0
    %v4451 = vsel %vm703, %v4418, 0
    %v4454 = vsel %vm703, %v4419, 0
    %v4457 = vsel %vm703, %v4420, 0
    %v4460 = vsel %vm703, %v4421, 0
    %v4463 = vsel %vm703, %v4422, 0
    %v4466 = vsel %vm703, %v4423, 0
    %v4469 = vsel %vm703, %v4424, 0
    %v4472 = vsel %vm703, %v4425, 0
    %v4475 = vsel %vm703, %v4426, 0
    %v4478 = vsel %vm703, %v4427, 0
    %4480 = vmatpush.bf16.msra.mxu0 0
    %4481 = vmatpush.bf16.msra.mxu0 0
    %4482 = vmatpush.bf16.msra.mxu0 0
    %4483 = vmatpush.bf16.msra.mxu0 0
    %4484 = vmatpush.bf16.msra.mxu0 0
    %4485 = vmatpush.bf16.msra.mxu0 0
    %4486 = vmatpush.bf16.msra.mxu0 0
    %4487 = vmatpush.bf16.msra.mxu0 %v4433
    %4488 = vmatmul.bf16.gmra.mxu0 %v4430
    %v4489 = vpop.f32.mrf.mxu0
    %v4490 = vadd.f32 %v4356, %v4489
    %v4491 = vpop.f32.mrf.mxu0
    %4492 = vdwg.mxu0
    %4493 = vmatpush.bf16.msra.mxu0 0
    %4494 = vmatpush.bf16.msra.mxu0 0
    %4495 = vmatpush.bf16.msra.mxu0 0
    %4496 = vmatpush.bf16.msra.mxu0 0
    %4497 = vmatpush.bf16.msra.mxu0 0
    %4498 = vmatpush.bf16.msra.mxu0 0
    %4499 = vmatpush.bf16.msra.mxu0 0
    %4500 = vmatpush.bf16.msra.mxu0 %v4436
    %4501 = vmatmul.bf16.gmra.mxu0 %v4430
    %v4502 = vpop.f32.mrf.mxu0
    %v4503 = vadd.f32 %v4357, %v4502
    %v4504 = vpop.f32.mrf.mxu0
    %4505 = vdwg.mxu0
    %4506 = vmatpush.bf16.msra.mxu0 0
    %4507 = vmatpush.bf16.msra.mxu0 0
    %4508 = vmatpush.bf16.msra.mxu0 0
    %4509 = vmatpush.bf16.msra.mxu0 0
    %4510 = vmatpush.bf16.msra.mxu0 0
    %4511 = vmatpush.bf16.msra.mxu0 0
    %4512 = vmatpush.bf16.msra.mxu0 0
    %4513 = vmatpush.bf16.msra.mxu0 %v4439
    %4514 = vmatmul.bf16.gmra.mxu0 %v4430
    %v4515 = vpop.f32.mrf.mxu0
    %v4516 = vadd.f32 %v4358, %v4515
    %v4517 = vpop.f32.mrf.mxu0
    %4518 = vdwg.mxu0
    %4519 = vmatpush.bf16.msra.mxu0 0
    %4520 = vmatpush.bf16.msra.mxu0 0
    %4521 = vmatpush.bf16.msra.mxu0 0
    %4522 = vmatpush.bf16.msra.mxu0 0
    %4523 = vmatpush.bf16.msra.mxu0 0
    %4524 = vmatpush.bf16.msra.mxu0 0
    %4525 = vmatpush.bf16.msra.mxu0 0
    %4526 = vmatpush.bf16.msra.mxu0 %v4442
    %4527 = vmatmul.bf16.gmra.mxu0 %v4430
    %v4528 = vpop.f32.mrf.mxu0
    %v4529 = vadd.f32 %v4359, %v4528
    %v4530 = vpop.f32.mrf.mxu0
    %4531 = vdwg.mxu0
    %4532 = vmatpush.bf16.msra.mxu0 0
    %4533 = vmatpush.bf16.msra.mxu0 0
    %4534 = vmatpush.bf16.msra.mxu0 0
    %4535 = vmatpush.bf16.msra.mxu0 0
    %4536 = vmatpush.bf16.msra.mxu0 0
    %4537 = vmatpush.bf16.msra.mxu0 0
    %4538 = vmatpush.bf16.msra.mxu0 0
    %4539 = vmatpush.bf16.msra.mxu0 %v4445
    %4540 = vmatmul.bf16.gmra.mxu0 %v4430
    %v4541 = vpop.f32.mrf.mxu0
    %v4542 = vadd.f32 %v4360, %v4541
    %v4543 = vpop.f32.mrf.mxu0
    %4544 = vdwg.mxu0
    %4545 = vmatpush.bf16.msra.mxu0 0
    %4546 = vmatpush.bf16.msra.mxu0 0
    %4547 = vmatpush.bf16.msra.mxu0 0
    %4548 = vmatpush.bf16.msra.mxu0 0
    %4549 = vmatpush.bf16.msra.mxu0 0
    %4550 = vmatpush.bf16.msra.mxu0 0
    %4551 = vmatpush.bf16.msra.mxu0 0
    %4552 = vmatpush.bf16.msra.mxu0 %v4448
    %4553 = vmatmul.bf16.gmra.mxu0 %v4430
    %v4554 = vpop.f32.mrf.mxu0
    %v4555 = vadd.f32 %v4361, %v4554
    %v4556 = vpop.f32.mrf.mxu0
    %4557 = vdwg.mxu0
    %4558 = vmatpush.bf16.msra.mxu0 0
    %4559 = vmatpush.bf16.msra.mxu0 0
    %4560 = vmatpush.bf16.msra.mxu0 0
    %4561 = vmatpush.bf16.msra.mxu0 0
    %4562 = vmatpush.bf16.msra.mxu0 0
    %4563 = vmatpush.bf16.msra.mxu0 0
    %4564 = vmatpush.bf16.msra.mxu0 0
    %4565 = vmatpush.bf16.msra.mxu0 %v4451
    %4566 = vmatmul.bf16.gmra.mxu0 %v4430
    %v4567 = vpop.f32.mrf.mxu0
    %v4568 = vadd.f32 %v4362, %v4567
    %v4569 = vpop.f32.mrf.mxu0
    %4570 = vdwg.mxu0
    %4571 = vmatpush.bf16.msra.mxu0 0
    %4572 = vmatpush.bf16.msra.mxu0 0
    %4573 = vmatpush.bf16.msra.mxu0 0
    %4574 = vmatpush.bf16.msra.mxu0 0
    %4575 = vmatpush.bf16.msra.mxu0 0
    %4576 = vmatpush.bf16.msra.mxu0 0
    %4577 = vmatpush.bf16.msra.mxu0 0
    %4578 = vmatpush.bf16.msra.mxu0 %v4454
    %4579 = vmatmul.bf16.gmra.mxu0 %v4430
    %v4580 = vpop.f32.mrf.mxu0
    %v4581 = vadd.f32 %v4363, %v4580
    %v4582 = vpop.f32.mrf.mxu0
    %4583 = vdwg.mxu0
    %4584 = vmatpush.bf16.msra.mxu0 0
    %4585 = vmatpush.bf16.msra.mxu0 0
    %4586 = vmatpush.bf16.msra.mxu0 0
    %4587 = vmatpush.bf16.msra.mxu0 0
    %4588 = vmatpush.bf16.msra.mxu0 0
    %4589 = vmatpush.bf16.msra.mxu0 0
    %4590 = vmatpush.bf16.msra.mxu0 0
    %4591 = vmatpush.bf16.msra.mxu0 %v4457
    %4592 = vmatmul.bf16.gmra.mxu0 %v4430
    %v4593 = vpop.f32.mrf.mxu0
    %v4594 = vadd.f32 %v4364, %v4593
    %v4595 = vpop.f32.mrf.mxu0
    %4596 = vdwg.mxu0
    %4597 = vmatpush.bf16.msra.mxu0 0
    %4598 = vmatpush.bf16.msra.mxu0 0
    %4599 = vmatpush.bf16.msra.mxu0 0
    %4600 = vmatpush.bf16.msra.mxu0 0
    %4601 = vmatpush.bf16.msra.mxu0 0
    %4602 = vmatpush.bf16.msra.mxu0 0
    %4603 = vmatpush.bf16.msra.mxu0 0
    %4604 = vmatpush.bf16.msra.mxu0 %v4460
    %4605 = vmatmul.bf16.gmra.mxu0 %v4430
    %v4606 = vpop.f32.mrf.mxu0
    %v4607 = vadd.f32 %v4365, %v4606
    %v4608 = vpop.f32.mrf.mxu0
    %4609 = vdwg.mxu0
    %4610 = vmatpush.bf16.msra.mxu0 0
    %4611 = vmatpush.bf16.msra.mxu0 0
    %4612 = vmatpush.bf16.msra.mxu0 0
    %4613 = vmatpush.bf16.msra.mxu0 0
    %4614 = vmatpush.bf16.msra.mxu0 0
    %4615 = vmatpush.bf16.msra.mxu0 0
    %4616 = vmatpush.bf16.msra.mxu0 0
    %4617 = vmatpush.bf16.msra.mxu0 %v4463
    %4618 = vmatmul.bf16.gmra.mxu0 %v4430
    %v4619 = vpop.f32.mrf.mxu0
    %v4620 = vadd.f32 %v4366, %v4619
    %v4621 = vpop.f32.mrf.mxu0
    %4622 = vdwg.mxu0
    %4623 = vmatpush.bf16.msra.mxu0 0
    %4624 = vmatpush.bf16.msra.mxu0 0
    %4625 = vmatpush.bf16.msra.mxu0 0
    %4626 = vmatpush.bf16.msra.mxu0 0
    %4627 = vmatpush.bf16.msra.mxu0 0
    %4628 = vmatpush.bf16.msra.mxu0 0
    %4629 = vmatpush.bf16.msra.mxu0 0
    %4630 = vmatpush.bf16.msra.mxu0 %v4466
    %4631 = vmatmul.bf16.gmra.mxu0 %v4430
    %v4632 = vpop.f32.mrf.mxu0
    %v4633 = vadd.f32 %v4367, %v4632
    %v4634 = vpop.f32.mrf.mxu0
    %4635 = vdwg.mxu0
    %4636 = vmatpush.bf16.msra.mxu0 0
    %4637 = vmatpush.bf16.msra.mxu0 0
    %4638 = vmatpush.bf16.msra.mxu0 0
    %4639 = vmatpush.bf16.msra.mxu0 0
    %4640 = vmatpush.bf16.msra.mxu0 0
    %4641 = vmatpush.bf16.msra.mxu0 0
    %4642 = vmatpush.bf16.msra.mxu0 0
    %4643 = vmatpush.bf16.msra.mxu0 %v4469
    %4644 = vmatmul.bf16.gmra.mxu0 %v4430
    %v4645 = vpop.f32.mrf.mxu0
    %v4646 = vadd.f32 %v4368, %v4645
    %v4647 = vpop.f32.mrf.mxu0
    %4648 = vdwg.mxu0
    %4649 = vmatpush.bf16.msra.mxu0 0
    %4650 = vmatpush.bf16.msra.mxu0 0
    %4651 = vmatpush.bf16.msra.mxu0 0
    %4652 = vmatpush.bf16.msra.mxu0 0
    %4653 = vmatpush.bf16.msra.mxu0 0
    %4654 = vmatpush.bf16.msra.mxu0 0
    %4655 = vmatpush.bf16.msra.mxu0 0
    %4656 = vmatpush.bf16.msra.mxu0 %v4472
    %4657 = vmatmul.bf16.gmra.mxu0 %v4430
    %v4658 = vpop.f32.mrf.mxu0
    %v4659 = vadd.f32 %v4369, %v4658
    %v4660 = vpop.f32.mrf.mxu0
    %4661 = vdwg.mxu0
    %4662 = vmatpush.bf16.msra.mxu0 0
    %4663 = vmatpush.bf16.msra.mxu0 0
    %4664 = vmatpush.bf16.msra.mxu0 0
    %4665 = vmatpush.bf16.msra.mxu0 0
    %4666 = vmatpush.bf16.msra.mxu0 0
    %4667 = vmatpush.bf16.msra.mxu0 0
    %4668 = vmatpush.bf16.msra.mxu0 0
    %4669 = vmatpush.bf16.msra.mxu0 %v4475
    %4670 = vmatmul.bf16.gmra.mxu0 %v4430
    %v4671 = vpop.f32.mrf.mxu0
    %v4672 = vadd.f32 %v4370, %v4671
    %v4673 = vpop.f32.mrf.mxu0
    %4674 = vdwg.mxu0
    %4675 = vmatpush.bf16.msra.mxu0 0
    %4676 = vmatpush.bf16.msra.mxu0 0
    %4677 = vmatpush.bf16.msra.mxu0 0
    %4678 = vmatpush.bf16.msra.mxu0 0
    %4679 = vmatpush.bf16.msra.mxu0 0
    %4680 = vmatpush.bf16.msra.mxu0 0
    %4681 = vmatpush.bf16.msra.mxu0 0
    %4682 = vmatpush.bf16.msra.mxu0 %v4478
    %4683 = vmatmul.bf16.gmra.mxu0 %v4430
    %v4684 = vpop.f32.mrf.mxu0
    %v4685 = vadd.f32 %v4371, %v4684
    %v4686 = vpop.f32.mrf.mxu0
    %4687 = vdwg.mxu0
    %v4688 = vmax.f32 %v4490, 0.0
    %v4689 = vmax.f32 %v4503, 0.0
    %v4690 = vmax.f32 %v4516, 0.0
    %v4691 = vmax.f32 %v4529, 0.0
    %v4692 = vmax.f32 %v4542, 0.0
    %v4693 = vmax.f32 %v4555, 0.0
    %v4694 = vmax.f32 %v4568, 0.0
    %v4695 = vmax.f32 %v4581, 0.0
    %v4696 = vmax.f32 %v4594, 0.0
    %v4697 = vmax.f32 %v4607, 0.0
    %v4698 = vmax.f32 %v4620, 0.0
    %v4699 = vmax.f32 %v4633, 0.0
    %v4700 = vmax.f32 %v4646, 0.0
    %v4701 = vmax.f32 %v4659, 0.0
    %v4702 = vmax.f32 %v4672, 0.0
    %v4703 = vmax.f32 %v4685, 0.0
    %v4704 = vld [vmem:[#allocation16] sm:$0xff]
    %v4705 = vld [vmem:[#allocation16 + $0x8] sm:$0xff]
    %v4706 = vld [vmem:[#allocation16 + $0x10] sm:$0xff]
    %v4707 = vld [vmem:[#allocation16 + $0x18] sm:$0xff]
    %v4708 = vld [vmem:[#allocation16 + $0x20] sm:$0xff]
    %v4709 = vld [vmem:[#allocation16 + $0x28] sm:$0xff]
    %v4710 = vld [vmem:[#allocation16 + $0x30] sm:$0xff]
    %v4711 = vld [vmem:[#allocation16 + $0x38] sm:$0xff]
    %v4712 = vld [vmem:[#allocation16 + $0x40] sm:$0xff]
    %v4713 = vld [vmem:[#allocation16 + $0x48] sm:$0xff]
    %v4714 = vld [vmem:[#allocation16 + $0x50] sm:$0xff]
    %v4715 = vld [vmem:[#allocation16 + $0x58] sm:$0xff]
    %v4716 = vld [vmem:[#allocation16 + $0x60] sm:$0xff]
    %v4717 = vld [vmem:[#allocation16 + $0x68] sm:$0xff]
    %v4718 = vld [vmem:[#allocation16 + $0x70] sm:$0xff]
    %v4719 = vld [vmem:[#allocation16 + $0x78] sm:$0xff]
    %v4720 = vld [vmem:[#allocation16 + $0x80] sm:$0xff]
    %v4721 = vld [vmem:[#allocation16 + $0x88] sm:$0xff]
    %v4722 = vld [vmem:[#allocation16 + $0x90] sm:$0xff]
    %v4723 = vld [vmem:[#allocation16 + $0x98] sm:$0xff]
    %v4724 = vld [vmem:[#allocation16 + $0xa0] sm:$0xff]
    %v4725 = vld [vmem:[#allocation16 + $0xa8] sm:$0xff]
    %v4726 = vld [vmem:[#allocation16 + $0xb0] sm:$0xff]
    %v4727 = vld [vmem:[#allocation16 + $0xb8] sm:$0xff]
    %v4728 = vld [vmem:[#allocation16 + $0xc0] sm:$0xff]
    %v4729 = vld [vmem:[#allocation16 + $0xc8] sm:$0xff]
    %v4730 = vld [vmem:[#allocation16 + $0xd0] sm:$0xff]
    %v4731 = vld [vmem:[#allocation16 + $0xd8] sm:$0xff]
    %v4732 = vld [vmem:[#allocation16 + $0xe0] sm:$0xff]
    %v4733 = vld [vmem:[#allocation16 + $0xe8] sm:$0xff]
    %v4734 = vld [vmem:[#allocation16 + $0xf0] sm:$0xff]
    %v4735 = vld [vmem:[#allocation16 + $0xf8] sm:$0xff]
    %v4736 = vld [vmem:[#allocation16 + $0x100] sm:$0xff]
    %v4737 = vld [vmem:[#allocation16 + $0x108] sm:$0xff]
    %v4738 = vld [vmem:[#allocation16 + $0x110] sm:$0xff]
    %v4739 = vld [vmem:[#allocation16 + $0x118] sm:$0xff]
    %v4740 = vld [vmem:[#allocation16 + $0x120] sm:$0xff]
    %v4741 = vld [vmem:[#allocation16 + $0x128] sm:$0xff]
    %v4742 = vld [vmem:[#allocation16 + $0x130] sm:$0xff]
    %v4743 = vld [vmem:[#allocation16 + $0x138] sm:$0xff]
    %v4744 = vld [vmem:[#allocation16 + $0x140] sm:$0xff]
    %v4745 = vld [vmem:[#allocation16 + $0x148] sm:$0xff]
    %v4746 = vld [vmem:[#allocation16 + $0x150] sm:$0xff]
    %v4747 = vld [vmem:[#allocation16 + $0x158] sm:$0xff]
    %v4748 = vld [vmem:[#allocation16 + $0x160] sm:$0xff]
    %v4749 = vld [vmem:[#allocation16 + $0x168] sm:$0xff]
    %v4750 = vld [vmem:[#allocation16 + $0x170] sm:$0xff]
    %v4751 = vld [vmem:[#allocation16 + $0x178] sm:$0xff]
    %v4752 = vld [vmem:[#allocation16 + $0x180] sm:$0xff]
    %v4753 = vld [vmem:[#allocation16 + $0x188] sm:$0xff]
    %v4754 = vld [vmem:[#allocation16 + $0x190] sm:$0xff]
    %v4755 = vld [vmem:[#allocation16 + $0x198] sm:$0xff]
    %v4756 = vld [vmem:[#allocation16 + $0x1a0] sm:$0xff]
    %v4757 = vld [vmem:[#allocation16 + $0x1a8] sm:$0xff]
    %v4758 = vld [vmem:[#allocation16 + $0x1b0] sm:$0xff]
    %v4759 = vld [vmem:[#allocation16 + $0x1b8] sm:$0xff]
    %v4760 = vld [vmem:[#allocation16 + $0x1c0] sm:$0xff]
    %v4761 = vld [vmem:[#allocation16 + $0x1c8] sm:$0xff]
    %v4762 = vld [vmem:[#allocation16 + $0x1d0] sm:$0xff]
    %v4763 = vld [vmem:[#allocation16 + $0x1d8] sm:$0xff]
    %v4764 = vld [vmem:[#allocation16 + $0x1e0] sm:$0xff]
    %v4765 = vld [vmem:[#allocation16 + $0x1e8] sm:$0xff]
    %v4766 = vld [vmem:[#allocation16 + $0x1f0] sm:$0xff]
    %v4767 = vld [vmem:[#allocation16 + $0x1f8] sm:$0xff]
    %v4768 = vld [vmem:[#allocation16 + $0x200] sm:$0xff]
    %v4769 = vld [vmem:[#allocation16 + $0x208] sm:$0xff]
    %v4770 = vld [vmem:[#allocation16 + $0x210] sm:$0xff]
    %v4771 = vld [vmem:[#allocation16 + $0x218] sm:$0xff]
    %v4772 = vld [vmem:[#allocation16 + $0x220] sm:$0xff]
    %v4773 = vld [vmem:[#allocation16 + $0x228] sm:$0xff]
    %v4774 = vld [vmem:[#allocation16 + $0x230] sm:$0xff]
    %v4775 = vld [vmem:[#allocation16 + $0x238] sm:$0xff]
    %v4776 = vld [vmem:[#allocation16 + $0x240] sm:$0xff]
    %v4777 = vld [vmem:[#allocation16 + $0x248] sm:$0xff]
    %v4778 = vld [vmem:[#allocation16 + $0x250] sm:$0xff]
    %v4779 = vld [vmem:[#allocation16 + $0x258] sm:$0xff]
    %v4780 = vld [vmem:[#allocation16 + $0x260] sm:$0xff]
    %v4781 = vld [vmem:[#allocation16 + $0x268] sm:$0xff]
    %v4782 = vld [vmem:[#allocation16 + $0x270] sm:$0xff]
    %v4783 = vld [vmem:[#allocation16 + $0x278] sm:$0xff]
    %v4784 = vld [vmem:[#allocation16 + $0x280] sm:$0xff]
    %v4785 = vld [vmem:[#allocation16 + $0x288] sm:$0xff]
    %v4786 = vld [vmem:[#allocation16 + $0x290] sm:$0xff]
    %v4787 = vld [vmem:[#allocation16 + $0x298] sm:$0xff]
    %v4788 = vld [vmem:[#allocation16 + $0x2a0] sm:$0xff]
    %v4789 = vld [vmem:[#allocation16 + $0x2a8] sm:$0xff]
    %v4790 = vld [vmem:[#allocation16 + $0x2b0] sm:$0xff]
    %v4791 = vld [vmem:[#allocation16 + $0x2b8] sm:$0xff]
    %v4792 = vld [vmem:[#allocation16 + $0x2c0] sm:$0xff]
    %v4793 = vld [vmem:[#allocation16 + $0x2c8] sm:$0xff]
    %v4794 = vld [vmem:[#allocation16 + $0x2d0] sm:$0xff]
    %v4795 = vld [vmem:[#allocation16 + $0x2d8] sm:$0xff]
    %v4796 = vld [vmem:[#allocation16 + $0x2e0] sm:$0xff]
    %v4797 = vld [vmem:[#allocation16 + $0x2e8] sm:$0xff]
    %v4798 = vld [vmem:[#allocation16 + $0x2f0] sm:$0xff]
    %v4799 = vld [vmem:[#allocation16 + $0x2f8] sm:$0xff]
    %v4800 = vld [vmem:[#allocation16 + $0x300] sm:$0xff]
    %v4801 = vld [vmem:[#allocation16 + $0x308] sm:$0xff]
    %v4802 = vld [vmem:[#allocation16 + $0x310] sm:$0xff]
    %v4803 = vld [vmem:[#allocation16 + $0x318] sm:$0xff]
    %v4804 = vld [vmem:[#allocation16 + $0x320] sm:$0xff]
    %v4805 = vld [vmem:[#allocation16 + $0x328] sm:$0xff]
    %v4806 = vld [vmem:[#allocation16 + $0x330] sm:$0xff]
    %v4807 = vld [vmem:[#allocation16 + $0x338] sm:$0xff]
    %v4808 = vld [vmem:[#allocation16 + $0x340] sm:$0xff]
    %v4809 = vld [vmem:[#allocation16 + $0x348] sm:$0xff]
    %v4810 = vld [vmem:[#allocation16 + $0x350] sm:$0xff]
    %v4811 = vld [vmem:[#allocation16 + $0x358] sm:$0xff]
    %v4812 = vld [vmem:[#allocation16 + $0x360] sm:$0xff]
    %v4813 = vld [vmem:[#allocation16 + $0x368] sm:$0xff]
    %v4814 = vld [vmem:[#allocation16 + $0x370] sm:$0xff]
    %v4815 = vld [vmem:[#allocation16 + $0x378] sm:$0xff]
    %v4816 = vld [vmem:[#allocation16 + $0x380] sm:$0xff]
    %v4817 = vld [vmem:[#allocation16 + $0x388] sm:$0xff]
    %v4818 = vld [vmem:[#allocation16 + $0x390] sm:$0xff]
    %v4819 = vld [vmem:[#allocation16 + $0x398] sm:$0xff]
    %v4820 = vld [vmem:[#allocation16 + $0x3a0] sm:$0xff]
    %v4821 = vld [vmem:[#allocation16 + $0x3a8] sm:$0xff]
    %v4822 = vld [vmem:[#allocation16 + $0x3b0] sm:$0xff]
    %v4823 = vld [vmem:[#allocation16 + $0x3b8] sm:$0xff]
    %v4824 = vld [vmem:[#allocation16 + $0x3c0] sm:$0xff]
    %v4825 = vld [vmem:[#allocation16 + $0x3c8] sm:$0xff]
    %v4826 = vld [vmem:[#allocation16 + $0x3d0] sm:$0xff]
    %v4827 = vld [vmem:[#allocation16 + $0x3d8] sm:$0xff]
    %v4828 = vld [vmem:[#allocation16 + $0x3e0] sm:$0xff]
    %v4829 = vld [vmem:[#allocation16 + $0x3e8] sm:$0xff]
    %v4830 = vld [vmem:[#allocation16 + $0x3f0] sm:$0xff]
    %v4831 = vld [vmem:[#allocation16 + $0x3f8] sm:$0xff]
    %v4832 = vld [vmem:[#allocation16 + $0x400] sm:$0xff]
    %v4833 = vld [vmem:[#allocation16 + $0x408] sm:$0xff]
    %v4834 = vld [vmem:[#allocation16 + $0x410] sm:$0xff]
    %v4835 = vld [vmem:[#allocation16 + $0x418] sm:$0xff]
    %v4836 = vld [vmem:[#allocation16 + $0x420] sm:$0xff]
    %v4837 = vld [vmem:[#allocation16 + $0x428] sm:$0xff]
    %v4838 = vld [vmem:[#allocation16 + $0x430] sm:$0xff]
    %v4839 = vld [vmem:[#allocation16 + $0x438] sm:$0xff]
    %v4840 = vld [vmem:[#allocation16 + $0x440] sm:$0xff]
    %v4841 = vld [vmem:[#allocation16 + $0x448] sm:$0xff]
    %v4842 = vld [vmem:[#allocation16 + $0x450] sm:$0xff]
    %v4843 = vld [vmem:[#allocation16 + $0x458] sm:$0xff]
    %v4844 = vld [vmem:[#allocation16 + $0x460] sm:$0xff]
    %v4845 = vld [vmem:[#allocation16 + $0x468] sm:$0xff]
    %v4846 = vld [vmem:[#allocation16 + $0x470] sm:$0xff]
    %v4847 = vld [vmem:[#allocation16 + $0x478] sm:$0xff]
    %v4848 = vld [vmem:[#allocation16 + $0x480] sm:$0xff]
    %v4849 = vld [vmem:[#allocation16 + $0x488] sm:$0xff]
    %v4850 = vld [vmem:[#allocation16 + $0x490] sm:$0xff]
    %v4851 = vld [vmem:[#allocation16 + $0x498] sm:$0xff]
    %v4852 = vld [vmem:[#allocation16 + $0x4a0] sm:$0xff]
    %v4853 = vld [vmem:[#allocation16 + $0x4a8] sm:$0xff]
    %v4854 = vld [vmem:[#allocation16 + $0x4b0] sm:$0xff]
    %v4855 = vld [vmem:[#allocation16 + $0x4b8] sm:$0xff]
    %v4856 = vld [vmem:[#allocation16 + $0x4c0] sm:$0xff]
    %v4857 = vld [vmem:[#allocation16 + $0x4c8] sm:$0xff]
    %v4858 = vld [vmem:[#allocation16 + $0x4d0] sm:$0xff]
    %v4859 = vld [vmem:[#allocation16 + $0x4d8] sm:$0xff]
    %v4860 = vld [vmem:[#allocation16 + $0x4e0] sm:$0xff]
    %v4861 = vld [vmem:[#allocation16 + $0x4e8] sm:$0xff]
    %v4862 = vld [vmem:[#allocation16 + $0x4f0] sm:$0xff]
    %v4863 = vld [vmem:[#allocation16 + $0x4f8] sm:$0xff]
    %v4864 = vld [vmem:[#allocation16 + $0x500] sm:$0xff]
    %v4865 = vld [vmem:[#allocation16 + $0x508] sm:$0xff]
    %v4866 = vld [vmem:[#allocation16 + $0x510] sm:$0xff]
    %v4867 = vld [vmem:[#allocation16 + $0x518] sm:$0xff]
    %v4868 = vld [vmem:[#allocation16 + $0x520] sm:$0xff]
    %v4869 = vld [vmem:[#allocation16 + $0x528] sm:$0xff]
    %v4870 = vld [vmem:[#allocation16 + $0x530] sm:$0xff]
    %v4871 = vld [vmem:[#allocation16 + $0x538] sm:$0xff]
    %v4872 = vld [vmem:[#allocation16 + $0x540] sm:$0xff]
    %v4873 = vld [vmem:[#allocation16 + $0x548] sm:$0xff]
    %v4874 = vld [vmem:[#allocation16 + $0x550] sm:$0xff]
    %v4875 = vld [vmem:[#allocation16 + $0x558] sm:$0xff]
    %v4876 = vld [vmem:[#allocation16 + $0x560] sm:$0xff]
    %v4877 = vld [vmem:[#allocation16 + $0x568] sm:$0xff]
    %v4878 = vld [vmem:[#allocation16 + $0x570] sm:$0xff]
    %v4879 = vld [vmem:[#allocation16 + $0x578] sm:$0xff]
    %v4880 = vld [vmem:[#allocation16 + $0x580] sm:$0xff]
    %v4881 = vld [vmem:[#allocation16 + $0x588] sm:$0xff]
    %v4882 = vld [vmem:[#allocation16 + $0x590] sm:$0xff]
    %v4883 = vld [vmem:[#allocation16 + $0x598] sm:$0xff]
    %v4884 = vld [vmem:[#allocation16 + $0x5a0] sm:$0xff]
    %v4885 = vld [vmem:[#allocation16 + $0x5a8] sm:$0xff]
    %v4886 = vld [vmem:[#allocation16 + $0x5b0] sm:$0xff]
    %v4887 = vld [vmem:[#allocation16 + $0x5b8] sm:$0xff]
    %v4888 = vld [vmem:[#allocation16 + $0x5c0] sm:$0xff]
    %v4889 = vld [vmem:[#allocation16 + $0x5c8] sm:$0xff]
    %v4890 = vld [vmem:[#allocation16 + $0x5d0] sm:$0xff]
    %v4891 = vld [vmem:[#allocation16 + $0x5d8] sm:$0xff]
    %v4892 = vld [vmem:[#allocation16 + $0x5e0] sm:$0xff]
    %v4893 = vld [vmem:[#allocation16 + $0x5e8] sm:$0xff]
    %v4894 = vld [vmem:[#allocation16 + $0x5f0] sm:$0xff]
    %v4895 = vld [vmem:[#allocation16 + $0x5f8] sm:$0xff]
    %v4896 = vld [vmem:[#allocation16 + $0x600] sm:$0xff]
    %v4897 = vld [vmem:[#allocation16 + $0x608] sm:$0xff]
    %v4898 = vld [vmem:[#allocation16 + $0x610] sm:$0xff]
    %v4899 = vld [vmem:[#allocation16 + $0x618] sm:$0xff]
    %v4900 = vld [vmem:[#allocation16 + $0x620] sm:$0xff]
    %v4901 = vld [vmem:[#allocation16 + $0x628] sm:$0xff]
    %v4902 = vld [vmem:[#allocation16 + $0x630] sm:$0xff]
    %v4903 = vld [vmem:[#allocation16 + $0x638] sm:$0xff]
    %v4904 = vld [vmem:[#allocation16 + $0x640] sm:$0xff]
    %v4905 = vld [vmem:[#allocation16 + $0x648] sm:$0xff]
    %v4906 = vld [vmem:[#allocation16 + $0x650] sm:$0xff]
    %v4907 = vld [vmem:[#allocation16 + $0x658] sm:$0xff]
    %v4908 = vld [vmem:[#allocation16 + $0x660] sm:$0xff]
    %v4909 = vld [vmem:[#allocation16 + $0x668] sm:$0xff]
    %v4910 = vld [vmem:[#allocation16 + $0x670] sm:$0xff]
    %v4911 = vld [vmem:[#allocation16 + $0x678] sm:$0xff]
    %v4912 = vld [vmem:[#allocation16 + $0x680] sm:$0xff]
    %v4913 = vld [vmem:[#allocation16 + $0x688] sm:$0xff]
    %v4914 = vld [vmem:[#allocation16 + $0x690] sm:$0xff]
    %v4915 = vld [vmem:[#allocation16 + $0x698] sm:$0xff]
    %v4916 = vld [vmem:[#allocation16 + $0x6a0] sm:$0xff]
    %v4917 = vld [vmem:[#allocation16 + $0x6a8] sm:$0xff]
    %v4918 = vld [vmem:[#allocation16 + $0x6b0] sm:$0xff]
    %v4919 = vld [vmem:[#allocation16 + $0x6b8] sm:$0xff]
    %v4920 = vld [vmem:[#allocation16 + $0x6c0] sm:$0xff]
    %v4921 = vld [vmem:[#allocation16 + $0x6c8] sm:$0xff]
    %v4922 = vld [vmem:[#allocation16 + $0x6d0] sm:$0xff]
    %v4923 = vld [vmem:[#allocation16 + $0x6d8] sm:$0xff]
    %v4924 = vld [vmem:[#allocation16 + $0x6e0] sm:$0xff]
    %v4925 = vld [vmem:[#allocation16 + $0x6e8] sm:$0xff]
    %v4926 = vld [vmem:[#allocation16 + $0x6f0] sm:$0xff]
    %v4927 = vld [vmem:[#allocation16 + $0x6f8] sm:$0xff]
    %v4928 = vld [vmem:[#allocation16 + $0x700] sm:$0xff]
    %v4929 = vld [vmem:[#allocation16 + $0x708] sm:$0xff]
    %v4930 = vld [vmem:[#allocation16 + $0x710] sm:$0xff]
    %v4931 = vld [vmem:[#allocation16 + $0x718] sm:$0xff]
    %v4932 = vld [vmem:[#allocation16 + $0x720] sm:$0xff]
    %v4933 = vld [vmem:[#allocation16 + $0x728] sm:$0xff]
    %v4934 = vld [vmem:[#allocation16 + $0x730] sm:$0xff]
    %v4935 = vld [vmem:[#allocation16 + $0x738] sm:$0xff]
    %v4936 = vld [vmem:[#allocation16 + $0x740] sm:$0xff]
    %v4937 = vld [vmem:[#allocation16 + $0x748] sm:$0xff]
    %v4938 = vld [vmem:[#allocation16 + $0x750] sm:$0xff]
    %v4939 = vld [vmem:[#allocation16 + $0x758] sm:$0xff]
    %v4940 = vld [vmem:[#allocation16 + $0x760] sm:$0xff]
    %v4941 = vld [vmem:[#allocation16 + $0x768] sm:$0xff]
    %v4942 = vld [vmem:[#allocation16 + $0x770] sm:$0xff]
    %v4943 = vld [vmem:[#allocation16 + $0x778] sm:$0xff]
    %v4944 = vld [vmem:[#allocation16 + $0x780] sm:$0xff]
    %v4945 = vld [vmem:[#allocation16 + $0x788] sm:$0xff]
    %v4946 = vld [vmem:[#allocation16 + $0x790] sm:$0xff]
    %v4947 = vld [vmem:[#allocation16 + $0x798] sm:$0xff]
    %v4948 = vld [vmem:[#allocation16 + $0x7a0] sm:$0xff]
    %v4949 = vld [vmem:[#allocation16 + $0x7a8] sm:$0xff]
    %v4950 = vld [vmem:[#allocation16 + $0x7b0] sm:$0xff]
    %v4951 = vld [vmem:[#allocation16 + $0x7b8] sm:$0xff]
    %v4952 = vld [vmem:[#allocation16 + $0x7c0] sm:$0xff]
    %v4953 = vld [vmem:[#allocation16 + $0x7c8] sm:$0xff]
    %v4954 = vld [vmem:[#allocation16 + $0x7d0] sm:$0xff]
    %v4955 = vld [vmem:[#allocation16 + $0x7d8] sm:$0xff]
    %v4956 = vld [vmem:[#allocation16 + $0x7e0] sm:$0xff]
    %v4957 = vld [vmem:[#allocation16 + $0x7e8] sm:$0xff]
    %v4958 = vld [vmem:[#allocation16 + $0x7f0] sm:$0xff]
    %v4959 = vld [vmem:[#allocation16 + $0x7f8] sm:$0xff]
    %v4960 = vld [vmem:[#allocation16 + $0x800] sm:$0xff]
    %v4961 = vld [vmem:[#allocation16 + $0x808] sm:$0xff]
    %v4962 = vld [vmem:[#allocation16 + $0x810] sm:$0xff]
    %v4963 = vld [vmem:[#allocation16 + $0x818] sm:$0xff]
    %v4964 = vld [vmem:[#allocation16 + $0x820] sm:$0xff]
    %v4965 = vld [vmem:[#allocation16 + $0x828] sm:$0xff]
    %v4966 = vld [vmem:[#allocation16 + $0x830] sm:$0xff]
    %v4967 = vld [vmem:[#allocation16 + $0x838] sm:$0xff]
    %v4968 = vld [vmem:[#allocation16 + $0x840] sm:$0xff]
    %v4969 = vld [vmem:[#allocation16 + $0x848] sm:$0xff]
    %v4970 = vld [vmem:[#allocation16 + $0x850] sm:$0xff]
    %v4971 = vld [vmem:[#allocation16 + $0x858] sm:$0xff]
    %v4972 = vld [vmem:[#allocation16 + $0x860] sm:$0xff]
    %v4973 = vld [vmem:[#allocation16 + $0x868] sm:$0xff]
    %v4974 = vld [vmem:[#allocation16 + $0x870] sm:$0xff]
    %v4975 = vld [vmem:[#allocation16 + $0x878] sm:$0xff]
    %v4976 = vld [vmem:[#allocation16 + $0x880] sm:$0xff]
    %v4977 = vld [vmem:[#allocation16 + $0x888] sm:$0xff]
    %v4978 = vld [vmem:[#allocation16 + $0x890] sm:$0xff]
    %v4979 = vld [vmem:[#allocation16 + $0x898] sm:$0xff]
    %v4980 = vld [vmem:[#allocation16 + $0x8a0] sm:$0xff]
    %v4981 = vld [vmem:[#allocation16 + $0x8a8] sm:$0xff]
    %v4982 = vld [vmem:[#allocation16 + $0x8b0] sm:$0xff]
    %v4983 = vld [vmem:[#allocation16 + $0x8b8] sm:$0xff]
    %v4984 = vld [vmem:[#allocation16 + $0x8c0] sm:$0xff]
    %v4985 = vld [vmem:[#allocation16 + $0x8c8] sm:$0xff]
    %v4986 = vld [vmem:[#allocation16 + $0x8d0] sm:$0xff]
    %v4987 = vld [vmem:[#allocation16 + $0x8d8] sm:$0xff]
    %v4988 = vld [vmem:[#allocation16 + $0x8e0] sm:$0xff]
    %v4989 = vld [vmem:[#allocation16 + $0x8e8] sm:$0xff]
    %v4990 = vld [vmem:[#allocation16 + $0x8f0] sm:$0xff]
    %v4991 = vld [vmem:[#allocation16 + $0x8f8] sm:$0xff]
    %v4992 = vld [vmem:[#allocation16 + $0x900] sm:$0xff]
    %v4993 = vld [vmem:[#allocation16 + $0x908] sm:$0xff]
    %v4994 = vld [vmem:[#allocation16 + $0x910] sm:$0xff]
    %v4995 = vld [vmem:[#allocation16 + $0x918] sm:$0xff]
    %v4996 = vld [vmem:[#allocation16 + $0x920] sm:$0xff]
    %v4997 = vld [vmem:[#allocation16 + $0x928] sm:$0xff]
    %v4998 = vld [vmem:[#allocation16 + $0x930] sm:$0xff]
    %v4999 = vld [vmem:[#allocation16 + $0x938] sm:$0xff]
    %v5000 = vld [vmem:[#allocation16 + $0x940] sm:$0xff]
    %v5001 = vld [vmem:[#allocation16 + $0x948] sm:$0xff]
    %v5002 = vld [vmem:[#allocation16 + $0x950] sm:$0xff]
    %v5003 = vld [vmem:[#allocation16 + $0x958] sm:$0xff]
    %v5004 = vld [vmem:[#allocation16 + $0x960] sm:$0xff]
    %v5005 = vld [vmem:[#allocation16 + $0x968] sm:$0xff]
    %v5006 = vld [vmem:[#allocation16 + $0x970] sm:$0xff]
    %v5007 = vld [vmem:[#allocation16 + $0x978] sm:$0xff]
    %v5008 = vld [vmem:[#allocation16 + $0x980] sm:$0xff]
    %v5009 = vld [vmem:[#allocation16 + $0x988] sm:$0xff]
    %v5010 = vld [vmem:[#allocation16 + $0x990] sm:$0xff]
    %v5011 = vld [vmem:[#allocation16 + $0x998] sm:$0xff]
    %v5012 = vld [vmem:[#allocation16 + $0x9a0] sm:$0xff]
    %v5013 = vld [vmem:[#allocation16 + $0x9a8] sm:$0xff]
    %v5014 = vld [vmem:[#allocation16 + $0x9b0] sm:$0xff]
    %v5015 = vld [vmem:[#allocation16 + $0x9b8] sm:$0xff]
    %v5016 = vld [vmem:[#allocation16 + $0x9c0] sm:$0xff]
    %v5017 = vld [vmem:[#allocation16 + $0x9c8] sm:$0xff]
    %v5018 = vld [vmem:[#allocation16 + $0x9d0] sm:$0xff]
    %v5019 = vld [vmem:[#allocation16 + $0x9d8] sm:$0xff]
    %v5020 = vld [vmem:[#allocation16 + $0x9e0] sm:$0xff]
    %v5021 = vld [vmem:[#allocation16 + $0x9e8] sm:$0xff]
    %v5022 = vld [vmem:[#allocation16 + $0x9f0] sm:$0xff]
    %v5023 = vld [vmem:[#allocation16 + $0x9f8] sm:$0xff]
    %v5024 = vld [vmem:[#allocation16 + $0xa00] sm:$0xff]
    %v5025 = vld [vmem:[#allocation16 + $0xa08] sm:$0xff]
    %v5026 = vld [vmem:[#allocation16 + $0xa10] sm:$0xff]
    %v5027 = vld [vmem:[#allocation16 + $0xa18] sm:$0xff]
    %v5028 = vld [vmem:[#allocation16 + $0xa20] sm:$0xff]
    %v5029 = vld [vmem:[#allocation16 + $0xa28] sm:$0xff]
    %v5030 = vld [vmem:[#allocation16 + $0xa30] sm:$0xff]
    %v5031 = vld [vmem:[#allocation16 + $0xa38] sm:$0xff]
    %v5032 = vld [vmem:[#allocation16 + $0xa40] sm:$0xff]
    %v5033 = vld [vmem:[#allocation16 + $0xa48] sm:$0xff]
    %v5034 = vld [vmem:[#allocation16 + $0xa50] sm:$0xff]
    %v5035 = vld [vmem:[#allocation16 + $0xa58] sm:$0xff]
    %v5036 = vld [vmem:[#allocation16 + $0xa60] sm:$0xff]
    %v5037 = vld [vmem:[#allocation16 + $0xa68] sm:$0xff]
    %v5038 = vld [vmem:[#allocation16 + $0xa70] sm:$0xff]
    %v5039 = vld [vmem:[#allocation16 + $0xa78] sm:$0xff]
    %v5040 = vld [vmem:[#allocation16 + $0xa80] sm:$0xff]
    %v5041 = vld [vmem:[#allocation16 + $0xa88] sm:$0xff]
    %v5042 = vld [vmem:[#allocation16 + $0xa90] sm:$0xff]
    %v5043 = vld [vmem:[#allocation16 + $0xa98] sm:$0xff]
    %v5044 = vld [vmem:[#allocation16 + $0xaa0] sm:$0xff]
    %v5045 = vld [vmem:[#allocation16 + $0xaa8] sm:$0xff]
    %v5046 = vld [vmem:[#allocation16 + $0xab0] sm:$0xff]
    %v5047 = vld [vmem:[#allocation16 + $0xab8] sm:$0xff]
    %v5048 = vld [vmem:[#allocation16 + $0xac0] sm:$0xff]
    %v5049 = vld [vmem:[#allocation16 + $0xac8] sm:$0xff]
    %v5050 = vld [vmem:[#allocation16 + $0xad0] sm:$0xff]
    %v5051 = vld [vmem:[#allocation16 + $0xad8] sm:$0xff]
    %v5052 = vld [vmem:[#allocation16 + $0xae0] sm:$0xff]
    %v5053 = vld [vmem:[#allocation16 + $0xae8] sm:$0xff]
    %v5054 = vld [vmem:[#allocation16 + $0xaf0] sm:$0xff]
    %v5055 = vld [vmem:[#allocation16 + $0xaf8] sm:$0xff]
    %v5056 = vld [vmem:[#allocation16 + $0xb00] sm:$0xff]
    %v5057 = vld [vmem:[#allocation16 + $0xb08] sm:$0xff]
    %v5058 = vld [vmem:[#allocation16 + $0xb10] sm:$0xff]
    %v5059 = vld [vmem:[#allocation16 + $0xb18] sm:$0xff]
    %v5060 = vld [vmem:[#allocation16 + $0xb20] sm:$0xff]
    %v5061 = vld [vmem:[#allocation16 + $0xb28] sm:$0xff]
    %v5062 = vld [vmem:[#allocation16 + $0xb30] sm:$0xff]
    %v5063 = vld [vmem:[#allocation16 + $0xb38] sm:$0xff]
    %v5064 = vld [vmem:[#allocation16 + $0xb40] sm:$0xff]
    %v5065 = vld [vmem:[#allocation16 + $0xb48] sm:$0xff]
    %v5066 = vld [vmem:[#allocation16 + $0xb50] sm:$0xff]
    %v5067 = vld [vmem:[#allocation16 + $0xb58] sm:$0xff]
    %v5068 = vld [vmem:[#allocation16 + $0xb60] sm:$0xff]
    %v5069 = vld [vmem:[#allocation16 + $0xb68] sm:$0xff]
    %v5070 = vld [vmem:[#allocation16 + $0xb70] sm:$0xff]
    %v5071 = vld [vmem:[#allocation16 + $0xb78] sm:$0xff]
    %v5072 = vld [vmem:[#allocation16 + $0xb80] sm:$0xff]
    %v5073 = vld [vmem:[#allocation16 + $0xb88] sm:$0xff]
    %v5074 = vld [vmem:[#allocation16 + $0xb90] sm:$0xff]
    %v5075 = vld [vmem:[#allocation16 + $0xb98] sm:$0xff]
    %v5076 = vld [vmem:[#allocation16 + $0xba0] sm:$0xff]
    %v5077 = vld [vmem:[#allocation16 + $0xba8] sm:$0xff]
    %v5078 = vld [vmem:[#allocation16 + $0xbb0] sm:$0xff]
    %v5079 = vld [vmem:[#allocation16 + $0xbb8] sm:$0xff]
    %v5080 = vld [vmem:[#allocation16 + $0xbc0] sm:$0xff]
    %v5081 = vld [vmem:[#allocation16 + $0xbc8] sm:$0xff]
    %v5082 = vld [vmem:[#allocation16 + $0xbd0] sm:$0xff]
    %v5083 = vld [vmem:[#allocation16 + $0xbd8] sm:$0xff]
    %v5084 = vld [vmem:[#allocation16 + $0xbe0] sm:$0xff]
    %v5085 = vld [vmem:[#allocation16 + $0xbe8] sm:$0xff]
    %v5086 = vld [vmem:[#allocation16 + $0xbf0] sm:$0xff]
    %v5087 = vld [vmem:[#allocation16 + $0xbf8] sm:$0xff]
    %v5088 = vld [vmem:[#allocation16 + $0xc00] sm:$0xff]
    %v5089 = vld [vmem:[#allocation16 + $0xc08] sm:$0xff]
    %v5090 = vld [vmem:[#allocation16 + $0xc10] sm:$0xff]
    %v5091 = vld [vmem:[#allocation16 + $0xc18] sm:$0xff]
    %v5092 = vld [vmem:[#allocation16 + $0xc20] sm:$0xff]
    %v5093 = vld [vmem:[#allocation16 + $0xc28] sm:$0xff]
    %v5094 = vld [vmem:[#allocation16 + $0xc30] sm:$0xff]
    %v5095 = vld [vmem:[#allocation16 + $0xc38] sm:$0xff]
    %v5096 = vld [vmem:[#allocation16 + $0xc40] sm:$0xff]
    %v5097 = vld [vmem:[#allocation16 + $0xc48] sm:$0xff]
    %v5098 = vld [vmem:[#allocation16 + $0xc50] sm:$0xff]
    %v5099 = vld [vmem:[#allocation16 + $0xc58] sm:$0xff]
    %v5100 = vld [vmem:[#allocation16 + $0xc60] sm:$0xff]
    %v5101 = vld [vmem:[#allocation16 + $0xc68] sm:$0xff]
    %v5102 = vld [vmem:[#allocation16 + $0xc70] sm:$0xff]
    %v5103 = vld [vmem:[#allocation16 + $0xc78] sm:$0xff]
    %v5104 = vld [vmem:[#allocation16 + $0xc80] sm:$0xff]
    %v5105 = vld [vmem:[#allocation16 + $0xc88] sm:$0xff]
    %v5106 = vld [vmem:[#allocation16 + $0xc90] sm:$0xff]
    %v5107 = vld [vmem:[#allocation16 + $0xc98] sm:$0xff]
    %v5108 = vld [vmem:[#allocation16 + $0xca0] sm:$0xff]
    %v5109 = vld [vmem:[#allocation16 + $0xca8] sm:$0xff]
    %v5110 = vld [vmem:[#allocation16 + $0xcb0] sm:$0xff]
    %v5111 = vld [vmem:[#allocation16 + $0xcb8] sm:$0xff]
    %v5112 = vld [vmem:[#allocation16 + $0xcc0] sm:$0xff]
    %v5113 = vld [vmem:[#allocation16 + $0xcc8] sm:$0xff]
    %v5114 = vld [vmem:[#allocation16 + $0xcd0] sm:$0xff]
    %v5115 = vld [vmem:[#allocation16 + $0xcd8] sm:$0xff]
    %v5116 = vld [vmem:[#allocation16 + $0xce0] sm:$0xff]
    %v5117 = vld [vmem:[#allocation16 + $0xce8] sm:$0xff]
    %v5118 = vld [vmem:[#allocation16 + $0xcf0] sm:$0xff]
    %v5119 = vld [vmem:[#allocation16 + $0xcf8] sm:$0xff]
    %v5120 = vld [vmem:[#allocation16 + $0xd00] sm:$0xff]
    %v5121 = vld [vmem:[#allocation16 + $0xd08] sm:$0xff]
    %v5122 = vld [vmem:[#allocation16 + $0xd10] sm:$0xff]
    %v5123 = vld [vmem:[#allocation16 + $0xd18] sm:$0xff]
    %v5124 = vld [vmem:[#allocation16 + $0xd20] sm:$0xff]
    %v5125 = vld [vmem:[#allocation16 + $0xd28] sm:$0xff]
    %v5126 = vld [vmem:[#allocation16 + $0xd30] sm:$0xff]
    %v5127 = vld [vmem:[#allocation16 + $0xd38] sm:$0xff]
    %v5128 = vld [vmem:[#allocation16 + $0xd40] sm:$0xff]
    %v5129 = vld [vmem:[#allocation16 + $0xd48] sm:$0xff]
    %v5130 = vld [vmem:[#allocation16 + $0xd50] sm:$0xff]
    %v5131 = vld [vmem:[#allocation16 + $0xd58] sm:$0xff]
    %v5132 = vld [vmem:[#allocation16 + $0xd60] sm:$0xff]
    %v5133 = vld [vmem:[#allocation16 + $0xd68] sm:$0xff]
    %v5134 = vld [vmem:[#allocation16 + $0xd70] sm:$0xff]
    %v5135 = vld [vmem:[#allocation16 + $0xd78] sm:$0xff]
    %v5136 = vld [vmem:[#allocation16 + $0xd80] sm:$0xff]
    %v5137 = vld [vmem:[#allocation16 + $0xd88] sm:$0xff]
    %v5138 = vld [vmem:[#allocation16 + $0xd90] sm:$0xff]
    %v5139 = vld [vmem:[#allocation16 + $0xd98] sm:$0xff]
    %v5140 = vld [vmem:[#allocation16 + $0xda0] sm:$0xff]
    %v5141 = vld [vmem:[#allocation16 + $0xda8] sm:$0xff]
    %v5142 = vld [vmem:[#allocation16 + $0xdb0] sm:$0xff]
    %v5143 = vld [vmem:[#allocation16 + $0xdb8] sm:$0xff]
    %v5144 = vld [vmem:[#allocation16 + $0xdc0] sm:$0xff]
    %v5145 = vld [vmem:[#allocation16 + $0xdc8] sm:$0xff]
    %v5146 = vld [vmem:[#allocation16 + $0xdd0] sm:$0xff]
    %v5147 = vld [vmem:[#allocation16 + $0xdd8] sm:$0xff]
    %v5148 = vld [vmem:[#allocation16 + $0xde0] sm:$0xff]
    %v5149 = vld [vmem:[#allocation16 + $0xde8] sm:$0xff]
    %v5150 = vld [vmem:[#allocation16 + $0xdf0] sm:$0xff]
    %v5151 = vld [vmem:[#allocation16 + $0xdf8] sm:$0xff]
    %v5152 = vld [vmem:[#allocation16 + $0xe00] sm:$0xff]
    %v5153 = vld [vmem:[#allocation16 + $0xe08] sm:$0xff]
    %v5154 = vld [vmem:[#allocation16 + $0xe10] sm:$0xff]
    %v5155 = vld [vmem:[#allocation16 + $0xe18] sm:$0xff]
    %v5156 = vld [vmem:[#allocation16 + $0xe20] sm:$0xff]
    %v5157 = vld [vmem:[#allocation16 + $0xe28] sm:$0xff]
    %v5158 = vld [vmem:[#allocation16 + $0xe30] sm:$0xff]
    %v5159 = vld [vmem:[#allocation16 + $0xe38] sm:$0xff]
    %v5160 = vld [vmem:[#allocation16 + $0xe40] sm:$0xff]
    %v5161 = vld [vmem:[#allocation16 + $0xe48] sm:$0xff]
    %v5162 = vld [vmem:[#allocation16 + $0xe50] sm:$0xff]
    %v5163 = vld [vmem:[#allocation16 + $0xe58] sm:$0xff]
    %v5164 = vld [vmem:[#allocation16 + $0xe60] sm:$0xff]
    %v5165 = vld [vmem:[#allocation16 + $0xe68] sm:$0xff]
    %v5166 = vld [vmem:[#allocation16 + $0xe70] sm:$0xff]
    %v5167 = vld [vmem:[#allocation16 + $0xe78] sm:$0xff]
    %v5168 = vld [vmem:[#allocation16 + $0xe80] sm:$0xff]
    %v5169 = vld [vmem:[#allocation16 + $0xe88] sm:$0xff]
    %v5170 = vld [vmem:[#allocation16 + $0xe90] sm:$0xff]
    %v5171 = vld [vmem:[#allocation16 + $0xe98] sm:$0xff]
    %v5172 = vld [vmem:[#allocation16 + $0xea0] sm:$0xff]
    %v5173 = vld [vmem:[#allocation16 + $0xea8] sm:$0xff]
    %v5174 = vld [vmem:[#allocation16 + $0xeb0] sm:$0xff]
    %v5175 = vld [vmem:[#allocation16 + $0xeb8] sm:$0xff]
    %v5176 = vld [vmem:[#allocation16 + $0xec0] sm:$0xff]
    %v5177 = vld [vmem:[#allocation16 + $0xec8] sm:$0xff]
    %v5178 = vld [vmem:[#allocation16 + $0xed0] sm:$0xff]
    %v5179 = vld [vmem:[#allocation16 + $0xed8] sm:$0xff]
    %v5180 = vld [vmem:[#allocation16 + $0xee0] sm:$0xff]
    %v5181 = vld [vmem:[#allocation16 + $0xee8] sm:$0xff]
    %v5182 = vld [vmem:[#allocation16 + $0xef0] sm:$0xff]
    %v5183 = vld [vmem:[#allocation16 + $0xef8] sm:$0xff]
    %v5184 = vld [vmem:[#allocation16 + $0xf00] sm:$0xff]
    %v5185 = vld [vmem:[#allocation16 + $0xf08] sm:$0xff]
    %v5186 = vld [vmem:[#allocation16 + $0xf10] sm:$0xff]
    %v5187 = vld [vmem:[#allocation16 + $0xf18] sm:$0xff]
    %v5188 = vld [vmem:[#allocation16 + $0xf20] sm:$0xff]
    %v5189 = vld [vmem:[#allocation16 + $0xf28] sm:$0xff]
    %v5190 = vld [vmem:[#allocation16 + $0xf30] sm:$0xff]
    %v5191 = vld [vmem:[#allocation16 + $0xf38] sm:$0xff]
    %v5192 = vld [vmem:[#allocation16 + $0xf40] sm:$0xff]
    %v5193 = vld [vmem:[#allocation16 + $0xf48] sm:$0xff]
    %v5194 = vld [vmem:[#allocation16 + $0xf50] sm:$0xff]
    %v5195 = vld [vmem:[#allocation16 + $0xf58] sm:$0xff]
    %v5196 = vld [vmem:[#allocation16 + $0xf60] sm:$0xff]
    %v5197 = vld [vmem:[#allocation16 + $0xf68] sm:$0xff]
    %v5198 = vld [vmem:[#allocation16 + $0xf70] sm:$0xff]
    %v5199 = vld [vmem:[#allocation16 + $0xf78] sm:$0xff]
    %v5200 = vld [vmem:[#allocation16 + $0xf80] sm:$0xff]
    %v5201 = vld [vmem:[#allocation16 + $0xf88] sm:$0xff]
    %v5202 = vld [vmem:[#allocation16 + $0xf90] sm:$0xff]
    %v5203 = vld [vmem:[#allocation16 + $0xf98] sm:$0xff]
    %v5204 = vld [vmem:[#allocation16 + $0xfa0] sm:$0xff]
    %v5205 = vld [vmem:[#allocation16 + $0xfa8] sm:$0xff]
    %v5206 = vld [vmem:[#allocation16 + $0xfb0] sm:$0xff]
    %v5207 = vld [vmem:[#allocation16 + $0xfb8] sm:$0xff]
    %v5208 = vld [vmem:[#allocation16 + $0xfc0] sm:$0xff]
    %v5209 = vld [vmem:[#allocation16 + $0xfc8] sm:$0xff]
    %v5210 = vld [vmem:[#allocation16 + $0xfd0] sm:$0xff]
    %v5211 = vld [vmem:[#allocation16 + $0xfd8] sm:$0xff]
    %v5212 = vld [vmem:[#allocation16 + $0xfe0] sm:$0xff]
    %v5213 = vld [vmem:[#allocation16 + $0xfe8] sm:$0xff]
    %v5214 = vld [vmem:[#allocation16 + $0xff0] sm:$0xff]
    %v5215 = vld [vmem:[#allocation16 + $0xff8] sm:$0xff]
    %v5216 = vld [vmem:[#allocation16 + $0x1000] sm:$0xff]
    %v5217 = vld [vmem:[#allocation16 + $0x1008] sm:$0xff]
    %v5218 = vld [vmem:[#allocation16 + $0x1010] sm:$0xff]
    %v5219 = vld [vmem:[#allocation16 + $0x1018] sm:$0xff]
    %v5220 = vld [vmem:[#allocation16 + $0x1020] sm:$0xff]
    %v5221 = vld [vmem:[#allocation16 + $0x1028] sm:$0xff]
    %v5222 = vld [vmem:[#allocation16 + $0x1030] sm:$0xff]
    %v5223 = vld [vmem:[#allocation16 + $0x1038] sm:$0xff]
    %v5224 = vld [vmem:[#allocation16 + $0x1040] sm:$0xff]
    %v5225 = vld [vmem:[#allocation16 + $0x1048] sm:$0xff]
    %v5226 = vld [vmem:[#allocation16 + $0x1050] sm:$0xff]
    %v5227 = vld [vmem:[#allocation16 + $0x1058] sm:$0xff]
    %v5228 = vld [vmem:[#allocation16 + $0x1060] sm:$0xff]
    %v5229 = vld [vmem:[#allocation16 + $0x1068] sm:$0xff]
    %v5230 = vld [vmem:[#allocation16 + $0x1070] sm:$0xff]
    %v5231 = vld [vmem:[#allocation16 + $0x1078] sm:$0xff]
    %v5232 = vld [vmem:[#allocation16 + $0x1080] sm:$0xff]
    %v5233 = vld [vmem:[#allocation16 + $0x1088] sm:$0xff]
    %v5234 = vld [vmem:[#allocation16 + $0x1090] sm:$0xff]
    %v5235 = vld [vmem:[#allocation16 + $0x1098] sm:$0xff]
    %v5236 = vld [vmem:[#allocation16 + $0x10a0] sm:$0xff]
    %v5237 = vld [vmem:[#allocation16 + $0x10a8] sm:$0xff]
    %v5238 = vld [vmem:[#allocation16 + $0x10b0] sm:$0xff]
    %v5239 = vld [vmem:[#allocation16 + $0x10b8] sm:$0xff]
    %v5240 = vld [vmem:[#allocation16 + $0x10c0] sm:$0xff]
    %v5241 = vld [vmem:[#allocation16 + $0x10c8] sm:$0xff]
    %v5242 = vld [vmem:[#allocation16 + $0x10d0] sm:$0xff]
    %v5243 = vld [vmem:[#allocation16 + $0x10d8] sm:$0xff]
    %v5244 = vld [vmem:[#allocation16 + $0x10e0] sm:$0xff]
    %v5245 = vld [vmem:[#allocation16 + $0x10e8] sm:$0xff]
    %v5246 = vld [vmem:[#allocation16 + $0x10f0] sm:$0xff]
    %v5247 = vld [vmem:[#allocation16 + $0x10f8] sm:$0xff]
    %v5248 = vld [vmem:[#allocation16 + $0x1100] sm:$0xff]
    %v5249 = vld [vmem:[#allocation16 + $0x1108] sm:$0xff]
    %v5250 = vld [vmem:[#allocation16 + $0x1110] sm:$0xff]
    %v5251 = vld [vmem:[#allocation16 + $0x1118] sm:$0xff]
    %v5252 = vld [vmem:[#allocation16 + $0x1120] sm:$0xff]
    %v5253 = vld [vmem:[#allocation16 + $0x1128] sm:$0xff]
    %v5254 = vld [vmem:[#allocation16 + $0x1130] sm:$0xff]
    %v5255 = vld [vmem:[#allocation16 + $0x1138] sm:$0xff]
    %v5256 = vld [vmem:[#allocation16 + $0x1140] sm:$0xff]
    %v5257 = vld [vmem:[#allocation16 + $0x1148] sm:$0xff]
    %v5258 = vld [vmem:[#allocation16 + $0x1150] sm:$0xff]
    %v5259 = vld [vmem:[#allocation16 + $0x1158] sm:$0xff]
    %v5260 = vld [vmem:[#allocation16 + $0x1160] sm:$0xff]
    %v5261 = vld [vmem:[#allocation16 + $0x1168] sm:$0xff]
    %v5262 = vld [vmem:[#allocation16 + $0x1170] sm:$0xff]
    %v5263 = vld [vmem:[#allocation16 + $0x1178] sm:$0xff]
    %v5264 = vld [vmem:[#allocation16 + $0x1180] sm:$0xff]
    %v5265 = vld [vmem:[#allocation16 + $0x1188] sm:$0xff]
    %v5266 = vld [vmem:[#allocation16 + $0x1190] sm:$0xff]
    %v5267 = vld [vmem:[#allocation16 + $0x1198] sm:$0xff]
    %v5268 = vld [vmem:[#allocation16 + $0x11a0] sm:$0xff]
    %v5269 = vld [vmem:[#allocation16 + $0x11a8] sm:$0xff]
    %v5270 = vld [vmem:[#allocation16 + $0x11b0] sm:$0xff]
    %v5271 = vld [vmem:[#allocation16 + $0x11b8] sm:$0xff]
    %v5272 = vld [vmem:[#allocation16 + $0x11c0] sm:$0xff]
    %v5273 = vld [vmem:[#allocation16 + $0x11c8] sm:$0xff]
    %v5274 = vld [vmem:[#allocation16 + $0x11d0] sm:$0xff]
    %v5275 = vld [vmem:[#allocation16 + $0x11d8] sm:$0xff]
    %v5276 = vld [vmem:[#allocation16 + $0x11e0] sm:$0xff]
    %v5277 = vld [vmem:[#allocation16 + $0x11e8] sm:$0xff]
    %v5278 = vld [vmem:[#allocation16 + $0x11f0] sm:$0xff]
    %v5279 = vld [vmem:[#allocation16 + $0x11f8] sm:$0xff]
    %v5280 = vld [vmem:[#allocation16 + $0x1200] sm:$0xff]
    %v5281 = vld [vmem:[#allocation16 + $0x1208] sm:$0xff]
    %v5282 = vld [vmem:[#allocation16 + $0x1210] sm:$0xff]
    %v5283 = vld [vmem:[#allocation16 + $0x1218] sm:$0xff]
    %v5284 = vld [vmem:[#allocation16 + $0x1220] sm:$0xff]
    %v5285 = vld [vmem:[#allocation16 + $0x1228] sm:$0xff]
    %v5286 = vld [vmem:[#allocation16 + $0x1230] sm:$0xff]
    %v5287 = vld [vmem:[#allocation16 + $0x1238] sm:$0xff]
    %v5288 = vld [vmem:[#allocation16 + $0x1240] sm:$0xff]
    %v5289 = vld [vmem:[#allocation16 + $0x1248] sm:$0xff]
    %v5290 = vld [vmem:[#allocation16 + $0x1250] sm:$0xff]
    %v5291 = vld [vmem:[#allocation16 + $0x1258] sm:$0xff]
    %v5292 = vld [vmem:[#allocation16 + $0x1260] sm:$0xff]
    %v5293 = vld [vmem:[#allocation16 + $0x1268] sm:$0xff]
    %v5294 = vld [vmem:[#allocation16 + $0x1270] sm:$0xff]
    %v5295 = vld [vmem:[#allocation16 + $0x1278] sm:$0xff]
    %v5296 = vld [vmem:[#allocation16 + $0x1280] sm:$0xff]
    %v5297 = vld [vmem:[#allocation16 + $0x1288] sm:$0xff]
    %v5298 = vld [vmem:[#allocation16 + $0x1290] sm:$0xff]
    %v5299 = vld [vmem:[#allocation16 + $0x1298] sm:$0xff]
    %v5300 = vld [vmem:[#allocation16 + $0x12a0] sm:$0xff]
    %v5301 = vld [vmem:[#allocation16 + $0x12a8] sm:$0xff]
    %v5302 = vld [vmem:[#allocation16 + $0x12b0] sm:$0xff]
    %v5303 = vld [vmem:[#allocation16 + $0x12b8] sm:$0xff]
    %v5304 = vld [vmem:[#allocation16 + $0x12c0] sm:$0xff]
    %v5305 = vld [vmem:[#allocation16 + $0x12c8] sm:$0xff]
    %v5306 = vld [vmem:[#allocation16 + $0x12d0] sm:$0xff]
    %v5307 = vld [vmem:[#allocation16 + $0x12d8] sm:$0xff]
    %v5308 = vld [vmem:[#allocation16 + $0x12e0] sm:$0xff]
    %v5309 = vld [vmem:[#allocation16 + $0x12e8] sm:$0xff]
    %v5310 = vld [vmem:[#allocation16 + $0x12f0] sm:$0xff]
    %v5311 = vld [vmem:[#allocation16 + $0x12f8] sm:$0xff]
    %v5312 = vld [vmem:[#allocation16 + $0x1300] sm:$0xff]
    %v5313 = vld [vmem:[#allocation16 + $0x1308] sm:$0xff]
    %v5314 = vld [vmem:[#allocation16 + $0x1310] sm:$0xff]
    %v5315 = vld [vmem:[#allocation16 + $0x1318] sm:$0xff]
    %v5316 = vld [vmem:[#allocation16 + $0x1320] sm:$0xff]
    %v5317 = vld [vmem:[#allocation16 + $0x1328] sm:$0xff]
    %v5318 = vld [vmem:[#allocation16 + $0x1330] sm:$0xff]
    %v5319 = vld [vmem:[#allocation16 + $0x1338] sm:$0xff]
    %v5320 = vld [vmem:[#allocation16 + $0x1340] sm:$0xff]
    %v5321 = vld [vmem:[#allocation16 + $0x1348] sm:$0xff]
    %v5322 = vld [vmem:[#allocation16 + $0x1350] sm:$0xff]
    %v5323 = vld [vmem:[#allocation16 + $0x1358] sm:$0xff]
    %v5324 = vld [vmem:[#allocation16 + $0x1360] sm:$0xff]
    %v5325 = vld [vmem:[#allocation16 + $0x1368] sm:$0xff]
    %v5326 = vld [vmem:[#allocation16 + $0x1370] sm:$0xff]
    %v5327 = vld [vmem:[#allocation16 + $0x1378] sm:$0xff]
    %v5328 = vld [vmem:[#allocation16 + $0x1380] sm:$0xff]
    %v5329 = vld [vmem:[#allocation16 + $0x1388] sm:$0xff]
    %v5330 = vld [vmem:[#allocation16 + $0x1390] sm:$0xff]
    %v5331 = vld [vmem:[#allocation16 + $0x1398] sm:$0xff]
    %v5332 = vld [vmem:[#allocation16 + $0x13a0] sm:$0xff]
    %v5333 = vld [vmem:[#allocation16 + $0x13a8] sm:$0xff]
    %v5334 = vld [vmem:[#allocation16 + $0x13b0] sm:$0xff]
    %v5335 = vld [vmem:[#allocation16 + $0x13b8] sm:$0xff]
    %v5336 = vld [vmem:[#allocation16 + $0x13c0] sm:$0xff]
    %v5337 = vld [vmem:[#allocation16 + $0x13c8] sm:$0xff]
    %v5338 = vld [vmem:[#allocation16 + $0x13d0] sm:$0xff]
    %v5339 = vld [vmem:[#allocation16 + $0x13d8] sm:$0xff]
    %v5340 = vld [vmem:[#allocation16 + $0x13e0] sm:$0xff]
    %v5341 = vld [vmem:[#allocation16 + $0x13e8] sm:$0xff]
    %v5342 = vld [vmem:[#allocation16 + $0x13f0] sm:$0xff]
    %v5343 = vld [vmem:[#allocation16 + $0x13f8] sm:$0xff]
    %v5344 = vld [vmem:[#allocation16 + $0x1400] sm:$0xff]
    %v5345 = vld [vmem:[#allocation16 + $0x1408] sm:$0xff]
    %v5346 = vld [vmem:[#allocation16 + $0x1410] sm:$0xff]
    %v5347 = vld [vmem:[#allocation16 + $0x1418] sm:$0xff]
    %v5348 = vld [vmem:[#allocation16 + $0x1420] sm:$0xff]
    %v5349 = vld [vmem:[#allocation16 + $0x1428] sm:$0xff]
    %v5350 = vld [vmem:[#allocation16 + $0x1430] sm:$0xff]
    %v5351 = vld [vmem:[#allocation16 + $0x1438] sm:$0xff]
    %v5352 = vld [vmem:[#allocation16 + $0x1440] sm:$0xff]
    %v5353 = vld [vmem:[#allocation16 + $0x1448] sm:$0xff]
    %v5354 = vld [vmem:[#allocation16 + $0x1450] sm:$0xff]
    %v5355 = vld [vmem:[#allocation16 + $0x1458] sm:$0xff]
    %v5356 = vld [vmem:[#allocation16 + $0x1460] sm:$0xff]
    %v5357 = vld [vmem:[#allocation16 + $0x1468] sm:$0xff]
    %v5358 = vld [vmem:[#allocation16 + $0x1470] sm:$0xff]
    %v5359 = vld [vmem:[#allocation16 + $0x1478] sm:$0xff]
    %v5360 = vld [vmem:[#allocation16 + $0x1480] sm:$0xff]
    %v5361 = vld [vmem:[#allocation16 + $0x1488] sm:$0xff]
    %v5362 = vld [vmem:[#allocation16 + $0x1490] sm:$0xff]
    %v5363 = vld [vmem:[#allocation16 + $0x1498] sm:$0xff]
    %v5364 = vld [vmem:[#allocation16 + $0x14a0] sm:$0xff]
    %v5365 = vld [vmem:[#allocation16 + $0x14a8] sm:$0xff]
    %v5366 = vld [vmem:[#allocation16 + $0x14b0] sm:$0xff]
    %v5367 = vld [vmem:[#allocation16 + $0x14b8] sm:$0xff]
    %v5368 = vld [vmem:[#allocation16 + $0x14c0] sm:$0xff]
    %v5369 = vld [vmem:[#allocation16 + $0x14c8] sm:$0xff]
    %v5370 = vld [vmem:[#allocation16 + $0x14d0] sm:$0xff]
    %v5371 = vld [vmem:[#allocation16 + $0x14d8] sm:$0xff]
    %v5372 = vld [vmem:[#allocation16 + $0x14e0] sm:$0xff]
    %v5373 = vld [vmem:[#allocation16 + $0x14e8] sm:$0xff]
    %v5374 = vld [vmem:[#allocation16 + $0x14f0] sm:$0xff]
    %v5375 = vld [vmem:[#allocation16 + $0x14f8] sm:$0xff]
    %v5376 = vld [vmem:[#allocation16 + $0x1500] sm:$0xff]
    %v5377 = vld [vmem:[#allocation16 + $0x1508] sm:$0xff]
    %v5378 = vld [vmem:[#allocation16 + $0x1510] sm:$0xff]
    %v5379 = vld [vmem:[#allocation16 + $0x1518] sm:$0xff]
    %v5380 = vld [vmem:[#allocation16 + $0x1520] sm:$0xff]
    %v5381 = vld [vmem:[#allocation16 + $0x1528] sm:$0xff]
    %v5382 = vld [vmem:[#allocation16 + $0x1530] sm:$0xff]
    %v5383 = vld [vmem:[#allocation16 + $0x1538] sm:$0xff]
    %v5384 = vld [vmem:[#allocation16 + $0x1540] sm:$0xff]
    %v5385 = vld [vmem:[#allocation16 + $0x1548] sm:$0xff]
    %v5386 = vld [vmem:[#allocation16 + $0x1550] sm:$0xff]
    %v5387 = vld [vmem:[#allocation16 + $0x1558] sm:$0xff]
    %v5388 = vld [vmem:[#allocation16 + $0x1560] sm:$0xff]
    %v5389 = vld [vmem:[#allocation16 + $0x1568] sm:$0xff]
    %v5390 = vld [vmem:[#allocation16 + $0x1570] sm:$0xff]
    %v5391 = vld [vmem:[#allocation16 + $0x1578] sm:$0xff]
    %v5392 = vld [vmem:[#allocation16 + $0x1580] sm:$0xff]
    %v5393 = vld [vmem:[#allocation16 + $0x1588] sm:$0xff]
    %v5394 = vld [vmem:[#allocation16 + $0x1590] sm:$0xff]
    %v5395 = vld [vmem:[#allocation16 + $0x1598] sm:$0xff]
    %v5396 = vld [vmem:[#allocation16 + $0x15a0] sm:$0xff]
    %v5397 = vld [vmem:[#allocation16 + $0x15a8] sm:$0xff]
    %v5398 = vld [vmem:[#allocation16 + $0x15b0] sm:$0xff]
    %v5399 = vld [vmem:[#allocation16 + $0x15b8] sm:$0xff]
    %v5400 = vld [vmem:[#allocation16 + $0x15c0] sm:$0xff]
    %v5401 = vld [vmem:[#allocation16 + $0x15c8] sm:$0xff]
    %v5402 = vld [vmem:[#allocation16 + $0x15d0] sm:$0xff]
    %v5403 = vld [vmem:[#allocation16 + $0x15d8] sm:$0xff]
    %v5404 = vld [vmem:[#allocation16 + $0x15e0] sm:$0xff]
    %v5405 = vld [vmem:[#allocation16 + $0x15e8] sm:$0xff]
    %v5406 = vld [vmem:[#allocation16 + $0x15f0] sm:$0xff]
    %v5407 = vld [vmem:[#allocation16 + $0x15f8] sm:$0xff]
    %v5408 = vld [vmem:[#allocation16 + $0x1600] sm:$0xff]
    %v5409 = vld [vmem:[#allocation16 + $0x1608] sm:$0xff]
    %v5410 = vld [vmem:[#allocation16 + $0x1610] sm:$0xff]
    %v5411 = vld [vmem:[#allocation16 + $0x1618] sm:$0xff]
    %v5412 = vld [vmem:[#allocation16 + $0x1620] sm:$0xff]
    %v5413 = vld [vmem:[#allocation16 + $0x1628] sm:$0xff]
    %v5414 = vld [vmem:[#allocation16 + $0x1630] sm:$0xff]
    %v5415 = vld [vmem:[#allocation16 + $0x1638] sm:$0xff]
    %v5416 = vld [vmem:[#allocation16 + $0x1640] sm:$0xff]
    %v5417 = vld [vmem:[#allocation16 + $0x1648] sm:$0xff]
    %v5418 = vld [vmem:[#allocation16 + $0x1650] sm:$0xff]
    %v5419 = vld [vmem:[#allocation16 + $0x1658] sm:$0xff]
    %v5420 = vld [vmem:[#allocation16 + $0x1660] sm:$0xff]
    %v5421 = vld [vmem:[#allocation16 + $0x1668] sm:$0xff]
    %v5422 = vld [vmem:[#allocation16 + $0x1670] sm:$0xff]
    %v5423 = vld [vmem:[#allocation16 + $0x1678] sm:$0xff]
    %v5424 = vld [vmem:[#allocation16 + $0x1680] sm:$0xff]
    %v5425 = vld [vmem:[#allocation16 + $0x1688] sm:$0xff]
    %v5426 = vld [vmem:[#allocation16 + $0x1690] sm:$0xff]
    %v5427 = vld [vmem:[#allocation16 + $0x1698] sm:$0xff]
    %v5428 = vld [vmem:[#allocation16 + $0x16a0] sm:$0xff]
    %v5429 = vld [vmem:[#allocation16 + $0x16a8] sm:$0xff]
    %v5430 = vld [vmem:[#allocation16 + $0x16b0] sm:$0xff]
    %v5431 = vld [vmem:[#allocation16 + $0x16b8] sm:$0xff]
    %v5432 = vld [vmem:[#allocation16 + $0x16c0] sm:$0xff]
    %v5433 = vld [vmem:[#allocation16 + $0x16c8] sm:$0xff]
    %v5434 = vld [vmem:[#allocation16 + $0x16d0] sm:$0xff]
    %v5435 = vld [vmem:[#allocation16 + $0x16d8] sm:$0xff]
    %v5436 = vld [vmem:[#allocation16 + $0x16e0] sm:$0xff]
    %v5437 = vld [vmem:[#allocation16 + $0x16e8] sm:$0xff]
    %v5438 = vld [vmem:[#allocation16 + $0x16f0] sm:$0xff]
    %v5439 = vld [vmem:[#allocation16 + $0x16f8] sm:$0xff]
    %v5440 = vld [vmem:[#allocation16 + $0x1700] sm:$0xff]
    %v5441 = vld [vmem:[#allocation16 + $0x1708] sm:$0xff]
    %v5442 = vld [vmem:[#allocation16 + $0x1710] sm:$0xff]
    %v5443 = vld [vmem:[#allocation16 + $0x1718] sm:$0xff]
    %v5444 = vld [vmem:[#allocation16 + $0x1720] sm:$0xff]
    %v5445 = vld [vmem:[#allocation16 + $0x1728] sm:$0xff]
    %v5446 = vld [vmem:[#allocation16 + $0x1730] sm:$0xff]
    %v5447 = vld [vmem:[#allocation16 + $0x1738] sm:$0xff]
    %v5448 = vld [vmem:[#allocation16 + $0x1740] sm:$0xff]
    %v5449 = vld [vmem:[#allocation16 + $0x1748] sm:$0xff]
    %v5450 = vld [vmem:[#allocation16 + $0x1750] sm:$0xff]
    %v5451 = vld [vmem:[#allocation16 + $0x1758] sm:$0xff]
    %v5452 = vld [vmem:[#allocation16 + $0x1760] sm:$0xff]
    %v5453 = vld [vmem:[#allocation16 + $0x1768] sm:$0xff]
    %v5454 = vld [vmem:[#allocation16 + $0x1770] sm:$0xff]
    %v5455 = vld [vmem:[#allocation16 + $0x1778] sm:$0xff]
    %v5456 = vld [vmem:[#allocation16 + $0x1780] sm:$0xff]
    %v5457 = vld [vmem:[#allocation16 + $0x1788] sm:$0xff]
    %v5458 = vld [vmem:[#allocation16 + $0x1790] sm:$0xff]
    %v5459 = vld [vmem:[#allocation16 + $0x1798] sm:$0xff]
    %v5460 = vld [vmem:[#allocation16 + $0x17a0] sm:$0xff]
    %v5461 = vld [vmem:[#allocation16 + $0x17a8] sm:$0xff]
    %v5462 = vld [vmem:[#allocation16 + $0x17b0] sm:$0xff]
    %v5463 = vld [vmem:[#allocation16 + $0x17b8] sm:$0xff]
    %v5464 = vld [vmem:[#allocation16 + $0x17c0] sm:$0xff]
    %v5465 = vld [vmem:[#allocation16 + $0x17c8] sm:$0xff]
    %v5466 = vld [vmem:[#allocation16 + $0x17d0] sm:$0xff]
    %v5467 = vld [vmem:[#allocation16 + $0x17d8] sm:$0xff]
    %v5468 = vld [vmem:[#allocation16 + $0x17e0] sm:$0xff]
    %v5469 = vld [vmem:[#allocation16 + $0x17e8] sm:$0xff]
    %v5470 = vld [vmem:[#allocation16 + $0x17f0] sm:$0xff]
    %v5471 = vld [vmem:[#allocation16 + $0x17f8] sm:$0xff]
    %v5472 = vld [vmem:[#allocation16 + $0x1800] sm:$0xff]
    %v5473 = vld [vmem:[#allocation16 + $0x1808] sm:$0xff]
    %v5474 = vld [vmem:[#allocation16 + $0x1810] sm:$0xff]
    %v5475 = vld [vmem:[#allocation16 + $0x1818] sm:$0xff]
    %v5476 = vld [vmem:[#allocation16 + $0x1820] sm:$0xff]
    %v5477 = vld [vmem:[#allocation16 + $0x1828] sm:$0xff]
    %v5478 = vld [vmem:[#allocation16 + $0x1830] sm:$0xff]
    %v5479 = vld [vmem:[#allocation16 + $0x1838] sm:$0xff]
    %v5480 = vld [vmem:[#allocation16 + $0x1840] sm:$0xff]
    %v5481 = vld [vmem:[#allocation16 + $0x1848] sm:$0xff]
    %v5482 = vld [vmem:[#allocation16 + $0x1850] sm:$0xff]
    %v5483 = vld [vmem:[#allocation16 + $0x1858] sm:$0xff]
    %v5484 = vld [vmem:[#allocation16 + $0x1860] sm:$0xff]
    %v5485 = vld [vmem:[#allocation16 + $0x1868] sm:$0xff]
    %v5486 = vld [vmem:[#allocation16 + $0x1870] sm:$0xff]
    %v5487 = vld [vmem:[#allocation16 + $0x1878] sm:$0xff]
    %v5488 = vld [vmem:[#allocation16 + $0x1880] sm:$0xff]
    %v5489 = vld [vmem:[#allocation16 + $0x1888] sm:$0xff]
    %v5490 = vld [vmem:[#allocation16 + $0x1890] sm:$0xff]
    %v5491 = vld [vmem:[#allocation16 + $0x1898] sm:$0xff]
    %v5492 = vld [vmem:[#allocation16 + $0x18a0] sm:$0xff]
    %v5493 = vld [vmem:[#allocation16 + $0x18a8] sm:$0xff]
    %v5494 = vld [vmem:[#allocation16 + $0x18b0] sm:$0xff]
    %v5495 = vld [vmem:[#allocation16 + $0x18b8] sm:$0xff]
    %v5496 = vld [vmem:[#allocation16 + $0x18c0] sm:$0xff]
    %v5497 = vld [vmem:[#allocation16 + $0x18c8] sm:$0xff]
    %v5498 = vld [vmem:[#allocation16 + $0x18d0] sm:$0xff]
    %v5499 = vld [vmem:[#allocation16 + $0x18d8] sm:$0xff]
    %v5500 = vld [vmem:[#allocation16 + $0x18e0] sm:$0xff]
    %v5501 = vld [vmem:[#allocation16 + $0x18e8] sm:$0xff]
    %v5502 = vld [vmem:[#allocation16 + $0x18f0] sm:$0xff]
    %v5503 = vld [vmem:[#allocation16 + $0x18f8] sm:$0xff]
    %v5504 = vld [vmem:[#allocation16 + $0x1900] sm:$0xff]
    %v5505 = vld [vmem:[#allocation16 + $0x1908] sm:$0xff]
    %v5506 = vld [vmem:[#allocation16 + $0x1910] sm:$0xff]
    %v5507 = vld [vmem:[#allocation16 + $0x1918] sm:$0xff]
    %v5508 = vld [vmem:[#allocation16 + $0x1920] sm:$0xff]
    %v5509 = vld [vmem:[#allocation16 + $0x1928] sm:$0xff]
    %v5510 = vld [vmem:[#allocation16 + $0x1930] sm:$0xff]
    %v5511 = vld [vmem:[#allocation16 + $0x1938] sm:$0xff]
    %v5512 = vld [vmem:[#allocation16 + $0x1940] sm:$0xff]
    %v5513 = vld [vmem:[#allocation16 + $0x1948] sm:$0xff]
    %v5514 = vld [vmem:[#allocation16 + $0x1950] sm:$0xff]
    %v5515 = vld [vmem:[#allocation16 + $0x1958] sm:$0xff]
    %v5516 = vld [vmem:[#allocation16 + $0x1960] sm:$0xff]
    %v5517 = vld [vmem:[#allocation16 + $0x1968] sm:$0xff]
    %v5518 = vld [vmem:[#allocation16 + $0x1970] sm:$0xff]
    %v5519 = vld [vmem:[#allocation16 + $0x1978] sm:$0xff]
    %v5520 = vld [vmem:[#allocation16 + $0x1980] sm:$0xff]
    %v5521 = vld [vmem:[#allocation16 + $0x1988] sm:$0xff]
    %v5522 = vld [vmem:[#allocation16 + $0x1990] sm:$0xff]
    %v5523 = vld [vmem:[#allocation16 + $0x1998] sm:$0xff]
    %v5524 = vld [vmem:[#allocation16 + $0x19a0] sm:$0xff]
    %v5525 = vld [vmem:[#allocation16 + $0x19a8] sm:$0xff]
    %v5526 = vld [vmem:[#allocation16 + $0x19b0] sm:$0xff]
    %v5527 = vld [vmem:[#allocation16 + $0x19b8] sm:$0xff]
    %v5528 = vld [vmem:[#allocation16 + $0x19c0] sm:$0xff]
    %v5529 = vld [vmem:[#allocation16 + $0x19c8] sm:$0xff]
    %v5530 = vld [vmem:[#allocation16 + $0x19d0] sm:$0xff]
    %v5531 = vld [vmem:[#allocation16 + $0x19d8] sm:$0xff]
    %v5532 = vld [vmem:[#allocation16 + $0x19e0] sm:$0xff]
    %v5533 = vld [vmem:[#allocation16 + $0x19e8] sm:$0xff]
    %v5534 = vld [vmem:[#allocation16 + $0x19f0] sm:$0xff]
    %v5535 = vld [vmem:[#allocation16 + $0x19f8] sm:$0xff]
    %v5536 = vld [vmem:[#allocation16 + $0x1a00] sm:$0xff]
    %v5537 = vld [vmem:[#allocation16 + $0x1a08] sm:$0xff]
    %v5538 = vld [vmem:[#allocation16 + $0x1a10] sm:$0xff]
    %v5539 = vld [vmem:[#allocation16 + $0x1a18] sm:$0xff]
    %v5540 = vld [vmem:[#allocation16 + $0x1a20] sm:$0xff]
    %v5541 = vld [vmem:[#allocation16 + $0x1a28] sm:$0xff]
    %v5542 = vld [vmem:[#allocation16 + $0x1a30] sm:$0xff]
    %v5543 = vld [vmem:[#allocation16 + $0x1a38] sm:$0xff]
    %v5544 = vld [vmem:[#allocation16 + $0x1a40] sm:$0xff]
    %v5545 = vld [vmem:[#allocation16 + $0x1a48] sm:$0xff]
    %v5546 = vld [vmem:[#allocation16 + $0x1a50] sm:$0xff]
    %v5547 = vld [vmem:[#allocation16 + $0x1a58] sm:$0xff]
    %v5548 = vld [vmem:[#allocation16 + $0x1a60] sm:$0xff]
    %v5549 = vld [vmem:[#allocation16 + $0x1a68] sm:$0xff]
    %v5550 = vld [vmem:[#allocation16 + $0x1a70] sm:$0xff]
    %v5551 = vld [vmem:[#allocation16 + $0x1a78] sm:$0xff]
    %v5552 = vld [vmem:[#allocation16 + $0x1a80] sm:$0xff]
    %v5553 = vld [vmem:[#allocation16 + $0x1a88] sm:$0xff]
    %v5554 = vld [vmem:[#allocation16 + $0x1a90] sm:$0xff]
    %v5555 = vld [vmem:[#allocation16 + $0x1a98] sm:$0xff]
    %v5556 = vld [vmem:[#allocation16 + $0x1aa0] sm:$0xff]
    %v5557 = vld [vmem:[#allocation16 + $0x1aa8] sm:$0xff]
    %v5558 = vld [vmem:[#allocation16 + $0x1ab0] sm:$0xff]
    %v5559 = vld [vmem:[#allocation16 + $0x1ab8] sm:$0xff]
    %v5560 = vld [vmem:[#allocation16 + $0x1ac0] sm:$0xff]
    %v5561 = vld [vmem:[#allocation16 + $0x1ac8] sm:$0xff]
    %v5562 = vld [vmem:[#allocation16 + $0x1ad0] sm:$0xff]
    %v5563 = vld [vmem:[#allocation16 + $0x1ad8] sm:$0xff]
    %v5564 = vld [vmem:[#allocation16 + $0x1ae0] sm:$0xff]
    %v5565 = vld [vmem:[#allocation16 + $0x1ae8] sm:$0xff]
    %v5566 = vld [vmem:[#allocation16 + $0x1af0] sm:$0xff]
    %v5567 = vld [vmem:[#allocation16 + $0x1af8] sm:$0xff]
    %v5568 = vld [vmem:[#allocation16 + $0x1b00] sm:$0xff]
    %v5569 = vld [vmem:[#allocation16 + $0x1b08] sm:$0xff]
    %v5570 = vld [vmem:[#allocation16 + $0x1b10] sm:$0xff]
    %v5571 = vld [vmem:[#allocation16 + $0x1b18] sm:$0xff]
    %v5572 = vld [vmem:[#allocation16 + $0x1b20] sm:$0xff]
    %v5573 = vld [vmem:[#allocation16 + $0x1b28] sm:$0xff]
    %v5574 = vld [vmem:[#allocation16 + $0x1b30] sm:$0xff]
    %v5575 = vld [vmem:[#allocation16 + $0x1b38] sm:$0xff]
    %v5576 = vld [vmem:[#allocation16 + $0x1b40] sm:$0xff]
    %v5577 = vld [vmem:[#allocation16 + $0x1b48] sm:$0xff]
    %v5578 = vld [vmem:[#allocation16 + $0x1b50] sm:$0xff]
    %v5579 = vld [vmem:[#allocation16 + $0x1b58] sm:$0xff]
    %v5580 = vld [vmem:[#allocation16 + $0x1b60] sm:$0xff]
    %v5581 = vld [vmem:[#allocation16 + $0x1b68] sm:$0xff]
    %v5582 = vld [vmem:[#allocation16 + $0x1b70] sm:$0xff]
    %v5583 = vld [vmem:[#allocation16 + $0x1b78] sm:$0xff]
    %v5584 = vld [vmem:[#allocation16 + $0x1b80] sm:$0xff]
    %v5585 = vld [vmem:[#allocation16 + $0x1b88] sm:$0xff]
    %v5586 = vld [vmem:[#allocation16 + $0x1b90] sm:$0xff]
    %v5587 = vld [vmem:[#allocation16 + $0x1b98] sm:$0xff]
    %v5588 = vld [vmem:[#allocation16 + $0x1ba0] sm:$0xff]
    %v5589 = vld [vmem:[#allocation16 + $0x1ba8] sm:$0xff]
    %v5590 = vld [vmem:[#allocation16 + $0x1bb0] sm:$0xff]
    %v5591 = vld [vmem:[#allocation16 + $0x1bb8] sm:$0xff]
    %v5592 = vld [vmem:[#allocation16 + $0x1bc0] sm:$0xff]
    %v5593 = vld [vmem:[#allocation16 + $0x1bc8] sm:$0xff]
    %v5594 = vld [vmem:[#allocation16 + $0x1bd0] sm:$0xff]
    %v5595 = vld [vmem:[#allocation16 + $0x1bd8] sm:$0xff]
    %v5596 = vld [vmem:[#allocation16 + $0x1be0] sm:$0xff]
    %v5597 = vld [vmem:[#allocation16 + $0x1be8] sm:$0xff]
    %v5598 = vld [vmem:[#allocation16 + $0x1bf0] sm:$0xff]
    %v5599 = vld [vmem:[#allocation16 + $0x1bf8] sm:$0xff]
    %v5600 = vld [vmem:[#allocation16 + $0x1c00] sm:$0xff]
    %v5601 = vld [vmem:[#allocation16 + $0x1c08] sm:$0xff]
    %v5602 = vld [vmem:[#allocation16 + $0x1c10] sm:$0xff]
    %v5603 = vld [vmem:[#allocation16 + $0x1c18] sm:$0xff]
    %v5604 = vld [vmem:[#allocation16 + $0x1c20] sm:$0xff]
    %v5605 = vld [vmem:[#allocation16 + $0x1c28] sm:$0xff]
    %v5606 = vld [vmem:[#allocation16 + $0x1c30] sm:$0xff]
    %v5607 = vld [vmem:[#allocation16 + $0x1c38] sm:$0xff]
    %v5608 = vld [vmem:[#allocation16 + $0x1c40] sm:$0xff]
    %v5609 = vld [vmem:[#allocation16 + $0x1c48] sm:$0xff]
    %v5610 = vld [vmem:[#allocation16 + $0x1c50] sm:$0xff]
    %v5611 = vld [vmem:[#allocation16 + $0x1c58] sm:$0xff]
    %v5612 = vld [vmem:[#allocation16 + $0x1c60] sm:$0xff]
    %v5613 = vld [vmem:[#allocation16 + $0x1c68] sm:$0xff]
    %v5614 = vld [vmem:[#allocation16 + $0x1c70] sm:$0xff]
    %v5615 = vld [vmem:[#allocation16 + $0x1c78] sm:$0xff]
    %v5616 = vld [vmem:[#allocation16 + $0x1c80] sm:$0xff]
    %v5617 = vld [vmem:[#allocation16 + $0x1c88] sm:$0xff]
    %v5618 = vld [vmem:[#allocation16 + $0x1c90] sm:$0xff]
    %v5619 = vld [vmem:[#allocation16 + $0x1c98] sm:$0xff]
    %v5620 = vld [vmem:[#allocation16 + $0x1ca0] sm:$0xff]
    %v5621 = vld [vmem:[#allocation16 + $0x1ca8] sm:$0xff]
    %v5622 = vld [vmem:[#allocation16 + $0x1cb0] sm:$0xff]
    %v5623 = vld [vmem:[#allocation16 + $0x1cb8] sm:$0xff]
    %v5624 = vld [vmem:[#allocation16 + $0x1cc0] sm:$0xff]
    %v5625 = vld [vmem:[#allocation16 + $0x1cc8] sm:$0xff]
    %v5626 = vld [vmem:[#allocation16 + $0x1cd0] sm:$0xff]
    %v5627 = vld [vmem:[#allocation16 + $0x1cd8] sm:$0xff]
    %v5628 = vld [vmem:[#allocation16 + $0x1ce0] sm:$0xff]
    %v5629 = vld [vmem:[#allocation16 + $0x1ce8] sm:$0xff]
    %v5630 = vld [vmem:[#allocation16 + $0x1cf0] sm:$0xff]
    %v5631 = vld [vmem:[#allocation16 + $0x1cf8] sm:$0xff]
    %v5632 = vld [vmem:[#allocation16 + $0x1d00] sm:$0xff]
    %v5633 = vld [vmem:[#allocation16 + $0x1d08] sm:$0xff]
    %v5634 = vld [vmem:[#allocation16 + $0x1d10] sm:$0xff]
    %v5635 = vld [vmem:[#allocation16 + $0x1d18] sm:$0xff]
    %v5636 = vld [vmem:[#allocation16 + $0x1d20] sm:$0xff]
    %v5637 = vld [vmem:[#allocation16 + $0x1d28] sm:$0xff]
    %v5638 = vld [vmem:[#allocation16 + $0x1d30] sm:$0xff]
    %v5639 = vld [vmem:[#allocation16 + $0x1d38] sm:$0xff]
    %v5640 = vld [vmem:[#allocation16 + $0x1d40] sm:$0xff]
    %v5641 = vld [vmem:[#allocation16 + $0x1d48] sm:$0xff]
    %v5642 = vld [vmem:[#allocation16 + $0x1d50] sm:$0xff]
    %v5643 = vld [vmem:[#allocation16 + $0x1d58] sm:$0xff]
    %v5644 = vld [vmem:[#allocation16 + $0x1d60] sm:$0xff]
    %v5645 = vld [vmem:[#allocation16 + $0x1d68] sm:$0xff]
    %v5646 = vld [vmem:[#allocation16 + $0x1d70] sm:$0xff]
    %v5647 = vld [vmem:[#allocation16 + $0x1d78] sm:$0xff]
    %v5648 = vld [vmem:[#allocation16 + $0x1d80] sm:$0xff]
    %v5649 = vld [vmem:[#allocation16 + $0x1d88] sm:$0xff]
    %v5650 = vld [vmem:[#allocation16 + $0x1d90] sm:$0xff]
    %v5651 = vld [vmem:[#allocation16 + $0x1d98] sm:$0xff]
    %v5652 = vld [vmem:[#allocation16 + $0x1da0] sm:$0xff]
    %v5653 = vld [vmem:[#allocation16 + $0x1da8] sm:$0xff]
    %v5654 = vld [vmem:[#allocation16 + $0x1db0] sm:$0xff]
    %v5655 = vld [vmem:[#allocation16 + $0x1db8] sm:$0xff]
    %v5656 = vld [vmem:[#allocation16 + $0x1dc0] sm:$0xff]
    %v5657 = vld [vmem:[#allocation16 + $0x1dc8] sm:$0xff]
    %v5658 = vld [vmem:[#allocation16 + $0x1dd0] sm:$0xff]
    %v5659 = vld [vmem:[#allocation16 + $0x1dd8] sm:$0xff]
    %v5660 = vld [vmem:[#allocation16 + $0x1de0] sm:$0xff]
    %v5661 = vld [vmem:[#allocation16 + $0x1de8] sm:$0xff]
    %v5662 = vld [vmem:[#allocation16 + $0x1df0] sm:$0xff]
    %v5663 = vld [vmem:[#allocation16 + $0x1df8] sm:$0xff]
    %v5664 = vld [vmem:[#allocation16 + $0x1e00] sm:$0xff]
    %v5665 = vld [vmem:[#allocation16 + $0x1e08] sm:$0xff]
    %v5666 = vld [vmem:[#allocation16 + $0x1e10] sm:$0xff]
    %v5667 = vld [vmem:[#allocation16 + $0x1e18] sm:$0xff]
    %v5668 = vld [vmem:[#allocation16 + $0x1e20] sm:$0xff]
    %v5669 = vld [vmem:[#allocation16 + $0x1e28] sm:$0xff]
    %v5670 = vld [vmem:[#allocation16 + $0x1e30] sm:$0xff]
    %v5671 = vld [vmem:[#allocation16 + $0x1e38] sm:$0xff]
    %v5672 = vld [vmem:[#allocation16 + $0x1e40] sm:$0xff]
    %v5673 = vld [vmem:[#allocation16 + $0x1e48] sm:$0xff]
    %v5674 = vld [vmem:[#allocation16 + $0x1e50] sm:$0xff]
    %v5675 = vld [vmem:[#allocation16 + $0x1e58] sm:$0xff]
    %v5676 = vld [vmem:[#allocation16 + $0x1e60] sm:$0xff]
    %v5677 = vld [vmem:[#allocation16 + $0x1e68] sm:$0xff]
    %v5678 = vld [vmem:[#allocation16 + $0x1e70] sm:$0xff]
    %v5679 = vld [vmem:[#allocation16 + $0x1e78] sm:$0xff]
    %v5680 = vld [vmem:[#allocation16 + $0x1e80] sm:$0xff]
    %v5681 = vld [vmem:[#allocation16 + $0x1e88] sm:$0xff]
    %v5682 = vld [vmem:[#allocation16 + $0x1e90] sm:$0xff]
    %v5683 = vld [vmem:[#allocation16 + $0x1e98] sm:$0xff]
    %v5684 = vld [vmem:[#allocation16 + $0x1ea0] sm:$0xff]
    %v5685 = vld [vmem:[#allocation16 + $0x1ea8] sm:$0xff]
    %v5686 = vld [vmem:[#allocation16 + $0x1eb0] sm:$0xff]
    %v5687 = vld [vmem:[#allocation16 + $0x1eb8] sm:$0xff]
    %v5688 = vld [vmem:[#allocation16 + $0x1ec0] sm:$0xff]
    %v5689 = vld [vmem:[#allocation16 + $0x1ec8] sm:$0xff]
    %v5690 = vld [vmem:[#allocation16 + $0x1ed0] sm:$0xff]
    %v5691 = vld [vmem:[#allocation16 + $0x1ed8] sm:$0xff]
    %v5692 = vld [vmem:[#allocation16 + $0x1ee0] sm:$0xff]
    %v5693 = vld [vmem:[#allocation16 + $0x1ee8] sm:$0xff]
    %v5694 = vld [vmem:[#allocation16 + $0x1ef0] sm:$0xff]
    %v5695 = vld [vmem:[#allocation16 + $0x1ef8] sm:$0xff]
    %v5696 = vld [vmem:[#allocation16 + $0x1f00] sm:$0xff]
    %v5697 = vld [vmem:[#allocation16 + $0x1f08] sm:$0xff]
    %v5698 = vld [vmem:[#allocation16 + $0x1f10] sm:$0xff]
    %v5699 = vld [vmem:[#allocation16 + $0x1f18] sm:$0xff]
    %v5700 = vld [vmem:[#allocation16 + $0x1f20] sm:$0xff]
    %v5701 = vld [vmem:[#allocation16 + $0x1f28] sm:$0xff]
    %v5702 = vld [vmem:[#allocation16 + $0x1f30] sm:$0xff]
    %v5703 = vld [vmem:[#allocation16 + $0x1f38] sm:$0xff]
    %v5704 = vld [vmem:[#allocation16 + $0x1f40] sm:$0xff]
    %v5705 = vld [vmem:[#allocation16 + $0x1f48] sm:$0xff]
    %v5706 = vld [vmem:[#allocation16 + $0x1f50] sm:$0xff]
    %v5707 = vld [vmem:[#allocation16 + $0x1f58] sm:$0xff]
    %v5708 = vld [vmem:[#allocation16 + $0x1f60] sm:$0xff]
    %v5709 = vld [vmem:[#allocation16 + $0x1f68] sm:$0xff]
    %v5710 = vld [vmem:[#allocation16 + $0x1f70] sm:$0xff]
    %v5711 = vld [vmem:[#allocation16 + $0x1f78] sm:$0xff]
    %v5712 = vld [vmem:[#allocation16 + $0x1f80] sm:$0xff]
    %v5713 = vld [vmem:[#allocation16 + $0x1f88] sm:$0xff]
    %v5714 = vld [vmem:[#allocation16 + $0x1f90] sm:$0xff]
    %v5715 = vld [vmem:[#allocation16 + $0x1f98] sm:$0xff]
    %v5716 = vld [vmem:[#allocation16 + $0x1fa0] sm:$0xff]
    %v5717 = vld [vmem:[#allocation16 + $0x1fa8] sm:$0xff]
    %v5718 = vld [vmem:[#allocation16 + $0x1fb0] sm:$0xff]
    %v5719 = vld [vmem:[#allocation16 + $0x1fb8] sm:$0xff]
    %v5720 = vld [vmem:[#allocation16 + $0x1fc0] sm:$0xff]
    %v5721 = vld [vmem:[#allocation16 + $0x1fc8] sm:$0xff]
    %v5722 = vld [vmem:[#allocation16 + $0x1fd0] sm:$0xff]
    %v5723 = vld [vmem:[#allocation16 + $0x1fd8] sm:$0xff]
    %v5724 = vld [vmem:[#allocation16 + $0x1fe0] sm:$0xff]
    %v5725 = vld [vmem:[#allocation16 + $0x1fe8] sm:$0xff]
    %v5726 = vld [vmem:[#allocation16 + $0x1ff0] sm:$0xff]
    %v5727 = vld [vmem:[#allocation16 + $0x1ff8] sm:$0xff]
    %v5728 = vpack.c.bf16 %v4688, %v4688
    %v5729 = vpack.c.bf16 %v4689, %v4689
    %v5730 = vpack.c.bf16 %v4690, %v4690
    %v5731 = vpack.c.bf16 %v4691, %v4691
    %v5732 = vpack.c.bf16 %v4692, %v4692
    %v5733 = vpack.c.bf16 %v4693, %v4693
    %v5734 = vpack.c.bf16 %v4694, %v4694
    %v5735 = vpack.c.bf16 %v4695, %v4695
    %v5736 = vpack.c.bf16 %v4696, %v4696
    %v5737 = vpack.c.bf16 %v4697, %v4697
    %v5738 = vpack.c.bf16 %v4698, %v4698
    %v5739 = vpack.c.bf16 %v4699, %v4699
    %v5740 = vpack.c.bf16 %v4700, %v4700
    %v5741 = vpack.c.bf16 %v4701, %v4701
    %v5742 = vpack.c.bf16 %v4702, %v4702
    %v5743 = vpack.c.bf16 %v4703, %v4703
    %v5744 = vld [vmem:[#allocation18] sm:$0xff]
    %v5746 = vperm.slane %v5744, 0
    %v5747 = vperm.slane %v5744, 1
    %v5748 = vperm.slane %v5744, 2
    %v5749 = vperm.slane %v5744, 3
    %v5750 = vperm.slane %v5744, 4
    %v5751 = vperm.slane %v5744, 5
    %v5752 = vperm.slane %v5744, 6
    %v5753 = vperm.slane %v5744, 7
    %v6786 = vunpack.c.l.b16 %v4704
    %v6787 = vunpack.c.h.b16 %v4704
    %v6788 = vunpack.c.l.b16 %v4705
    %v6789 = vunpack.c.h.b16 %v4705
    %v6790 = vunpack.c.l.b16 %v4706
    %v6791 = vunpack.c.h.b16 %v4706
    %v6792 = vunpack.c.l.b16 %v4707
    %v6793 = vunpack.c.h.b16 %v4707
    %v6794 = vunpack.c.l.b16 %v4708
    %v6795 = vunpack.c.h.b16 %v4708
    %v6796 = vunpack.c.l.b16 %v4709
    %v6797 = vunpack.c.h.b16 %v4709
    %v6798 = vunpack.c.l.b16 %v4710
    %v6799 = vunpack.c.h.b16 %v4710
    %v6800 = vunpack.c.l.b16 %v4711
    %v6801 = vunpack.c.h.b16 %v4711
    %v6802 = vunpack.c.l.b16 %v4712
    %v6803 = vunpack.c.h.b16 %v4712
    %v6804 = vunpack.c.l.b16 %v4713
    %v6805 = vunpack.c.h.b16 %v4713
    %v6806 = vunpack.c.l.b16 %v4714
    %v6807 = vunpack.c.h.b16 %v4714
    %v6808 = vunpack.c.l.b16 %v4715
    %v6809 = vunpack.c.h.b16 %v4715
    %v6810 = vunpack.c.l.b16 %v4716
    %v6811 = vunpack.c.h.b16 %v4716
    %v6812 = vunpack.c.l.b16 %v4717
    %v6813 = vunpack.c.h.b16 %v4717
    %v6814 = vunpack.c.l.b16 %v4718
    %v6815 = vunpack.c.h.b16 %v4718
    %v6816 = vunpack.c.l.b16 %v4719
    %v6817 = vunpack.c.h.b16 %v4719
    %v6818 = vunpack.c.l.b16 %v4720
    %v6819 = vunpack.c.h.b16 %v4720
    %v6820 = vunpack.c.l.b16 %v4721
    %v6821 = vunpack.c.h.b16 %v4721
    %v6822 = vunpack.c.l.b16 %v4722
    %v6823 = vunpack.c.h.b16 %v4722
    %v6824 = vunpack.c.l.b16 %v4723
    %v6825 = vunpack.c.h.b16 %v4723
    %v6826 = vunpack.c.l.b16 %v4724
    %v6827 = vunpack.c.h.b16 %v4724
    %v6828 = vunpack.c.l.b16 %v4725
    %v6829 = vunpack.c.h.b16 %v4725
    %v6830 = vunpack.c.l.b16 %v4726
    %v6831 = vunpack.c.h.b16 %v4726
    %v6832 = vunpack.c.l.b16 %v4727
    %v6833 = vunpack.c.h.b16 %v4727
    %v6834 = vunpack.c.l.b16 %v4728
    %v6835 = vunpack.c.h.b16 %v4728
    %v6836 = vunpack.c.l.b16 %v4729
    %v6837 = vunpack.c.h.b16 %v4729
    %v6838 = vunpack.c.l.b16 %v4730
    %v6839 = vunpack.c.h.b16 %v4730
    %v6840 = vunpack.c.l.b16 %v4731
    %v6841 = vunpack.c.h.b16 %v4731
    %v6842 = vunpack.c.l.b16 %v4732
    %v6843 = vunpack.c.h.b16 %v4732
    %v6844 = vunpack.c.l.b16 %v4733
    %v6845 = vunpack.c.h.b16 %v4733
    %v6846 = vunpack.c.l.b16 %v4734
    %v6847 = vunpack.c.h.b16 %v4734
    %v6848 = vunpack.c.l.b16 %v4735
    %v6849 = vunpack.c.h.b16 %v4735
    %v6850 = vunpack.c.l.b16 %v4736
    %v6851 = vunpack.c.h.b16 %v4736
    %v6852 = vunpack.c.l.b16 %v4737
    %v6853 = vunpack.c.h.b16 %v4737
    %v6854 = vunpack.c.l.b16 %v4738
    %v6855 = vunpack.c.h.b16 %v4738
    %v6856 = vunpack.c.l.b16 %v4739
    %v6857 = vunpack.c.h.b16 %v4739
    %v6858 = vunpack.c.l.b16 %v4740
    %v6859 = vunpack.c.h.b16 %v4740
    %v6860 = vunpack.c.l.b16 %v4741
    %v6861 = vunpack.c.h.b16 %v4741
    %v6862 = vunpack.c.l.b16 %v4742
    %v6863 = vunpack.c.h.b16 %v4742
    %v6864 = vunpack.c.l.b16 %v4743
    %v6865 = vunpack.c.h.b16 %v4743
    %v6866 = vunpack.c.l.b16 %v4744
    %v6867 = vunpack.c.h.b16 %v4744
    %v6868 = vunpack.c.l.b16 %v4745
    %v6869 = vunpack.c.h.b16 %v4745
    %v6870 = vunpack.c.l.b16 %v4746
    %v6871 = vunpack.c.h.b16 %v4746
    %v6872 = vunpack.c.l.b16 %v4747
    %v6873 = vunpack.c.h.b16 %v4747
    %v6874 = vunpack.c.l.b16 %v4748
    %v6875 = vunpack.c.h.b16 %v4748
    %v6876 = vunpack.c.l.b16 %v4749
    %v6877 = vunpack.c.h.b16 %v4749
    %v6878 = vunpack.c.l.b16 %v4750
    %v6879 = vunpack.c.h.b16 %v4750
    %v6880 = vunpack.c.l.b16 %v4751
    %v6881 = vunpack.c.h.b16 %v4751
    %v6882 = vunpack.c.l.b16 %v4752
    %v6883 = vunpack.c.h.b16 %v4752
    %v6884 = vunpack.c.l.b16 %v4753
    %v6885 = vunpack.c.h.b16 %v4753
    %v6886 = vunpack.c.l.b16 %v4754
    %v6887 = vunpack.c.h.b16 %v4754
    %v6888 = vunpack.c.l.b16 %v4755
    %v6889 = vunpack.c.h.b16 %v4755
    %v6890 = vunpack.c.l.b16 %v4756
    %v6891 = vunpack.c.h.b16 %v4756
    %v6892 = vunpack.c.l.b16 %v4757
    %v6893 = vunpack.c.h.b16 %v4757
    %v6894 = vunpack.c.l.b16 %v4758
    %v6895 = vunpack.c.h.b16 %v4758
    %v6896 = vunpack.c.l.b16 %v4759
    %v6897 = vunpack.c.h.b16 %v4759
    %v6898 = vunpack.c.l.b16 %v4760
    %v6899 = vunpack.c.h.b16 %v4760
    %v6900 = vunpack.c.l.b16 %v4761
    %v6901 = vunpack.c.h.b16 %v4761
    %v6902 = vunpack.c.l.b16 %v4762
    %v6903 = vunpack.c.h.b16 %v4762
    %v6904 = vunpack.c.l.b16 %v4763
    %v6905 = vunpack.c.h.b16 %v4763
    %v6906 = vunpack.c.l.b16 %v4764
    %v6907 = vunpack.c.h.b16 %v4764
    %v6908 = vunpack.c.l.b16 %v4765
    %v6909 = vunpack.c.h.b16 %v4765
    %v6910 = vunpack.c.l.b16 %v4766
    %v6911 = vunpack.c.h.b16 %v4766
    %v6912 = vunpack.c.l.b16 %v4767
    %v6913 = vunpack.c.h.b16 %v4767
    %v6914 = vunpack.c.l.b16 %v4768
    %v6915 = vunpack.c.h.b16 %v4768
    %v6916 = vunpack.c.l.b16 %v4769
    %v6917 = vunpack.c.h.b16 %v4769
    %v6918 = vunpack.c.l.b16 %v4770
    %v6919 = vunpack.c.h.b16 %v4770
    %v6920 = vunpack.c.l.b16 %v4771
    %v6921 = vunpack.c.h.b16 %v4771
    %v6922 = vunpack.c.l.b16 %v4772
    %v6923 = vunpack.c.h.b16 %v4772
    %v6924 = vunpack.c.l.b16 %v4773
    %v6925 = vunpack.c.h.b16 %v4773
    %v6926 = vunpack.c.l.b16 %v4774
    %v6927 = vunpack.c.h.b16 %v4774
    %v6928 = vunpack.c.l.b16 %v4775
    %v6929 = vunpack.c.h.b16 %v4775
    %v6930 = vunpack.c.l.b16 %v4776
    %v6931 = vunpack.c.h.b16 %v4776
    %v6932 = vunpack.c.l.b16 %v4777
    %v6933 = vunpack.c.h.b16 %v4777
    %v6934 = vunpack.c.l.b16 %v4778
    %v6935 = vunpack.c.h.b16 %v4778
    %v6936 = vunpack.c.l.b16 %v4779
    %v6937 = vunpack.c.h.b16 %v4779
    %v6938 = vunpack.c.l.b16 %v4780
    %v6939 = vunpack.c.h.b16 %v4780
    %v6940 = vunpack.c.l.b16 %v4781
    %v6941 = vunpack.c.h.b16 %v4781
    %v6942 = vunpack.c.l.b16 %v4782
    %v6943 = vunpack.c.h.b16 %v4782
    %v6944 = vunpack.c.l.b16 %v4783
    %v6945 = vunpack.c.h.b16 %v4783
    %v6946 = vunpack.c.l.b16 %v4784
    %v6947 = vunpack.c.h.b16 %v4784
    %v6948 = vunpack.c.l.b16 %v4785
    %v6949 = vunpack.c.h.b16 %v4785
    %v6950 = vunpack.c.l.b16 %v4786
    %v6951 = vunpack.c.h.b16 %v4786
    %v6952 = vunpack.c.l.b16 %v4787
    %v6953 = vunpack.c.h.b16 %v4787
    %v6954 = vunpack.c.l.b16 %v4788
    %v6955 = vunpack.c.h.b16 %v4788
    %v6956 = vunpack.c.l.b16 %v4789
    %v6957 = vunpack.c.h.b16 %v4789
    %v6958 = vunpack.c.l.b16 %v4790
    %v6959 = vunpack.c.h.b16 %v4790
    %v6960 = vunpack.c.l.b16 %v4791
    %v6961 = vunpack.c.h.b16 %v4791
    %v6962 = vunpack.c.l.b16 %v4792
    %v6963 = vunpack.c.h.b16 %v4792
    %v6964 = vunpack.c.l.b16 %v4793
    %v6965 = vunpack.c.h.b16 %v4793
    %v6966 = vunpack.c.l.b16 %v4794
    %v6967 = vunpack.c.h.b16 %v4794
    %v6968 = vunpack.c.l.b16 %v4795
    %v6969 = vunpack.c.h.b16 %v4795
    %v6970 = vunpack.c.l.b16 %v4796
    %v6971 = vunpack.c.h.b16 %v4796
    %v6972 = vunpack.c.l.b16 %v4797
    %v6973 = vunpack.c.h.b16 %v4797
    %v6974 = vunpack.c.l.b16 %v4798
    %v6975 = vunpack.c.h.b16 %v4798
    %v6976 = vunpack.c.l.b16 %v4799
    %v6977 = vunpack.c.h.b16 %v4799
    %v6978 = vunpack.c.l.b16 %v4800
    %v6979 = vunpack.c.h.b16 %v4800
    %v6980 = vunpack.c.l.b16 %v4801
    %v6981 = vunpack.c.h.b16 %v4801
    %v6982 = vunpack.c.l.b16 %v4802
    %v6983 = vunpack.c.h.b16 %v4802
    %v6984 = vunpack.c.l.b16 %v4803
    %v6985 = vunpack.c.h.b16 %v4803
    %v6986 = vunpack.c.l.b16 %v4804
    %v6987 = vunpack.c.h.b16 %v4804
    %v6988 = vunpack.c.l.b16 %v4805
    %v6989 = vunpack.c.h.b16 %v4805
    %v6990 = vunpack.c.l.b16 %v4806
    %v6991 = vunpack.c.h.b16 %v4806
    %v6992 = vunpack.c.l.b16 %v4807
    %v6993 = vunpack.c.h.b16 %v4807
    %v6994 = vunpack.c.l.b16 %v4808
    %v6995 = vunpack.c.h.b16 %v4808
    %v6996 = vunpack.c.l.b16 %v4809
    %v6997 = vunpack.c.h.b16 %v4809
    %v6998 = vunpack.c.l.b16 %v4810
    %v6999 = vunpack.c.h.b16 %v4810
    %v7000 = vunpack.c.l.b16 %v4811
    %v7001 = vunpack.c.h.b16 %v4811
    %v7002 = vunpack.c.l.b16 %v4812
    %v7003 = vunpack.c.h.b16 %v4812
    %v7004 = vunpack.c.l.b16 %v4813
    %v7005 = vunpack.c.h.b16 %v4813
    %v7006 = vunpack.c.l.b16 %v4814
    %v7007 = vunpack.c.h.b16 %v4814
    %v7008 = vunpack.c.l.b16 %v4815
    %v7009 = vunpack.c.h.b16 %v4815
    %v7010 = vunpack.c.l.b16 %v4816
    %v7011 = vunpack.c.h.b16 %v4816
    %v7012 = vunpack.c.l.b16 %v4817
    %v7013 = vunpack.c.h.b16 %v4817
    %v7014 = vunpack.c.l.b16 %v4818
    %v7015 = vunpack.c.h.b16 %v4818
    %v7016 = vunpack.c.l.b16 %v4819
    %v7017 = vunpack.c.h.b16 %v4819
    %v7018 = vunpack.c.l.b16 %v4820
    %v7019 = vunpack.c.h.b16 %v4820
    %v7020 = vunpack.c.l.b16 %v4821
    %v7021 = vunpack.c.h.b16 %v4821
    %v7022 = vunpack.c.l.b16 %v4822
    %v7023 = vunpack.c.h.b16 %v4822
    %v7024 = vunpack.c.l.b16 %v4823
    %v7025 = vunpack.c.h.b16 %v4823
    %v7026 = vunpack.c.l.b16 %v4824
    %v7027 = vunpack.c.h.b16 %v4824
    %v7028 = vunpack.c.l.b16 %v4825
    %v7029 = vunpack.c.h.b16 %v4825
    %v7030 = vunpack.c.l.b16 %v4826
    %v7031 = vunpack.c.h.b16 %v4826
    %v7032 = vunpack.c.l.b16 %v4827
    %v7033 = vunpack.c.h.b16 %v4827
    %v7034 = vunpack.c.l.b16 %v4828
    %v7035 = vunpack.c.h.b16 %v4828
    %v7036 = vunpack.c.l.b16 %v4829
    %v7037 = vunpack.c.h.b16 %v4829
    %v7038 = vunpack.c.l.b16 %v4830
    %v7039 = vunpack.c.h.b16 %v4830
    %v7040 = vunpack.c.l.b16 %v4831
    %v7041 = vunpack.c.h.b16 %v4831
    %v7042 = vunpack.c.l.b16 %v4832
    %v7043 = vunpack.c.h.b16 %v4832
    %v7044 = vunpack.c.l.b16 %v4833
    %v7045 = vunpack.c.h.b16 %v4833
    %v7046 = vunpack.c.l.b16 %v4834
    %v7047 = vunpack.c.h.b16 %v4834
    %v7048 = vunpack.c.l.b16 %v4835
    %v7049 = vunpack.c.h.b16 %v4835
    %v7050 = vunpack.c.l.b16 %v4836
    %v7051 = vunpack.c.h.b16 %v4836
    %v7052 = vunpack.c.l.b16 %v4837
    %v7053 = vunpack.c.h.b16 %v4837
    %v7054 = vunpack.c.l.b16 %v4838
    %v7055 = vunpack.c.h.b16 %v4838
    %v7056 = vunpack.c.l.b16 %v4839
    %v7057 = vunpack.c.h.b16 %v4839
    %v7058 = vunpack.c.l.b16 %v4840
    %v7059 = vunpack.c.h.b16 %v4840
    %v7060 = vunpack.c.l.b16 %v4841
    %v7061 = vunpack.c.h.b16 %v4841
    %v7062 = vunpack.c.l.b16 %v4842
    %v7063 = vunpack.c.h.b16 %v4842
    %v7064 = vunpack.c.l.b16 %v4843
    %v7065 = vunpack.c.h.b16 %v4843
    %v7066 = vunpack.c.l.b16 %v4844
    %v7067 = vunpack.c.h.b16 %v4844
    %v7068 = vunpack.c.l.b16 %v4845
    %v7069 = vunpack.c.h.b16 %v4845
    %v7070 = vunpack.c.l.b16 %v4846
    %v7071 = vunpack.c.h.b16 %v4846
    %v7072 = vunpack.c.l.b16 %v4847
    %v7073 = vunpack.c.h.b16 %v4847
    %v7074 = vunpack.c.l.b16 %v4848
    %v7075 = vunpack.c.h.b16 %v4848
    %v7076 = vunpack.c.l.b16 %v4849
    %v7077 = vunpack.c.h.b16 %v4849
    %v7078 = vunpack.c.l.b16 %v4850
    %v7079 = vunpack.c.h.b16 %v4850
    %v7080 = vunpack.c.l.b16 %v4851
    %v7081 = vunpack.c.h.b16 %v4851
    %v7082 = vunpack.c.l.b16 %v4852
    %v7083 = vunpack.c.h.b16 %v4852
    %v7084 = vunpack.c.l.b16 %v4853
    %v7085 = vunpack.c.h.b16 %v4853
    %v7086 = vunpack.c.l.b16 %v4854
    %v7087 = vunpack.c.h.b16 %v4854
    %v7088 = vunpack.c.l.b16 %v4855
    %v7089 = vunpack.c.h.b16 %v4855
    %v7090 = vunpack.c.l.b16 %v4856
    %v7091 = vunpack.c.h.b16 %v4856
    %v7092 = vunpack.c.l.b16 %v4857
    %v7093 = vunpack.c.h.b16 %v4857
    %v7094 = vunpack.c.l.b16 %v4858
    %v7095 = vunpack.c.h.b16 %v4858
    %v7096 = vunpack.c.l.b16 %v4859
    %v7097 = vunpack.c.h.b16 %v4859
    %v7098 = vunpack.c.l.b16 %v4860
    %v7099 = vunpack.c.h.b16 %v4860
    %v7100 = vunpack.c.l.b16 %v4861
    %v7101 = vunpack.c.h.b16 %v4861
    %v7102 = vunpack.c.l.b16 %v4862
    %v7103 = vunpack.c.h.b16 %v4862
    %v7104 = vunpack.c.l.b16 %v4863
    %v7105 = vunpack.c.h.b16 %v4863
    %v7106 = vunpack.c.l.b16 %v4864
    %v7107 = vunpack.c.h.b16 %v4864
    %v7108 = vunpack.c.l.b16 %v4865
    %v7109 = vunpack.c.h.b16 %v4865
    %v7110 = vunpack.c.l.b16 %v4866
    %v7111 = vunpack.c.h.b16 %v4866
    %v7112 = vunpack.c.l.b16 %v4867
    %v7113 = vunpack.c.h.b16 %v4867
    %v7114 = vunpack.c.l.b16 %v4868
    %v7115 = vunpack.c.h.b16 %v4868
    %v7116 = vunpack.c.l.b16 %v4869
    %v7117 = vunpack.c.h.b16 %v4869
    %v7118 = vunpack.c.l.b16 %v4870
    %v7119 = vunpack.c.h.b16 %v4870
    %v7120 = vunpack.c.l.b16 %v4871
    %v7121 = vunpack.c.h.b16 %v4871
    %v7122 = vunpack.c.l.b16 %v4872
    %v7123 = vunpack.c.h.b16 %v4872
    %v7124 = vunpack.c.l.b16 %v4873
    %v7125 = vunpack.c.h.b16 %v4873
    %v7126 = vunpack.c.l.b16 %v4874
    %v7127 = vunpack.c.h.b16 %v4874
    %v7128 = vunpack.c.l.b16 %v4875
    %v7129 = vunpack.c.h.b16 %v4875
    %v7130 = vunpack.c.l.b16 %v4876
    %v7131 = vunpack.c.h.b16 %v4876
    %v7132 = vunpack.c.l.b16 %v4877
    %v7133 = vunpack.c.h.b16 %v4877
    %v7134 = vunpack.c.l.b16 %v4878
    %v7135 = vunpack.c.h.b16 %v4878
    %v7136 = vunpack.c.l.b16 %v4879
    %v7137 = vunpack.c.h.b16 %v4879
    %v7138 = vunpack.c.l.b16 %v4880
    %v7139 = vunpack.c.h.b16 %v4880
    %v7140 = vunpack.c.l.b16 %v4881
    %v7141 = vunpack.c.h.b16 %v4881
    %v7142 = vunpack.c.l.b16 %v4882
    %v7143 = vunpack.c.h.b16 %v4882
    %v7144 = vunpack.c.l.b16 %v4883
    %v7145 = vunpack.c.h.b16 %v4883
    %v7146 = vunpack.c.l.b16 %v4884
    %v7147 = vunpack.c.h.b16 %v4884
    %v7148 = vunpack.c.l.b16 %v4885
    %v7149 = vunpack.c.h.b16 %v4885
    %v7150 = vunpack.c.l.b16 %v4886
    %v7151 = vunpack.c.h.b16 %v4886
    %v7152 = vunpack.c.l.b16 %v4887
    %v7153 = vunpack.c.h.b16 %v4887
    %v7154 = vunpack.c.l.b16 %v4888
    %v7155 = vunpack.c.h.b16 %v4888
    %v7156 = vunpack.c.l.b16 %v4889
    %v7157 = vunpack.c.h.b16 %v4889
    %v7158 = vunpack.c.l.b16 %v4890
    %v7159 = vunpack.c.h.b16 %v4890
    %v7160 = vunpack.c.l.b16 %v4891
    %v7161 = vunpack.c.h.b16 %v4891
    %v7162 = vunpack.c.l.b16 %v4892
    %v7163 = vunpack.c.h.b16 %v4892
    %v7164 = vunpack.c.l.b16 %v4893
    %v7165 = vunpack.c.h.b16 %v4893
    %v7166 = vunpack.c.l.b16 %v4894
    %v7167 = vunpack.c.h.b16 %v4894
    %v7168 = vunpack.c.l.b16 %v4895
    %v7169 = vunpack.c.h.b16 %v4895
    %v7170 = vunpack.c.l.b16 %v4896
    %v7171 = vunpack.c.h.b16 %v4896
    %v7172 = vunpack.c.l.b16 %v4897
    %v7173 = vunpack.c.h.b16 %v4897
    %v7174 = vunpack.c.l.b16 %v4898
    %v7175 = vunpack.c.h.b16 %v4898
    %v7176 = vunpack.c.l.b16 %v4899
    %v7177 = vunpack.c.h.b16 %v4899
    %v7178 = vunpack.c.l.b16 %v4900
    %v7179 = vunpack.c.h.b16 %v4900
    %v7180 = vunpack.c.l.b16 %v4901
    %v7181 = vunpack.c.h.b16 %v4901
    %v7182 = vunpack.c.l.b16 %v4902
    %v7183 = vunpack.c.h.b16 %v4902
    %v7184 = vunpack.c.l.b16 %v4903
    %v7185 = vunpack.c.h.b16 %v4903
    %v7186 = vunpack.c.l.b16 %v4904
    %v7187 = vunpack.c.h.b16 %v4904
    %v7188 = vunpack.c.l.b16 %v4905
    %v7189 = vunpack.c.h.b16 %v4905
    %v7190 = vunpack.c.l.b16 %v4906
    %v7191 = vunpack.c.h.b16 %v4906
    %v7192 = vunpack.c.l.b16 %v4907
    %v7193 = vunpack.c.h.b16 %v4907
    %v7194 = vunpack.c.l.b16 %v4908
    %v7195 = vunpack.c.h.b16 %v4908
    %v7196 = vunpack.c.l.b16 %v4909
    %v7197 = vunpack.c.h.b16 %v4909
    %v7198 = vunpack.c.l.b16 %v4910
    %v7199 = vunpack.c.h.b16 %v4910
    %v7200 = vunpack.c.l.b16 %v4911
    %v7201 = vunpack.c.h.b16 %v4911
    %v7202 = vunpack.c.l.b16 %v4912
    %v7203 = vunpack.c.h.b16 %v4912
    %v7204 = vunpack.c.l.b16 %v4913
    %v7205 = vunpack.c.h.b16 %v4913
    %v7206 = vunpack.c.l.b16 %v4914
    %v7207 = vunpack.c.h.b16 %v4914
    %v7208 = vunpack.c.l.b16 %v4915
    %v7209 = vunpack.c.h.b16 %v4915
    %v7210 = vunpack.c.l.b16 %v4916
    %v7211 = vunpack.c.h.b16 %v4916
    %v7212 = vunpack.c.l.b16 %v4917
    %v7213 = vunpack.c.h.b16 %v4917
    %v7214 = vunpack.c.l.b16 %v4918
    %v7215 = vunpack.c.h.b16 %v4918
    %v7216 = vunpack.c.l.b16 %v4919
    %v7217 = vunpack.c.h.b16 %v4919
    %v7218 = vunpack.c.l.b16 %v4920
    %v7219 = vunpack.c.h.b16 %v4920
    %v7220 = vunpack.c.l.b16 %v4921
    %v7221 = vunpack.c.h.b16 %v4921
    %v7222 = vunpack.c.l.b16 %v4922
    %v7223 = vunpack.c.h.b16 %v4922
    %v7224 = vunpack.c.l.b16 %v4923
    %v7225 = vunpack.c.h.b16 %v4923
    %v7226 = vunpack.c.l.b16 %v4924
    %v7227 = vunpack.c.h.b16 %v4924
    %v7228 = vunpack.c.l.b16 %v4925
    %v7229 = vunpack.c.h.b16 %v4925
    %v7230 = vunpack.c.l.b16 %v4926
    %v7231 = vunpack.c.h.b16 %v4926
    %v7232 = vunpack.c.l.b16 %v4927
    %v7233 = vunpack.c.h.b16 %v4927
    %v7234 = vunpack.c.l.b16 %v4928
    %v7235 = vunpack.c.h.b16 %v4928
    %v7236 = vunpack.c.l.b16 %v4929
    %v7237 = vunpack.c.h.b16 %v4929
    %v7238 = vunpack.c.l.b16 %v4930
    %v7239 = vunpack.c.h.b16 %v4930
    %v7240 = vunpack.c.l.b16 %v4931
    %v7241 = vunpack.c.h.b16 %v4931
    %v7242 = vunpack.c.l.b16 %v4932
    %v7243 = vunpack.c.h.b16 %v4932
    %v7244 = vunpack.c.l.b16 %v4933
    %v7245 = vunpack.c.h.b16 %v4933
    %v7246 = vunpack.c.l.b16 %v4934
    %v7247 = vunpack.c.h.b16 %v4934
    %v7248 = vunpack.c.l.b16 %v4935
    %v7249 = vunpack.c.h.b16 %v4935
    %v7250 = vunpack.c.l.b16 %v4936
    %v7251 = vunpack.c.h.b16 %v4936
    %v7252 = vunpack.c.l.b16 %v4937
    %v7253 = vunpack.c.h.b16 %v4937
    %v7254 = vunpack.c.l.b16 %v4938
    %v7255 = vunpack.c.h.b16 %v4938
    %v7256 = vunpack.c.l.b16 %v4939
    %v7257 = vunpack.c.h.b16 %v4939
    %v7258 = vunpack.c.l.b16 %v4940
    %v7259 = vunpack.c.h.b16 %v4940
    %v7260 = vunpack.c.l.b16 %v4941
    %v7261 = vunpack.c.h.b16 %v4941
    %v7262 = vunpack.c.l.b16 %v4942
    %v7263 = vunpack.c.h.b16 %v4942
    %v7264 = vunpack.c.l.b16 %v4943
    %v7265 = vunpack.c.h.b16 %v4943
    %v7266 = vunpack.c.l.b16 %v4944
    %v7267 = vunpack.c.h.b16 %v4944
    %v7268 = vunpack.c.l.b16 %v4945
    %v7269 = vunpack.c.h.b16 %v4945
    %v7270 = vunpack.c.l.b16 %v4946
    %v7271 = vunpack.c.h.b16 %v4946
    %v7272 = vunpack.c.l.b16 %v4947
    %v7273 = vunpack.c.h.b16 %v4947
    %v7274 = vunpack.c.l.b16 %v4948
    %v7275 = vunpack.c.h.b16 %v4948
    %v7276 = vunpack.c.l.b16 %v4949
    %v7277 = vunpack.c.h.b16 %v4949
    %v7278 = vunpack.c.l.b16 %v4950
    %v7279 = vunpack.c.h.b16 %v4950
    %v7280 = vunpack.c.l.b16 %v4951
    %v7281 = vunpack.c.h.b16 %v4951
    %v7282 = vunpack.c.l.b16 %v4952
    %v7283 = vunpack.c.h.b16 %v4952
    %v7284 = vunpack.c.l.b16 %v4953
    %v7285 = vunpack.c.h.b16 %v4953
    %v7286 = vunpack.c.l.b16 %v4954
    %v7287 = vunpack.c.h.b16 %v4954
    %v7288 = vunpack.c.l.b16 %v4955
    %v7289 = vunpack.c.h.b16 %v4955
    %v7290 = vunpack.c.l.b16 %v4956
    %v7291 = vunpack.c.h.b16 %v4956
    %v7292 = vunpack.c.l.b16 %v4957
    %v7293 = vunpack.c.h.b16 %v4957
    %v7294 = vunpack.c.l.b16 %v4958
    %v7295 = vunpack.c.h.b16 %v4958
    %v7296 = vunpack.c.l.b16 %v4959
    %v7297 = vunpack.c.h.b16 %v4959
    %v7298 = vunpack.c.l.b16 %v4960
    %v7299 = vunpack.c.h.b16 %v4960
    %v7300 = vunpack.c.l.b16 %v4961
    %v7301 = vunpack.c.h.b16 %v4961
    %v7302 = vunpack.c.l.b16 %v4962
    %v7303 = vunpack.c.h.b16 %v4962
    %v7304 = vunpack.c.l.b16 %v4963
    %v7305 = vunpack.c.h.b16 %v4963
    %v7306 = vunpack.c.l.b16 %v4964
    %v7307 = vunpack.c.h.b16 %v4964
    %v7308 = vunpack.c.l.b16 %v4965
    %v7309 = vunpack.c.h.b16 %v4965
    %v7310 = vunpack.c.l.b16 %v4966
    %v7311 = vunpack.c.h.b16 %v4966
    %v7312 = vunpack.c.l.b16 %v4967
    %v7313 = vunpack.c.h.b16 %v4967
    %v7314 = vunpack.c.l.b16 %v4968
    %v7315 = vunpack.c.h.b16 %v4968
    %v7316 = vunpack.c.l.b16 %v4969
    %v7317 = vunpack.c.h.b16 %v4969
    %v7318 = vunpack.c.l.b16 %v4970
    %v7319 = vunpack.c.h.b16 %v4970
    %v7320 = vunpack.c.l.b16 %v4971
    %v7321 = vunpack.c.h.b16 %v4971
    %v7322 = vunpack.c.l.b16 %v4972
    %v7323 = vunpack.c.h.b16 %v4972
    %v7324 = vunpack.c.l.b16 %v4973
    %v7325 = vunpack.c.h.b16 %v4973
    %v7326 = vunpack.c.l.b16 %v4974
    %v7327 = vunpack.c.h.b16 %v4974
    %v7328 = vunpack.c.l.b16 %v4975
    %v7329 = vunpack.c.h.b16 %v4975
    %v7330 = vunpack.c.l.b16 %v4976
    %v7331 = vunpack.c.h.b16 %v4976
    %v7332 = vunpack.c.l.b16 %v4977
    %v7333 = vunpack.c.h.b16 %v4977
    %v7334 = vunpack.c.l.b16 %v4978
    %v7335 = vunpack.c.h.b16 %v4978
    %v7336 = vunpack.c.l.b16 %v4979
    %v7337 = vunpack.c.h.b16 %v4979
    %v7338 = vunpack.c.l.b16 %v4980
    %v7339 = vunpack.c.h.b16 %v4980
    %v7340 = vunpack.c.l.b16 %v4981
    %v7341 = vunpack.c.h.b16 %v4981
    %v7342 = vunpack.c.l.b16 %v4982
    %v7343 = vunpack.c.h.b16 %v4982
    %v7344 = vunpack.c.l.b16 %v4983
    %v7345 = vunpack.c.h.b16 %v4983
    %v7346 = vunpack.c.l.b16 %v4984
    %v7347 = vunpack.c.h.b16 %v4984
    %v7348 = vunpack.c.l.b16 %v4985
    %v7349 = vunpack.c.h.b16 %v4985
    %v7350 = vunpack.c.l.b16 %v4986
    %v7351 = vunpack.c.h.b16 %v4986
    %v7352 = vunpack.c.l.b16 %v4987
    %v7353 = vunpack.c.h.b16 %v4987
    %v7354 = vunpack.c.l.b16 %v4988
    %v7355 = vunpack.c.h.b16 %v4988
    %v7356 = vunpack.c.l.b16 %v4989
    %v7357 = vunpack.c.h.b16 %v4989
    %v7358 = vunpack.c.l.b16 %v4990
    %v7359 = vunpack.c.h.b16 %v4990
    %v7360 = vunpack.c.l.b16 %v4991
    %v7361 = vunpack.c.h.b16 %v4991
    %v7362 = vunpack.c.l.b16 %v4992
    %v7363 = vunpack.c.h.b16 %v4992
    %v7364 = vunpack.c.l.b16 %v4993
    %v7365 = vunpack.c.h.b16 %v4993
    %v7366 = vunpack.c.l.b16 %v4994
    %v7367 = vunpack.c.h.b16 %v4994
    %v7368 = vunpack.c.l.b16 %v4995
    %v7369 = vunpack.c.h.b16 %v4995
    %v7370 = vunpack.c.l.b16 %v4996
    %v7371 = vunpack.c.h.b16 %v4996
    %v7372 = vunpack.c.l.b16 %v4997
    %v7373 = vunpack.c.h.b16 %v4997
    %v7374 = vunpack.c.l.b16 %v4998
    %v7375 = vunpack.c.h.b16 %v4998
    %v7376 = vunpack.c.l.b16 %v4999
    %v7377 = vunpack.c.h.b16 %v4999
    %v7378 = vunpack.c.l.b16 %v5000
    %v7379 = vunpack.c.h.b16 %v5000
    %v7380 = vunpack.c.l.b16 %v5001
    %v7381 = vunpack.c.h.b16 %v5001
    %v7382 = vunpack.c.l.b16 %v5002
    %v7383 = vunpack.c.h.b16 %v5002
    %v7384 = vunpack.c.l.b16 %v5003
    %v7385 = vunpack.c.h.b16 %v5003
    %v7386 = vunpack.c.l.b16 %v5004
    %v7387 = vunpack.c.h.b16 %v5004
    %v7388 = vunpack.c.l.b16 %v5005
    %v7389 = vunpack.c.h.b16 %v5005
    %v7390 = vunpack.c.l.b16 %v5006
    %v7391 = vunpack.c.h.b16 %v5006
    %v7392 = vunpack.c.l.b16 %v5007
    %v7393 = vunpack.c.h.b16 %v5007
    %v7394 = vunpack.c.l.b16 %v5008
    %v7395 = vunpack.c.h.b16 %v5008
    %v7396 = vunpack.c.l.b16 %v5009
    %v7397 = vunpack.c.h.b16 %v5009
    %v7398 = vunpack.c.l.b16 %v5010
    %v7399 = vunpack.c.h.b16 %v5010
    %v7400 = vunpack.c.l.b16 %v5011
    %v7401 = vunpack.c.h.b16 %v5011
    %v7402 = vunpack.c.l.b16 %v5012
    %v7403 = vunpack.c.h.b16 %v5012
    %v7404 = vunpack.c.l.b16 %v5013
    %v7405 = vunpack.c.h.b16 %v5013
    %v7406 = vunpack.c.l.b16 %v5014
    %v7407 = vunpack.c.h.b16 %v5014
    %v7408 = vunpack.c.l.b16 %v5015
    %v7409 = vunpack.c.h.b16 %v5015
    %v7410 = vunpack.c.l.b16 %v5016
    %v7411 = vunpack.c.h.b16 %v5016
    %v7412 = vunpack.c.l.b16 %v5017
    %v7413 = vunpack.c.h.b16 %v5017
    %v7414 = vunpack.c.l.b16 %v5018
    %v7415 = vunpack.c.h.b16 %v5018
    %v7416 = vunpack.c.l.b16 %v5019
    %v7417 = vunpack.c.h.b16 %v5019
    %v7418 = vunpack.c.l.b16 %v5020
    %v7419 = vunpack.c.h.b16 %v5020
    %v7420 = vunpack.c.l.b16 %v5021
    %v7421 = vunpack.c.h.b16 %v5021
    %v7422 = vunpack.c.l.b16 %v5022
    %v7423 = vunpack.c.h.b16 %v5022
    %v7424 = vunpack.c.l.b16 %v5023
    %v7425 = vunpack.c.h.b16 %v5023
    %v7426 = vunpack.c.l.b16 %v5024
    %v7427 = vunpack.c.h.b16 %v5024
    %v7428 = vunpack.c.l.b16 %v5025
    %v7429 = vunpack.c.h.b16 %v5025
    %v7430 = vunpack.c.l.b16 %v5026
    %v7431 = vunpack.c.h.b16 %v5026
    %v7432 = vunpack.c.l.b16 %v5027
    %v7433 = vunpack.c.h.b16 %v5027
    %v7434 = vunpack.c.l.b16 %v5028
    %v7435 = vunpack.c.h.b16 %v5028
    %v7436 = vunpack.c.l.b16 %v5029
    %v7437 = vunpack.c.h.b16 %v5029
    %v7438 = vunpack.c.l.b16 %v5030
    %v7439 = vunpack.c.h.b16 %v5030
    %v7440 = vunpack.c.l.b16 %v5031
    %v7441 = vunpack.c.h.b16 %v5031
    %v7442 = vunpack.c.l.b16 %v5032
    %v7443 = vunpack.c.h.b16 %v5032
    %v7444 = vunpack.c.l.b16 %v5033
    %v7445 = vunpack.c.h.b16 %v5033
    %v7446 = vunpack.c.l.b16 %v5034
    %v7447 = vunpack.c.h.b16 %v5034
    %v7448 = vunpack.c.l.b16 %v5035
    %v7449 = vunpack.c.h.b16 %v5035
    %v7450 = vunpack.c.l.b16 %v5036
    %v7451 = vunpack.c.h.b16 %v5036
    %v7452 = vunpack.c.l.b16 %v5037
    %v7453 = vunpack.c.h.b16 %v5037
    %v7454 = vunpack.c.l.b16 %v5038
    %v7455 = vunpack.c.h.b16 %v5038
    %v7456 = vunpack.c.l.b16 %v5039
    %v7457 = vunpack.c.h.b16 %v5039
    %v7458 = vunpack.c.l.b16 %v5040
    %v7459 = vunpack.c.h.b16 %v5040
    %v7460 = vunpack.c.l.b16 %v5041
    %v7461 = vunpack.c.h.b16 %v5041
    %v7462 = vunpack.c.l.b16 %v5042
    %v7463 = vunpack.c.h.b16 %v5042
    %v7464 = vunpack.c.l.b16 %v5043
    %v7465 = vunpack.c.h.b16 %v5043
    %v7466 = vunpack.c.l.b16 %v5044
    %v7467 = vunpack.c.h.b16 %v5044
    %v7468 = vunpack.c.l.b16 %v5045
    %v7469 = vunpack.c.h.b16 %v5045
    %v7470 = vunpack.c.l.b16 %v5046
    %v7471 = vunpack.c.h.b16 %v5046
    %v7472 = vunpack.c.l.b16 %v5047
    %v7473 = vunpack.c.h.b16 %v5047
    %v7474 = vunpack.c.l.b16 %v5048
    %v7475 = vunpack.c.h.b16 %v5048
    %v7476 = vunpack.c.l.b16 %v5049
    %v7477 = vunpack.c.h.b16 %v5049
    %v7478 = vunpack.c.l.b16 %v5050
    %v7479 = vunpack.c.h.b16 %v5050
    %v7480 = vunpack.c.l.b16 %v5051
    %v7481 = vunpack.c.h.b16 %v5051
    %v7482 = vunpack.c.l.b16 %v5052
    %v7483 = vunpack.c.h.b16 %v5052
    %v7484 = vunpack.c.l.b16 %v5053
    %v7485 = vunpack.c.h.b16 %v5053
    %v7486 = vunpack.c.l.b16 %v5054
    %v7487 = vunpack.c.h.b16 %v5054
    %v7488 = vunpack.c.l.b16 %v5055
    %v7489 = vunpack.c.h.b16 %v5055
    %v7490 = vunpack.c.l.b16 %v5056
    %v7491 = vunpack.c.h.b16 %v5056
    %v7492 = vunpack.c.l.b16 %v5057
    %v7493 = vunpack.c.h.b16 %v5057
    %v7494 = vunpack.c.l.b16 %v5058
    %v7495 = vunpack.c.h.b16 %v5058
    %v7496 = vunpack.c.l.b16 %v5059
    %v7497 = vunpack.c.h.b16 %v5059
    %v7498 = vunpack.c.l.b16 %v5060
    %v7499 = vunpack.c.h.b16 %v5060
    %v7500 = vunpack.c.l.b16 %v5061
    %v7501 = vunpack.c.h.b16 %v5061
    %v7502 = vunpack.c.l.b16 %v5062
    %v7503 = vunpack.c.h.b16 %v5062
    %v7504 = vunpack.c.l.b16 %v5063
    %v7505 = vunpack.c.h.b16 %v5063
    %v7506 = vunpack.c.l.b16 %v5064
    %v7507 = vunpack.c.h.b16 %v5064
    %v7508 = vunpack.c.l.b16 %v5065
    %v7509 = vunpack.c.h.b16 %v5065
    %v7510 = vunpack.c.l.b16 %v5066
    %v7511 = vunpack.c.h.b16 %v5066
    %v7512 = vunpack.c.l.b16 %v5067
    %v7513 = vunpack.c.h.b16 %v5067
    %v7514 = vunpack.c.l.b16 %v5068
    %v7515 = vunpack.c.h.b16 %v5068
    %v7516 = vunpack.c.l.b16 %v5069
    %v7517 = vunpack.c.h.b16 %v5069
    %v7518 = vunpack.c.l.b16 %v5070
    %v7519 = vunpack.c.h.b16 %v5070
    %v7520 = vunpack.c.l.b16 %v5071
    %v7521 = vunpack.c.h.b16 %v5071
    %v7522 = vunpack.c.l.b16 %v5072
    %v7523 = vunpack.c.h.b16 %v5072
    %v7524 = vunpack.c.l.b16 %v5073
    %v7525 = vunpack.c.h.b16 %v5073
    %v7526 = vunpack.c.l.b16 %v5074
    %v7527 = vunpack.c.h.b16 %v5074
    %v7528 = vunpack.c.l.b16 %v5075
    %v7529 = vunpack.c.h.b16 %v5075
    %v7530 = vunpack.c.l.b16 %v5076
    %v7531 = vunpack.c.h.b16 %v5076
    %v7532 = vunpack.c.l.b16 %v5077
    %v7533 = vunpack.c.h.b16 %v5077
    %v7534 = vunpack.c.l.b16 %v5078
    %v7535 = vunpack.c.h.b16 %v5078
    %v7536 = vunpack.c.l.b16 %v5079
    %v7537 = vunpack.c.h.b16 %v5079
    %v7538 = vunpack.c.l.b16 %v5080
    %v7539 = vunpack.c.h.b16 %v5080
    %v7540 = vunpack.c.l.b16 %v5081
    %v7541 = vunpack.c.h.b16 %v5081
    %v7542 = vunpack.c.l.b16 %v5082
    %v7543 = vunpack.c.h.b16 %v5082
    %v7544 = vunpack.c.l.b16 %v5083
    %v7545 = vunpack.c.h.b16 %v5083
    %v7546 = vunpack.c.l.b16 %v5084
    %v7547 = vunpack.c.h.b16 %v5084
    %v7548 = vunpack.c.l.b16 %v5085
    %v7549 = vunpack.c.h.b16 %v5085
    %v7550 = vunpack.c.l.b16 %v5086
    %v7551 = vunpack.c.h.b16 %v5086
    %v7552 = vunpack.c.l.b16 %v5087
    %v7553 = vunpack.c.h.b16 %v5087
    %v7554 = vunpack.c.l.b16 %v5088
    %v7555 = vunpack.c.h.b16 %v5088
    %v7556 = vunpack.c.l.b16 %v5089
    %v7557 = vunpack.c.h.b16 %v5089
    %v7558 = vunpack.c.l.b16 %v5090
    %v7559 = vunpack.c.h.b16 %v5090
    %v7560 = vunpack.c.l.b16 %v5091
    %v7561 = vunpack.c.h.b16 %v5091
    %v7562 = vunpack.c.l.b16 %v5092
    %v7563 = vunpack.c.h.b16 %v5092
    %v7564 = vunpack.c.l.b16 %v5093
    %v7565 = vunpack.c.h.b16 %v5093
    %v7566 = vunpack.c.l.b16 %v5094
    %v7567 = vunpack.c.h.b16 %v5094
    %v7568 = vunpack.c.l.b16 %v5095
    %v7569 = vunpack.c.h.b16 %v5095
    %v7570 = vunpack.c.l.b16 %v5096
    %v7571 = vunpack.c.h.b16 %v5096
    %v7572 = vunpack.c.l.b16 %v5097
    %v7573 = vunpack.c.h.b16 %v5097
    %v7574 = vunpack.c.l.b16 %v5098
    %v7575 = vunpack.c.h.b16 %v5098
    %v7576 = vunpack.c.l.b16 %v5099
    %v7577 = vunpack.c.h.b16 %v5099
    %v7578 = vunpack.c.l.b16 %v5100
    %v7579 = vunpack.c.h.b16 %v5100
    %v7580 = vunpack.c.l.b16 %v5101
    %v7581 = vunpack.c.h.b16 %v5101
    %v7582 = vunpack.c.l.b16 %v5102
    %v7583 = vunpack.c.h.b16 %v5102
    %v7584 = vunpack.c.l.b16 %v5103
    %v7585 = vunpack.c.h.b16 %v5103
    %v7586 = vunpack.c.l.b16 %v5104
    %v7587 = vunpack.c.h.b16 %v5104
    %v7588 = vunpack.c.l.b16 %v5105
    %v7589 = vunpack.c.h.b16 %v5105
    %v7590 = vunpack.c.l.b16 %v5106
    %v7591 = vunpack.c.h.b16 %v5106
    %v7592 = vunpack.c.l.b16 %v5107
    %v7593 = vunpack.c.h.b16 %v5107
    %v7594 = vunpack.c.l.b16 %v5108
    %v7595 = vunpack.c.h.b16 %v5108
    %v7596 = vunpack.c.l.b16 %v5109
    %v7597 = vunpack.c.h.b16 %v5109
    %v7598 = vunpack.c.l.b16 %v5110
    %v7599 = vunpack.c.h.b16 %v5110
    %v7600 = vunpack.c.l.b16 %v5111
    %v7601 = vunpack.c.h.b16 %v5111
    %v7602 = vunpack.c.l.b16 %v5112
    %v7603 = vunpack.c.h.b16 %v5112
    %v7604 = vunpack.c.l.b16 %v5113
    %v7605 = vunpack.c.h.b16 %v5113
    %v7606 = vunpack.c.l.b16 %v5114
    %v7607 = vunpack.c.h.b16 %v5114
    %v7608 = vunpack.c.l.b16 %v5115
    %v7609 = vunpack.c.h.b16 %v5115
    %v7610 = vunpack.c.l.b16 %v5116
    %v7611 = vunpack.c.h.b16 %v5116
    %v7612 = vunpack.c.l.b16 %v5117
    %v7613 = vunpack.c.h.b16 %v5117
    %v7614 = vunpack.c.l.b16 %v5118
    %v7615 = vunpack.c.h.b16 %v5118
    %v7616 = vunpack.c.l.b16 %v5119
    %v7617 = vunpack.c.h.b16 %v5119
    %v7618 = vunpack.c.l.b16 %v5120
    %v7619 = vunpack.c.h.b16 %v5120
    %v7620 = vunpack.c.l.b16 %v5121
    %v7621 = vunpack.c.h.b16 %v5121
    %v7622 = vunpack.c.l.b16 %v5122
    %v7623 = vunpack.c.h.b16 %v5122
    %v7624 = vunpack.c.l.b16 %v5123
    %v7625 = vunpack.c.h.b16 %v5123
    %v7626 = vunpack.c.l.b16 %v5124
    %v7627 = vunpack.c.h.b16 %v5124
    %v7628 = vunpack.c.l.b16 %v5125
    %v7629 = vunpack.c.h.b16 %v5125
    %v7630 = vunpack.c.l.b16 %v5126
    %v7631 = vunpack.c.h.b16 %v5126
    %v7632 = vunpack.c.l.b16 %v5127
    %v7633 = vunpack.c.h.b16 %v5127
    %v7634 = vunpack.c.l.b16 %v5128
    %v7635 = vunpack.c.h.b16 %v5128
    %v7636 = vunpack.c.l.b16 %v5129
    %v7637 = vunpack.c.h.b16 %v5129
    %v7638 = vunpack.c.l.b16 %v5130
    %v7639 = vunpack.c.h.b16 %v5130
    %v7640 = vunpack.c.l.b16 %v5131
    %v7641 = vunpack.c.h.b16 %v5131
    %v7642 = vunpack.c.l.b16 %v5132
    %v7643 = vunpack.c.h.b16 %v5132
    %v7644 = vunpack.c.l.b16 %v5133
    %v7645 = vunpack.c.h.b16 %v5133
    %v7646 = vunpack.c.l.b16 %v5134
    %v7647 = vunpack.c.h.b16 %v5134
    %v7648 = vunpack.c.l.b16 %v5135
    %v7649 = vunpack.c.h.b16 %v5135
    %v7650 = vunpack.c.l.b16 %v5136
    %v7651 = vunpack.c.h.b16 %v5136
    %v7652 = vunpack.c.l.b16 %v5137
    %v7653 = vunpack.c.h.b16 %v5137
    %v7654 = vunpack.c.l.b16 %v5138
    %v7655 = vunpack.c.h.b16 %v5138
    %v7656 = vunpack.c.l.b16 %v5139
    %v7657 = vunpack.c.h.b16 %v5139
    %v7658 = vunpack.c.l.b16 %v5140
    %v7659 = vunpack.c.h.b16 %v5140
    %v7660 = vunpack.c.l.b16 %v5141
    %v7661 = vunpack.c.h.b16 %v5141
    %v7662 = vunpack.c.l.b16 %v5142
    %v7663 = vunpack.c.h.b16 %v5142
    %v7664 = vunpack.c.l.b16 %v5143
    %v7665 = vunpack.c.h.b16 %v5143
    %v7666 = vunpack.c.l.b16 %v5144
    %v7667 = vunpack.c.h.b16 %v5144
    %v7668 = vunpack.c.l.b16 %v5145
    %v7669 = vunpack.c.h.b16 %v5145
    %v7670 = vunpack.c.l.b16 %v5146
    %v7671 = vunpack.c.h.b16 %v5146
    %v7672 = vunpack.c.l.b16 %v5147
    %v7673 = vunpack.c.h.b16 %v5147
    %v7674 = vunpack.c.l.b16 %v5148
    %v7675 = vunpack.c.h.b16 %v5148
    %v7676 = vunpack.c.l.b16 %v5149
    %v7677 = vunpack.c.h.b16 %v5149
    %v7678 = vunpack.c.l.b16 %v5150
    %v7679 = vunpack.c.h.b16 %v5150
    %v7680 = vunpack.c.l.b16 %v5151
    %v7681 = vunpack.c.h.b16 %v5151
    %v7682 = vunpack.c.l.b16 %v5152
    %v7683 = vunpack.c.h.b16 %v5152
    %v7684 = vunpack.c.l.b16 %v5153
    %v7685 = vunpack.c.h.b16 %v5153
    %v7686 = vunpack.c.l.b16 %v5154
    %v7687 = vunpack.c.h.b16 %v5154
    %v7688 = vunpack.c.l.b16 %v5155
    %v7689 = vunpack.c.h.b16 %v5155
    %v7690 = vunpack.c.l.b16 %v5156
    %v7691 = vunpack.c.h.b16 %v5156
    %v7692 = vunpack.c.l.b16 %v5157
    %v7693 = vunpack.c.h.b16 %v5157
    %v7694 = vunpack.c.l.b16 %v5158
    %v7695 = vunpack.c.h.b16 %v5158
    %v7696 = vunpack.c.l.b16 %v5159
    %v7697 = vunpack.c.h.b16 %v5159
    %v7698 = vunpack.c.l.b16 %v5160
    %v7699 = vunpack.c.h.b16 %v5160
    %v7700 = vunpack.c.l.b16 %v5161
    %v7701 = vunpack.c.h.b16 %v5161
    %v7702 = vunpack.c.l.b16 %v5162
    %v7703 = vunpack.c.h.b16 %v5162
    %v7704 = vunpack.c.l.b16 %v5163
    %v7705 = vunpack.c.h.b16 %v5163
    %v7706 = vunpack.c.l.b16 %v5164
    %v7707 = vunpack.c.h.b16 %v5164
    %v7708 = vunpack.c.l.b16 %v5165
    %v7709 = vunpack.c.h.b16 %v5165
    %v7710 = vunpack.c.l.b16 %v5166
    %v7711 = vunpack.c.h.b16 %v5166
    %v7712 = vunpack.c.l.b16 %v5167
    %v7713 = vunpack.c.h.b16 %v5167
    %v7714 = vunpack.c.l.b16 %v5168
    %v7715 = vunpack.c.h.b16 %v5168
    %v7716 = vunpack.c.l.b16 %v5169
    %v7717 = vunpack.c.h.b16 %v5169
    %v7718 = vunpack.c.l.b16 %v5170
    %v7719 = vunpack.c.h.b16 %v5170
    %v7720 = vunpack.c.l.b16 %v5171
    %v7721 = vunpack.c.h.b16 %v5171
    %v7722 = vunpack.c.l.b16 %v5172
    %v7723 = vunpack.c.h.b16 %v5172
    %v7724 = vunpack.c.l.b16 %v5173
    %v7725 = vunpack.c.h.b16 %v5173
    %v7726 = vunpack.c.l.b16 %v5174
    %v7727 = vunpack.c.h.b16 %v5174
    %v7728 = vunpack.c.l.b16 %v5175
    %v7729 = vunpack.c.h.b16 %v5175
    %v7730 = vunpack.c.l.b16 %v5176
    %v7731 = vunpack.c.h.b16 %v5176
    %v7732 = vunpack.c.l.b16 %v5177
    %v7733 = vunpack.c.h.b16 %v5177
    %v7734 = vunpack.c.l.b16 %v5178
    %v7735 = vunpack.c.h.b16 %v5178
    %v7736 = vunpack.c.l.b16 %v5179
    %v7737 = vunpack.c.h.b16 %v5179
    %v7738 = vunpack.c.l.b16 %v5180
    %v7739 = vunpack.c.h.b16 %v5180
    %v7740 = vunpack.c.l.b16 %v5181
    %v7741 = vunpack.c.h.b16 %v5181
    %v7742 = vunpack.c.l.b16 %v5182
    %v7743 = vunpack.c.h.b16 %v5182
    %v7744 = vunpack.c.l.b16 %v5183
    %v7745 = vunpack.c.h.b16 %v5183
    %v7746 = vunpack.c.l.b16 %v5184
    %v7747 = vunpack.c.h.b16 %v5184
    %v7748 = vunpack.c.l.b16 %v5185
    %v7749 = vunpack.c.h.b16 %v5185
    %v7750 = vunpack.c.l.b16 %v5186
    %v7751 = vunpack.c.h.b16 %v5186
    %v7752 = vunpack.c.l.b16 %v5187
    %v7753 = vunpack.c.h.b16 %v5187
    %v7754 = vunpack.c.l.b16 %v5188
    %v7755 = vunpack.c.h.b16 %v5188
    %v7756 = vunpack.c.l.b16 %v5189
    %v7757 = vunpack.c.h.b16 %v5189
    %v7758 = vunpack.c.l.b16 %v5190
    %v7759 = vunpack.c.h.b16 %v5190
    %v7760 = vunpack.c.l.b16 %v5191
    %v7761 = vunpack.c.h.b16 %v5191
    %v7762 = vunpack.c.l.b16 %v5192
    %v7763 = vunpack.c.h.b16 %v5192
    %v7764 = vunpack.c.l.b16 %v5193
    %v7765 = vunpack.c.h.b16 %v5193
    %v7766 = vunpack.c.l.b16 %v5194
    %v7767 = vunpack.c.h.b16 %v5194
    %v7768 = vunpack.c.l.b16 %v5195
    %v7769 = vunpack.c.h.b16 %v5195
    %v7770 = vunpack.c.l.b16 %v5196
    %v7771 = vunpack.c.h.b16 %v5196
    %v7772 = vunpack.c.l.b16 %v5197
    %v7773 = vunpack.c.h.b16 %v5197
    %v7774 = vunpack.c.l.b16 %v5198
    %v7775 = vunpack.c.h.b16 %v5198
    %v7776 = vunpack.c.l.b16 %v5199
    %v7777 = vunpack.c.h.b16 %v5199
    %v7778 = vunpack.c.l.b16 %v5200
    %v7779 = vunpack.c.h.b16 %v5200
    %v7780 = vunpack.c.l.b16 %v5201
    %v7781 = vunpack.c.h.b16 %v5201
    %v7782 = vunpack.c.l.b16 %v5202
    %v7783 = vunpack.c.h.b16 %v5202
    %v7784 = vunpack.c.l.b16 %v5203
    %v7785 = vunpack.c.h.b16 %v5203
    %v7786 = vunpack.c.l.b16 %v5204
    %v7787 = vunpack.c.h.b16 %v5204
    %v7788 = vunpack.c.l.b16 %v5205
    %v7789 = vunpack.c.h.b16 %v5205
    %v7790 = vunpack.c.l.b16 %v5206
    %v7791 = vunpack.c.h.b16 %v5206
    %v7792 = vunpack.c.l.b16 %v5207
    %v7793 = vunpack.c.h.b16 %v5207
    %v7794 = vunpack.c.l.b16 %v5208
    %v7795 = vunpack.c.h.b16 %v5208
    %v7796 = vunpack.c.l.b16 %v5209
    %v7797 = vunpack.c.h.b16 %v5209
    %v7798 = vunpack.c.l.b16 %v5210
    %v7799 = vunpack.c.h.b16 %v5210
    %v7800 = vunpack.c.l.b16 %v5211
    %v7801 = vunpack.c.h.b16 %v5211
    %v7802 = vunpack.c.l.b16 %v5212
    %v7803 = vunpack.c.h.b16 %v5212
    %v7804 = vunpack.c.l.b16 %v5213
    %v7805 = vunpack.c.h.b16 %v5213
    %v7806 = vunpack.c.l.b16 %v5214
    %v7807 = vunpack.c.h.b16 %v5214
    %v7808 = vunpack.c.l.b16 %v5215
    %v7809 = vunpack.c.h.b16 %v5215
    %v7810 = vunpack.c.l.b16 %v5216
    %v7811 = vunpack.c.h.b16 %v5216
    %v7812 = vunpack.c.l.b16 %v5217
    %v7813 = vunpack.c.h.b16 %v5217
    %v7814 = vunpack.c.l.b16 %v5218
    %v7815 = vunpack.c.h.b16 %v5218
    %v7816 = vunpack.c.l.b16 %v5219
    %v7817 = vunpack.c.h.b16 %v5219
    %v7818 = vunpack.c.l.b16 %v5220
    %v7819 = vunpack.c.h.b16 %v5220
    %v7820 = vunpack.c.l.b16 %v5221
    %v7821 = vunpack.c.h.b16 %v5221
    %v7822 = vunpack.c.l.b16 %v5222
    %v7823 = vunpack.c.h.b16 %v5222
    %v7824 = vunpack.c.l.b16 %v5223
    %v7825 = vunpack.c.h.b16 %v5223
    %v7826 = vunpack.c.l.b16 %v5224
    %v7827 = vunpack.c.h.b16 %v5224
    %v7828 = vunpack.c.l.b16 %v5225
    %v7829 = vunpack.c.h.b16 %v5225
    %v7830 = vunpack.c.l.b16 %v5226
    %v7831 = vunpack.c.h.b16 %v5226
    %v7832 = vunpack.c.l.b16 %v5227
    %v7833 = vunpack.c.h.b16 %v5227
    %v7834 = vunpack.c.l.b16 %v5228
    %v7835 = vunpack.c.h.b16 %v5228
    %v7836 = vunpack.c.l.b16 %v5229
    %v7837 = vunpack.c.h.b16 %v5229
    %v7838 = vunpack.c.l.b16 %v5230
    %v7839 = vunpack.c.h.b16 %v5230
    %v7840 = vunpack.c.l.b16 %v5231
    %v7841 = vunpack.c.h.b16 %v5231
    %v7842 = vunpack.c.l.b16 %v5232
    %v7843 = vunpack.c.h.b16 %v5232
    %v7844 = vunpack.c.l.b16 %v5233
    %v7845 = vunpack.c.h.b16 %v5233
    %v7846 = vunpack.c.l.b16 %v5234
    %v7847 = vunpack.c.h.b16 %v5234
    %v7848 = vunpack.c.l.b16 %v5235
    %v7849 = vunpack.c.h.b16 %v5235
    %v7850 = vunpack.c.l.b16 %v5236
    %v7851 = vunpack.c.h.b16 %v5236
    %v7852 = vunpack.c.l.b16 %v5237
    %v7853 = vunpack.c.h.b16 %v5237
    %v7854 = vunpack.c.l.b16 %v5238
    %v7855 = vunpack.c.h.b16 %v5238
    %v7856 = vunpack.c.l.b16 %v5239
    %v7857 = vunpack.c.h.b16 %v5239
    %v7858 = vunpack.c.l.b16 %v5240
    %v7859 = vunpack.c.h.b16 %v5240
    %v7860 = vunpack.c.l.b16 %v5241
    %v7861 = vunpack.c.h.b16 %v5241
    %v7862 = vunpack.c.l.b16 %v5242
    %v7863 = vunpack.c.h.b16 %v5242
    %v7864 = vunpack.c.l.b16 %v5243
    %v7865 = vunpack.c.h.b16 %v5243
    %v7866 = vunpack.c.l.b16 %v5244
    %v7867 = vunpack.c.h.b16 %v5244
    %v7868 = vunpack.c.l.b16 %v5245
    %v7869 = vunpack.c.h.b16 %v5245
    %v7870 = vunpack.c.l.b16 %v5246
    %v7871 = vunpack.c.h.b16 %v5246
    %v7872 = vunpack.c.l.b16 %v5247
    %v7873 = vunpack.c.h.b16 %v5247
    %v7874 = vunpack.c.l.b16 %v5248
    %v7875 = vunpack.c.h.b16 %v5248
    %v7876 = vunpack.c.l.b16 %v5249
    %v7877 = vunpack.c.h.b16 %v5249
    %v7878 = vunpack.c.l.b16 %v5250
    %v7879 = vunpack.c.h.b16 %v5250
    %v7880 = vunpack.c.l.b16 %v5251
    %v7881 = vunpack.c.h.b16 %v5251
    %v7882 = vunpack.c.l.b16 %v5252
    %v7883 = vunpack.c.h.b16 %v5252
    %v7884 = vunpack.c.l.b16 %v5253
    %v7885 = vunpack.c.h.b16 %v5253
    %v7886 = vunpack.c.l.b16 %v5254
    %v7887 = vunpack.c.h.b16 %v5254
    %v7888 = vunpack.c.l.b16 %v5255
    %v7889 = vunpack.c.h.b16 %v5255
    %v7890 = vunpack.c.l.b16 %v5256
    %v7891 = vunpack.c.h.b16 %v5256
    %v7892 = vunpack.c.l.b16 %v5257
    %v7893 = vunpack.c.h.b16 %v5257
    %v7894 = vunpack.c.l.b16 %v5258
    %v7895 = vunpack.c.h.b16 %v5258
    %v7896 = vunpack.c.l.b16 %v5259
    %v7897 = vunpack.c.h.b16 %v5259
    %v7898 = vunpack.c.l.b16 %v5260
    %v7899 = vunpack.c.h.b16 %v5260
    %v7900 = vunpack.c.l.b16 %v5261
    %v7901 = vunpack.c.h.b16 %v5261
    %v7902 = vunpack.c.l.b16 %v5262
    %v7903 = vunpack.c.h.b16 %v5262
    %v7904 = vunpack.c.l.b16 %v5263
    %v7905 = vunpack.c.h.b16 %v5263
    %v7906 = vunpack.c.l.b16 %v5264
    %v7907 = vunpack.c.h.b16 %v5264
    %v7908 = vunpack.c.l.b16 %v5265
    %v7909 = vunpack.c.h.b16 %v5265
    %v7910 = vunpack.c.l.b16 %v5266
    %v7911 = vunpack.c.h.b16 %v5266
    %v7912 = vunpack.c.l.b16 %v5267
    %v7913 = vunpack.c.h.b16 %v5267
    %v7914 = vunpack.c.l.b16 %v5268
    %v7915 = vunpack.c.h.b16 %v5268
    %v7916 = vunpack.c.l.b16 %v5269
    %v7917 = vunpack.c.h.b16 %v5269
    %v7918 = vunpack.c.l.b16 %v5270
    %v7919 = vunpack.c.h.b16 %v5270
    %v7920 = vunpack.c.l.b16 %v5271
    %v7921 = vunpack.c.h.b16 %v5271
    %v7922 = vunpack.c.l.b16 %v5272
    %v7923 = vunpack.c.h.b16 %v5272
    %v7924 = vunpack.c.l.b16 %v5273
    %v7925 = vunpack.c.h.b16 %v5273
    %v7926 = vunpack.c.l.b16 %v5274
    %v7927 = vunpack.c.h.b16 %v5274
    %v7928 = vunpack.c.l.b16 %v5275
    %v7929 = vunpack.c.h.b16 %v5275
    %v7930 = vunpack.c.l.b16 %v5276
    %v7931 = vunpack.c.h.b16 %v5276
    %v7932 = vunpack.c.l.b16 %v5277
    %v7933 = vunpack.c.h.b16 %v5277
    %v7934 = vunpack.c.l.b16 %v5278
    %v7935 = vunpack.c.h.b16 %v5278
    %v7936 = vunpack.c.l.b16 %v5279
    %v7937 = vunpack.c.h.b16 %v5279
    %v7938 = vunpack.c.l.b16 %v5280
    %v7939 = vunpack.c.h.b16 %v5280
    %v7940 = vunpack.c.l.b16 %v5281
    %v7941 = vunpack.c.h.b16 %v5281
    %v7942 = vunpack.c.l.b16 %v5282
    %v7943 = vunpack.c.h.b16 %v5282
    %v7944 = vunpack.c.l.b16 %v5283
    %v7945 = vunpack.c.h.b16 %v5283
    %v7946 = vunpack.c.l.b16 %v5284
    %v7947 = vunpack.c.h.b16 %v5284
    %v7948 = vunpack.c.l.b16 %v5285
    %v7949 = vunpack.c.h.b16 %v5285
    %v7950 = vunpack.c.l.b16 %v5286
    %v7951 = vunpack.c.h.b16 %v5286
    %v7952 = vunpack.c.l.b16 %v5287
    %v7953 = vunpack.c.h.b16 %v5287
    %v7954 = vunpack.c.l.b16 %v5288
    %v7955 = vunpack.c.h.b16 %v5288
    %v7956 = vunpack.c.l.b16 %v5289
    %v7957 = vunpack.c.h.b16 %v5289
    %v7958 = vunpack.c.l.b16 %v5290
    %v7959 = vunpack.c.h.b16 %v5290
    %v7960 = vunpack.c.l.b16 %v5291
    %v7961 = vunpack.c.h.b16 %v5291
    %v7962 = vunpack.c.l.b16 %v5292
    %v7963 = vunpack.c.h.b16 %v5292
    %v7964 = vunpack.c.l.b16 %v5293
    %v7965 = vunpack.c.h.b16 %v5293
    %v7966 = vunpack.c.l.b16 %v5294
    %v7967 = vunpack.c.h.b16 %v5294
    %v7968 = vunpack.c.l.b16 %v5295
    %v7969 = vunpack.c.h.b16 %v5295
    %v7970 = vunpack.c.l.b16 %v5296
    %v7971 = vunpack.c.h.b16 %v5296
    %v7972 = vunpack.c.l.b16 %v5297
    %v7973 = vunpack.c.h.b16 %v5297
    %v7974 = vunpack.c.l.b16 %v5298
    %v7975 = vunpack.c.h.b16 %v5298
    %v7976 = vunpack.c.l.b16 %v5299
    %v7977 = vunpack.c.h.b16 %v5299
    %v7978 = vunpack.c.l.b16 %v5300
    %v7979 = vunpack.c.h.b16 %v5300
    %v7980 = vunpack.c.l.b16 %v5301
    %v7981 = vunpack.c.h.b16 %v5301
    %v7982 = vunpack.c.l.b16 %v5302
    %v7983 = vunpack.c.h.b16 %v5302
    %v7984 = vunpack.c.l.b16 %v5303
    %v7985 = vunpack.c.h.b16 %v5303
    %v7986 = vunpack.c.l.b16 %v5304
    %v7987 = vunpack.c.h.b16 %v5304
    %v7988 = vunpack.c.l.b16 %v5305
    %v7989 = vunpack.c.h.b16 %v5305
    %v7990 = vunpack.c.l.b16 %v5306
    %v7991 = vunpack.c.h.b16 %v5306
    %v7992 = vunpack.c.l.b16 %v5307
    %v7993 = vunpack.c.h.b16 %v5307
    %v7994 = vunpack.c.l.b16 %v5308
    %v7995 = vunpack.c.h.b16 %v5308
    %v7996 = vunpack.c.l.b16 %v5309
    %v7997 = vunpack.c.h.b16 %v5309
    %v7998 = vunpack.c.l.b16 %v5310
    %v7999 = vunpack.c.h.b16 %v5310
    %v8000 = vunpack.c.l.b16 %v5311
    %v8001 = vunpack.c.h.b16 %v5311
    %v8002 = vunpack.c.l.b16 %v5312
    %v8003 = vunpack.c.h.b16 %v5312
    %v8004 = vunpack.c.l.b16 %v5313
    %v8005 = vunpack.c.h.b16 %v5313
    %v8006 = vunpack.c.l.b16 %v5314
    %v8007 = vunpack.c.h.b16 %v5314
    %v8008 = vunpack.c.l.b16 %v5315
    %v8009 = vunpack.c.h.b16 %v5315
    %v8010 = vunpack.c.l.b16 %v5316
    %v8011 = vunpack.c.h.b16 %v5316
    %v8012 = vunpack.c.l.b16 %v5317
    %v8013 = vunpack.c.h.b16 %v5317
    %v8014 = vunpack.c.l.b16 %v5318
    %v8015 = vunpack.c.h.b16 %v5318
    %v8016 = vunpack.c.l.b16 %v5319
    %v8017 = vunpack.c.h.b16 %v5319
    %v8018 = vunpack.c.l.b16 %v5320
    %v8019 = vunpack.c.h.b16 %v5320
    %v8020 = vunpack.c.l.b16 %v5321
    %v8021 = vunpack.c.h.b16 %v5321
    %v8022 = vunpack.c.l.b16 %v5322
    %v8023 = vunpack.c.h.b16 %v5322
    %v8024 = vunpack.c.l.b16 %v5323
    %v8025 = vunpack.c.h.b16 %v5323
    %v8026 = vunpack.c.l.b16 %v5324
    %v8027 = vunpack.c.h.b16 %v5324
    %v8028 = vunpack.c.l.b16 %v5325
    %v8029 = vunpack.c.h.b16 %v5325
    %v8030 = vunpack.c.l.b16 %v5326
    %v8031 = vunpack.c.h.b16 %v5326
    %v8032 = vunpack.c.l.b16 %v5327
    %v8033 = vunpack.c.h.b16 %v5327
    %v8034 = vunpack.c.l.b16 %v5328
    %v8035 = vunpack.c.h.b16 %v5328
    %v8036 = vunpack.c.l.b16 %v5329
    %v8037 = vunpack.c.h.b16 %v5329
    %v8038 = vunpack.c.l.b16 %v5330
    %v8039 = vunpack.c.h.b16 %v5330
    %v8040 = vunpack.c.l.b16 %v5331
    %v8041 = vunpack.c.h.b16 %v5331
    %v8042 = vunpack.c.l.b16 %v5332
    %v8043 = vunpack.c.h.b16 %v5332
    %v8044 = vunpack.c.l.b16 %v5333
    %v8045 = vunpack.c.h.b16 %v5333
    %v8046 = vunpack.c.l.b16 %v5334
    %v8047 = vunpack.c.h.b16 %v5334
    %v8048 = vunpack.c.l.b16 %v5335
    %v8049 = vunpack.c.h.b16 %v5335
    %v8050 = vunpack.c.l.b16 %v5336
    %v8051 = vunpack.c.h.b16 %v5336
    %v8052 = vunpack.c.l.b16 %v5337
    %v8053 = vunpack.c.h.b16 %v5337
    %v8054 = vunpack.c.l.b16 %v5338
    %v8055 = vunpack.c.h.b16 %v5338
    %v8056 = vunpack.c.l.b16 %v5339
    %v8057 = vunpack.c.h.b16 %v5339
    %v8058 = vunpack.c.l.b16 %v5340
    %v8059 = vunpack.c.h.b16 %v5340
    %v8060 = vunpack.c.l.b16 %v5341
    %v8061 = vunpack.c.h.b16 %v5341
    %v8062 = vunpack.c.l.b16 %v5342
    %v8063 = vunpack.c.h.b16 %v5342
    %v8064 = vunpack.c.l.b16 %v5343
    %v8065 = vunpack.c.h.b16 %v5343
    %v8066 = vunpack.c.l.b16 %v5344
    %v8067 = vunpack.c.h.b16 %v5344
    %v8068 = vunpack.c.l.b16 %v5345
    %v8069 = vunpack.c.h.b16 %v5345
    %v8070 = vunpack.c.l.b16 %v5346
    %v8071 = vunpack.c.h.b16 %v5346
    %v8072 = vunpack.c.l.b16 %v5347
    %v8073 = vunpack.c.h.b16 %v5347
    %v8074 = vunpack.c.l.b16 %v5348
    %v8075 = vunpack.c.h.b16 %v5348
    %v8076 = vunpack.c.l.b16 %v5349
    %v8077 = vunpack.c.h.b16 %v5349
    %v8078 = vunpack.c.l.b16 %v5350
    %v8079 = vunpack.c.h.b16 %v5350
    %v8080 = vunpack.c.l.b16 %v5351
    %v8081 = vunpack.c.h.b16 %v5351
    %v8082 = vunpack.c.l.b16 %v5352
    %v8083 = vunpack.c.h.b16 %v5352
    %v8084 = vunpack.c.l.b16 %v5353
    %v8085 = vunpack.c.h.b16 %v5353
    %v8086 = vunpack.c.l.b16 %v5354
    %v8087 = vunpack.c.h.b16 %v5354
    %v8088 = vunpack.c.l.b16 %v5355
    %v8089 = vunpack.c.h.b16 %v5355
    %v8090 = vunpack.c.l.b16 %v5356
    %v8091 = vunpack.c.h.b16 %v5356
    %v8092 = vunpack.c.l.b16 %v5357
    %v8093 = vunpack.c.h.b16 %v5357
    %v8094 = vunpack.c.l.b16 %v5358
    %v8095 = vunpack.c.h.b16 %v5358
    %v8096 = vunpack.c.l.b16 %v5359
    %v8097 = vunpack.c.h.b16 %v5359
    %v8098 = vunpack.c.l.b16 %v5360
    %v8099 = vunpack.c.h.b16 %v5360
    %v8100 = vunpack.c.l.b16 %v5361
    %v8101 = vunpack.c.h.b16 %v5361
    %v8102 = vunpack.c.l.b16 %v5362
    %v8103 = vunpack.c.h.b16 %v5362
    %v8104 = vunpack.c.l.b16 %v5363
    %v8105 = vunpack.c.h.b16 %v5363
    %v8106 = vunpack.c.l.b16 %v5364
    %v8107 = vunpack.c.h.b16 %v5364
    %v8108 = vunpack.c.l.b16 %v5365
    %v8109 = vunpack.c.h.b16 %v5365
    %v8110 = vunpack.c.l.b16 %v5366
    %v8111 = vunpack.c.h.b16 %v5366
    %v8112 = vunpack.c.l.b16 %v5367
    %v8113 = vunpack.c.h.b16 %v5367
    %v8114 = vunpack.c.l.b16 %v5368
    %v8115 = vunpack.c.h.b16 %v5368
    %v8116 = vunpack.c.l.b16 %v5369
    %v8117 = vunpack.c.h.b16 %v5369
    %v8118 = vunpack.c.l.b16 %v5370
    %v8119 = vunpack.c.h.b16 %v5370
    %v8120 = vunpack.c.l.b16 %v5371
    %v8121 = vunpack.c.h.b16 %v5371
    %v8122 = vunpack.c.l.b16 %v5372
    %v8123 = vunpack.c.h.b16 %v5372
    %v8124 = vunpack.c.l.b16 %v5373
    %v8125 = vunpack.c.h.b16 %v5373
    %v8126 = vunpack.c.l.b16 %v5374
    %v8127 = vunpack.c.h.b16 %v5374
    %v8128 = vunpack.c.l.b16 %v5375
    %v8129 = vunpack.c.h.b16 %v5375
    %v8130 = vunpack.c.l.b16 %v5376
    %v8131 = vunpack.c.h.b16 %v5376
    %v8132 = vunpack.c.l.b16 %v5377
    %v8133 = vunpack.c.h.b16 %v5377
    %v8134 = vunpack.c.l.b16 %v5378
    %v8135 = vunpack.c.h.b16 %v5378
    %v8136 = vunpack.c.l.b16 %v5379
    %v8137 = vunpack.c.h.b16 %v5379
    %v8138 = vunpack.c.l.b16 %v5380
    %v8139 = vunpack.c.h.b16 %v5380
    %v8140 = vunpack.c.l.b16 %v5381
    %v8141 = vunpack.c.h.b16 %v5381
    %v8142 = vunpack.c.l.b16 %v5382
    %v8143 = vunpack.c.h.b16 %v5382
    %v8144 = vunpack.c.l.b16 %v5383
    %v8145 = vunpack.c.h.b16 %v5383
    %v8146 = vunpack.c.l.b16 %v5384
    %v8147 = vunpack.c.h.b16 %v5384
    %v8148 = vunpack.c.l.b16 %v5385
    %v8149 = vunpack.c.h.b16 %v5385
    %v8150 = vunpack.c.l.b16 %v5386
    %v8151 = vunpack.c.h.b16 %v5386
    %v8152 = vunpack.c.l.b16 %v5387
    %v8153 = vunpack.c.h.b16 %v5387
    %v8154 = vunpack.c.l.b16 %v5388
    %v8155 = vunpack.c.h.b16 %v5388
    %v8156 = vunpack.c.l.b16 %v5389
    %v8157 = vunpack.c.h.b16 %v5389
    %v8158 = vunpack.c.l.b16 %v5390
    %v8159 = vunpack.c.h.b16 %v5390
    %v8160 = vunpack.c.l.b16 %v5391
    %v8161 = vunpack.c.h.b16 %v5391
    %v8162 = vunpack.c.l.b16 %v5392
    %v8163 = vunpack.c.h.b16 %v5392
    %v8164 = vunpack.c.l.b16 %v5393
    %v8165 = vunpack.c.h.b16 %v5393
    %v8166 = vunpack.c.l.b16 %v5394
    %v8167 = vunpack.c.h.b16 %v5394
    %v8168 = vunpack.c.l.b16 %v5395
    %v8169 = vunpack.c.h.b16 %v5395
    %v8170 = vunpack.c.l.b16 %v5396
    %v8171 = vunpack.c.h.b16 %v5396
    %v8172 = vunpack.c.l.b16 %v5397
    %v8173 = vunpack.c.h.b16 %v5397
    %v8174 = vunpack.c.l.b16 %v5398
    %v8175 = vunpack.c.h.b16 %v5398
    %v8176 = vunpack.c.l.b16 %v5399
    %v8177 = vunpack.c.h.b16 %v5399
    %v8178 = vunpack.c.l.b16 %v5400
    %v8179 = vunpack.c.h.b16 %v5400
    %v8180 = vunpack.c.l.b16 %v5401
    %v8181 = vunpack.c.h.b16 %v5401
    %v8182 = vunpack.c.l.b16 %v5402
    %v8183 = vunpack.c.h.b16 %v5402
    %v8184 = vunpack.c.l.b16 %v5403
    %v8185 = vunpack.c.h.b16 %v5403
    %v8186 = vunpack.c.l.b16 %v5404
    %v8187 = vunpack.c.h.b16 %v5404
    %v8188 = vunpack.c.l.b16 %v5405
    %v8189 = vunpack.c.h.b16 %v5405
    %v8190 = vunpack.c.l.b16 %v5406
    %v8191 = vunpack.c.h.b16 %v5406
    %v8192 = vunpack.c.l.b16 %v5407
    %v8193 = vunpack.c.h.b16 %v5407
    %v8194 = vunpack.c.l.b16 %v5408
    %v8195 = vunpack.c.h.b16 %v5408
    %v8196 = vunpack.c.l.b16 %v5409
    %v8197 = vunpack.c.h.b16 %v5409
    %v8198 = vunpack.c.l.b16 %v5410
    %v8199 = vunpack.c.h.b16 %v5410
    %v8200 = vunpack.c.l.b16 %v5411
    %v8201 = vunpack.c.h.b16 %v5411
    %v8202 = vunpack.c.l.b16 %v5412
    %v8203 = vunpack.c.h.b16 %v5412
    %v8204 = vunpack.c.l.b16 %v5413
    %v8205 = vunpack.c.h.b16 %v5413
    %v8206 = vunpack.c.l.b16 %v5414
    %v8207 = vunpack.c.h.b16 %v5414
    %v8208 = vunpack.c.l.b16 %v5415
    %v8209 = vunpack.c.h.b16 %v5415
    %v8210 = vunpack.c.l.b16 %v5416
    %v8211 = vunpack.c.h.b16 %v5416
    %v8212 = vunpack.c.l.b16 %v5417
    %v8213 = vunpack.c.h.b16 %v5417
    %v8214 = vunpack.c.l.b16 %v5418
    %v8215 = vunpack.c.h.b16 %v5418
    %v8216 = vunpack.c.l.b16 %v5419
    %v8217 = vunpack.c.h.b16 %v5419
    %v8218 = vunpack.c.l.b16 %v5420
    %v8219 = vunpack.c.h.b16 %v5420
    %v8220 = vunpack.c.l.b16 %v5421
    %v8221 = vunpack.c.h.b16 %v5421
    %v8222 = vunpack.c.l.b16 %v5422
    %v8223 = vunpack.c.h.b16 %v5422
    %v8224 = vunpack.c.l.b16 %v5423
    %v8225 = vunpack.c.h.b16 %v5423
    %v8226 = vunpack.c.l.b16 %v5424
    %v8227 = vunpack.c.h.b16 %v5424
    %v8228 = vunpack.c.l.b16 %v5425
    %v8229 = vunpack.c.h.b16 %v5425
    %v8230 = vunpack.c.l.b16 %v5426
    %v8231 = vunpack.c.h.b16 %v5426
    %v8232 = vunpack.c.l.b16 %v5427
    %v8233 = vunpack.c.h.b16 %v5427
    %v8234 = vunpack.c.l.b16 %v5428
    %v8235 = vunpack.c.h.b16 %v5428
    %v8236 = vunpack.c.l.b16 %v5429
    %v8237 = vunpack.c.h.b16 %v5429
    %v8238 = vunpack.c.l.b16 %v5430
    %v8239 = vunpack.c.h.b16 %v5430
    %v8240 = vunpack.c.l.b16 %v5431
    %v8241 = vunpack.c.h.b16 %v5431
    %v8242 = vunpack.c.l.b16 %v5432
    %v8243 = vunpack.c.h.b16 %v5432
    %v8244 = vunpack.c.l.b16 %v5433
    %v8245 = vunpack.c.h.b16 %v5433
    %v8246 = vunpack.c.l.b16 %v5434
    %v8247 = vunpack.c.h.b16 %v5434
    %v8248 = vunpack.c.l.b16 %v5435
    %v8249 = vunpack.c.h.b16 %v5435
    %v8250 = vunpack.c.l.b16 %v5436
    %v8251 = vunpack.c.h.b16 %v5436
    %v8252 = vunpack.c.l.b16 %v5437
    %v8253 = vunpack.c.h.b16 %v5437
    %v8254 = vunpack.c.l.b16 %v5438
    %v8255 = vunpack.c.h.b16 %v5438
    %v8256 = vunpack.c.l.b16 %v5439
    %v8257 = vunpack.c.h.b16 %v5439
    %v8258 = vunpack.c.l.b16 %v5440
    %v8259 = vunpack.c.h.b16 %v5440
    %v8260 = vunpack.c.l.b16 %v5441
    %v8261 = vunpack.c.h.b16 %v5441
    %v8262 = vunpack.c.l.b16 %v5442
    %v8263 = vunpack.c.h.b16 %v5442
    %v8264 = vunpack.c.l.b16 %v5443
    %v8265 = vunpack.c.h.b16 %v5443
    %v8266 = vunpack.c.l.b16 %v5444
    %v8267 = vunpack.c.h.b16 %v5444
    %v8268 = vunpack.c.l.b16 %v5445
    %v8269 = vunpack.c.h.b16 %v5445
    %v8270 = vunpack.c.l.b16 %v5446
    %v8271 = vunpack.c.h.b16 %v5446
    %v8272 = vunpack.c.l.b16 %v5447
    %v8273 = vunpack.c.h.b16 %v5447
    %v8274 = vunpack.c.l.b16 %v5448
    %v8275 = vunpack.c.h.b16 %v5448
    %v8276 = vunpack.c.l.b16 %v5449
    %v8277 = vunpack.c.h.b16 %v5449
    %v8278 = vunpack.c.l.b16 %v5450
    %v8279 = vunpack.c.h.b16 %v5450
    %v8280 = vunpack.c.l.b16 %v5451
    %v8281 = vunpack.c.h.b16 %v5451
    %v8282 = vunpack.c.l.b16 %v5452
    %v8283 = vunpack.c.h.b16 %v5452
    %v8284 = vunpack.c.l.b16 %v5453
    %v8285 = vunpack.c.h.b16 %v5453
    %v8286 = vunpack.c.l.b16 %v5454
    %v8287 = vunpack.c.h.b16 %v5454
    %v8288 = vunpack.c.l.b16 %v5455
    %v8289 = vunpack.c.h.b16 %v5455
    %v8290 = vunpack.c.l.b16 %v5456
    %v8291 = vunpack.c.h.b16 %v5456
    %v8292 = vunpack.c.l.b16 %v5457
    %v8293 = vunpack.c.h.b16 %v5457
    %v8294 = vunpack.c.l.b16 %v5458
    %v8295 = vunpack.c.h.b16 %v5458
    %v8296 = vunpack.c.l.b16 %v5459
    %v8297 = vunpack.c.h.b16 %v5459
    %v8298 = vunpack.c.l.b16 %v5460
    %v8299 = vunpack.c.h.b16 %v5460
    %v8300 = vunpack.c.l.b16 %v5461
    %v8301 = vunpack.c.h.b16 %v5461
    %v8302 = vunpack.c.l.b16 %v5462
    %v8303 = vunpack.c.h.b16 %v5462
    %v8304 = vunpack.c.l.b16 %v5463
    %v8305 = vunpack.c.h.b16 %v5463
    %v8306 = vunpack.c.l.b16 %v5464
    %v8307 = vunpack.c.h.b16 %v5464
    %v8308 = vunpack.c.l.b16 %v5465
    %v8309 = vunpack.c.h.b16 %v5465
    %v8310 = vunpack.c.l.b16 %v5466
    %v8311 = vunpack.c.h.b16 %v5466
    %v8312 = vunpack.c.l.b16 %v5467
    %v8313 = vunpack.c.h.b16 %v5467
    %v8314 = vunpack.c.l.b16 %v5468
    %v8315 = vunpack.c.h.b16 %v5468
    %v8316 = vunpack.c.l.b16 %v5469
    %v8317 = vunpack.c.h.b16 %v5469
    %v8318 = vunpack.c.l.b16 %v5470
    %v8319 = vunpack.c.h.b16 %v5470
    %v8320 = vunpack.c.l.b16 %v5471
    %v8321 = vunpack.c.h.b16 %v5471
    %v8322 = vunpack.c.l.b16 %v5472
    %v8323 = vunpack.c.h.b16 %v5472
    %v8324 = vunpack.c.l.b16 %v5473
    %v8325 = vunpack.c.h.b16 %v5473
    %v8326 = vunpack.c.l.b16 %v5474
    %v8327 = vunpack.c.h.b16 %v5474
    %v8328 = vunpack.c.l.b16 %v5475
    %v8329 = vunpack.c.h.b16 %v5475
    %v8330 = vunpack.c.l.b16 %v5476
    %v8331 = vunpack.c.h.b16 %v5476
    %v8332 = vunpack.c.l.b16 %v5477
    %v8333 = vunpack.c.h.b16 %v5477
    %v8334 = vunpack.c.l.b16 %v5478
    %v8335 = vunpack.c.h.b16 %v5478
    %v8336 = vunpack.c.l.b16 %v5479
    %v8337 = vunpack.c.h.b16 %v5479
    %v8338 = vunpack.c.l.b16 %v5480
    %v8339 = vunpack.c.h.b16 %v5480
    %v8340 = vunpack.c.l.b16 %v5481
    %v8341 = vunpack.c.h.b16 %v5481
    %v8342 = vunpack.c.l.b16 %v5482
    %v8343 = vunpack.c.h.b16 %v5482
    %v8344 = vunpack.c.l.b16 %v5483
    %v8345 = vunpack.c.h.b16 %v5483
    %v8346 = vunpack.c.l.b16 %v5484
    %v8347 = vunpack.c.h.b16 %v5484
    %v8348 = vunpack.c.l.b16 %v5485
    %v8349 = vunpack.c.h.b16 %v5485
    %v8350 = vunpack.c.l.b16 %v5486
    %v8351 = vunpack.c.h.b16 %v5486
    %v8352 = vunpack.c.l.b16 %v5487
    %v8353 = vunpack.c.h.b16 %v5487
    %v8354 = vunpack.c.l.b16 %v5488
    %v8355 = vunpack.c.h.b16 %v5488
    %v8356 = vunpack.c.l.b16 %v5489
    %v8357 = vunpack.c.h.b16 %v5489
    %v8358 = vunpack.c.l.b16 %v5490
    %v8359 = vunpack.c.h.b16 %v5490
    %v8360 = vunpack.c.l.b16 %v5491
    %v8361 = vunpack.c.h.b16 %v5491
    %v8362 = vunpack.c.l.b16 %v5492
    %v8363 = vunpack.c.h.b16 %v5492
    %v8364 = vunpack.c.l.b16 %v5493
    %v8365 = vunpack.c.h.b16 %v5493
    %v8366 = vunpack.c.l.b16 %v5494
    %v8367 = vunpack.c.h.b16 %v5494
    %v8368 = vunpack.c.l.b16 %v5495
    %v8369 = vunpack.c.h.b16 %v5495
    %v8370 = vunpack.c.l.b16 %v5496
    %v8371 = vunpack.c.h.b16 %v5496
    %v8372 = vunpack.c.l.b16 %v5497
    %v8373 = vunpack.c.h.b16 %v5497
    %v8374 = vunpack.c.l.b16 %v5498
    %v8375 = vunpack.c.h.b16 %v5498
    %v8376 = vunpack.c.l.b16 %v5499
    %v8377 = vunpack.c.h.b16 %v5499
    %v8378 = vunpack.c.l.b16 %v5500
    %v8379 = vunpack.c.h.b16 %v5500
    %v8380 = vunpack.c.l.b16 %v5501
    %v8381 = vunpack.c.h.b16 %v5501
    %v8382 = vunpack.c.l.b16 %v5502
    %v8383 = vunpack.c.h.b16 %v5502
    %v8384 = vunpack.c.l.b16 %v5503
    %v8385 = vunpack.c.h.b16 %v5503
    %v8386 = vunpack.c.l.b16 %v5504
    %v8387 = vunpack.c.h.b16 %v5504
    %v8388 = vunpack.c.l.b16 %v5505
    %v8389 = vunpack.c.h.b16 %v5505
    %v8390 = vunpack.c.l.b16 %v5506
    %v8391 = vunpack.c.h.b16 %v5506
    %v8392 = vunpack.c.l.b16 %v5507
    %v8393 = vunpack.c.h.b16 %v5507
    %v8394 = vunpack.c.l.b16 %v5508
    %v8395 = vunpack.c.h.b16 %v5508
    %v8396 = vunpack.c.l.b16 %v5509
    %v8397 = vunpack.c.h.b16 %v5509
    %v8398 = vunpack.c.l.b16 %v5510
    %v8399 = vunpack.c.h.b16 %v5510
    %v8400 = vunpack.c.l.b16 %v5511
    %v8401 = vunpack.c.h.b16 %v5511
    %v8402 = vunpack.c.l.b16 %v5512
    %v8403 = vunpack.c.h.b16 %v5512
    %v8404 = vunpack.c.l.b16 %v5513
    %v8405 = vunpack.c.h.b16 %v5513
    %v8406 = vunpack.c.l.b16 %v5514
    %v8407 = vunpack.c.h.b16 %v5514
    %v8408 = vunpack.c.l.b16 %v5515
    %v8409 = vunpack.c.h.b16 %v5515
    %v8410 = vunpack.c.l.b16 %v5516
    %v8411 = vunpack.c.h.b16 %v5516
    %v8412 = vunpack.c.l.b16 %v5517
    %v8413 = vunpack.c.h.b16 %v5517
    %v8414 = vunpack.c.l.b16 %v5518
    %v8415 = vunpack.c.h.b16 %v5518
    %v8416 = vunpack.c.l.b16 %v5519
    %v8417 = vunpack.c.h.b16 %v5519
    %v8418 = vunpack.c.l.b16 %v5520
    %v8419 = vunpack.c.h.b16 %v5520
    %v8420 = vunpack.c.l.b16 %v5521
    %v8421 = vunpack.c.h.b16 %v5521
    %v8422 = vunpack.c.l.b16 %v5522
    %v8423 = vunpack.c.h.b16 %v5522
    %v8424 = vunpack.c.l.b16 %v5523
    %v8425 = vunpack.c.h.b16 %v5523
    %v8426 = vunpack.c.l.b16 %v5524
    %v8427 = vunpack.c.h.b16 %v5524
    %v8428 = vunpack.c.l.b16 %v5525
    %v8429 = vunpack.c.h.b16 %v5525
    %v8430 = vunpack.c.l.b16 %v5526
    %v8431 = vunpack.c.h.b16 %v5526
    %v8432 = vunpack.c.l.b16 %v5527
    %v8433 = vunpack.c.h.b16 %v5527
    %v8434 = vunpack.c.l.b16 %v5528
    %v8435 = vunpack.c.h.b16 %v5528
    %v8436 = vunpack.c.l.b16 %v5529
    %v8437 = vunpack.c.h.b16 %v5529
    %v8438 = vunpack.c.l.b16 %v5530
    %v8439 = vunpack.c.h.b16 %v5530
    %v8440 = vunpack.c.l.b16 %v5531
    %v8441 = vunpack.c.h.b16 %v5531
    %v8442 = vunpack.c.l.b16 %v5532
    %v8443 = vunpack.c.h.b16 %v5532
    %v8444 = vunpack.c.l.b16 %v5533
    %v8445 = vunpack.c.h.b16 %v5533
    %v8446 = vunpack.c.l.b16 %v5534
    %v8447 = vunpack.c.h.b16 %v5534
    %v8448 = vunpack.c.l.b16 %v5535
    %v8449 = vunpack.c.h.b16 %v5535
    %v8450 = vunpack.c.l.b16 %v5536
    %v8451 = vunpack.c.h.b16 %v5536
    %v8452 = vunpack.c.l.b16 %v5537
    %v8453 = vunpack.c.h.b16 %v5537
    %v8454 = vunpack.c.l.b16 %v5538
    %v8455 = vunpack.c.h.b16 %v5538
    %v8456 = vunpack.c.l.b16 %v5539
    %v8457 = vunpack.c.h.b16 %v5539
    %v8458 = vunpack.c.l.b16 %v5540
    %v8459 = vunpack.c.h.b16 %v5540
    %v8460 = vunpack.c.l.b16 %v5541
    %v8461 = vunpack.c.h.b16 %v5541
    %v8462 = vunpack.c.l.b16 %v5542
    %v8463 = vunpack.c.h.b16 %v5542
    %v8464 = vunpack.c.l.b16 %v5543
    %v8465 = vunpack.c.h.b16 %v5543
    %v8466 = vunpack.c.l.b16 %v5544
    %v8467 = vunpack.c.h.b16 %v5544
    %v8468 = vunpack.c.l.b16 %v5545
    %v8469 = vunpack.c.h.b16 %v5545
    %v8470 = vunpack.c.l.b16 %v5546
    %v8471 = vunpack.c.h.b16 %v5546
    %v8472 = vunpack.c.l.b16 %v5547
    %v8473 = vunpack.c.h.b16 %v5547
    %v8474 = vunpack.c.l.b16 %v5548
    %v8475 = vunpack.c.h.b16 %v5548
    %v8476 = vunpack.c.l.b16 %v5549
    %v8477 = vunpack.c.h.b16 %v5549
    %v8478 = vunpack.c.l.b16 %v5550
    %v8479 = vunpack.c.h.b16 %v5550
    %v8480 = vunpack.c.l.b16 %v5551
    %v8481 = vunpack.c.h.b16 %v5551
    %v8482 = vunpack.c.l.b16 %v5552
    %v8483 = vunpack.c.h.b16 %v5552
    %v8484 = vunpack.c.l.b16 %v5553
    %v8485 = vunpack.c.h.b16 %v5553
    %v8486 = vunpack.c.l.b16 %v5554
    %v8487 = vunpack.c.h.b16 %v5554
    %v8488 = vunpack.c.l.b16 %v5555
    %v8489 = vunpack.c.h.b16 %v5555
    %v8490 = vunpack.c.l.b16 %v5556
    %v8491 = vunpack.c.h.b16 %v5556
    %v8492 = vunpack.c.l.b16 %v5557
    %v8493 = vunpack.c.h.b16 %v5557
    %v8494 = vunpack.c.l.b16 %v5558
    %v8495 = vunpack.c.h.b16 %v5558
    %v8496 = vunpack.c.l.b16 %v5559
    %v8497 = vunpack.c.h.b16 %v5559
    %v8498 = vunpack.c.l.b16 %v5560
    %v8499 = vunpack.c.h.b16 %v5560
    %v8500 = vunpack.c.l.b16 %v5561
    %v8501 = vunpack.c.h.b16 %v5561
    %v8502 = vunpack.c.l.b16 %v5562
    %v8503 = vunpack.c.h.b16 %v5562
    %v8504 = vunpack.c.l.b16 %v5563
    %v8505 = vunpack.c.h.b16 %v5563
    %v8506 = vunpack.c.l.b16 %v5564
    %v8507 = vunpack.c.h.b16 %v5564
    %v8508 = vunpack.c.l.b16 %v5565
    %v8509 = vunpack.c.h.b16 %v5565
    %v8510 = vunpack.c.l.b16 %v5566
    %v8511 = vunpack.c.h.b16 %v5566
    %v8512 = vunpack.c.l.b16 %v5567
    %v8513 = vunpack.c.h.b16 %v5567
    %v8514 = vunpack.c.l.b16 %v5568
    %v8515 = vunpack.c.h.b16 %v5568
    %v8516 = vunpack.c.l.b16 %v5569
    %v8517 = vunpack.c.h.b16 %v5569
    %v8518 = vunpack.c.l.b16 %v5570
    %v8519 = vunpack.c.h.b16 %v5570
    %v8520 = vunpack.c.l.b16 %v5571
    %v8521 = vunpack.c.h.b16 %v5571
    %v8522 = vunpack.c.l.b16 %v5572
    %v8523 = vunpack.c.h.b16 %v5572
    %v8524 = vunpack.c.l.b16 %v5573
    %v8525 = vunpack.c.h.b16 %v5573
    %v8526 = vunpack.c.l.b16 %v5574
    %v8527 = vunpack.c.h.b16 %v5574
    %v8528 = vunpack.c.l.b16 %v5575
    %v8529 = vunpack.c.h.b16 %v5575
    %v8530 = vunpack.c.l.b16 %v5576
    %v8531 = vunpack.c.h.b16 %v5576
    %v8532 = vunpack.c.l.b16 %v5577
    %v8533 = vunpack.c.h.b16 %v5577
    %v8534 = vunpack.c.l.b16 %v5578
    %v8535 = vunpack.c.h.b16 %v5578
    %v8536 = vunpack.c.l.b16 %v5579
    %v8537 = vunpack.c.h.b16 %v5579
    %v8538 = vunpack.c.l.b16 %v5580
    %v8539 = vunpack.c.h.b16 %v5580
    %v8540 = vunpack.c.l.b16 %v5581
    %v8541 = vunpack.c.h.b16 %v5581
    %v8542 = vunpack.c.l.b16 %v5582
    %v8543 = vunpack.c.h.b16 %v5582
    %v8544 = vunpack.c.l.b16 %v5583
    %v8545 = vunpack.c.h.b16 %v5583
    %v8546 = vunpack.c.l.b16 %v5584
    %v8547 = vunpack.c.h.b16 %v5584
    %v8548 = vunpack.c.l.b16 %v5585
    %v8549 = vunpack.c.h.b16 %v5585
    %v8550 = vunpack.c.l.b16 %v5586
    %v8551 = vunpack.c.h.b16 %v5586
    %v8552 = vunpack.c.l.b16 %v5587
    %v8553 = vunpack.c.h.b16 %v5587
    %v8554 = vunpack.c.l.b16 %v5588
    %v8555 = vunpack.c.h.b16 %v5588
    %v8556 = vunpack.c.l.b16 %v5589
    %v8557 = vunpack.c.h.b16 %v5589
    %v8558 = vunpack.c.l.b16 %v5590
    %v8559 = vunpack.c.h.b16 %v5590
    %v8560 = vunpack.c.l.b16 %v5591
    %v8561 = vunpack.c.h.b16 %v5591
    %v8562 = vunpack.c.l.b16 %v5592
    %v8563 = vunpack.c.h.b16 %v5592
    %v8564 = vunpack.c.l.b16 %v5593
    %v8565 = vunpack.c.h.b16 %v5593
    %v8566 = vunpack.c.l.b16 %v5594
    %v8567 = vunpack.c.h.b16 %v5594
    %v8568 = vunpack.c.l.b16 %v5595
    %v8569 = vunpack.c.h.b16 %v5595
    %v8570 = vunpack.c.l.b16 %v5596
    %v8571 = vunpack.c.h.b16 %v5596
    %v8572 = vunpack.c.l.b16 %v5597
    %v8573 = vunpack.c.h.b16 %v5597
    %v8574 = vunpack.c.l.b16 %v5598
    %v8575 = vunpack.c.h.b16 %v5598
    %v8576 = vunpack.c.l.b16 %v5599
    %v8577 = vunpack.c.h.b16 %v5599
    %v8578 = vunpack.c.l.b16 %v5600
    %v8579 = vunpack.c.h.b16 %v5600
    %v8580 = vunpack.c.l.b16 %v5601
    %v8581 = vunpack.c.h.b16 %v5601
    %v8582 = vunpack.c.l.b16 %v5602
    %v8583 = vunpack.c.h.b16 %v5602
    %v8584 = vunpack.c.l.b16 %v5603
    %v8585 = vunpack.c.h.b16 %v5603
    %v8586 = vunpack.c.l.b16 %v5604
    %v8587 = vunpack.c.h.b16 %v5604
    %v8588 = vunpack.c.l.b16 %v5605
    %v8589 = vunpack.c.h.b16 %v5605
    %v8590 = vunpack.c.l.b16 %v5606
    %v8591 = vunpack.c.h.b16 %v5606
    %v8592 = vunpack.c.l.b16 %v5607
    %v8593 = vunpack.c.h.b16 %v5607
    %v8594 = vunpack.c.l.b16 %v5608
    %v8595 = vunpack.c.h.b16 %v5608
    %v8596 = vunpack.c.l.b16 %v5609
    %v8597 = vunpack.c.h.b16 %v5609
    %v8598 = vunpack.c.l.b16 %v5610
    %v8599 = vunpack.c.h.b16 %v5610
    %v8600 = vunpack.c.l.b16 %v5611
    %v8601 = vunpack.c.h.b16 %v5611
    %v8602 = vunpack.c.l.b16 %v5612
    %v8603 = vunpack.c.h.b16 %v5612
    %v8604 = vunpack.c.l.b16 %v5613
    %v8605 = vunpack.c.h.b16 %v5613
    %v8606 = vunpack.c.l.b16 %v5614
    %v8607 = vunpack.c.h.b16 %v5614
    %v8608 = vunpack.c.l.b16 %v5615
    %v8609 = vunpack.c.h.b16 %v5615
    %v8610 = vunpack.c.l.b16 %v5616
    %v8611 = vunpack.c.h.b16 %v5616
    %v8612 = vunpack.c.l.b16 %v5617
    %v8613 = vunpack.c.h.b16 %v5617
    %v8614 = vunpack.c.l.b16 %v5618
    %v8615 = vunpack.c.h.b16 %v5618
    %v8616 = vunpack.c.l.b16 %v5619
    %v8617 = vunpack.c.h.b16 %v5619
    %v8618 = vunpack.c.l.b16 %v5620
    %v8619 = vunpack.c.h.b16 %v5620
    %v8620 = vunpack.c.l.b16 %v5621
    %v8621 = vunpack.c.h.b16 %v5621
    %v8622 = vunpack.c.l.b16 %v5622
    %v8623 = vunpack.c.h.b16 %v5622
    %v8624 = vunpack.c.l.b16 %v5623
    %v8625 = vunpack.c.h.b16 %v5623
    %v8626 = vunpack.c.l.b16 %v5624
    %v8627 = vunpack.c.h.b16 %v5624
    %v8628 = vunpack.c.l.b16 %v5625
    %v8629 = vunpack.c.h.b16 %v5625
    %v8630 = vunpack.c.l.b16 %v5626
    %v8631 = vunpack.c.h.b16 %v5626
    %v8632 = vunpack.c.l.b16 %v5627
    %v8633 = vunpack.c.h.b16 %v5627
    %v8634 = vunpack.c.l.b16 %v5628
    %v8635 = vunpack.c.h.b16 %v5628
    %v8636 = vunpack.c.l.b16 %v5629
    %v8637 = vunpack.c.h.b16 %v5629
    %v8638 = vunpack.c.l.b16 %v5630
    %v8639 = vunpack.c.h.b16 %v5630
    %v8640 = vunpack.c.l.b16 %v5631
    %v8641 = vunpack.c.h.b16 %v5631
    %v8642 = vunpack.c.l.b16 %v5632
    %v8643 = vunpack.c.h.b16 %v5632
    %v8644 = vunpack.c.l.b16 %v5633
    %v8645 = vunpack.c.h.b16 %v5633
    %v8646 = vunpack.c.l.b16 %v5634
    %v8647 = vunpack.c.h.b16 %v5634
    %v8648 = vunpack.c.l.b16 %v5635
    %v8649 = vunpack.c.h.b16 %v5635
    %v8650 = vunpack.c.l.b16 %v5636
    %v8651 = vunpack.c.h.b16 %v5636
    %v8652 = vunpack.c.l.b16 %v5637
    %v8653 = vunpack.c.h.b16 %v5637
    %v8654 = vunpack.c.l.b16 %v5638
    %v8655 = vunpack.c.h.b16 %v5638
    %v8656 = vunpack.c.l.b16 %v5639
    %v8657 = vunpack.c.h.b16 %v5639
    %v8658 = vunpack.c.l.b16 %v5640
    %v8659 = vunpack.c.h.b16 %v5640
    %v8660 = vunpack.c.l.b16 %v5641
    %v8661 = vunpack.c.h.b16 %v5641
    %v8662 = vunpack.c.l.b16 %v5642
    %v8663 = vunpack.c.h.b16 %v5642
    %v8664 = vunpack.c.l.b16 %v5643
    %v8665 = vunpack.c.h.b16 %v5643
    %v8666 = vunpack.c.l.b16 %v5644
    %v8667 = vunpack.c.h.b16 %v5644
    %v8668 = vunpack.c.l.b16 %v5645
    %v8669 = vunpack.c.h.b16 %v5645
    %v8670 = vunpack.c.l.b16 %v5646
    %v8671 = vunpack.c.h.b16 %v5646
    %v8672 = vunpack.c.l.b16 %v5647
    %v8673 = vunpack.c.h.b16 %v5647
    %v8674 = vunpack.c.l.b16 %v5648
    %v8675 = vunpack.c.h.b16 %v5648
    %v8676 = vunpack.c.l.b16 %v5649
    %v8677 = vunpack.c.h.b16 %v5649
    %v8678 = vunpack.c.l.b16 %v5650
    %v8679 = vunpack.c.h.b16 %v5650
    %v8680 = vunpack.c.l.b16 %v5651
    %v8681 = vunpack.c.h.b16 %v5651
    %v8682 = vunpack.c.l.b16 %v5652
    %v8683 = vunpack.c.h.b16 %v5652
    %v8684 = vunpack.c.l.b16 %v5653
    %v8685 = vunpack.c.h.b16 %v5653
    %v8686 = vunpack.c.l.b16 %v5654
    %v8687 = vunpack.c.h.b16 %v5654
    %v8688 = vunpack.c.l.b16 %v5655
    %v8689 = vunpack.c.h.b16 %v5655
    %v8690 = vunpack.c.l.b16 %v5656
    %v8691 = vunpack.c.h.b16 %v5656
    %v8692 = vunpack.c.l.b16 %v5657
    %v8693 = vunpack.c.h.b16 %v5657
    %v8694 = vunpack.c.l.b16 %v5658
    %v8695 = vunpack.c.h.b16 %v5658
    %v8696 = vunpack.c.l.b16 %v5659
    %v8697 = vunpack.c.h.b16 %v5659
    %v8698 = vunpack.c.l.b16 %v5660
    %v8699 = vunpack.c.h.b16 %v5660
    %v8700 = vunpack.c.l.b16 %v5661
    %v8701 = vunpack.c.h.b16 %v5661
    %v8702 = vunpack.c.l.b16 %v5662
    %v8703 = vunpack.c.h.b16 %v5662
    %v8704 = vunpack.c.l.b16 %v5663
    %v8705 = vunpack.c.h.b16 %v5663
    %v8706 = vunpack.c.l.b16 %v5664
    %v8707 = vunpack.c.h.b16 %v5664
    %v8708 = vunpack.c.l.b16 %v5665
    %v8709 = vunpack.c.h.b16 %v5665
    %v8710 = vunpack.c.l.b16 %v5666
    %v8711 = vunpack.c.h.b16 %v5666
    %v8712 = vunpack.c.l.b16 %v5667
    %v8713 = vunpack.c.h.b16 %v5667
    %v8714 = vunpack.c.l.b16 %v5668
    %v8715 = vunpack.c.h.b16 %v5668
    %v8716 = vunpack.c.l.b16 %v5669
    %v8717 = vunpack.c.h.b16 %v5669
    %v8718 = vunpack.c.l.b16 %v5670
    %v8719 = vunpack.c.h.b16 %v5670
    %v8720 = vunpack.c.l.b16 %v5671
    %v8721 = vunpack.c.h.b16 %v5671
    %v8722 = vunpack.c.l.b16 %v5672
    %v8723 = vunpack.c.h.b16 %v5672
    %v8724 = vunpack.c.l.b16 %v5673
    %v8725 = vunpack.c.h.b16 %v5673
    %v8726 = vunpack.c.l.b16 %v5674
    %v8727 = vunpack.c.h.b16 %v5674
    %v8728 = vunpack.c.l.b16 %v5675
    %v8729 = vunpack.c.h.b16 %v5675
    %v8730 = vunpack.c.l.b16 %v5676
    %v8731 = vunpack.c.h.b16 %v5676
    %v8732 = vunpack.c.l.b16 %v5677
    %v8733 = vunpack.c.h.b16 %v5677
    %v8734 = vunpack.c.l.b16 %v5678
    %v8735 = vunpack.c.h.b16 %v5678
    %v8736 = vunpack.c.l.b16 %v5679
    %v8737 = vunpack.c.h.b16 %v5679
    %v8738 = vunpack.c.l.b16 %v5680
    %v8739 = vunpack.c.h.b16 %v5680
    %v8740 = vunpack.c.l.b16 %v5681
    %v8741 = vunpack.c.h.b16 %v5681
    %v8742 = vunpack.c.l.b16 %v5682
    %v8743 = vunpack.c.h.b16 %v5682
    %v8744 = vunpack.c.l.b16 %v5683
    %v8745 = vunpack.c.h.b16 %v5683
    %v8746 = vunpack.c.l.b16 %v5684
    %v8747 = vunpack.c.h.b16 %v5684
    %v8748 = vunpack.c.l.b16 %v5685
    %v8749 = vunpack.c.h.b16 %v5685
    %v8750 = vunpack.c.l.b16 %v5686
    %v8751 = vunpack.c.h.b16 %v5686
    %v8752 = vunpack.c.l.b16 %v5687
    %v8753 = vunpack.c.h.b16 %v5687
    %v8754 = vunpack.c.l.b16 %v5688
    %v8755 = vunpack.c.h.b16 %v5688
    %v8756 = vunpack.c.l.b16 %v5689
    %v8757 = vunpack.c.h.b16 %v5689
    %v8758 = vunpack.c.l.b16 %v5690
    %v8759 = vunpack.c.h.b16 %v5690
    %v8760 = vunpack.c.l.b16 %v5691
    %v8761 = vunpack.c.h.b16 %v5691
    %v8762 = vunpack.c.l.b16 %v5692
    %v8763 = vunpack.c.h.b16 %v5692
    %v8764 = vunpack.c.l.b16 %v5693
    %v8765 = vunpack.c.h.b16 %v5693
    %v8766 = vunpack.c.l.b16 %v5694
    %v8767 = vunpack.c.h.b16 %v5694
    %v8768 = vunpack.c.l.b16 %v5695
    %v8769 = vunpack.c.h.b16 %v5695
    %v8770 = vunpack.c.l.b16 %v5696
    %v8771 = vunpack.c.h.b16 %v5696
    %v8772 = vunpack.c.l.b16 %v5697
    %v8773 = vunpack.c.h.b16 %v5697
    %v8774 = vunpack.c.l.b16 %v5698
    %v8775 = vunpack.c.h.b16 %v5698
    %v8776 = vunpack.c.l.b16 %v5699
    %v8777 = vunpack.c.h.b16 %v5699
    %v8778 = vunpack.c.l.b16 %v5700
    %v8779 = vunpack.c.h.b16 %v5700
    %v8780 = vunpack.c.l.b16 %v5701
    %v8781 = vunpack.c.h.b16 %v5701
    %v8782 = vunpack.c.l.b16 %v5702
    %v8783 = vunpack.c.h.b16 %v5702
    %v8784 = vunpack.c.l.b16 %v5703
    %v8785 = vunpack.c.h.b16 %v5703
    %v8786 = vunpack.c.l.b16 %v5704
    %v8787 = vunpack.c.h.b16 %v5704
    %v8788 = vunpack.c.l.b16 %v5705
    %v8789 = vunpack.c.h.b16 %v5705
    %v8790 = vunpack.c.l.b16 %v5706
    %v8791 = vunpack.c.h.b16 %v5706
    %v8792 = vunpack.c.l.b16 %v5707
    %v8793 = vunpack.c.h.b16 %v5707
    %v8794 = vunpack.c.l.b16 %v5708
    %v8795 = vunpack.c.h.b16 %v5708
    %v8796 = vunpack.c.l.b16 %v5709
    %v8797 = vunpack.c.h.b16 %v5709
    %v8798 = vunpack.c.l.b16 %v5710
    %v8799 = vunpack.c.h.b16 %v5710
    %v8800 = vunpack.c.l.b16 %v5711
    %v8801 = vunpack.c.h.b16 %v5711
    %v8802 = vunpack.c.l.b16 %v5712
    %v8803 = vunpack.c.h.b16 %v5712
    %v8804 = vunpack.c.l.b16 %v5713
    %v8805 = vunpack.c.h.b16 %v5713
    %v8806 = vunpack.c.l.b16 %v5714
    %v8807 = vunpack.c.h.b16 %v5714
    %v8808 = vunpack.c.l.b16 %v5715
    %v8809 = vunpack.c.h.b16 %v5715
    %v8810 = vunpack.c.l.b16 %v5716
    %v8811 = vunpack.c.h.b16 %v5716
    %v8812 = vunpack.c.l.b16 %v5717
    %v8813 = vunpack.c.h.b16 %v5717
    %v8814 = vunpack.c.l.b16 %v5718
    %v8815 = vunpack.c.h.b16 %v5718
    %v8816 = vunpack.c.l.b16 %v5719
    %v8817 = vunpack.c.h.b16 %v5719
    %v8818 = vunpack.c.l.b16 %v5720
    %v8819 = vunpack.c.h.b16 %v5720
    %v8820 = vunpack.c.l.b16 %v5721
    %v8821 = vunpack.c.h.b16 %v5721
    %v8822 = vunpack.c.l.b16 %v5722
    %v8823 = vunpack.c.h.b16 %v5722
    %v8824 = vunpack.c.l.b16 %v5723
    %v8825 = vunpack.c.h.b16 %v5723
    %v8826 = vunpack.c.l.b16 %v5724
    %v8827 = vunpack.c.h.b16 %v5724
    %v8828 = vunpack.c.l.b16 %v5725
    %v8829 = vunpack.c.h.b16 %v5725
    %v8830 = vunpack.c.l.b16 %v5726
    %v8831 = vunpack.c.h.b16 %v5726
    %v8832 = vunpack.c.l.b16 %v5727
    %v8833 = vunpack.c.h.b16 %v5727
    %v8834 = vpack.c.b16 %v6794, %v6786
    %v8835 = vpack.c.b16 %v6795, %v6787
    %v8836 = vpack.c.b16 %v6796, %v6788
    %v8837 = vpack.c.b16 %v6797, %v6789
    %v8838 = vpack.c.b16 %v6798, %v6790
    %v8839 = vpack.c.b16 %v6799, %v6791
    %v8840 = vpack.c.b16 %v6800, %v6792
    %v8841 = vpack.c.b16 %v6801, %v6793
    %v8842 = vpack.c.b16 %v6810, %v6802
    %v8843 = vpack.c.b16 %v6811, %v6803
    %v8844 = vpack.c.b16 %v6812, %v6804
    %v8845 = vpack.c.b16 %v6813, %v6805
    %v8846 = vpack.c.b16 %v6814, %v6806
    %v8847 = vpack.c.b16 %v6815, %v6807
    %v8848 = vpack.c.b16 %v6816, %v6808
    %v8849 = vpack.c.b16 %v6817, %v6809
    %v8850 = vpack.c.b16 %v6826, %v6818
    %v8851 = vpack.c.b16 %v6827, %v6819
    %v8852 = vpack.c.b16 %v6828, %v6820
    %v8853 = vpack.c.b16 %v6829, %v6821
    %v8854 = vpack.c.b16 %v6830, %v6822
    %v8855 = vpack.c.b16 %v6831, %v6823
    %v8856 = vpack.c.b16 %v6832, %v6824
    %v8857 = vpack.c.b16 %v6833, %v6825
    %v8858 = vpack.c.b16 %v6842, %v6834
    %v8859 = vpack.c.b16 %v6843, %v6835
    %v8860 = vpack.c.b16 %v6844, %v6836
    %v8861 = vpack.c.b16 %v6845, %v6837
    %v8862 = vpack.c.b16 %v6846, %v6838
    %v8863 = vpack.c.b16 %v6847, %v6839
    %v8864 = vpack.c.b16 %v6848, %v6840
    %v8865 = vpack.c.b16 %v6849, %v6841
    %v8866 = vpack.c.b16 %v6858, %v6850
    %v8867 = vpack.c.b16 %v6859, %v6851
    %v8868 = vpack.c.b16 %v6860, %v6852
    %v8869 = vpack.c.b16 %v6861, %v6853
    %v8870 = vpack.c.b16 %v6862, %v6854
    %v8871 = vpack.c.b16 %v6863, %v6855
    %v8872 = vpack.c.b16 %v6864, %v6856
    %v8873 = vpack.c.b16 %v6865, %v6857
    %v8874 = vpack.c.b16 %v6874, %v6866
    %v8875 = vpack.c.b16 %v6875, %v6867
    %v8876 = vpack.c.b16 %v6876, %v6868
    %v8877 = vpack.c.b16 %v6877, %v6869
    %v8878 = vpack.c.b16 %v6878, %v6870
    %v8879 = vpack.c.b16 %v6879, %v6871
    %v8880 = vpack.c.b16 %v6880, %v6872
    %v8881 = vpack.c.b16 %v6881, %v6873
    %v8882 = vpack.c.b16 %v6890, %v6882
    %v8883 = vpack.c.b16 %v6891, %v6883
    %v8884 = vpack.c.b16 %v6892, %v6884
    %v8885 = vpack.c.b16 %v6893, %v6885
    %v8886 = vpack.c.b16 %v6894, %v6886
    %v8887 = vpack.c.b16 %v6895, %v6887
    %v8888 = vpack.c.b16 %v6896, %v6888
    %v8889 = vpack.c.b16 %v6897, %v6889
    %v8890 = vpack.c.b16 %v6906, %v6898
    %v8891 = vpack.c.b16 %v6907, %v6899
    %v8892 = vpack.c.b16 %v6908, %v6900
    %v8893 = vpack.c.b16 %v6909, %v6901
    %v8894 = vpack.c.b16 %v6910, %v6902
    %v8895 = vpack.c.b16 %v6911, %v6903
    %v8896 = vpack.c.b16 %v6912, %v6904
    %v8897 = vpack.c.b16 %v6913, %v6905
    %v8898 = vpack.c.b16 %v6922, %v6914
    %v8899 = vpack.c.b16 %v6923, %v6915
    %v8900 = vpack.c.b16 %v6924, %v6916
    %v8901 = vpack.c.b16 %v6925, %v6917
    %v8902 = vpack.c.b16 %v6926, %v6918
    %v8903 = vpack.c.b16 %v6927, %v6919
    %v8904 = vpack.c.b16 %v6928, %v6920
    %v8905 = vpack.c.b16 %v6929, %v6921
    %v8906 = vpack.c.b16 %v6938, %v6930
    %v8907 = vpack.c.b16 %v6939, %v6931
    %v8908 = vpack.c.b16 %v6940, %v6932
    %v8909 = vpack.c.b16 %v6941, %v6933
    %v8910 = vpack.c.b16 %v6942, %v6934
    %v8911 = vpack.c.b16 %v6943, %v6935
    %v8912 = vpack.c.b16 %v6944, %v6936
    %v8913 = vpack.c.b16 %v6945, %v6937
    %v8914 = vpack.c.b16 %v6954, %v6946
    %v8915 = vpack.c.b16 %v6955, %v6947
    %v8916 = vpack.c.b16 %v6956, %v6948
    %v8917 = vpack.c.b16 %v6957, %v6949
    %v8918 = vpack.c.b16 %v6958, %v6950
    %v8919 = vpack.c.b16 %v6959, %v6951
    %v8920 = vpack.c.b16 %v6960, %v6952
    %v8921 = vpack.c.b16 %v6961, %v6953
    %v8922 = vpack.c.b16 %v6970, %v6962
    %v8923 = vpack.c.b16 %v6971, %v6963
    %v8924 = vpack.c.b16 %v6972, %v6964
    %v8925 = vpack.c.b16 %v6973, %v6965
    %v8926 = vpack.c.b16 %v6974, %v6966
    %v8927 = vpack.c.b16 %v6975, %v6967
    %v8928 = vpack.c.b16 %v6976, %v6968
    %v8929 = vpack.c.b16 %v6977, %v6969
    %v8930 = vpack.c.b16 %v6986, %v6978
    %v8931 = vpack.c.b16 %v6987, %v6979
    %v8932 = vpack.c.b16 %v6988, %v6980
    %v8933 = vpack.c.b16 %v6989, %v6981
    %v8934 = vpack.c.b16 %v6990, %v6982
    %v8935 = vpack.c.b16 %v6991, %v6983
    %v8936 = vpack.c.b16 %v6992, %v6984
    %v8937 = vpack.c.b16 %v6993, %v6985
    %v8938 = vpack.c.b16 %v7002, %v6994
    %v8939 = vpack.c.b16 %v7003, %v6995
    %v8940 = vpack.c.b16 %v7004, %v6996
    %v8941 = vpack.c.b16 %v7005, %v6997
    %v8942 = vpack.c.b16 %v7006, %v6998
    %v8943 = vpack.c.b16 %v7007, %v6999
    %v8944 = vpack.c.b16 %v7008, %v7000
    %v8945 = vpack.c.b16 %v7009, %v7001
    %v8946 = vpack.c.b16 %v7018, %v7010
    %v8947 = vpack.c.b16 %v7019, %v7011
    %v8948 = vpack.c.b16 %v7020, %v7012
    %v8949 = vpack.c.b16 %v7021, %v7013
    %v8950 = vpack.c.b16 %v7022, %v7014
    %v8951 = vpack.c.b16 %v7023, %v7015
    %v8952 = vpack.c.b16 %v7024, %v7016
    %v8953 = vpack.c.b16 %v7025, %v7017
    %v8954 = vpack.c.b16 %v7034, %v7026
    %v8955 = vpack.c.b16 %v7035, %v7027
    %v8956 = vpack.c.b16 %v7036, %v7028
    %v8957 = vpack.c.b16 %v7037, %v7029
    %v8958 = vpack.c.b16 %v7038, %v7030
    %v8959 = vpack.c.b16 %v7039, %v7031
    %v8960 = vpack.c.b16 %v7040, %v7032
    %v8961 = vpack.c.b16 %v7041, %v7033
    %v8962 = vpack.c.b16 %v7050, %v7042
    %v8963 = vpack.c.b16 %v7051, %v7043
    %v8964 = vpack.c.b16 %v7052, %v7044
    %v8965 = vpack.c.b16 %v7053, %v7045
    %v8966 = vpack.c.b16 %v7054, %v7046
    %v8967 = vpack.c.b16 %v7055, %v7047
    %v8968 = vpack.c.b16 %v7056, %v7048
    %v8969 = vpack.c.b16 %v7057, %v7049
    %v8970 = vpack.c.b16 %v7066, %v7058
    %v8971 = vpack.c.b16 %v7067, %v7059
    %v8972 = vpack.c.b16 %v7068, %v7060
    %v8973 = vpack.c.b16 %v7069, %v7061
    %v8974 = vpack.c.b16 %v7070, %v7062
    %v8975 = vpack.c.b16 %v7071, %v7063
    %v8976 = vpack.c.b16 %v7072, %v7064
    %v8977 = vpack.c.b16 %v7073, %v7065
    %v8978 = vpack.c.b16 %v7082, %v7074
    %v8979 = vpack.c.b16 %v7083, %v7075
    %v8980 = vpack.c.b16 %v7084, %v7076
    %v8981 = vpack.c.b16 %v7085, %v7077
    %v8982 = vpack.c.b16 %v7086, %v7078
    %v8983 = vpack.c.b16 %v7087, %v7079
    %v8984 = vpack.c.b16 %v7088, %v7080
    %v8985 = vpack.c.b16 %v7089, %v7081
    %v8986 = vpack.c.b16 %v7098, %v7090
    %v8987 = vpack.c.b16 %v7099, %v7091
    %v8988 = vpack.c.b16 %v7100, %v7092
    %v8989 = vpack.c.b16 %v7101, %v7093
    %v8990 = vpack.c.b16 %v7102, %v7094
    %v8991 = vpack.c.b16 %v7103, %v7095
    %v8992 = vpack.c.b16 %v7104, %v7096
    %v8993 = vpack.c.b16 %v7105, %v7097
    %v8994 = vpack.c.b16 %v7114, %v7106
    %v8995 = vpack.c.b16 %v7115, %v7107
    %v8996 = vpack.c.b16 %v7116, %v7108
    %v8997 = vpack.c.b16 %v7117, %v7109
    %v8998 = vpack.c.b16 %v7118, %v7110
    %v8999 = vpack.c.b16 %v7119, %v7111
    %v9000 = vpack.c.b16 %v7120, %v7112
    %v9001 = vpack.c.b16 %v7121, %v7113
    %v9002 = vpack.c.b16 %v7130, %v7122
    %v9003 = vpack.c.b16 %v7131, %v7123
    %v9004 = vpack.c.b16 %v7132, %v7124
    %v9005 = vpack.c.b16 %v7133, %v7125
    %v9006 = vpack.c.b16 %v7134, %v7126
    %v9007 = vpack.c.b16 %v7135, %v7127
    %v9008 = vpack.c.b16 %v7136, %v7128
    %v9009 = vpack.c.b16 %v7137, %v7129
    %v9010 = vpack.c.b16 %v7146, %v7138
    %v9011 = vpack.c.b16 %v7147, %v7139
    %v9012 = vpack.c.b16 %v7148, %v7140
    %v9013 = vpack.c.b16 %v7149, %v7141
    %v9014 = vpack.c.b16 %v7150, %v7142
    %v9015 = vpack.c.b16 %v7151, %v7143
    %v9016 = vpack.c.b16 %v7152, %v7144
    %v9017 = vpack.c.b16 %v7153, %v7145
    %v9018 = vpack.c.b16 %v7162, %v7154
    %v9019 = vpack.c.b16 %v7163, %v7155
    %v9020 = vpack.c.b16 %v7164, %v7156
    %v9021 = vpack.c.b16 %v7165, %v7157
    %v9022 = vpack.c.b16 %v7166, %v7158
    %v9023 = vpack.c.b16 %v7167, %v7159
    %v9024 = vpack.c.b16 %v7168, %v7160
    %v9025 = vpack.c.b16 %v7169, %v7161
    %v9026 = vpack.c.b16 %v7178, %v7170
    %v9027 = vpack.c.b16 %v7179, %v7171
    %v9028 = vpack.c.b16 %v7180, %v7172
    %v9029 = vpack.c.b16 %v7181, %v7173
    %v9030 = vpack.c.b16 %v7182, %v7174
    %v9031 = vpack.c.b16 %v7183, %v7175
    %v9032 = vpack.c.b16 %v7184, %v7176
    %v9033 = vpack.c.b16 %v7185, %v7177
    %v9034 = vpack.c.b16 %v7194, %v7186
    %v9035 = vpack.c.b16 %v7195, %v7187
    %v9036 = vpack.c.b16 %v7196, %v7188
    %v9037 = vpack.c.b16 %v7197, %v7189
    %v9038 = vpack.c.b16 %v7198, %v7190
    %v9039 = vpack.c.b16 %v7199, %v7191
    %v9040 = vpack.c.b16 %v7200, %v7192
    %v9041 = vpack.c.b16 %v7201, %v7193
    %v9042 = vpack.c.b16 %v7210, %v7202
    %v9043 = vpack.c.b16 %v7211, %v7203
    %v9044 = vpack.c.b16 %v7212, %v7204
    %v9045 = vpack.c.b16 %v7213, %v7205
    %v9046 = vpack.c.b16 %v7214, %v7206
    %v9047 = vpack.c.b16 %v7215, %v7207
    %v9048 = vpack.c.b16 %v7216, %v7208
    %v9049 = vpack.c.b16 %v7217, %v7209
    %v9050 = vpack.c.b16 %v7226, %v7218
    %v9051 = vpack.c.b16 %v7227, %v7219
    %v9052 = vpack.c.b16 %v7228, %v7220
    %v9053 = vpack.c.b16 %v7229, %v7221
    %v9054 = vpack.c.b16 %v7230, %v7222
    %v9055 = vpack.c.b16 %v7231, %v7223
    %v9056 = vpack.c.b16 %v7232, %v7224
    %v9057 = vpack.c.b16 %v7233, %v7225
    %v9058 = vpack.c.b16 %v7242, %v7234
    %v9059 = vpack.c.b16 %v7243, %v7235
    %v9060 = vpack.c.b16 %v7244, %v7236
    %v9061 = vpack.c.b16 %v7245, %v7237
    %v9062 = vpack.c.b16 %v7246, %v7238
    %v9063 = vpack.c.b16 %v7247, %v7239
    %v9064 = vpack.c.b16 %v7248, %v7240
    %v9065 = vpack.c.b16 %v7249, %v7241
    %v9066 = vpack.c.b16 %v7258, %v7250
    %v9067 = vpack.c.b16 %v7259, %v7251
    %v9068 = vpack.c.b16 %v7260, %v7252
    %v9069 = vpack.c.b16 %v7261, %v7253
    %v9070 = vpack.c.b16 %v7262, %v7254
    %v9071 = vpack.c.b16 %v7263, %v7255
    %v9072 = vpack.c.b16 %v7264, %v7256
    %v9073 = vpack.c.b16 %v7265, %v7257
    %v9074 = vpack.c.b16 %v7274, %v7266
    %v9075 = vpack.c.b16 %v7275, %v7267
    %v9076 = vpack.c.b16 %v7276, %v7268
    %v9077 = vpack.c.b16 %v7277, %v7269
    %v9078 = vpack.c.b16 %v7278, %v7270
    %v9079 = vpack.c.b16 %v7279, %v7271
    %v9080 = vpack.c.b16 %v7280, %v7272
    %v9081 = vpack.c.b16 %v7281, %v7273
    %v9082 = vpack.c.b16 %v7290, %v7282
    %v9083 = vpack.c.b16 %v7291, %v7283
    %v9084 = vpack.c.b16 %v7292, %v7284
    %v9085 = vpack.c.b16 %v7293, %v7285
    %v9086 = vpack.c.b16 %v7294, %v7286
    %v9087 = vpack.c.b16 %v7295, %v7287
    %v9088 = vpack.c.b16 %v7296, %v7288
    %v9089 = vpack.c.b16 %v7297, %v7289
    %v9090 = vpack.c.b16 %v7306, %v7298
    %v9091 = vpack.c.b16 %v7307, %v7299
    %v9092 = vpack.c.b16 %v7308, %v7300
    %v9093 = vpack.c.b16 %v7309, %v7301
    %v9094 = vpack.c.b16 %v7310, %v7302
    %v9095 = vpack.c.b16 %v7311, %v7303
    %v9096 = vpack.c.b16 %v7312, %v7304
    %v9097 = vpack.c.b16 %v7313, %v7305
    %v9098 = vpack.c.b16 %v7322, %v7314
    %v9099 = vpack.c.b16 %v7323, %v7315
    %v9100 = vpack.c.b16 %v7324, %v7316
    %v9101 = vpack.c.b16 %v7325, %v7317
    %v9102 = vpack.c.b16 %v7326, %v7318
    %v9103 = vpack.c.b16 %v7327, %v7319
    %v9104 = vpack.c.b16 %v7328, %v7320
    %v9105 = vpack.c.b16 %v7329, %v7321
    %v9106 = vpack.c.b16 %v7338, %v7330
    %v9107 = vpack.c.b16 %v7339, %v7331
    %v9108 = vpack.c.b16 %v7340, %v7332
    %v9109 = vpack.c.b16 %v7341, %v7333
    %v9110 = vpack.c.b16 %v7342, %v7334
    %v9111 = vpack.c.b16 %v7343, %v7335
    %v9112 = vpack.c.b16 %v7344, %v7336
    %v9113 = vpack.c.b16 %v7345, %v7337
    %v9114 = vpack.c.b16 %v7354, %v7346
    %v9115 = vpack.c.b16 %v7355, %v7347
    %v9116 = vpack.c.b16 %v7356, %v7348
    %v9117 = vpack.c.b16 %v7357, %v7349
    %v9118 = vpack.c.b16 %v7358, %v7350
    %v9119 = vpack.c.b16 %v7359, %v7351
    %v9120 = vpack.c.b16 %v7360, %v7352
    %v9121 = vpack.c.b16 %v7361, %v7353
    %v9122 = vpack.c.b16 %v7370, %v7362
    %v9123 = vpack.c.b16 %v7371, %v7363
    %v9124 = vpack.c.b16 %v7372, %v7364
    %v9125 = vpack.c.b16 %v7373, %v7365
    %v9126 = vpack.c.b16 %v7374, %v7366
    %v9127 = vpack.c.b16 %v7375, %v7367
    %v9128 = vpack.c.b16 %v7376, %v7368
    %v9129 = vpack.c.b16 %v7377, %v7369
    %v9130 = vpack.c.b16 %v7386, %v7378
    %v9131 = vpack.c.b16 %v7387, %v7379
    %v9132 = vpack.c.b16 %v7388, %v7380
    %v9133 = vpack.c.b16 %v7389, %v7381
    %v9134 = vpack.c.b16 %v7390, %v7382
    %v9135 = vpack.c.b16 %v7391, %v7383
    %v9136 = vpack.c.b16 %v7392, %v7384
    %v9137 = vpack.c.b16 %v7393, %v7385
    %v9138 = vpack.c.b16 %v7402, %v7394
    %v9139 = vpack.c.b16 %v7403, %v7395
    %v9140 = vpack.c.b16 %v7404, %v7396
    %v9141 = vpack.c.b16 %v7405, %v7397
    %v9142 = vpack.c.b16 %v7406, %v7398
    %v9143 = vpack.c.b16 %v7407, %v7399
    %v9144 = vpack.c.b16 %v7408, %v7400
    %v9145 = vpack.c.b16 %v7409, %v7401
    %v9146 = vpack.c.b16 %v7418, %v7410
    %v9147 = vpack.c.b16 %v7419, %v7411
    %v9148 = vpack.c.b16 %v7420, %v7412
    %v9149 = vpack.c.b16 %v7421, %v7413
    %v9150 = vpack.c.b16 %v7422, %v7414
    %v9151 = vpack.c.b16 %v7423, %v7415
    %v9152 = vpack.c.b16 %v7424, %v7416
    %v9153 = vpack.c.b16 %v7425, %v7417
    %v9154 = vpack.c.b16 %v7434, %v7426
    %v9155 = vpack.c.b16 %v7435, %v7427
    %v9156 = vpack.c.b16 %v7436, %v7428
    %v9157 = vpack.c.b16 %v7437, %v7429
    %v9158 = vpack.c.b16 %v7438, %v7430
    %v9159 = vpack.c.b16 %v7439, %v7431
    %v9160 = vpack.c.b16 %v7440, %v7432
    %v9161 = vpack.c.b16 %v7441, %v7433
    %v9162 = vpack.c.b16 %v7450, %v7442
    %v9163 = vpack.c.b16 %v7451, %v7443
    %v9164 = vpack.c.b16 %v7452, %v7444
    %v9165 = vpack.c.b16 %v7453, %v7445
    %v9166 = vpack.c.b16 %v7454, %v7446
    %v9167 = vpack.c.b16 %v7455, %v7447
    %v9168 = vpack.c.b16 %v7456, %v7448
    %v9169 = vpack.c.b16 %v7457, %v7449
    %v9170 = vpack.c.b16 %v7466, %v7458
    %v9171 = vpack.c.b16 %v7467, %v7459
    %v9172 = vpack.c.b16 %v7468, %v7460
    %v9173 = vpack.c.b16 %v7469, %v7461
    %v9174 = vpack.c.b16 %v7470, %v7462
    %v9175 = vpack.c.b16 %v7471, %v7463
    %v9176 = vpack.c.b16 %v7472, %v7464
    %v9177 = vpack.c.b16 %v7473, %v7465
    %v9178 = vpack.c.b16 %v7482, %v7474
    %v9179 = vpack.c.b16 %v7483, %v7475
    %v9180 = vpack.c.b16 %v7484, %v7476
    %v9181 = vpack.c.b16 %v7485, %v7477
    %v9182 = vpack.c.b16 %v7486, %v7478
    %v9183 = vpack.c.b16 %v7487, %v7479
    %v9184 = vpack.c.b16 %v7488, %v7480
    %v9185 = vpack.c.b16 %v7489, %v7481
    %v9186 = vpack.c.b16 %v7498, %v7490
    %v9187 = vpack.c.b16 %v7499, %v7491
    %v9188 = vpack.c.b16 %v7500, %v7492
    %v9189 = vpack.c.b16 %v7501, %v7493
    %v9190 = vpack.c.b16 %v7502, %v7494
    %v9191 = vpack.c.b16 %v7503, %v7495
    %v9192 = vpack.c.b16 %v7504, %v7496
    %v9193 = vpack.c.b16 %v7505, %v7497
    %v9194 = vpack.c.b16 %v7514, %v7506
    %v9195 = vpack.c.b16 %v7515, %v7507
    %v9196 = vpack.c.b16 %v7516, %v7508
    %v9197 = vpack.c.b16 %v7517, %v7509
    %v9198 = vpack.c.b16 %v7518, %v7510
    %v9199 = vpack.c.b16 %v7519, %v7511
    %v9200 = vpack.c.b16 %v7520, %v7512
    %v9201 = vpack.c.b16 %v7521, %v7513
    %v9202 = vpack.c.b16 %v7530, %v7522
    %v9203 = vpack.c.b16 %v7531, %v7523
    %v9204 = vpack.c.b16 %v7532, %v7524
    %v9205 = vpack.c.b16 %v7533, %v7525
    %v9206 = vpack.c.b16 %v7534, %v7526
    %v9207 = vpack.c.b16 %v7535, %v7527
    %v9208 = vpack.c.b16 %v7536, %v7528
    %v9209 = vpack.c.b16 %v7537, %v7529
    %v9210 = vpack.c.b16 %v7546, %v7538
    %v9211 = vpack.c.b16 %v7547, %v7539
    %v9212 = vpack.c.b16 %v7548, %v7540
    %v9213 = vpack.c.b16 %v7549, %v7541
    %v9214 = vpack.c.b16 %v7550, %v7542
    %v9215 = vpack.c.b16 %v7551, %v7543
    %v9216 = vpack.c.b16 %v7552, %v7544
    %v9217 = vpack.c.b16 %v7553, %v7545
    %v9218 = vpack.c.b16 %v7562, %v7554
    %v9219 = vpack.c.b16 %v7563, %v7555
    %v9220 = vpack.c.b16 %v7564, %v7556
    %v9221 = vpack.c.b16 %v7565, %v7557
    %v9222 = vpack.c.b16 %v7566, %v7558
    %v9223 = vpack.c.b16 %v7567, %v7559
    %v9224 = vpack.c.b16 %v7568, %v7560
    %v9225 = vpack.c.b16 %v7569, %v7561
    %v9226 = vpack.c.b16 %v7578, %v7570
    %v9227 = vpack.c.b16 %v7579, %v7571
    %v9228 = vpack.c.b16 %v7580, %v7572
    %v9229 = vpack.c.b16 %v7581, %v7573
    %v9230 = vpack.c.b16 %v7582, %v7574
    %v9231 = vpack.c.b16 %v7583, %v7575
    %v9232 = vpack.c.b16 %v7584, %v7576
    %v9233 = vpack.c.b16 %v7585, %v7577
    %v9234 = vpack.c.b16 %v7594, %v7586
    %v9235 = vpack.c.b16 %v7595, %v7587
    %v9236 = vpack.c.b16 %v7596, %v7588
    %v9237 = vpack.c.b16 %v7597, %v7589
    %v9238 = vpack.c.b16 %v7598, %v7590
    %v9239 = vpack.c.b16 %v7599, %v7591
    %v9240 = vpack.c.b16 %v7600, %v7592
    %v9241 = vpack.c.b16 %v7601, %v7593
    %v9242 = vpack.c.b16 %v7610, %v7602
    %v9243 = vpack.c.b16 %v7611, %v7603
    %v9244 = vpack.c.b16 %v7612, %v7604
    %v9245 = vpack.c.b16 %v7613, %v7605
    %v9246 = vpack.c.b16 %v7614, %v7606
    %v9247 = vpack.c.b16 %v7615, %v7607
    %v9248 = vpack.c.b16 %v7616, %v7608
    %v9249 = vpack.c.b16 %v7617, %v7609
    %v9250 = vpack.c.b16 %v7626, %v7618
    %v9251 = vpack.c.b16 %v7627, %v7619
    %v9252 = vpack.c.b16 %v7628, %v7620
    %v9253 = vpack.c.b16 %v7629, %v7621
    %v9254 = vpack.c.b16 %v7630, %v7622
    %v9255 = vpack.c.b16 %v7631, %v7623
    %v9256 = vpack.c.b16 %v7632, %v7624
    %v9257 = vpack.c.b16 %v7633, %v7625
    %v9258 = vpack.c.b16 %v7642, %v7634
    %v9259 = vpack.c.b16 %v7643, %v7635
    %v9260 = vpack.c.b16 %v7644, %v7636
    %v9261 = vpack.c.b16 %v7645, %v7637
    %v9262 = vpack.c.b16 %v7646, %v7638
    %v9263 = vpack.c.b16 %v7647, %v7639
    %v9264 = vpack.c.b16 %v7648, %v7640
    %v9265 = vpack.c.b16 %v7649, %v7641
    %v9266 = vpack.c.b16 %v7658, %v7650
    %v9267 = vpack.c.b16 %v7659, %v7651
    %v9268 = vpack.c.b16 %v7660, %v7652
    %v9269 = vpack.c.b16 %v7661, %v7653
    %v9270 = vpack.c.b16 %v7662, %v7654
    %v9271 = vpack.c.b16 %v7663, %v7655
    %v9272 = vpack.c.b16 %v7664, %v7656
    %v9273 = vpack.c.b16 %v7665, %v7657
    %v9274 = vpack.c.b16 %v7674, %v7666
    %v9275 = vpack.c.b16 %v7675, %v7667
    %v9276 = vpack.c.b16 %v7676, %v7668
    %v9277 = vpack.c.b16 %v7677, %v7669
    %v9278 = vpack.c.b16 %v7678, %v7670
    %v9279 = vpack.c.b16 %v7679, %v7671
    %v9280 = vpack.c.b16 %v7680, %v7672
    %v9281 = vpack.c.b16 %v7681, %v7673
    %v9282 = vpack.c.b16 %v7690, %v7682
    %v9283 = vpack.c.b16 %v7691, %v7683
    %v9284 = vpack.c.b16 %v7692, %v7684
    %v9285 = vpack.c.b16 %v7693, %v7685
    %v9286 = vpack.c.b16 %v7694, %v7686
    %v9287 = vpack.c.b16 %v7695, %v7687
    %v9288 = vpack.c.b16 %v7696, %v7688
    %v9289 = vpack.c.b16 %v7697, %v7689
    %v9290 = vpack.c.b16 %v7706, %v7698
    %v9291 = vpack.c.b16 %v7707, %v7699
    %v9292 = vpack.c.b16 %v7708, %v7700
    %v9293 = vpack.c.b16 %v7709, %v7701
    %v9294 = vpack.c.b16 %v7710, %v7702
    %v9295 = vpack.c.b16 %v7711, %v7703
    %v9296 = vpack.c.b16 %v7712, %v7704
    %v9297 = vpack.c.b16 %v7713, %v7705
    %v9298 = vpack.c.b16 %v7722, %v7714
    %v9299 = vpack.c.b16 %v7723, %v7715
    %v9300 = vpack.c.b16 %v7724, %v7716
    %v9301 = vpack.c.b16 %v7725, %v7717
    %v9302 = vpack.c.b16 %v7726, %v7718
    %v9303 = vpack.c.b16 %v7727, %v7719
    %v9304 = vpack.c.b16 %v7728, %v7720
    %v9305 = vpack.c.b16 %v7729, %v7721
    %v9306 = vpack.c.b16 %v7738, %v7730
    %v9307 = vpack.c.b16 %v7739, %v7731
    %v9308 = vpack.c.b16 %v7740, %v7732
    %v9309 = vpack.c.b16 %v7741, %v7733
    %v9310 = vpack.c.b16 %v7742, %v7734
    %v9311 = vpack.c.b16 %v7743, %v7735
    %v9312 = vpack.c.b16 %v7744, %v7736
    %v9313 = vpack.c.b16 %v7745, %v7737
    %v9314 = vpack.c.b16 %v7754, %v7746
    %v9315 = vpack.c.b16 %v7755, %v7747
    %v9316 = vpack.c.b16 %v7756, %v7748
    %v9317 = vpack.c.b16 %v7757, %v7749
    %v9318 = vpack.c.b16 %v7758, %v7750
    %v9319 = vpack.c.b16 %v7759, %v7751
    %v9320 = vpack.c.b16 %v7760, %v7752
    %v9321 = vpack.c.b16 %v7761, %v7753
    %v9322 = vpack.c.b16 %v7770, %v7762
    %v9323 = vpack.c.b16 %v7771, %v7763
    %v9324 = vpack.c.b16 %v7772, %v7764
    %v9325 = vpack.c.b16 %v7773, %v7765
    %v9326 = vpack.c.b16 %v7774, %v7766
    %v9327 = vpack.c.b16 %v7775, %v7767
    %v9328 = vpack.c.b16 %v7776, %v7768
    %v9329 = vpack.c.b16 %v7777, %v7769
    %v9330 = vpack.c.b16 %v7786, %v7778
    %v9331 = vpack.c.b16 %v7787, %v7779
    %v9332 = vpack.c.b16 %v7788, %v7780
    %v9333 = vpack.c.b16 %v7789, %v7781
    %v9334 = vpack.c.b16 %v7790, %v7782
    %v9335 = vpack.c.b16 %v7791, %v7783
    %v9336 = vpack.c.b16 %v7792, %v7784
    %v9337 = vpack.c.b16 %v7793, %v7785
    %v9338 = vpack.c.b16 %v7802, %v7794
    %v9339 = vpack.c.b16 %v7803, %v7795
    %v9340 = vpack.c.b16 %v7804, %v7796
    %v9341 = vpack.c.b16 %v7805, %v7797
    %v9342 = vpack.c.b16 %v7806, %v7798
    %v9343 = vpack.c.b16 %v7807, %v7799
    %v9344 = vpack.c.b16 %v7808, %v7800
    %v9345 = vpack.c.b16 %v7809, %v7801
    %v9346 = vpack.c.b16 %v7818, %v7810
    %v9347 = vpack.c.b16 %v7819, %v7811
    %v9348 = vpack.c.b16 %v7820, %v7812
    %v9349 = vpack.c.b16 %v7821, %v7813
    %v9350 = vpack.c.b16 %v7822, %v7814
    %v9351 = vpack.c.b16 %v7823, %v7815
    %v9352 = vpack.c.b16 %v7824, %v7816
    %v9353 = vpack.c.b16 %v7825, %v7817
    %v9354 = vpack.c.b16 %v7834, %v7826
    %v9355 = vpack.c.b16 %v7835, %v7827
    %v9356 = vpack.c.b16 %v7836, %v7828
    %v9357 = vpack.c.b16 %v7837, %v7829
    %v9358 = vpack.c.b16 %v7838, %v7830
    %v9359 = vpack.c.b16 %v7839, %v7831
    %v9360 = vpack.c.b16 %v7840, %v7832
    %v9361 = vpack.c.b16 %v7841, %v7833
    %v9362 = vpack.c.b16 %v7850, %v7842
    %v9363 = vpack.c.b16 %v7851, %v7843
    %v9364 = vpack.c.b16 %v7852, %v7844
    %v9365 = vpack.c.b16 %v7853, %v7845
    %v9366 = vpack.c.b16 %v7854, %v7846
    %v9367 = vpack.c.b16 %v7855, %v7847
    %v9368 = vpack.c.b16 %v7856, %v7848
    %v9369 = vpack.c.b16 %v7857, %v7849
    %v9370 = vpack.c.b16 %v7866, %v7858
    %v9371 = vpack.c.b16 %v7867, %v7859
    %v9372 = vpack.c.b16 %v7868, %v7860
    %v9373 = vpack.c.b16 %v7869, %v7861
    %v9374 = vpack.c.b16 %v7870, %v7862
    %v9375 = vpack.c.b16 %v7871, %v7863
    %v9376 = vpack.c.b16 %v7872, %v7864
    %v9377 = vpack.c.b16 %v7873, %v7865
    %v9378 = vpack.c.b16 %v7882, %v7874
    %v9379 = vpack.c.b16 %v7883, %v7875
    %v9380 = vpack.c.b16 %v7884, %v7876
    %v9381 = vpack.c.b16 %v7885, %v7877
    %v9382 = vpack.c.b16 %v7886, %v7878
    %v9383 = vpack.c.b16 %v7887, %v7879
    %v9384 = vpack.c.b16 %v7888, %v7880
    %v9385 = vpack.c.b16 %v7889, %v7881
    %v9386 = vpack.c.b16 %v7898, %v7890
    %v9387 = vpack.c.b16 %v7899, %v7891
    %v9388 = vpack.c.b16 %v7900, %v7892
    %v9389 = vpack.c.b16 %v7901, %v7893
    %v9390 = vpack.c.b16 %v7902, %v7894
    %v9391 = vpack.c.b16 %v7903, %v7895
    %v9392 = vpack.c.b16 %v7904, %v7896
    %v9393 = vpack.c.b16 %v7905, %v7897
    %v9394 = vpack.c.b16 %v7914, %v7906
    %v9395 = vpack.c.b16 %v7915, %v7907
    %v9396 = vpack.c.b16 %v7916, %v7908
    %v9397 = vpack.c.b16 %v7917, %v7909
    %v9398 = vpack.c.b16 %v7918, %v7910
    %v9399 = vpack.c.b16 %v7919, %v7911
    %v9400 = vpack.c.b16 %v7920, %v7912
    %v9401 = vpack.c.b16 %v7921, %v7913
    %v9402 = vpack.c.b16 %v7930, %v7922
    %v9403 = vpack.c.b16 %v7931, %v7923
    %v9404 = vpack.c.b16 %v7932, %v7924
    %v9405 = vpack.c.b16 %v7933, %v7925
    %v9406 = vpack.c.b16 %v7934, %v7926
    %v9407 = vpack.c.b16 %v7935, %v7927
    %v9408 = vpack.c.b16 %v7936, %v7928
    %v9409 = vpack.c.b16 %v7937, %v7929
    %v9410 = vpack.c.b16 %v7946, %v7938
    %v9411 = vpack.c.b16 %v7947, %v7939
    %v9412 = vpack.c.b16 %v7948, %v7940
    %v9413 = vpack.c.b16 %v7949, %v7941
    %v9414 = vpack.c.b16 %v7950, %v7942
    %v9415 = vpack.c.b16 %v7951, %v7943
    %v9416 = vpack.c.b16 %v7952, %v7944
    %v9417 = vpack.c.b16 %v7953, %v7945
    %v9418 = vpack.c.b16 %v7962, %v7954
    %v9419 = vpack.c.b16 %v7963, %v7955
    %v9420 = vpack.c.b16 %v7964, %v7956
    %v9421 = vpack.c.b16 %v7965, %v7957
    %v9422 = vpack.c.b16 %v7966, %v7958
    %v9423 = vpack.c.b16 %v7967, %v7959
    %v9424 = vpack.c.b16 %v7968, %v7960
    %v9425 = vpack.c.b16 %v7969, %v7961
    %v9426 = vpack.c.b16 %v7978, %v7970
    %v9427 = vpack.c.b16 %v7979, %v7971
    %v9428 = vpack.c.b16 %v7980, %v7972
    %v9429 = vpack.c.b16 %v7981, %v7973
    %v9430 = vpack.c.b16 %v7982, %v7974
    %v9431 = vpack.c.b16 %v7983, %v7975
    %v9432 = vpack.c.b16 %v7984, %v7976
    %v9433 = vpack.c.b16 %v7985, %v7977
    %v9434 = vpack.c.b16 %v7994, %v7986
    %v9435 = vpack.c.b16 %v7995, %v7987
    %v9436 = vpack.c.b16 %v7996, %v7988
    %v9437 = vpack.c.b16 %v7997, %v7989
    %v9438 = vpack.c.b16 %v7998, %v7990
    %v9439 = vpack.c.b16 %v7999, %v7991
    %v9440 = vpack.c.b16 %v8000, %v7992
    %v9441 = vpack.c.b16 %v8001, %v7993
    %v9442 = vpack.c.b16 %v8010, %v8002
    %v9443 = vpack.c.b16 %v8011, %v8003
    %v9444 = vpack.c.b16 %v8012, %v8004
    %v9445 = vpack.c.b16 %v8013, %v8005
    %v9446 = vpack.c.b16 %v8014, %v8006
    %v9447 = vpack.c.b16 %v8015, %v8007
    %v9448 = vpack.c.b16 %v8016, %v8008
    %v9449 = vpack.c.b16 %v8017, %v8009
    %v9450 = vpack.c.b16 %v8026, %v8018
    %v9451 = vpack.c.b16 %v8027, %v8019
    %v9452 = vpack.c.b16 %v8028, %v8020
    %v9453 = vpack.c.b16 %v8029, %v8021
    %v9454 = vpack.c.b16 %v8030, %v8022
    %v9455 = vpack.c.b16 %v8031, %v8023
    %v9456 = vpack.c.b16 %v8032, %v8024
    %v9457 = vpack.c.b16 %v8033, %v8025
    %v9458 = vpack.c.b16 %v8042, %v8034
    %v9459 = vpack.c.b16 %v8043, %v8035
    %v9460 = vpack.c.b16 %v8044, %v8036
    %v9461 = vpack.c.b16 %v8045, %v8037
    %v9462 = vpack.c.b16 %v8046, %v8038
    %v9463 = vpack.c.b16 %v8047, %v8039
    %v9464 = vpack.c.b16 %v8048, %v8040
    %v9465 = vpack.c.b16 %v8049, %v8041
    %v9466 = vpack.c.b16 %v8058, %v8050
    %v9467 = vpack.c.b16 %v8059, %v8051
    %v9468 = vpack.c.b16 %v8060, %v8052
    %v9469 = vpack.c.b16 %v8061, %v8053
    %v9470 = vpack.c.b16 %v8062, %v8054
    %v9471 = vpack.c.b16 %v8063, %v8055
    %v9472 = vpack.c.b16 %v8064, %v8056
    %v9473 = vpack.c.b16 %v8065, %v8057
    %v9474 = vpack.c.b16 %v8074, %v8066
    %v9475 = vpack.c.b16 %v8075, %v8067
    %v9476 = vpack.c.b16 %v8076, %v8068
    %v9477 = vpack.c.b16 %v8077, %v8069
    %v9478 = vpack.c.b16 %v8078, %v8070
    %v9479 = vpack.c.b16 %v8079, %v8071
    %v9480 = vpack.c.b16 %v8080, %v8072
    %v9481 = vpack.c.b16 %v8081, %v8073
    %v9482 = vpack.c.b16 %v8090, %v8082
    %v9483 = vpack.c.b16 %v8091, %v8083
    %v9484 = vpack.c.b16 %v8092, %v8084
    %v9485 = vpack.c.b16 %v8093, %v8085
    %v9486 = vpack.c.b16 %v8094, %v8086
    %v9487 = vpack.c.b16 %v8095, %v8087
    %v9488 = vpack.c.b16 %v8096, %v8088
    %v9489 = vpack.c.b16 %v8097, %v8089
    %v9490 = vpack.c.b16 %v8106, %v8098
    %v9491 = vpack.c.b16 %v8107, %v8099
    %v9492 = vpack.c.b16 %v8108, %v8100
    %v9493 = vpack.c.b16 %v8109, %v8101
    %v9494 = vpack.c.b16 %v8110, %v8102
    %v9495 = vpack.c.b16 %v8111, %v8103
    %v9496 = vpack.c.b16 %v8112, %v8104
    %v9497 = vpack.c.b16 %v8113, %v8105
    %v9498 = vpack.c.b16 %v8122, %v8114
    %v9499 = vpack.c.b16 %v8123, %v8115
    %v9500 = vpack.c.b16 %v8124, %v8116
    %v9501 = vpack.c.b16 %v8125, %v8117
    %v9502 = vpack.c.b16 %v8126, %v8118
    %v9503 = vpack.c.b16 %v8127, %v8119
    %v9504 = vpack.c.b16 %v8128, %v8120
    %v9505 = vpack.c.b16 %v8129, %v8121
    %v9506 = vpack.c.b16 %v8138, %v8130
    %v9507 = vpack.c.b16 %v8139, %v8131
    %v9508 = vpack.c.b16 %v8140, %v8132
    %v9509 = vpack.c.b16 %v8141, %v8133
    %v9510 = vpack.c.b16 %v8142, %v8134
    %v9511 = vpack.c.b16 %v8143, %v8135
    %v9512 = vpack.c.b16 %v8144, %v8136
    %v9513 = vpack.c.b16 %v8145, %v8137
    %v9514 = vpack.c.b16 %v8154, %v8146
    %v9515 = vpack.c.b16 %v8155, %v8147
    %v9516 = vpack.c.b16 %v8156, %v8148
    %v9517 = vpack.c.b16 %v8157, %v8149
    %v9518 = vpack.c.b16 %v8158, %v8150
    %v9519 = vpack.c.b16 %v8159, %v8151
    %v9520 = vpack.c.b16 %v8160, %v8152
    %v9521 = vpack.c.b16 %v8161, %v8153
    %v9522 = vpack.c.b16 %v8170, %v8162
    %v9523 = vpack.c.b16 %v8171, %v8163
    %v9524 = vpack.c.b16 %v8172, %v8164
    %v9525 = vpack.c.b16 %v8173, %v8165
    %v9526 = vpack.c.b16 %v8174, %v8166
    %v9527 = vpack.c.b16 %v8175, %v8167
    %v9528 = vpack.c.b16 %v8176, %v8168
    %v9529 = vpack.c.b16 %v8177, %v8169
    %v9530 = vpack.c.b16 %v8186, %v8178
    %v9531 = vpack.c.b16 %v8187, %v8179
    %v9532 = vpack.c.b16 %v8188, %v8180
    %v9533 = vpack.c.b16 %v8189, %v8181
    %v9534 = vpack.c.b16 %v8190, %v8182
    %v9535 = vpack.c.b16 %v8191, %v8183
    %v9536 = vpack.c.b16 %v8192, %v8184
    %v9537 = vpack.c.b16 %v8193, %v8185
    %v9538 = vpack.c.b16 %v8202, %v8194
    %v9539 = vpack.c.b16 %v8203, %v8195
    %v9540 = vpack.c.b16 %v8204, %v8196
    %v9541 = vpack.c.b16 %v8205, %v8197
    %v9542 = vpack.c.b16 %v8206, %v8198
    %v9543 = vpack.c.b16 %v8207, %v8199
    %v9544 = vpack.c.b16 %v8208, %v8200
    %v9545 = vpack.c.b16 %v8209, %v8201
    %v9546 = vpack.c.b16 %v8218, %v8210
    %v9547 = vpack.c.b16 %v8219, %v8211
    %v9548 = vpack.c.b16 %v8220, %v8212
    %v9549 = vpack.c.b16 %v8221, %v8213
    %v9550 = vpack.c.b16 %v8222, %v8214
    %v9551 = vpack.c.b16 %v8223, %v8215
    %v9552 = vpack.c.b16 %v8224, %v8216
    %v9553 = vpack.c.b16 %v8225, %v8217
    %v9554 = vpack.c.b16 %v8234, %v8226
    %v9555 = vpack.c.b16 %v8235, %v8227
    %v9556 = vpack.c.b16 %v8236, %v8228
    %v9557 = vpack.c.b16 %v8237, %v8229
    %v9558 = vpack.c.b16 %v8238, %v8230
    %v9559 = vpack.c.b16 %v8239, %v8231
    %v9560 = vpack.c.b16 %v8240, %v8232
    %v9561 = vpack.c.b16 %v8241, %v8233
    %v9562 = vpack.c.b16 %v8250, %v8242
    %v9563 = vpack.c.b16 %v8251, %v8243
    %v9564 = vpack.c.b16 %v8252, %v8244
    %v9565 = vpack.c.b16 %v8253, %v8245
    %v9566 = vpack.c.b16 %v8254, %v8246
    %v9567 = vpack.c.b16 %v8255, %v8247
    %v9568 = vpack.c.b16 %v8256, %v8248
    %v9569 = vpack.c.b16 %v8257, %v8249
    %v9570 = vpack.c.b16 %v8266, %v8258
    %v9571 = vpack.c.b16 %v8267, %v8259
    %v9572 = vpack.c.b16 %v8268, %v8260
    %v9573 = vpack.c.b16 %v8269, %v8261
    %v9574 = vpack.c.b16 %v8270, %v8262
    %v9575 = vpack.c.b16 %v8271, %v8263
    %v9576 = vpack.c.b16 %v8272, %v8264
    %v9577 = vpack.c.b16 %v8273, %v8265
    %v9578 = vpack.c.b16 %v8282, %v8274
    %v9579 = vpack.c.b16 %v8283, %v8275
    %v9580 = vpack.c.b16 %v8284, %v8276
    %v9581 = vpack.c.b16 %v8285, %v8277
    %v9582 = vpack.c.b16 %v8286, %v8278
    %v9583 = vpack.c.b16 %v8287, %v8279
    %v9584 = vpack.c.b16 %v8288, %v8280
    %v9585 = vpack.c.b16 %v8289, %v8281
    %v9586 = vpack.c.b16 %v8298, %v8290
    %v9587 = vpack.c.b16 %v8299, %v8291
    %v9588 = vpack.c.b16 %v8300, %v8292
    %v9589 = vpack.c.b16 %v8301, %v8293
    %v9590 = vpack.c.b16 %v8302, %v8294
    %v9591 = vpack.c.b16 %v8303, %v8295
    %v9592 = vpack.c.b16 %v8304, %v8296
    %v9593 = vpack.c.b16 %v8305, %v8297
    %v9594 = vpack.c.b16 %v8314, %v8306
    %v9595 = vpack.c.b16 %v8315, %v8307
    %v9596 = vpack.c.b16 %v8316, %v8308
    %v9597 = vpack.c.b16 %v8317, %v8309
    %v9598 = vpack.c.b16 %v8318, %v8310
    %v9599 = vpack.c.b16 %v8319, %v8311
    %v9600 = vpack.c.b16 %v8320, %v8312
    %v9601 = vpack.c.b16 %v8321, %v8313
    %v9602 = vpack.c.b16 %v8330, %v8322
    %v9603 = vpack.c.b16 %v8331, %v8323
    %v9604 = vpack.c.b16 %v8332, %v8324
    %v9605 = vpack.c.b16 %v8333, %v8325
    %v9606 = vpack.c.b16 %v8334, %v8326
    %v9607 = vpack.c.b16 %v8335, %v8327
    %v9608 = vpack.c.b16 %v8336, %v8328
    %v9609 = vpack.c.b16 %v8337, %v8329
    %v9610 = vpack.c.b16 %v8346, %v8338
    %v9611 = vpack.c.b16 %v8347, %v8339
    %v9612 = vpack.c.b16 %v8348, %v8340
    %v9613 = vpack.c.b16 %v8349, %v8341
    %v9614 = vpack.c.b16 %v8350, %v8342
    %v9615 = vpack.c.b16 %v8351, %v8343
    %v9616 = vpack.c.b16 %v8352, %v8344
    %v9617 = vpack.c.b16 %v8353, %v8345
    %v9618 = vpack.c.b16 %v8362, %v8354
    %v9619 = vpack.c.b16 %v8363, %v8355
    %v9620 = vpack.c.b16 %v8364, %v8356
    %v9621 = vpack.c.b16 %v8365, %v8357
    %v9622 = vpack.c.b16 %v8366, %v8358
    %v9623 = vpack.c.b16 %v8367, %v8359
    %v9624 = vpack.c.b16 %v8368, %v8360
    %v9625 = vpack.c.b16 %v8369, %v8361
    %v9626 = vpack.c.b16 %v8378, %v8370
    %v9627 = vpack.c.b16 %v8379, %v8371
    %v9628 = vpack.c.b16 %v8380, %v8372
    %v9629 = vpack.c.b16 %v8381, %v8373
    %v9630 = vpack.c.b16 %v8382, %v8374
    %v9631 = vpack.c.b16 %v8383, %v8375
    %v9632 = vpack.c.b16 %v8384, %v8376
    %v9633 = vpack.c.b16 %v8385, %v8377
    %v9634 = vpack.c.b16 %v8394, %v8386
    %v9635 = vpack.c.b16 %v8395, %v8387
    %v9636 = vpack.c.b16 %v8396, %v8388
    %v9637 = vpack.c.b16 %v8397, %v8389
    %v9638 = vpack.c.b16 %v8398, %v8390
    %v9639 = vpack.c.b16 %v8399, %v8391
    %v9640 = vpack.c.b16 %v8400, %v8392
    %v9641 = vpack.c.b16 %v8401, %v8393
    %v9642 = vpack.c.b16 %v8410, %v8402
    %v9643 = vpack.c.b16 %v8411, %v8403
    %v9644 = vpack.c.b16 %v8412, %v8404
    %v9645 = vpack.c.b16 %v8413, %v8405
    %v9646 = vpack.c.b16 %v8414, %v8406
    %v9647 = vpack.c.b16 %v8415, %v8407
    %v9648 = vpack.c.b16 %v8416, %v8408
    %v9649 = vpack.c.b16 %v8417, %v8409
    %v9650 = vpack.c.b16 %v8426, %v8418
    %v9651 = vpack.c.b16 %v8427, %v8419
    %v9652 = vpack.c.b16 %v8428, %v8420
    %v9653 = vpack.c.b16 %v8429, %v8421
    %v9654 = vpack.c.b16 %v8430, %v8422
    %v9655 = vpack.c.b16 %v8431, %v8423
    %v9656 = vpack.c.b16 %v8432, %v8424
    %v9657 = vpack.c.b16 %v8433, %v8425
    %v9658 = vpack.c.b16 %v8442, %v8434
    %v9659 = vpack.c.b16 %v8443, %v8435
    %v9660 = vpack.c.b16 %v8444, %v8436
    %v9661 = vpack.c.b16 %v8445, %v8437
    %v9662 = vpack.c.b16 %v8446, %v8438
    %v9663 = vpack.c.b16 %v8447, %v8439
    %v9664 = vpack.c.b16 %v8448, %v8440
    %v9665 = vpack.c.b16 %v8449, %v8441
    %v9666 = vpack.c.b16 %v8458, %v8450
    %v9667 = vpack.c.b16 %v8459, %v8451
    %v9668 = vpack.c.b16 %v8460, %v8452
    %v9669 = vpack.c.b16 %v8461, %v8453
    %v9670 = vpack.c.b16 %v8462, %v8454
    %v9671 = vpack.c.b16 %v8463, %v8455
    %v9672 = vpack.c.b16 %v8464, %v8456
    %v9673 = vpack.c.b16 %v8465, %v8457
    %v9674 = vpack.c.b16 %v8474, %v8466
    %v9675 = vpack.c.b16 %v8475, %v8467
    %v9676 = vpack.c.b16 %v8476, %v8468
    %v9677 = vpack.c.b16 %v8477, %v8469
    %v9678 = vpack.c.b16 %v8478, %v8470
    %v9679 = vpack.c.b16 %v8479, %v8471
    %v9680 = vpack.c.b16 %v8480, %v8472
    %v9681 = vpack.c.b16 %v8481, %v8473
    %v9682 = vpack.c.b16 %v8490, %v8482
    %v9683 = vpack.c.b16 %v8491, %v8483
    %v9684 = vpack.c.b16 %v8492, %v8484
    %v9685 = vpack.c.b16 %v8493, %v8485
    %v9686 = vpack.c.b16 %v8494, %v8486
    %v9687 = vpack.c.b16 %v8495, %v8487
    %v9688 = vpack.c.b16 %v8496, %v8488
    %v9689 = vpack.c.b16 %v8497, %v8489
    %v9690 = vpack.c.b16 %v8506, %v8498
    %v9691 = vpack.c.b16 %v8507, %v8499
    %v9692 = vpack.c.b16 %v8508, %v8500
    %v9693 = vpack.c.b16 %v8509, %v8501
    %v9694 = vpack.c.b16 %v8510, %v8502
    %v9695 = vpack.c.b16 %v8511, %v8503
    %v9696 = vpack.c.b16 %v8512, %v8504
    %v9697 = vpack.c.b16 %v8513, %v8505
    %v9698 = vpack.c.b16 %v8522, %v8514
    %v9699 = vpack.c.b16 %v8523, %v8515
    %v9700 = vpack.c.b16 %v8524, %v8516
    %v9701 = vpack.c.b16 %v8525, %v8517
    %v9702 = vpack.c.b16 %v8526, %v8518
    %v9703 = vpack.c.b16 %v8527, %v8519
    %v9704 = vpack.c.b16 %v8528, %v8520
    %v9705 = vpack.c.b16 %v8529, %v8521
    %v9706 = vpack.c.b16 %v8538, %v8530
    %v9707 = vpack.c.b16 %v8539, %v8531
    %v9708 = vpack.c.b16 %v8540, %v8532
    %v9709 = vpack.c.b16 %v8541, %v8533
    %v9710 = vpack.c.b16 %v8542, %v8534
    %v9711 = vpack.c.b16 %v8543, %v8535
    %v9712 = vpack.c.b16 %v8544, %v8536
    %v9713 = vpack.c.b16 %v8545, %v8537
    %v9714 = vpack.c.b16 %v8554, %v8546
    %v9715 = vpack.c.b16 %v8555, %v8547
    %v9716 = vpack.c.b16 %v8556, %v8548
    %v9717 = vpack.c.b16 %v8557, %v8549
    %v9718 = vpack.c.b16 %v8558, %v8550
    %v9719 = vpack.c.b16 %v8559, %v8551
    %v9720 = vpack.c.b16 %v8560, %v8552
    %v9721 = vpack.c.b16 %v8561, %v8553
    %v9722 = vpack.c.b16 %v8570, %v8562
    %v9723 = vpack.c.b16 %v8571, %v8563
    %v9724 = vpack.c.b16 %v8572, %v8564
    %v9725 = vpack.c.b16 %v8573, %v8565
    %v9726 = vpack.c.b16 %v8574, %v8566
    %v9727 = vpack.c.b16 %v8575, %v8567
    %v9728 = vpack.c.b16 %v8576, %v8568
    %v9729 = vpack.c.b16 %v8577, %v8569
    %v9730 = vpack.c.b16 %v8586, %v8578
    %v9731 = vpack.c.b16 %v8587, %v8579
    %v9732 = vpack.c.b16 %v8588, %v8580
    %v9733 = vpack.c.b16 %v8589, %v8581
    %v9734 = vpack.c.b16 %v8590, %v8582
    %v9735 = vpack.c.b16 %v8591, %v8583
    %v9736 = vpack.c.b16 %v8592, %v8584
    %v9737 = vpack.c.b16 %v8593, %v8585
    %v9738 = vpack.c.b16 %v8602, %v8594
    %v9739 = vpack.c.b16 %v8603, %v8595
    %v9740 = vpack.c.b16 %v8604, %v8596
    %v9741 = vpack.c.b16 %v8605, %v8597
    %v9742 = vpack.c.b16 %v8606, %v8598
    %v9743 = vpack.c.b16 %v8607, %v8599
    %v9744 = vpack.c.b16 %v8608, %v8600
    %v9745 = vpack.c.b16 %v8609, %v8601
    %v9746 = vpack.c.b16 %v8618, %v8610
    %v9747 = vpack.c.b16 %v8619, %v8611
    %v9748 = vpack.c.b16 %v8620, %v8612
    %v9749 = vpack.c.b16 %v8621, %v8613
    %v9750 = vpack.c.b16 %v8622, %v8614
    %v9751 = vpack.c.b16 %v8623, %v8615
    %v9752 = vpack.c.b16 %v8624, %v8616
    %v9753 = vpack.c.b16 %v8625, %v8617
    %v9754 = vpack.c.b16 %v8634, %v8626
    %v9755 = vpack.c.b16 %v8635, %v8627
    %v9756 = vpack.c.b16 %v8636, %v8628
    %v9757 = vpack.c.b16 %v8637, %v8629
    %v9758 = vpack.c.b16 %v8638, %v8630
    %v9759 = vpack.c.b16 %v8639, %v8631
    %v9760 = vpack.c.b16 %v8640, %v8632
    %v9761 = vpack.c.b16 %v8641, %v8633
    %v9762 = vpack.c.b16 %v8650, %v8642
    %v9763 = vpack.c.b16 %v8651, %v8643
    %v9764 = vpack.c.b16 %v8652, %v8644
    %v9765 = vpack.c.b16 %v8653, %v8645
    %v9766 = vpack.c.b16 %v8654, %v8646
    %v9767 = vpack.c.b16 %v8655, %v8647
    %v9768 = vpack.c.b16 %v8656, %v8648
    %v9769 = vpack.c.b16 %v8657, %v8649
    %v9770 = vpack.c.b16 %v8666, %v8658
    %v9771 = vpack.c.b16 %v8667, %v8659
    %v9772 = vpack.c.b16 %v8668, %v8660
    %v9773 = vpack.c.b16 %v8669, %v8661
    %v9774 = vpack.c.b16 %v8670, %v8662
    %v9775 = vpack.c.b16 %v8671, %v8663
    %v9776 = vpack.c.b16 %v8672, %v8664
    %v9777 = vpack.c.b16 %v8673, %v8665
    %v9778 = vpack.c.b16 %v8682, %v8674
    %v9779 = vpack.c.b16 %v8683, %v8675
    %v9780 = vpack.c.b16 %v8684, %v8676
    %v9781 = vpack.c.b16 %v8685, %v8677
    %v9782 = vpack.c.b16 %v8686, %v8678
    %v9783 = vpack.c.b16 %v8687, %v8679
    %v9784 = vpack.c.b16 %v8688, %v8680
    %v9785 = vpack.c.b16 %v8689, %v8681
    %v9786 = vpack.c.b16 %v8698, %v8690
    %v9787 = vpack.c.b16 %v8699, %v8691
    %v9788 = vpack.c.b16 %v8700, %v8692
    %v9789 = vpack.c.b16 %v8701, %v8693
    %v9790 = vpack.c.b16 %v8702, %v8694
    %v9791 = vpack.c.b16 %v8703, %v8695
    %v9792 = vpack.c.b16 %v8704, %v8696
    %v9793 = vpack.c.b16 %v8705, %v8697
    %v9794 = vpack.c.b16 %v8714, %v8706
    %v9795 = vpack.c.b16 %v8715, %v8707
    %v9796 = vpack.c.b16 %v8716, %v8708
    %v9797 = vpack.c.b16 %v8717, %v8709
    %v9798 = vpack.c.b16 %v8718, %v8710
    %v9799 = vpack.c.b16 %v8719, %v8711
    %v9800 = vpack.c.b16 %v8720, %v8712
    %v9801 = vpack.c.b16 %v8721, %v8713
    %v9802 = vpack.c.b16 %v8730, %v8722
    %v9803 = vpack.c.b16 %v8731, %v8723
    %v9804 = vpack.c.b16 %v8732, %v8724
    %v9805 = vpack.c.b16 %v8733, %v8725
    %v9806 = vpack.c.b16 %v8734, %v8726
    %v9807 = vpack.c.b16 %v8735, %v8727
    %v9808 = vpack.c.b16 %v8736, %v8728
    %v9809 = vpack.c.b16 %v8737, %v8729
    %v9810 = vpack.c.b16 %v8746, %v8738
    %v9811 = vpack.c.b16 %v8747, %v8739
    %v9812 = vpack.c.b16 %v8748, %v8740
    %v9813 = vpack.c.b16 %v8749, %v8741
    %v9814 = vpack.c.b16 %v8750, %v8742
    %v9815 = vpack.c.b16 %v8751, %v8743
    %v9816 = vpack.c.b16 %v8752, %v8744
    %v9817 = vpack.c.b16 %v8753, %v8745
    %v9818 = vpack.c.b16 %v8762, %v8754
    %v9819 = vpack.c.b16 %v8763, %v8755
    %v9820 = vpack.c.b16 %v8764, %v8756
    %v9821 = vpack.c.b16 %v8765, %v8757
    %v9822 = vpack.c.b16 %v8766, %v8758
    %v9823 = vpack.c.b16 %v8767, %v8759
    %v9824 = vpack.c.b16 %v8768, %v8760
    %v9825 = vpack.c.b16 %v8769, %v8761
    %v9826 = vpack.c.b16 %v8778, %v8770
    %v9827 = vpack.c.b16 %v8779, %v8771
    %v9828 = vpack.c.b16 %v8780, %v8772
    %v9829 = vpack.c.b16 %v8781, %v8773
    %v9830 = vpack.c.b16 %v8782, %v8774
    %v9831 = vpack.c.b16 %v8783, %v8775
    %v9832 = vpack.c.b16 %v8784, %v8776
    %v9833 = vpack.c.b16 %v8785, %v8777
    %v9834 = vpack.c.b16 %v8794, %v8786
    %v9835 = vpack.c.b16 %v8795, %v8787
    %v9836 = vpack.c.b16 %v8796, %v8788
    %v9837 = vpack.c.b16 %v8797, %v8789
    %v9838 = vpack.c.b16 %v8798, %v8790
    %v9839 = vpack.c.b16 %v8799, %v8791
    %v9840 = vpack.c.b16 %v8800, %v8792
    %v9841 = vpack.c.b16 %v8801, %v8793
    %v9842 = vpack.c.b16 %v8810, %v8802
    %v9843 = vpack.c.b16 %v8811, %v8803
    %v9844 = vpack.c.b16 %v8812, %v8804
    %v9845 = vpack.c.b16 %v8813, %v8805
    %v9846 = vpack.c.b16 %v8814, %v8806
    %v9847 = vpack.c.b16 %v8815, %v8807
    %v9848 = vpack.c.b16 %v8816, %v8808
    %v9849 = vpack.c.b16 %v8817, %v8809
    %v9850 = vpack.c.b16 %v8826, %v8818
    %v9851 = vpack.c.b16 %v8827, %v8819
    %v9852 = vpack.c.b16 %v8828, %v8820
    %v9853 = vpack.c.b16 %v8829, %v8821
    %v9854 = vpack.c.b16 %v8830, %v8822
    %v9855 = vpack.c.b16 %v8831, %v8823
    %v9856 = vpack.c.b16 %v8832, %v8824
    %v9857 = vpack.c.b16 %v8833, %v8825
    %10882 = vmatpush.bf16.msra.mxu0 %v8890
    %10883 = vmatpush.bf16.msra.mxu0 %v8882
    %10884 = vmatpush.bf16.msra.mxu0 %v8874
    %10885 = vmatpush.bf16.msra.mxu0 %v8866
    %10886 = vmatpush.bf16.msra.mxu0 %v8858
    %10887 = vmatpush.bf16.msra.mxu0 %v8850
    %10888 = vmatpush.bf16.msra.mxu0 %v8842
    %10889 = vmatpush.bf16.msra.mxu0 %v8834
    %10890 = vmatmul.bf16.gmra.mxu0 %v5728
    %v10891 = vpop.f32.mrf.mxu0
    %v10892 = vadd.f32 %v5746, %v10891
    %v10893 = vpop.f32.mrf.mxu0
    %10894 = vdwg.mxu0
    %10895 = vmatpush.bf16.msra.mxu0 %v8954
    %10896 = vmatpush.bf16.msra.mxu0 %v8946
    %10897 = vmatpush.bf16.msra.mxu0 %v8938
    %10898 = vmatpush.bf16.msra.mxu0 %v8930
    %10899 = vmatpush.bf16.msra.mxu0 %v8922
    %10900 = vmatpush.bf16.msra.mxu0 %v8914
    %10901 = vmatpush.bf16.msra.mxu0 %v8906
    %10902 = vmatpush.bf16.msra.mxu0 %v8898
    %10903 = vmatmul.bf16.gmra.mxu0 %v5729
    %v10904 = vpop.f32.mrf.mxu0
    %v10905 = vadd.f32 %v10892, %v10904
    %v10906 = vpop.f32.mrf.mxu0
    %10907 = vdwg.mxu0
    %10908 = vmatpush.bf16.msra.mxu0 %v9018
    %10909 = vmatpush.bf16.msra.mxu0 %v9010
    %10910 = vmatpush.bf16.msra.mxu0 %v9002
    %10911 = vmatpush.bf16.msra.mxu0 %v8994
    %10912 = vmatpush.bf16.msra.mxu0 %v8986
    %10913 = vmatpush.bf16.msra.mxu0 %v8978
    %10914 = vmatpush.bf16.msra.mxu0 %v8970
    %10915 = vmatpush.bf16.msra.mxu0 %v8962
    %10916 = vmatmul.bf16.gmra.mxu0 %v5730
    %v10917 = vpop.f32.mrf.mxu0
    %v10918 = vadd.f32 %v10905, %v10917
    %v10919 = vpop.f32.mrf.mxu0
    %10920 = vdwg.mxu0
    %10921 = vmatpush.bf16.msra.mxu0 %v9082
    %10922 = vmatpush.bf16.msra.mxu0 %v9074
    %10923 = vmatpush.bf16.msra.mxu0 %v9066
    %10924 = vmatpush.bf16.msra.mxu0 %v9058
    %10925 = vmatpush.bf16.msra.mxu0 %v9050
    %10926 = vmatpush.bf16.msra.mxu0 %v9042
    %10927 = vmatpush.bf16.msra.mxu0 %v9034
    %10928 = vmatpush.bf16.msra.mxu0 %v9026
    %10929 = vmatmul.bf16.gmra.mxu0 %v5731
    %v10930 = vpop.f32.mrf.mxu0
    %v10931 = vadd.f32 %v10918, %v10930
    %v10932 = vpop.f32.mrf.mxu0
    %10933 = vdwg.mxu0
    %10934 = vmatpush.bf16.msra.mxu0 %v9146
    %10935 = vmatpush.bf16.msra.mxu0 %v9138
    %10936 = vmatpush.bf16.msra.mxu0 %v9130
    %10937 = vmatpush.bf16.msra.mxu0 %v9122
    %10938 = vmatpush.bf16.msra.mxu0 %v9114
    %10939 = vmatpush.bf16.msra.mxu0 %v9106
    %10940 = vmatpush.bf16.msra.mxu0 %v9098
    %10941 = vmatpush.bf16.msra.mxu0 %v9090
    %10942 = vmatmul.bf16.gmra.mxu0 %v5732
    %v10943 = vpop.f32.mrf.mxu0
    %v10944 = vadd.f32 %v10931, %v10943
    %v10945 = vpop.f32.mrf.mxu0
    %10946 = vdwg.mxu0
    %10947 = vmatpush.bf16.msra.mxu0 %v9210
    %10948 = vmatpush.bf16.msra.mxu0 %v9202
    %10949 = vmatpush.bf16.msra.mxu0 %v9194
    %10950 = vmatpush.bf16.msra.mxu0 %v9186
    %10951 = vmatpush.bf16.msra.mxu0 %v9178
    %10952 = vmatpush.bf16.msra.mxu0 %v9170
    %10953 = vmatpush.bf16.msra.mxu0 %v9162
    %10954 = vmatpush.bf16.msra.mxu0 %v9154
    %10955 = vmatmul.bf16.gmra.mxu0 %v5733
    %v10956 = vpop.f32.mrf.mxu0
    %v10957 = vadd.f32 %v10944, %v10956
    %v10958 = vpop.f32.mrf.mxu0
    %10959 = vdwg.mxu0
    %10960 = vmatpush.bf16.msra.mxu0 %v9274
    %10961 = vmatpush.bf16.msra.mxu0 %v9266
    %10962 = vmatpush.bf16.msra.mxu0 %v9258
    %10963 = vmatpush.bf16.msra.mxu0 %v9250
    %10964 = vmatpush.bf16.msra.mxu0 %v9242
    %10965 = vmatpush.bf16.msra.mxu0 %v9234
    %10966 = vmatpush.bf16.msra.mxu0 %v9226
    %10967 = vmatpush.bf16.msra.mxu0 %v9218
    %10968 = vmatmul.bf16.gmra.mxu0 %v5734
    %v10969 = vpop.f32.mrf.mxu0
    %v10970 = vadd.f32 %v10957, %v10969
    %v10971 = vpop.f32.mrf.mxu0
    %10972 = vdwg.mxu0
    %10973 = vmatpush.bf16.msra.mxu0 %v9338
    %10974 = vmatpush.bf16.msra.mxu0 %v9330
    %10975 = vmatpush.bf16.msra.mxu0 %v9322
    %10976 = vmatpush.bf16.msra.mxu0 %v9314
    %10977 = vmatpush.bf16.msra.mxu0 %v9306
    %10978 = vmatpush.bf16.msra.mxu0 %v9298
    %10979 = vmatpush.bf16.msra.mxu0 %v9290
    %10980 = vmatpush.bf16.msra.mxu0 %v9282
    %10981 = vmatmul.bf16.gmra.mxu0 %v5735
    %v10982 = vpop.f32.mrf.mxu0
    %v10983 = vadd.f32 %v10970, %v10982
    %v10984 = vpop.f32.mrf.mxu0
    %10985 = vdwg.mxu0
    %10986 = vmatpush.bf16.msra.mxu0 %v9402
    %10987 = vmatpush.bf16.msra.mxu0 %v9394
    %10988 = vmatpush.bf16.msra.mxu0 %v9386
    %10989 = vmatpush.bf16.msra.mxu0 %v9378
    %10990 = vmatpush.bf16.msra.mxu0 %v9370
    %10991 = vmatpush.bf16.msra.mxu0 %v9362
    %10992 = vmatpush.bf16.msra.mxu0 %v9354
    %10993 = vmatpush.bf16.msra.mxu0 %v9346
    %10994 = vmatmul.bf16.gmra.mxu0 %v5736
    %v10995 = vpop.f32.mrf.mxu0
    %v10996 = vadd.f32 %v10983, %v10995
    %v10997 = vpop.f32.mrf.mxu0
    %10998 = vdwg.mxu0
    %10999 = vmatpush.bf16.msra.mxu0 %v9466
    %11000 = vmatpush.bf16.msra.mxu0 %v9458
    %11001 = vmatpush.bf16.msra.mxu0 %v9450
    %11002 = vmatpush.bf16.msra.mxu0 %v9442
    %11003 = vmatpush.bf16.msra.mxu0 %v9434
    %11004 = vmatpush.bf16.msra.mxu0 %v9426
    %11005 = vmatpush.bf16.msra.mxu0 %v9418
    %11006 = vmatpush.bf16.msra.mxu0 %v9410
    %11007 = vmatmul.bf16.gmra.mxu0 %v5737
    %v11008 = vpop.f32.mrf.mxu0
    %v11009 = vadd.f32 %v10996, %v11008
    %v11010 = vpop.f32.mrf.mxu0
    %11011 = vdwg.mxu0
    %11012 = vmatpush.bf16.msra.mxu0 %v9530
    %11013 = vmatpush.bf16.msra.mxu0 %v9522
    %11014 = vmatpush.bf16.msra.mxu0 %v9514
    %11015 = vmatpush.bf16.msra.mxu0 %v9506
    %11016 = vmatpush.bf16.msra.mxu0 %v9498
    %11017 = vmatpush.bf16.msra.mxu0 %v9490
    %11018 = vmatpush.bf16.msra.mxu0 %v9482
    %11019 = vmatpush.bf16.msra.mxu0 %v9474
    %11020 = vmatmul.bf16.gmra.mxu0 %v5738
    %v11021 = vpop.f32.mrf.mxu0
    %v11022 = vadd.f32 %v11009, %v11021
    %v11023 = vpop.f32.mrf.mxu0
    %11024 = vdwg.mxu0
    %11025 = vmatpush.bf16.msra.mxu0 %v9594
    %11026 = vmatpush.bf16.msra.mxu0 %v9586
    %11027 = vmatpush.bf16.msra.mxu0 %v9578
    %11028 = vmatpush.bf16.msra.mxu0 %v9570
    %11029 = vmatpush.bf16.msra.mxu0 %v9562
    %11030 = vmatpush.bf16.msra.mxu0 %v9554
    %11031 = vmatpush.bf16.msra.mxu0 %v9546
    %11032 = vmatpush.bf16.msra.mxu0 %v9538
    %11033 = vmatmul.bf16.gmra.mxu0 %v5739
    %v11034 = vpop.f32.mrf.mxu0
    %v11035 = vadd.f32 %v11022, %v11034
    %v11036 = vpop.f32.mrf.mxu0
    %11037 = vdwg.mxu0
    %11038 = vmatpush.bf16.msra.mxu0 %v9658
    %11039 = vmatpush.bf16.msra.mxu0 %v9650
    %11040 = vmatpush.bf16.msra.mxu0 %v9642
    %11041 = vmatpush.bf16.msra.mxu0 %v9634
    %11042 = vmatpush.bf16.msra.mxu0 %v9626
    %11043 = vmatpush.bf16.msra.mxu0 %v9618
    %11044 = vmatpush.bf16.msra.mxu0 %v9610
    %11045 = vmatpush.bf16.msra.mxu0 %v9602
    %11046 = vmatmul.bf16.gmra.mxu0 %v5740
    %v11047 = vpop.f32.mrf.mxu0
    %v11048 = vadd.f32 %v11035, %v11047
    %v11049 = vpop.f32.mrf.mxu0
    %11050 = vdwg.mxu0
    %11051 = vmatpush.bf16.msra.mxu0 %v9722
    %11052 = vmatpush.bf16.msra.mxu0 %v9714
    %11053 = vmatpush.bf16.msra.mxu0 %v9706
    %11054 = vmatpush.bf16.msra.mxu0 %v9698
    %11055 = vmatpush.bf16.msra.mxu0 %v9690
    %11056 = vmatpush.bf16.msra.mxu0 %v9682
    %11057 = vmatpush.bf16.msra.mxu0 %v9674
    %11058 = vmatpush.bf16.msra.mxu0 %v9666
    %11059 = vmatmul.bf16.gmra.mxu0 %v5741
    %v11060 = vpop.f32.mrf.mxu0
    %v11061 = vadd.f32 %v11048, %v11060
    %v11062 = vpop.f32.mrf.mxu0
    %11063 = vdwg.mxu0
    %11064 = vmatpush.bf16.msra.mxu0 %v9786
    %11065 = vmatpush.bf16.msra.mxu0 %v9778
    %11066 = vmatpush.bf16.msra.mxu0 %v9770
    %11067 = vmatpush.bf16.msra.mxu0 %v9762
    %11068 = vmatpush.bf16.msra.mxu0 %v9754
    %11069 = vmatpush.bf16.msra.mxu0 %v9746
    %11070 = vmatpush.bf16.msra.mxu0 %v9738
    %11071 = vmatpush.bf16.msra.mxu0 %v9730
    %11072 = vmatmul.bf16.gmra.mxu0 %v5742
    %v11073 = vpop.f32.mrf.mxu0
    %v11074 = vadd.f32 %v11061, %v11073
    %v11075 = vpop.f32.mrf.mxu0
    %11076 = vdwg.mxu0
    %11077 = vmatpush.bf16.msra.mxu0 %v9850
    %11078 = vmatpush.bf16.msra.mxu0 %v9842
    %11079 = vmatpush.bf16.msra.mxu0 %v9834
    %11080 = vmatpush.bf16.msra.mxu0 %v9826
    %11081 = vmatpush.bf16.msra.mxu0 %v9818
    %11082 = vmatpush.bf16.msra.mxu0 %v9810
    %11083 = vmatpush.bf16.msra.mxu0 %v9802
    %11084 = vmatpush.bf16.msra.mxu0 %v9794
    %11085 = vmatmul.bf16.gmra.mxu0 %v5743
    %v11086 = vpop.f32.mrf.mxu0
    %v11087 = vadd.f32 %v11074, %v11086
    %v11088 = vpop.f32.mrf.mxu0
    %11089 = vdwg.mxu0
    %11090 = vmatpush.bf16.msra.mxu0 %v8891
    %11091 = vmatpush.bf16.msra.mxu0 %v8883
    %11092 = vmatpush.bf16.msra.mxu0 %v8875
    %11093 = vmatpush.bf16.msra.mxu0 %v8867
    %11094 = vmatpush.bf16.msra.mxu0 %v8859
    %11095 = vmatpush.bf16.msra.mxu0 %v8851
    %11096 = vmatpush.bf16.msra.mxu0 %v8843
    %11097 = vmatpush.bf16.msra.mxu0 %v8835
    %11098 = vmatmul.bf16.gmra.mxu0 %v5728
    %v11099 = vpop.f32.mrf.mxu0
    %v11100 = vadd.f32 %v5747, %v11099
    %v11101 = vpop.f32.mrf.mxu0
    %11102 = vdwg.mxu0
    %11103 = vmatpush.bf16.msra.mxu0 %v8955
    %11104 = vmatpush.bf16.msra.mxu0 %v8947
    %11105 = vmatpush.bf16.msra.mxu0 %v8939
    %11106 = vmatpush.bf16.msra.mxu0 %v8931
    %11107 = vmatpush.bf16.msra.mxu0 %v8923
    %11108 = vmatpush.bf16.msra.mxu0 %v8915
    %11109 = vmatpush.bf16.msra.mxu0 %v8907
    %11110 = vmatpush.bf16.msra.mxu0 %v8899
    %11111 = vmatmul.bf16.gmra.mxu0 %v5729
    %v11112 = vpop.f32.mrf.mxu0
    %v11113 = vadd.f32 %v11100, %v11112
    %v11114 = vpop.f32.mrf.mxu0
    %11115 = vdwg.mxu0
    %11116 = vmatpush.bf16.msra.mxu0 %v9019
    %11117 = vmatpush.bf16.msra.mxu0 %v9011
    %11118 = vmatpush.bf16.msra.mxu0 %v9003
    %11119 = vmatpush.bf16.msra.mxu0 %v8995
    %11120 = vmatpush.bf16.msra.mxu0 %v8987
    %11121 = vmatpush.bf16.msra.mxu0 %v8979
    %11122 = vmatpush.bf16.msra.mxu0 %v8971
    %11123 = vmatpush.bf16.msra.mxu0 %v8963
    %11124 = vmatmul.bf16.gmra.mxu0 %v5730
    %v11125 = vpop.f32.mrf.mxu0
    %v11126 = vadd.f32 %v11113, %v11125
    %v11127 = vpop.f32.mrf.mxu0
    %11128 = vdwg.mxu0
    %11129 = vmatpush.bf16.msra.mxu0 %v9083
    %11130 = vmatpush.bf16.msra.mxu0 %v9075
    %11131 = vmatpush.bf16.msra.mxu0 %v9067
    %11132 = vmatpush.bf16.msra.mxu0 %v9059
    %11133 = vmatpush.bf16.msra.mxu0 %v9051
    %11134 = vmatpush.bf16.msra.mxu0 %v9043
    %11135 = vmatpush.bf16.msra.mxu0 %v9035
    %11136 = vmatpush.bf16.msra.mxu0 %v9027
    %11137 = vmatmul.bf16.gmra.mxu0 %v5731
    %v11138 = vpop.f32.mrf.mxu0
    %v11139 = vadd.f32 %v11126, %v11138
    %v11140 = vpop.f32.mrf.mxu0
    %11141 = vdwg.mxu0
    %11142 = vmatpush.bf16.msra.mxu0 %v9147
    %11143 = vmatpush.bf16.msra.mxu0 %v9139
    %11144 = vmatpush.bf16.msra.mxu0 %v9131
    %11145 = vmatpush.bf16.msra.mxu0 %v9123
    %11146 = vmatpush.bf16.msra.mxu0 %v9115
    %11147 = vmatpush.bf16.msra.mxu0 %v9107
    %11148 = vmatpush.bf16.msra.mxu0 %v9099
    %11149 = vmatpush.bf16.msra.mxu0 %v9091
    %11150 = vmatmul.bf16.gmra.mxu0 %v5732
    %v11151 = vpop.f32.mrf.mxu0
    %v11152 = vadd.f32 %v11139, %v11151
    %v11153 = vpop.f32.mrf.mxu0
    %11154 = vdwg.mxu0
    %11155 = vmatpush.bf16.msra.mxu0 %v9211
    %11156 = vmatpush.bf16.msra.mxu0 %v9203
    %11157 = vmatpush.bf16.msra.mxu0 %v9195
    %11158 = vmatpush.bf16.msra.mxu0 %v9187
    %11159 = vmatpush.bf16.msra.mxu0 %v9179
    %11160 = vmatpush.bf16.msra.mxu0 %v9171
    %11161 = vmatpush.bf16.msra.mxu0 %v9163
    %11162 = vmatpush.bf16.msra.mxu0 %v9155
    %11163 = vmatmul.bf16.gmra.mxu0 %v5733
    %v11164 = vpop.f32.mrf.mxu0
    %v11165 = vadd.f32 %v11152, %v11164
    %v11166 = vpop.f32.mrf.mxu0
    %11167 = vdwg.mxu0
    %11168 = vmatpush.bf16.msra.mxu0 %v9275
    %11169 = vmatpush.bf16.msra.mxu0 %v9267
    %11170 = vmatpush.bf16.msra.mxu0 %v9259
    %11171 = vmatpush.bf16.msra.mxu0 %v9251
    %11172 = vmatpush.bf16.msra.mxu0 %v9243
    %11173 = vmatpush.bf16.msra.mxu0 %v9235
    %11174 = vmatpush.bf16.msra.mxu0 %v9227
    %11175 = vmatpush.bf16.msra.mxu0 %v9219
    %11176 = vmatmul.bf16.gmra.mxu0 %v5734
    %v11177 = vpop.f32.mrf.mxu0
    %v11178 = vadd.f32 %v11165, %v11177
    %v11179 = vpop.f32.mrf.mxu0
    %11180 = vdwg.mxu0
    %11181 = vmatpush.bf16.msra.mxu0 %v9339
    %11182 = vmatpush.bf16.msra.mxu0 %v9331
    %11183 = vmatpush.bf16.msra.mxu0 %v9323
    %11184 = vmatpush.bf16.msra.mxu0 %v9315
    %11185 = vmatpush.bf16.msra.mxu0 %v9307
    %11186 = vmatpush.bf16.msra.mxu0 %v9299
    %11187 = vmatpush.bf16.msra.mxu0 %v9291
    %11188 = vmatpush.bf16.msra.mxu0 %v9283
    %11189 = vmatmul.bf16.gmra.mxu0 %v5735
    %v11190 = vpop.f32.mrf.mxu0
    %v11191 = vadd.f32 %v11178, %v11190
    %v11192 = vpop.f32.mrf.mxu0
    %11193 = vdwg.mxu0
    %11194 = vmatpush.bf16.msra.mxu0 %v9403
    %11195 = vmatpush.bf16.msra.mxu0 %v9395
    %11196 = vmatpush.bf16.msra.mxu0 %v9387
    %11197 = vmatpush.bf16.msra.mxu0 %v9379
    %11198 = vmatpush.bf16.msra.mxu0 %v9371
    %11199 = vmatpush.bf16.msra.mxu0 %v9363
    %11200 = vmatpush.bf16.msra.mxu0 %v9355
    %11201 = vmatpush.bf16.msra.mxu0 %v9347
    %11202 = vmatmul.bf16.gmra.mxu0 %v5736
    %v11203 = vpop.f32.mrf.mxu0
    %v11204 = vadd.f32 %v11191, %v11203
    %v11205 = vpop.f32.mrf.mxu0
    %11206 = vdwg.mxu0
    %11207 = vmatpush.bf16.msra.mxu0 %v9467
    %11208 = vmatpush.bf16.msra.mxu0 %v9459
    %11209 = vmatpush.bf16.msra.mxu0 %v9451
    %11210 = vmatpush.bf16.msra.mxu0 %v9443
    %11211 = vmatpush.bf16.msra.mxu0 %v9435
    %11212 = vmatpush.bf16.msra.mxu0 %v9427
    %11213 = vmatpush.bf16.msra.mxu0 %v9419
    %11214 = vmatpush.bf16.msra.mxu0 %v9411
    %11215 = vmatmul.bf16.gmra.mxu0 %v5737
    %v11216 = vpop.f32.mrf.mxu0
    %v11217 = vadd.f32 %v11204, %v11216
    %v11218 = vpop.f32.mrf.mxu0
    %11219 = vdwg.mxu0
    %11220 = vmatpush.bf16.msra.mxu0 %v9531
    %11221 = vmatpush.bf16.msra.mxu0 %v9523
    %11222 = vmatpush.bf16.msra.mxu0 %v9515
    %11223 = vmatpush.bf16.msra.mxu0 %v9507
    %11224 = vmatpush.bf16.msra.mxu0 %v9499
    %11225 = vmatpush.bf16.msra.mxu0 %v9491
    %11226 = vmatpush.bf16.msra.mxu0 %v9483
    %11227 = vmatpush.bf16.msra.mxu0 %v9475
    %11228 = vmatmul.bf16.gmra.mxu0 %v5738
    %v11229 = vpop.f32.mrf.mxu0
    %v11230 = vadd.f32 %v11217, %v11229
    %v11231 = vpop.f32.mrf.mxu0
    %11232 = vdwg.mxu0
    %11233 = vmatpush.bf16.msra.mxu0 %v9595
    %11234 = vmatpush.bf16.msra.mxu0 %v9587
    %11235 = vmatpush.bf16.msra.mxu0 %v9579
    %11236 = vmatpush.bf16.msra.mxu0 %v9571
    %11237 = vmatpush.bf16.msra.mxu0 %v9563
    %11238 = vmatpush.bf16.msra.mxu0 %v9555
    %11239 = vmatpush.bf16.msra.mxu0 %v9547
    %11240 = vmatpush.bf16.msra.mxu0 %v9539
    %11241 = vmatmul.bf16.gmra.mxu0 %v5739
    %v11242 = vpop.f32.mrf.mxu0
    %v11243 = vadd.f32 %v11230, %v11242
    %v11244 = vpop.f32.mrf.mxu0
    %11245 = vdwg.mxu0
    %11246 = vmatpush.bf16.msra.mxu0 %v9659
    %11247 = vmatpush.bf16.msra.mxu0 %v9651
    %11248 = vmatpush.bf16.msra.mxu0 %v9643
    %11249 = vmatpush.bf16.msra.mxu0 %v9635
    %11250 = vmatpush.bf16.msra.mxu0 %v9627
    %11251 = vmatpush.bf16.msra.mxu0 %v9619
    %11252 = vmatpush.bf16.msra.mxu0 %v9611
    %11253 = vmatpush.bf16.msra.mxu0 %v9603
    %11254 = vmatmul.bf16.gmra.mxu0 %v5740
    %v11255 = vpop.f32.mrf.mxu0
    %v11256 = vadd.f32 %v11243, %v11255
    %v11257 = vpop.f32.mrf.mxu0
    %11258 = vdwg.mxu0
    %11259 = vmatpush.bf16.msra.mxu0 %v9723
    %11260 = vmatpush.bf16.msra.mxu0 %v9715
    %11261 = vmatpush.bf16.msra.mxu0 %v9707
    %11262 = vmatpush.bf16.msra.mxu0 %v9699
    %11263 = vmatpush.bf16.msra.mxu0 %v9691
    %11264 = vmatpush.bf16.msra.mxu0 %v9683
    %11265 = vmatpush.bf16.msra.mxu0 %v9675
    %11266 = vmatpush.bf16.msra.mxu0 %v9667
    %11267 = vmatmul.bf16.gmra.mxu0 %v5741
    %v11268 = vpop.f32.mrf.mxu0
    %v11269 = vadd.f32 %v11256, %v11268
    %v11270 = vpop.f32.mrf.mxu0
    %11271 = vdwg.mxu0
    %11272 = vmatpush.bf16.msra.mxu0 %v9787
    %11273 = vmatpush.bf16.msra.mxu0 %v9779
    %11274 = vmatpush.bf16.msra.mxu0 %v9771
    %11275 = vmatpush.bf16.msra.mxu0 %v9763
    %11276 = vmatpush.bf16.msra.mxu0 %v9755
    %11277 = vmatpush.bf16.msra.mxu0 %v9747
    %11278 = vmatpush.bf16.msra.mxu0 %v9739
    %11279 = vmatpush.bf16.msra.mxu0 %v9731
    %11280 = vmatmul.bf16.gmra.mxu0 %v5742
    %v11281 = vpop.f32.mrf.mxu0
    %v11282 = vadd.f32 %v11269, %v11281
    %v11283 = vpop.f32.mrf.mxu0
    %11284 = vdwg.mxu0
    %11285 = vmatpush.bf16.msra.mxu0 %v9851
    %11286 = vmatpush.bf16.msra.mxu0 %v9843
    %11287 = vmatpush.bf16.msra.mxu0 %v9835
    %11288 = vmatpush.bf16.msra.mxu0 %v9827
    %11289 = vmatpush.bf16.msra.mxu0 %v9819
    %11290 = vmatpush.bf16.msra.mxu0 %v9811
    %11291 = vmatpush.bf16.msra.mxu0 %v9803
    %11292 = vmatpush.bf16.msra.mxu0 %v9795
    %11293 = vmatmul.bf16.gmra.mxu0 %v5743
    %v11294 = vpop.f32.mrf.mxu0
    %v11295 = vadd.f32 %v11282, %v11294
    %v11296 = vpop.f32.mrf.mxu0
    %11297 = vdwg.mxu0
    %11298 = vmatpush.bf16.msra.mxu0 %v8892
    %11299 = vmatpush.bf16.msra.mxu0 %v8884
    %11300 = vmatpush.bf16.msra.mxu0 %v8876
    %11301 = vmatpush.bf16.msra.mxu0 %v8868
    %11302 = vmatpush.bf16.msra.mxu0 %v8860
    %11303 = vmatpush.bf16.msra.mxu0 %v8852
    %11304 = vmatpush.bf16.msra.mxu0 %v8844
    %11305 = vmatpush.bf16.msra.mxu0 %v8836
    %11306 = vmatmul.bf16.gmra.mxu0 %v5728
    %v11307 = vpop.f32.mrf.mxu0
    %v11308 = vadd.f32 %v5748, %v11307
    %v11309 = vpop.f32.mrf.mxu0
    %11310 = vdwg.mxu0
    %11311 = vmatpush.bf16.msra.mxu0 %v8956
    %11312 = vmatpush.bf16.msra.mxu0 %v8948
    %11313 = vmatpush.bf16.msra.mxu0 %v8940
    %11314 = vmatpush.bf16.msra.mxu0 %v8932
    %11315 = vmatpush.bf16.msra.mxu0 %v8924
    %11316 = vmatpush.bf16.msra.mxu0 %v8916
    %11317 = vmatpush.bf16.msra.mxu0 %v8908
    %11318 = vmatpush.bf16.msra.mxu0 %v8900
    %11319 = vmatmul.bf16.gmra.mxu0 %v5729
    %v11320 = vpop.f32.mrf.mxu0
    %v11321 = vadd.f32 %v11308, %v11320
    %v11322 = vpop.f32.mrf.mxu0
    %11323 = vdwg.mxu0
    %11324 = vmatpush.bf16.msra.mxu0 %v9020
    %11325 = vmatpush.bf16.msra.mxu0 %v9012
    %11326 = vmatpush.bf16.msra.mxu0 %v9004
    %11327 = vmatpush.bf16.msra.mxu0 %v8996
    %11328 = vmatpush.bf16.msra.mxu0 %v8988
    %11329 = vmatpush.bf16.msra.mxu0 %v8980
    %11330 = vmatpush.bf16.msra.mxu0 %v8972
    %11331 = vmatpush.bf16.msra.mxu0 %v8964
    %11332 = vmatmul.bf16.gmra.mxu0 %v5730
    %v11333 = vpop.f32.mrf.mxu0
    %v11334 = vadd.f32 %v11321, %v11333
    %v11335 = vpop.f32.mrf.mxu0
    %11336 = vdwg.mxu0
    %11337 = vmatpush.bf16.msra.mxu0 %v9084
    %11338 = vmatpush.bf16.msra.mxu0 %v9076
    %11339 = vmatpush.bf16.msra.mxu0 %v9068
    %11340 = vmatpush.bf16.msra.mxu0 %v9060
    %11341 = vmatpush.bf16.msra.mxu0 %v9052
    %11342 = vmatpush.bf16.msra.mxu0 %v9044
    %11343 = vmatpush.bf16.msra.mxu0 %v9036
    %11344 = vmatpush.bf16.msra.mxu0 %v9028
    %11345 = vmatmul.bf16.gmra.mxu0 %v5731
    %v11346 = vpop.f32.mrf.mxu0
    %v11347 = vadd.f32 %v11334, %v11346
    %v11348 = vpop.f32.mrf.mxu0
    %11349 = vdwg.mxu0
    %11350 = vmatpush.bf16.msra.mxu0 %v9148
    %11351 = vmatpush.bf16.msra.mxu0 %v9140
    %11352 = vmatpush.bf16.msra.mxu0 %v9132
    %11353 = vmatpush.bf16.msra.mxu0 %v9124
    %11354 = vmatpush.bf16.msra.mxu0 %v9116
    %11355 = vmatpush.bf16.msra.mxu0 %v9108
    %11356 = vmatpush.bf16.msra.mxu0 %v9100
    %11357 = vmatpush.bf16.msra.mxu0 %v9092
    %11358 = vmatmul.bf16.gmra.mxu0 %v5732
    %v11359 = vpop.f32.mrf.mxu0
    %v11360 = vadd.f32 %v11347, %v11359
    %v11361 = vpop.f32.mrf.mxu0
    %11362 = vdwg.mxu0
    %11363 = vmatpush.bf16.msra.mxu0 %v9212
    %11364 = vmatpush.bf16.msra.mxu0 %v9204
    %11365 = vmatpush.bf16.msra.mxu0 %v9196
    %11366 = vmatpush.bf16.msra.mxu0 %v9188
    %11367 = vmatpush.bf16.msra.mxu0 %v9180
    %11368 = vmatpush.bf16.msra.mxu0 %v9172
    %11369 = vmatpush.bf16.msra.mxu0 %v9164
    %11370 = vmatpush.bf16.msra.mxu0 %v9156
    %11371 = vmatmul.bf16.gmra.mxu0 %v5733
    %v11372 = vpop.f32.mrf.mxu0
    %v11373 = vadd.f32 %v11360, %v11372
    %v11374 = vpop.f32.mrf.mxu0
    %11375 = vdwg.mxu0
    %11376 = vmatpush.bf16.msra.mxu0 %v9276
    %11377 = vmatpush.bf16.msra.mxu0 %v9268
    %11378 = vmatpush.bf16.msra.mxu0 %v9260
    %11379 = vmatpush.bf16.msra.mxu0 %v9252
    %11380 = vmatpush.bf16.msra.mxu0 %v9244
    %11381 = vmatpush.bf16.msra.mxu0 %v9236
    %11382 = vmatpush.bf16.msra.mxu0 %v9228
    %11383 = vmatpush.bf16.msra.mxu0 %v9220
    %11384 = vmatmul.bf16.gmra.mxu0 %v5734
    %v11385 = vpop.f32.mrf.mxu0
    %v11386 = vadd.f32 %v11373, %v11385
    %v11387 = vpop.f32.mrf.mxu0
    %11388 = vdwg.mxu0
    %11389 = vmatpush.bf16.msra.mxu0 %v9340
    %11390 = vmatpush.bf16.msra.mxu0 %v9332
    %11391 = vmatpush.bf16.msra.mxu0 %v9324
    %11392 = vmatpush.bf16.msra.mxu0 %v9316
    %11393 = vmatpush.bf16.msra.mxu0 %v9308
    %11394 = vmatpush.bf16.msra.mxu0 %v9300
    %11395 = vmatpush.bf16.msra.mxu0 %v9292
    %11396 = vmatpush.bf16.msra.mxu0 %v9284
    %11397 = vmatmul.bf16.gmra.mxu0 %v5735
    %v11398 = vpop.f32.mrf.mxu0
    %v11399 = vadd.f32 %v11386, %v11398
    %v11400 = vpop.f32.mrf.mxu0
    %11401 = vdwg.mxu0
    %11402 = vmatpush.bf16.msra.mxu0 %v9404
    %11403 = vmatpush.bf16.msra.mxu0 %v9396
    %11404 = vmatpush.bf16.msra.mxu0 %v9388
    %11405 = vmatpush.bf16.msra.mxu0 %v9380
    %11406 = vmatpush.bf16.msra.mxu0 %v9372
    %11407 = vmatpush.bf16.msra.mxu0 %v9364
    %11408 = vmatpush.bf16.msra.mxu0 %v9356
    %11409 = vmatpush.bf16.msra.mxu0 %v9348
    %11410 = vmatmul.bf16.gmra.mxu0 %v5736
    %v11411 = vpop.f32.mrf.mxu0
    %v11412 = vadd.f32 %v11399, %v11411
    %v11413 = vpop.f32.mrf.mxu0
    %11414 = vdwg.mxu0
    %11415 = vmatpush.bf16.msra.mxu0 %v9468
    %11416 = vmatpush.bf16.msra.mxu0 %v9460
    %11417 = vmatpush.bf16.msra.mxu0 %v9452
    %11418 = vmatpush.bf16.msra.mxu0 %v9444
    %11419 = vmatpush.bf16.msra.mxu0 %v9436
    %11420 = vmatpush.bf16.msra.mxu0 %v9428
    %11421 = vmatpush.bf16.msra.mxu0 %v9420
    %11422 = vmatpush.bf16.msra.mxu0 %v9412
    %11423 = vmatmul.bf16.gmra.mxu0 %v5737
    %v11424 = vpop.f32.mrf.mxu0
    %v11425 = vadd.f32 %v11412, %v11424
    %v11426 = vpop.f32.mrf.mxu0
    %11427 = vdwg.mxu0
    %11428 = vmatpush.bf16.msra.mxu0 %v9532
    %11429 = vmatpush.bf16.msra.mxu0 %v9524
    %11430 = vmatpush.bf16.msra.mxu0 %v9516
    %11431 = vmatpush.bf16.msra.mxu0 %v9508
    %11432 = vmatpush.bf16.msra.mxu0 %v9500
    %11433 = vmatpush.bf16.msra.mxu0 %v9492
    %11434 = vmatpush.bf16.msra.mxu0 %v9484
    %11435 = vmatpush.bf16.msra.mxu0 %v9476
    %11436 = vmatmul.bf16.gmra.mxu0 %v5738
    %v11437 = vpop.f32.mrf.mxu0
    %v11438 = vadd.f32 %v11425, %v11437
    %v11439 = vpop.f32.mrf.mxu0
    %11440 = vdwg.mxu0
    %11441 = vmatpush.bf16.msra.mxu0 %v9596
    %11442 = vmatpush.bf16.msra.mxu0 %v9588
    %11443 = vmatpush.bf16.msra.mxu0 %v9580
    %11444 = vmatpush.bf16.msra.mxu0 %v9572
    %11445 = vmatpush.bf16.msra.mxu0 %v9564
    %11446 = vmatpush.bf16.msra.mxu0 %v9556
    %11447 = vmatpush.bf16.msra.mxu0 %v9548
    %11448 = vmatpush.bf16.msra.mxu0 %v9540
    %11449 = vmatmul.bf16.gmra.mxu0 %v5739
    %v11450 = vpop.f32.mrf.mxu0
    %v11451 = vadd.f32 %v11438, %v11450
    %v11452 = vpop.f32.mrf.mxu0
    %11453 = vdwg.mxu0
    %11454 = vmatpush.bf16.msra.mxu0 %v9660
    %11455 = vmatpush.bf16.msra.mxu0 %v9652
    %11456 = vmatpush.bf16.msra.mxu0 %v9644
    %11457 = vmatpush.bf16.msra.mxu0 %v9636
    %11458 = vmatpush.bf16.msra.mxu0 %v9628
    %11459 = vmatpush.bf16.msra.mxu0 %v9620
    %11460 = vmatpush.bf16.msra.mxu0 %v9612
    %11461 = vmatpush.bf16.msra.mxu0 %v9604
    %11462 = vmatmul.bf16.gmra.mxu0 %v5740
    %v11463 = vpop.f32.mrf.mxu0
    %v11464 = vadd.f32 %v11451, %v11463
    %v11465 = vpop.f32.mrf.mxu0
    %11466 = vdwg.mxu0
    %11467 = vmatpush.bf16.msra.mxu0 %v9724
    %11468 = vmatpush.bf16.msra.mxu0 %v9716
    %11469 = vmatpush.bf16.msra.mxu0 %v9708
    %11470 = vmatpush.bf16.msra.mxu0 %v9700
    %11471 = vmatpush.bf16.msra.mxu0 %v9692
    %11472 = vmatpush.bf16.msra.mxu0 %v9684
    %11473 = vmatpush.bf16.msra.mxu0 %v9676
    %11474 = vmatpush.bf16.msra.mxu0 %v9668
    %11475 = vmatmul.bf16.gmra.mxu0 %v5741
    %v11476 = vpop.f32.mrf.mxu0
    %v11477 = vadd.f32 %v11464, %v11476
    %v11478 = vpop.f32.mrf.mxu0
    %11479 = vdwg.mxu0
    %11480 = vmatpush.bf16.msra.mxu0 %v9788
    %11481 = vmatpush.bf16.msra.mxu0 %v9780
    %11482 = vmatpush.bf16.msra.mxu0 %v9772
    %11483 = vmatpush.bf16.msra.mxu0 %v9764
    %11484 = vmatpush.bf16.msra.mxu0 %v9756
    %11485 = vmatpush.bf16.msra.mxu0 %v9748
    %11486 = vmatpush.bf16.msra.mxu0 %v9740
    %11487 = vmatpush.bf16.msra.mxu0 %v9732
    %11488 = vmatmul.bf16.gmra.mxu0 %v5742
    %v11489 = vpop.f32.mrf.mxu0
    %v11490 = vadd.f32 %v11477, %v11489
    %v11491 = vpop.f32.mrf.mxu0
    %11492 = vdwg.mxu0
    %11493 = vmatpush.bf16.msra.mxu0 %v9852
    %11494 = vmatpush.bf16.msra.mxu0 %v9844
    %11495 = vmatpush.bf16.msra.mxu0 %v9836
    %11496 = vmatpush.bf16.msra.mxu0 %v9828
    %11497 = vmatpush.bf16.msra.mxu0 %v9820
    %11498 = vmatpush.bf16.msra.mxu0 %v9812
    %11499 = vmatpush.bf16.msra.mxu0 %v9804
    %11500 = vmatpush.bf16.msra.mxu0 %v9796
    %11501 = vmatmul.bf16.gmra.mxu0 %v5743
    %v11502 = vpop.f32.mrf.mxu0
    %v11503 = vadd.f32 %v11490, %v11502
    %v11504 = vpop.f32.mrf.mxu0
    %11505 = vdwg.mxu0
    %11506 = vmatpush.bf16.msra.mxu0 %v8893
    %11507 = vmatpush.bf16.msra.mxu0 %v8885
    %11508 = vmatpush.bf16.msra.mxu0 %v8877
    %11509 = vmatpush.bf16.msra.mxu0 %v8869
    %11510 = vmatpush.bf16.msra.mxu0 %v8861
    %11511 = vmatpush.bf16.msra.mxu0 %v8853
    %11512 = vmatpush.bf16.msra.mxu0 %v8845
    %11513 = vmatpush.bf16.msra.mxu0 %v8837
    %11514 = vmatmul.bf16.gmra.mxu0 %v5728
    %v11515 = vpop.f32.mrf.mxu0
    %v11516 = vadd.f32 %v5749, %v11515
    %v11517 = vpop.f32.mrf.mxu0
    %11518 = vdwg.mxu0
    %11519 = vmatpush.bf16.msra.mxu0 %v8957
    %11520 = vmatpush.bf16.msra.mxu0 %v8949
    %11521 = vmatpush.bf16.msra.mxu0 %v8941
    %11522 = vmatpush.bf16.msra.mxu0 %v8933
    %11523 = vmatpush.bf16.msra.mxu0 %v8925
    %11524 = vmatpush.bf16.msra.mxu0 %v8917
    %11525 = vmatpush.bf16.msra.mxu0 %v8909
    %11526 = vmatpush.bf16.msra.mxu0 %v8901
    %11527 = vmatmul.bf16.gmra.mxu0 %v5729
    %v11528 = vpop.f32.mrf.mxu0
    %v11529 = vadd.f32 %v11516, %v11528
    %v11530 = vpop.f32.mrf.mxu0
    %11531 = vdwg.mxu0
    %11532 = vmatpush.bf16.msra.mxu0 %v9021
    %11533 = vmatpush.bf16.msra.mxu0 %v9013
    %11534 = vmatpush.bf16.msra.mxu0 %v9005
    %11535 = vmatpush.bf16.msra.mxu0 %v8997
    %11536 = vmatpush.bf16.msra.mxu0 %v8989
    %11537 = vmatpush.bf16.msra.mxu0 %v8981
    %11538 = vmatpush.bf16.msra.mxu0 %v8973
    %11539 = vmatpush.bf16.msra.mxu0 %v8965
    %11540 = vmatmul.bf16.gmra.mxu0 %v5730
    %v11541 = vpop.f32.mrf.mxu0
    %v11542 = vadd.f32 %v11529, %v11541
    %v11543 = vpop.f32.mrf.mxu0
    %11544 = vdwg.mxu0
    %11545 = vmatpush.bf16.msra.mxu0 %v9085
    %11546 = vmatpush.bf16.msra.mxu0 %v9077
    %11547 = vmatpush.bf16.msra.mxu0 %v9069
    %11548 = vmatpush.bf16.msra.mxu0 %v9061
    %11549 = vmatpush.bf16.msra.mxu0 %v9053
    %11550 = vmatpush.bf16.msra.mxu0 %v9045
    %11551 = vmatpush.bf16.msra.mxu0 %v9037
    %11552 = vmatpush.bf16.msra.mxu0 %v9029
    %11553 = vmatmul.bf16.gmra.mxu0 %v5731
    %v11554 = vpop.f32.mrf.mxu0
    %v11555 = vadd.f32 %v11542, %v11554
    %v11556 = vpop.f32.mrf.mxu0
    %11557 = vdwg.mxu0
    %11558 = vmatpush.bf16.msra.mxu0 %v9149
    %11559 = vmatpush.bf16.msra.mxu0 %v9141
    %11560 = vmatpush.bf16.msra.mxu0 %v9133
    %11561 = vmatpush.bf16.msra.mxu0 %v9125
    %11562 = vmatpush.bf16.msra.mxu0 %v9117
    %11563 = vmatpush.bf16.msra.mxu0 %v9109
    %11564 = vmatpush.bf16.msra.mxu0 %v9101
    %11565 = vmatpush.bf16.msra.mxu0 %v9093
    %11566 = vmatmul.bf16.gmra.mxu0 %v5732
    %v11567 = vpop.f32.mrf.mxu0
    %v11568 = vadd.f32 %v11555, %v11567
    %v11569 = vpop.f32.mrf.mxu0
    %11570 = vdwg.mxu0
    %11571 = vmatpush.bf16.msra.mxu0 %v9213
    %11572 = vmatpush.bf16.msra.mxu0 %v9205
    %11573 = vmatpush.bf16.msra.mxu0 %v9197
    %11574 = vmatpush.bf16.msra.mxu0 %v9189
    %11575 = vmatpush.bf16.msra.mxu0 %v9181
    %11576 = vmatpush.bf16.msra.mxu0 %v9173
    %11577 = vmatpush.bf16.msra.mxu0 %v9165
    %11578 = vmatpush.bf16.msra.mxu0 %v9157
    %11579 = vmatmul.bf16.gmra.mxu0 %v5733
    %v11580 = vpop.f32.mrf.mxu0
    %v11581 = vadd.f32 %v11568, %v11580
    %v11582 = vpop.f32.mrf.mxu0
    %11583 = vdwg.mxu0
    %11584 = vmatpush.bf16.msra.mxu0 %v9277
    %11585 = vmatpush.bf16.msra.mxu0 %v9269
    %11586 = vmatpush.bf16.msra.mxu0 %v9261
    %11587 = vmatpush.bf16.msra.mxu0 %v9253
    %11588 = vmatpush.bf16.msra.mxu0 %v9245
    %11589 = vmatpush.bf16.msra.mxu0 %v9237
    %11590 = vmatpush.bf16.msra.mxu0 %v9229
    %11591 = vmatpush.bf16.msra.mxu0 %v9221
    %11592 = vmatmul.bf16.gmra.mxu0 %v5734
    %v11593 = vpop.f32.mrf.mxu0
    %v11594 = vadd.f32 %v11581, %v11593
    %v11595 = vpop.f32.mrf.mxu0
    %11596 = vdwg.mxu0
    %11597 = vmatpush.bf16.msra.mxu0 %v9341
    %11598 = vmatpush.bf16.msra.mxu0 %v9333
    %11599 = vmatpush.bf16.msra.mxu0 %v9325
    %11600 = vmatpush.bf16.msra.mxu0 %v9317
    %11601 = vmatpush.bf16.msra.mxu0 %v9309
    %11602 = vmatpush.bf16.msra.mxu0 %v9301
    %11603 = vmatpush.bf16.msra.mxu0 %v9293
    %11604 = vmatpush.bf16.msra.mxu0 %v9285
    %11605 = vmatmul.bf16.gmra.mxu0 %v5735
    %v11606 = vpop.f32.mrf.mxu0
    %v11607 = vadd.f32 %v11594, %v11606
    %v11608 = vpop.f32.mrf.mxu0
    %11609 = vdwg.mxu0
    %11610 = vmatpush.bf16.msra.mxu0 %v9405
    %11611 = vmatpush.bf16.msra.mxu0 %v9397
    %11612 = vmatpush.bf16.msra.mxu0 %v9389
    %11613 = vmatpush.bf16.msra.mxu0 %v9381
    %11614 = vmatpush.bf16.msra.mxu0 %v9373
    %11615 = vmatpush.bf16.msra.mxu0 %v9365
    %11616 = vmatpush.bf16.msra.mxu0 %v9357
    %11617 = vmatpush.bf16.msra.mxu0 %v9349
    %11618 = vmatmul.bf16.gmra.mxu0 %v5736
    %v11619 = vpop.f32.mrf.mxu0
    %v11620 = vadd.f32 %v11607, %v11619
    %v11621 = vpop.f32.mrf.mxu0
    %11622 = vdwg.mxu0
    %11623 = vmatpush.bf16.msra.mxu0 %v9469
    %11624 = vmatpush.bf16.msra.mxu0 %v9461
    %11625 = vmatpush.bf16.msra.mxu0 %v9453
    %11626 = vmatpush.bf16.msra.mxu0 %v9445
    %11627 = vmatpush.bf16.msra.mxu0 %v9437
    %11628 = vmatpush.bf16.msra.mxu0 %v9429
    %11629 = vmatpush.bf16.msra.mxu0 %v9421
    %11630 = vmatpush.bf16.msra.mxu0 %v9413
    %11631 = vmatmul.bf16.gmra.mxu0 %v5737
    %v11632 = vpop.f32.mrf.mxu0
    %v11633 = vadd.f32 %v11620, %v11632
    %v11634 = vpop.f32.mrf.mxu0
    %11635 = vdwg.mxu0
    %11636 = vmatpush.bf16.msra.mxu0 %v9533
    %11637 = vmatpush.bf16.msra.mxu0 %v9525
    %11638 = vmatpush.bf16.msra.mxu0 %v9517
    %11639 = vmatpush.bf16.msra.mxu0 %v9509
    %11640 = vmatpush.bf16.msra.mxu0 %v9501
    %11641 = vmatpush.bf16.msra.mxu0 %v9493
    %11642 = vmatpush.bf16.msra.mxu0 %v9485
    %11643 = vmatpush.bf16.msra.mxu0 %v9477
    %11644 = vmatmul.bf16.gmra.mxu0 %v5738
    %v11645 = vpop.f32.mrf.mxu0
    %v11646 = vadd.f32 %v11633, %v11645
    %v11647 = vpop.f32.mrf.mxu0
    %11648 = vdwg.mxu0
    %11649 = vmatpush.bf16.msra.mxu0 %v9597
    %11650 = vmatpush.bf16.msra.mxu0 %v9589
    %11651 = vmatpush.bf16.msra.mxu0 %v9581
    %11652 = vmatpush.bf16.msra.mxu0 %v9573
    %11653 = vmatpush.bf16.msra.mxu0 %v9565
    %11654 = vmatpush.bf16.msra.mxu0 %v9557
    %11655 = vmatpush.bf16.msra.mxu0 %v9549
    %11656 = vmatpush.bf16.msra.mxu0 %v9541
    %11657 = vmatmul.bf16.gmra.mxu0 %v5739
    %v11658 = vpop.f32.mrf.mxu0
    %v11659 = vadd.f32 %v11646, %v11658
    %v11660 = vpop.f32.mrf.mxu0
    %11661 = vdwg.mxu0
    %11662 = vmatpush.bf16.msra.mxu0 %v9661
    %11663 = vmatpush.bf16.msra.mxu0 %v9653
    %11664 = vmatpush.bf16.msra.mxu0 %v9645
    %11665 = vmatpush.bf16.msra.mxu0 %v9637
    %11666 = vmatpush.bf16.msra.mxu0 %v9629
    %11667 = vmatpush.bf16.msra.mxu0 %v9621
    %11668 = vmatpush.bf16.msra.mxu0 %v9613
    %11669 = vmatpush.bf16.msra.mxu0 %v9605
    %11670 = vmatmul.bf16.gmra.mxu0 %v5740
    %v11671 = vpop.f32.mrf.mxu0
    %v11672 = vadd.f32 %v11659, %v11671
    %v11673 = vpop.f32.mrf.mxu0
    %11674 = vdwg.mxu0
    %11675 = vmatpush.bf16.msra.mxu0 %v9725
    %11676 = vmatpush.bf16.msra.mxu0 %v9717
    %11677 = vmatpush.bf16.msra.mxu0 %v9709
    %11678 = vmatpush.bf16.msra.mxu0 %v9701
    %11679 = vmatpush.bf16.msra.mxu0 %v9693
    %11680 = vmatpush.bf16.msra.mxu0 %v9685
    %11681 = vmatpush.bf16.msra.mxu0 %v9677
    %11682 = vmatpush.bf16.msra.mxu0 %v9669
    %11683 = vmatmul.bf16.gmra.mxu0 %v5741
    %v11684 = vpop.f32.mrf.mxu0
    %v11685 = vadd.f32 %v11672, %v11684
    %v11686 = vpop.f32.mrf.mxu0
    %11687 = vdwg.mxu0
    %11688 = vmatpush.bf16.msra.mxu0 %v9789
    %11689 = vmatpush.bf16.msra.mxu0 %v9781
    %11690 = vmatpush.bf16.msra.mxu0 %v9773
    %11691 = vmatpush.bf16.msra.mxu0 %v9765
    %11692 = vmatpush.bf16.msra.mxu0 %v9757
    %11693 = vmatpush.bf16.msra.mxu0 %v9749
    %11694 = vmatpush.bf16.msra.mxu0 %v9741
    %11695 = vmatpush.bf16.msra.mxu0 %v9733
    %11696 = vmatmul.bf16.gmra.mxu0 %v5742
    %v11697 = vpop.f32.mrf.mxu0
    %v11698 = vadd.f32 %v11685, %v11697
    %v11699 = vpop.f32.mrf.mxu0
    %11700 = vdwg.mxu0
    %11701 = vmatpush.bf16.msra.mxu0 %v9853
    %11702 = vmatpush.bf16.msra.mxu0 %v9845
    %11703 = vmatpush.bf16.msra.mxu0 %v9837
    %11704 = vmatpush.bf16.msra.mxu0 %v9829
    %11705 = vmatpush.bf16.msra.mxu0 %v9821
    %11706 = vmatpush.bf16.msra.mxu0 %v9813
    %11707 = vmatpush.bf16.msra.mxu0 %v9805
    %11708 = vmatpush.bf16.msra.mxu0 %v9797
    %11709 = vmatmul.bf16.gmra.mxu0 %v5743
    %v11710 = vpop.f32.mrf.mxu0
    %v11711 = vadd.f32 %v11698, %v11710
    %v11712 = vpop.f32.mrf.mxu0
    %11713 = vdwg.mxu0
    %11714 = vmatpush.bf16.msra.mxu0 %v8894
    %11715 = vmatpush.bf16.msra.mxu0 %v8886
    %11716 = vmatpush.bf16.msra.mxu0 %v8878
    %11717 = vmatpush.bf16.msra.mxu0 %v8870
    %11718 = vmatpush.bf16.msra.mxu0 %v8862
    %11719 = vmatpush.bf16.msra.mxu0 %v8854
    %11720 = vmatpush.bf16.msra.mxu0 %v8846
    %11721 = vmatpush.bf16.msra.mxu0 %v8838
    %11722 = vmatmul.bf16.gmra.mxu0 %v5728
    %v11723 = vpop.f32.mrf.mxu0
    %v11724 = vadd.f32 %v5750, %v11723
    %v11725 = vpop.f32.mrf.mxu0
    %11726 = vdwg.mxu0
    %11727 = vmatpush.bf16.msra.mxu0 %v8958
    %11728 = vmatpush.bf16.msra.mxu0 %v8950
    %11729 = vmatpush.bf16.msra.mxu0 %v8942
    %11730 = vmatpush.bf16.msra.mxu0 %v8934
    %11731 = vmatpush.bf16.msra.mxu0 %v8926
    %11732 = vmatpush.bf16.msra.mxu0 %v8918
    %11733 = vmatpush.bf16.msra.mxu0 %v8910
    %11734 = vmatpush.bf16.msra.mxu0 %v8902
    %11735 = vmatmul.bf16.gmra.mxu0 %v5729
    %v11736 = vpop.f32.mrf.mxu0
    %v11737 = vadd.f32 %v11724, %v11736
    %v11738 = vpop.f32.mrf.mxu0
    %11739 = vdwg.mxu0
    %11740 = vmatpush.bf16.msra.mxu0 %v9022
    %11741 = vmatpush.bf16.msra.mxu0 %v9014
    %11742 = vmatpush.bf16.msra.mxu0 %v9006
    %11743 = vmatpush.bf16.msra.mxu0 %v8998
    %11744 = vmatpush.bf16.msra.mxu0 %v8990
    %11745 = vmatpush.bf16.msra.mxu0 %v8982
    %11746 = vmatpush.bf16.msra.mxu0 %v8974
    %11747 = vmatpush.bf16.msra.mxu0 %v8966
    %11748 = vmatmul.bf16.gmra.mxu0 %v5730
    %v11749 = vpop.f32.mrf.mxu0
    %v11750 = vadd.f32 %v11737, %v11749
    %v11751 = vpop.f32.mrf.mxu0
    %11752 = vdwg.mxu0
    %11753 = vmatpush.bf16.msra.mxu0 %v9086
    %11754 = vmatpush.bf16.msra.mxu0 %v9078
    %11755 = vmatpush.bf16.msra.mxu0 %v9070
    %11756 = vmatpush.bf16.msra.mxu0 %v9062
    %11757 = vmatpush.bf16.msra.mxu0 %v9054
    %11758 = vmatpush.bf16.msra.mxu0 %v9046
    %11759 = vmatpush.bf16.msra.mxu0 %v9038
    %11760 = vmatpush.bf16.msra.mxu0 %v9030
    %11761 = vmatmul.bf16.gmra.mxu0 %v5731
    %v11762 = vpop.f32.mrf.mxu0
    %v11763 = vadd.f32 %v11750, %v11762
    %v11764 = vpop.f32.mrf.mxu0
    %11765 = vdwg.mxu0
    %11766 = vmatpush.bf16.msra.mxu0 %v9150
    %11767 = vmatpush.bf16.msra.mxu0 %v9142
    %11768 = vmatpush.bf16.msra.mxu0 %v9134
    %11769 = vmatpush.bf16.msra.mxu0 %v9126
    %11770 = vmatpush.bf16.msra.mxu0 %v9118
    %11771 = vmatpush.bf16.msra.mxu0 %v9110
    %11772 = vmatpush.bf16.msra.mxu0 %v9102
    %11773 = vmatpush.bf16.msra.mxu0 %v9094
    %11774 = vmatmul.bf16.gmra.mxu0 %v5732
    %v11775 = vpop.f32.mrf.mxu0
    %v11776 = vadd.f32 %v11763, %v11775
    %v11777 = vpop.f32.mrf.mxu0
    %11778 = vdwg.mxu0
    %11779 = vmatpush.bf16.msra.mxu0 %v9214
    %11780 = vmatpush.bf16.msra.mxu0 %v9206
    %11781 = vmatpush.bf16.msra.mxu0 %v9198
    %11782 = vmatpush.bf16.msra.mxu0 %v9190
    %11783 = vmatpush.bf16.msra.mxu0 %v9182
    %11784 = vmatpush.bf16.msra.mxu0 %v9174
    %11785 = vmatpush.bf16.msra.mxu0 %v9166
    %11786 = vmatpush.bf16.msra.mxu0 %v9158
    %11787 = vmatmul.bf16.gmra.mxu0 %v5733
    %v11788 = vpop.f32.mrf.mxu0
    %v11789 = vadd.f32 %v11776, %v11788
    %v11790 = vpop.f32.mrf.mxu0
    %11791 = vdwg.mxu0
    %11792 = vmatpush.bf16.msra.mxu0 %v9278
    %11793 = vmatpush.bf16.msra.mxu0 %v9270
    %11794 = vmatpush.bf16.msra.mxu0 %v9262
    %11795 = vmatpush.bf16.msra.mxu0 %v9254
    %11796 = vmatpush.bf16.msra.mxu0 %v9246
    %11797 = vmatpush.bf16.msra.mxu0 %v9238
    %11798 = vmatpush.bf16.msra.mxu0 %v9230
    %11799 = vmatpush.bf16.msra.mxu0 %v9222
    %11800 = vmatmul.bf16.gmra.mxu0 %v5734
    %v11801 = vpop.f32.mrf.mxu0
    %v11802 = vadd.f32 %v11789, %v11801
    %v11803 = vpop.f32.mrf.mxu0
    %11804 = vdwg.mxu0
    %11805 = vmatpush.bf16.msra.mxu0 %v9342
    %11806 = vmatpush.bf16.msra.mxu0 %v9334
    %11807 = vmatpush.bf16.msra.mxu0 %v9326
    %11808 = vmatpush.bf16.msra.mxu0 %v9318
    %11809 = vmatpush.bf16.msra.mxu0 %v9310
    %11810 = vmatpush.bf16.msra.mxu0 %v9302
    %11811 = vmatpush.bf16.msra.mxu0 %v9294
    %11812 = vmatpush.bf16.msra.mxu0 %v9286
    %11813 = vmatmul.bf16.gmra.mxu0 %v5735
    %v11814 = vpop.f32.mrf.mxu0
    %v11815 = vadd.f32 %v11802, %v11814
    %v11816 = vpop.f32.mrf.mxu0
    %11817 = vdwg.mxu0
    %11818 = vmatpush.bf16.msra.mxu0 %v9406
    %11819 = vmatpush.bf16.msra.mxu0 %v9398
    %11820 = vmatpush.bf16.msra.mxu0 %v9390
    %11821 = vmatpush.bf16.msra.mxu0 %v9382
    %11822 = vmatpush.bf16.msra.mxu0 %v9374
    %11823 = vmatpush.bf16.msra.mxu0 %v9366
    %11824 = vmatpush.bf16.msra.mxu0 %v9358
    %11825 = vmatpush.bf16.msra.mxu0 %v9350
    %11826 = vmatmul.bf16.gmra.mxu0 %v5736
    %v11827 = vpop.f32.mrf.mxu0
    %v11828 = vadd.f32 %v11815, %v11827
    %v11829 = vpop.f32.mrf.mxu0
    %11830 = vdwg.mxu0
    %11831 = vmatpush.bf16.msra.mxu0 %v9470
    %11832 = vmatpush.bf16.msra.mxu0 %v9462
    %11833 = vmatpush.bf16.msra.mxu0 %v9454
    %11834 = vmatpush.bf16.msra.mxu0 %v9446
    %11835 = vmatpush.bf16.msra.mxu0 %v9438
    %11836 = vmatpush.bf16.msra.mxu0 %v9430
    %11837 = vmatpush.bf16.msra.mxu0 %v9422
    %11838 = vmatpush.bf16.msra.mxu0 %v9414
    %11839 = vmatmul.bf16.gmra.mxu0 %v5737
    %v11840 = vpop.f32.mrf.mxu0
    %v11841 = vadd.f32 %v11828, %v11840
    %v11842 = vpop.f32.mrf.mxu0
    %11843 = vdwg.mxu0
    %11844 = vmatpush.bf16.msra.mxu0 %v9534
    %11845 = vmatpush.bf16.msra.mxu0 %v9526
    %11846 = vmatpush.bf16.msra.mxu0 %v9518
    %11847 = vmatpush.bf16.msra.mxu0 %v9510
    %11848 = vmatpush.bf16.msra.mxu0 %v9502
    %11849 = vmatpush.bf16.msra.mxu0 %v9494
    %11850 = vmatpush.bf16.msra.mxu0 %v9486
    %11851 = vmatpush.bf16.msra.mxu0 %v9478
    %11852 = vmatmul.bf16.gmra.mxu0 %v5738
    %v11853 = vpop.f32.mrf.mxu0
    %v11854 = vadd.f32 %v11841, %v11853
    %v11855 = vpop.f32.mrf.mxu0
    %11856 = vdwg.mxu0
    %11857 = vmatpush.bf16.msra.mxu0 %v9598
    %11858 = vmatpush.bf16.msra.mxu0 %v9590
    %11859 = vmatpush.bf16.msra.mxu0 %v9582
    %11860 = vmatpush.bf16.msra.mxu0 %v9574
    %11861 = vmatpush.bf16.msra.mxu0 %v9566
    %11862 = vmatpush.bf16.msra.mxu0 %v9558
    %11863 = vmatpush.bf16.msra.mxu0 %v9550
    %11864 = vmatpush.bf16.msra.mxu0 %v9542
    %11865 = vmatmul.bf16.gmra.mxu0 %v5739
    %v11866 = vpop.f32.mrf.mxu0
    %v11867 = vadd.f32 %v11854, %v11866
    %v11868 = vpop.f32.mrf.mxu0
    %11869 = vdwg.mxu0
    %11870 = vmatpush.bf16.msra.mxu0 %v9662
    %11871 = vmatpush.bf16.msra.mxu0 %v9654
    %11872 = vmatpush.bf16.msra.mxu0 %v9646
    %11873 = vmatpush.bf16.msra.mxu0 %v9638
    %11874 = vmatpush.bf16.msra.mxu0 %v9630
    %11875 = vmatpush.bf16.msra.mxu0 %v9622
    %11876 = vmatpush.bf16.msra.mxu0 %v9614
    %11877 = vmatpush.bf16.msra.mxu0 %v9606
    %11878 = vmatmul.bf16.gmra.mxu0 %v5740
    %v11879 = vpop.f32.mrf.mxu0
    %v11880 = vadd.f32 %v11867, %v11879
    %v11881 = vpop.f32.mrf.mxu0
    %11882 = vdwg.mxu0
    %11883 = vmatpush.bf16.msra.mxu0 %v9726
    %11884 = vmatpush.bf16.msra.mxu0 %v9718
    %11885 = vmatpush.bf16.msra.mxu0 %v9710
    %11886 = vmatpush.bf16.msra.mxu0 %v9702
    %11887 = vmatpush.bf16.msra.mxu0 %v9694
    %11888 = vmatpush.bf16.msra.mxu0 %v9686
    %11889 = vmatpush.bf16.msra.mxu0 %v9678
    %11890 = vmatpush.bf16.msra.mxu0 %v9670
    %11891 = vmatmul.bf16.gmra.mxu0 %v5741
    %v11892 = vpop.f32.mrf.mxu0
    %v11893 = vadd.f32 %v11880, %v11892
    %v11894 = vpop.f32.mrf.mxu0
    %11895 = vdwg.mxu0
    %11896 = vmatpush.bf16.msra.mxu0 %v9790
    %11897 = vmatpush.bf16.msra.mxu0 %v9782
    %11898 = vmatpush.bf16.msra.mxu0 %v9774
    %11899 = vmatpush.bf16.msra.mxu0 %v9766
    %11900 = vmatpush.bf16.msra.mxu0 %v9758
    %11901 = vmatpush.bf16.msra.mxu0 %v9750
    %11902 = vmatpush.bf16.msra.mxu0 %v9742
    %11903 = vmatpush.bf16.msra.mxu0 %v9734
    %11904 = vmatmul.bf16.gmra.mxu0 %v5742
    %v11905 = vpop.f32.mrf.mxu0
    %v11906 = vadd.f32 %v11893, %v11905
    %v11907 = vpop.f32.mrf.mxu0
    %11908 = vdwg.mxu0
    %11909 = vmatpush.bf16.msra.mxu0 %v9854
    %11910 = vmatpush.bf16.msra.mxu0 %v9846
    %11911 = vmatpush.bf16.msra.mxu0 %v9838
    %11912 = vmatpush.bf16.msra.mxu0 %v9830
    %11913 = vmatpush.bf16.msra.mxu0 %v9822
    %11914 = vmatpush.bf16.msra.mxu0 %v9814
    %11915 = vmatpush.bf16.msra.mxu0 %v9806
    %11916 = vmatpush.bf16.msra.mxu0 %v9798
    %11917 = vmatmul.bf16.gmra.mxu0 %v5743
    %v11918 = vpop.f32.mrf.mxu0
    %v11919 = vadd.f32 %v11906, %v11918
    %v11920 = vpop.f32.mrf.mxu0
    %11921 = vdwg.mxu0
    %11922 = vmatpush.bf16.msra.mxu0 %v8895
    %11923 = vmatpush.bf16.msra.mxu0 %v8887
    %11924 = vmatpush.bf16.msra.mxu0 %v8879
    %11925 = vmatpush.bf16.msra.mxu0 %v8871
    %11926 = vmatpush.bf16.msra.mxu0 %v8863
    %11927 = vmatpush.bf16.msra.mxu0 %v8855
    %11928 = vmatpush.bf16.msra.mxu0 %v8847
    %11929 = vmatpush.bf16.msra.mxu0 %v8839
    %11930 = vmatmul.bf16.gmra.mxu0 %v5728
    %v11931 = vpop.f32.mrf.mxu0
    %v11932 = vadd.f32 %v5751, %v11931
    %v11933 = vpop.f32.mrf.mxu0
    %11934 = vdwg.mxu0
    %11935 = vmatpush.bf16.msra.mxu0 %v8959
    %11936 = vmatpush.bf16.msra.mxu0 %v8951
    %11937 = vmatpush.bf16.msra.mxu0 %v8943
    %11938 = vmatpush.bf16.msra.mxu0 %v8935
    %11939 = vmatpush.bf16.msra.mxu0 %v8927
    %11940 = vmatpush.bf16.msra.mxu0 %v8919
    %11941 = vmatpush.bf16.msra.mxu0 %v8911
    %11942 = vmatpush.bf16.msra.mxu0 %v8903
    %11943 = vmatmul.bf16.gmra.mxu0 %v5729
    %v11944 = vpop.f32.mrf.mxu0
    %v11945 = vadd.f32 %v11932, %v11944
    %v11946 = vpop.f32.mrf.mxu0
    %11947 = vdwg.mxu0
    %11948 = vmatpush.bf16.msra.mxu0 %v9023
    %11949 = vmatpush.bf16.msra.mxu0 %v9015
    %11950 = vmatpush.bf16.msra.mxu0 %v9007
    %11951 = vmatpush.bf16.msra.mxu0 %v8999
    %11952 = vmatpush.bf16.msra.mxu0 %v8991
    %11953 = vmatpush.bf16.msra.mxu0 %v8983
    %11954 = vmatpush.bf16.msra.mxu0 %v8975
    %11955 = vmatpush.bf16.msra.mxu0 %v8967
    %11956 = vmatmul.bf16.gmra.mxu0 %v5730
    %v11957 = vpop.f32.mrf.mxu0
    %v11958 = vadd.f32 %v11945, %v11957
    %v11959 = vpop.f32.mrf.mxu0
    %11960 = vdwg.mxu0
    %11961 = vmatpush.bf16.msra.mxu0 %v9087
    %11962 = vmatpush.bf16.msra.mxu0 %v9079
    %11963 = vmatpush.bf16.msra.mxu0 %v9071
    %11964 = vmatpush.bf16.msra.mxu0 %v9063
    %11965 = vmatpush.bf16.msra.mxu0 %v9055
    %11966 = vmatpush.bf16.msra.mxu0 %v9047
    %11967 = vmatpush.bf16.msra.mxu0 %v9039
    %11968 = vmatpush.bf16.msra.mxu0 %v9031
    %11969 = vmatmul.bf16.gmra.mxu0 %v5731
    %v11970 = vpop.f32.mrf.mxu0
    %v11971 = vadd.f32 %v11958, %v11970
    %v11972 = vpop.f32.mrf.mxu0
    %11973 = vdwg.mxu0
    %11974 = vmatpush.bf16.msra.mxu0 %v9151
    %11975 = vmatpush.bf16.msra.mxu0 %v9143
    %11976 = vmatpush.bf16.msra.mxu0 %v9135
    %11977 = vmatpush.bf16.msra.mxu0 %v9127
    %11978 = vmatpush.bf16.msra.mxu0 %v9119
    %11979 = vmatpush.bf16.msra.mxu0 %v9111
    %11980 = vmatpush.bf16.msra.mxu0 %v9103
    %11981 = vmatpush.bf16.msra.mxu0 %v9095
    %11982 = vmatmul.bf16.gmra.mxu0 %v5732
    %v11983 = vpop.f32.mrf.mxu0
    %v11984 = vadd.f32 %v11971, %v11983
    %v11985 = vpop.f32.mrf.mxu0
    %11986 = vdwg.mxu0
    %11987 = vmatpush.bf16.msra.mxu0 %v9215
    %11988 = vmatpush.bf16.msra.mxu0 %v9207
    %11989 = vmatpush.bf16.msra.mxu0 %v9199
    %11990 = vmatpush.bf16.msra.mxu0 %v9191
    %11991 = vmatpush.bf16.msra.mxu0 %v9183
    %11992 = vmatpush.bf16.msra.mxu0 %v9175
    %11993 = vmatpush.bf16.msra.mxu0 %v9167
    %11994 = vmatpush.bf16.msra.mxu0 %v9159
    %11995 = vmatmul.bf16.gmra.mxu0 %v5733
    %v11996 = vpop.f32.mrf.mxu0
    %v11997 = vadd.f32 %v11984, %v11996
    %v11998 = vpop.f32.mrf.mxu0
    %11999 = vdwg.mxu0
    %12000 = vmatpush.bf16.msra.mxu0 %v9279
    %12001 = vmatpush.bf16.msra.mxu0 %v9271
    %12002 = vmatpush.bf16.msra.mxu0 %v9263
    %12003 = vmatpush.bf16.msra.mxu0 %v9255
    %12004 = vmatpush.bf16.msra.mxu0 %v9247
    %12005 = vmatpush.bf16.msra.mxu0 %v9239
    %12006 = vmatpush.bf16.msra.mxu0 %v9231
    %12007 = vmatpush.bf16.msra.mxu0 %v9223
    %12008 = vmatmul.bf16.gmra.mxu0 %v5734
    %v12009 = vpop.f32.mrf.mxu0
    %v12010 = vadd.f32 %v11997, %v12009
    %v12011 = vpop.f32.mrf.mxu0
    %12012 = vdwg.mxu0
    %12013 = vmatpush.bf16.msra.mxu0 %v9343
    %12014 = vmatpush.bf16.msra.mxu0 %v9335
    %12015 = vmatpush.bf16.msra.mxu0 %v9327
    %12016 = vmatpush.bf16.msra.mxu0 %v9319
    %12017 = vmatpush.bf16.msra.mxu0 %v9311
    %12018 = vmatpush.bf16.msra.mxu0 %v9303
    %12019 = vmatpush.bf16.msra.mxu0 %v9295
    %12020 = vmatpush.bf16.msra.mxu0 %v9287
    %12021 = vmatmul.bf16.gmra.mxu0 %v5735
    %v12022 = vpop.f32.mrf.mxu0
    %v12023 = vadd.f32 %v12010, %v12022
    %v12024 = vpop.f32.mrf.mxu0
    %12025 = vdwg.mxu0
    %12026 = vmatpush.bf16.msra.mxu0 %v9407
    %12027 = vmatpush.bf16.msra.mxu0 %v9399
    %12028 = vmatpush.bf16.msra.mxu0 %v9391
    %12029 = vmatpush.bf16.msra.mxu0 %v9383
    %12030 = vmatpush.bf16.msra.mxu0 %v9375
    %12031 = vmatpush.bf16.msra.mxu0 %v9367
    %12032 = vmatpush.bf16.msra.mxu0 %v9359
    %12033 = vmatpush.bf16.msra.mxu0 %v9351
    %12034 = vmatmul.bf16.gmra.mxu0 %v5736
    %v12035 = vpop.f32.mrf.mxu0
    %v12036 = vadd.f32 %v12023, %v12035
    %v12037 = vpop.f32.mrf.mxu0
    %12038 = vdwg.mxu0
    %12039 = vmatpush.bf16.msra.mxu0 %v9471
    %12040 = vmatpush.bf16.msra.mxu0 %v9463
    %12041 = vmatpush.bf16.msra.mxu0 %v9455
    %12042 = vmatpush.bf16.msra.mxu0 %v9447
    %12043 = vmatpush.bf16.msra.mxu0 %v9439
    %12044 = vmatpush.bf16.msra.mxu0 %v9431
    %12045 = vmatpush.bf16.msra.mxu0 %v9423
    %12046 = vmatpush.bf16.msra.mxu0 %v9415
    %12047 = vmatmul.bf16.gmra.mxu0 %v5737
    %v12048 = vpop.f32.mrf.mxu0
    %v12049 = vadd.f32 %v12036, %v12048
    %v12050 = vpop.f32.mrf.mxu0
    %12051 = vdwg.mxu0
    %12052 = vmatpush.bf16.msra.mxu0 %v9535
    %12053 = vmatpush.bf16.msra.mxu0 %v9527
    %12054 = vmatpush.bf16.msra.mxu0 %v9519
    %12055 = vmatpush.bf16.msra.mxu0 %v9511
    %12056 = vmatpush.bf16.msra.mxu0 %v9503
    %12057 = vmatpush.bf16.msra.mxu0 %v9495
    %12058 = vmatpush.bf16.msra.mxu0 %v9487
    %12059 = vmatpush.bf16.msra.mxu0 %v9479
    %12060 = vmatmul.bf16.gmra.mxu0 %v5738
    %v12061 = vpop.f32.mrf.mxu0
    %v12062 = vadd.f32 %v12049, %v12061
    %v12063 = vpop.f32.mrf.mxu0
    %12064 = vdwg.mxu0
    %12065 = vmatpush.bf16.msra.mxu0 %v9599
    %12066 = vmatpush.bf16.msra.mxu0 %v9591
    %12067 = vmatpush.bf16.msra.mxu0 %v9583
    %12068 = vmatpush.bf16.msra.mxu0 %v9575
    %12069 = vmatpush.bf16.msra.mxu0 %v9567
    %12070 = vmatpush.bf16.msra.mxu0 %v9559
    %12071 = vmatpush.bf16.msra.mxu0 %v9551
    %12072 = vmatpush.bf16.msra.mxu0 %v9543
    %12073 = vmatmul.bf16.gmra.mxu0 %v5739
    %v12074 = vpop.f32.mrf.mxu0
    %v12075 = vadd.f32 %v12062, %v12074
    %v12076 = vpop.f32.mrf.mxu0
    %12077 = vdwg.mxu0
    %12078 = vmatpush.bf16.msra.mxu0 %v9663
    %12079 = vmatpush.bf16.msra.mxu0 %v9655
    %12080 = vmatpush.bf16.msra.mxu0 %v9647
    %12081 = vmatpush.bf16.msra.mxu0 %v9639
    %12082 = vmatpush.bf16.msra.mxu0 %v9631
    %12083 = vmatpush.bf16.msra.mxu0 %v9623
    %12084 = vmatpush.bf16.msra.mxu0 %v9615
    %12085 = vmatpush.bf16.msra.mxu0 %v9607
    %12086 = vmatmul.bf16.gmra.mxu0 %v5740
    %v12087 = vpop.f32.mrf.mxu0
    %v12088 = vadd.f32 %v12075, %v12087
    %v12089 = vpop.f32.mrf.mxu0
    %12090 = vdwg.mxu0
    %12091 = vmatpush.bf16.msra.mxu0 %v9727
    %12092 = vmatpush.bf16.msra.mxu0 %v9719
    %12093 = vmatpush.bf16.msra.mxu0 %v9711
    %12094 = vmatpush.bf16.msra.mxu0 %v9703
    %12095 = vmatpush.bf16.msra.mxu0 %v9695
    %12096 = vmatpush.bf16.msra.mxu0 %v9687
    %12097 = vmatpush.bf16.msra.mxu0 %v9679
    %12098 = vmatpush.bf16.msra.mxu0 %v9671
    %12099 = vmatmul.bf16.gmra.mxu0 %v5741
    %v12100 = vpop.f32.mrf.mxu0
    %v12101 = vadd.f32 %v12088, %v12100
    %v12102 = vpop.f32.mrf.mxu0
    %12103 = vdwg.mxu0
    %12104 = vmatpush.bf16.msra.mxu0 %v9791
    %12105 = vmatpush.bf16.msra.mxu0 %v9783
    %12106 = vmatpush.bf16.msra.mxu0 %v9775
    %12107 = vmatpush.bf16.msra.mxu0 %v9767
    %12108 = vmatpush.bf16.msra.mxu0 %v9759
    %12109 = vmatpush.bf16.msra.mxu0 %v9751
    %12110 = vmatpush.bf16.msra.mxu0 %v9743
    %12111 = vmatpush.bf16.msra.mxu0 %v9735
    %12112 = vmatmul.bf16.gmra.mxu0 %v5742
    %v12113 = vpop.f32.mrf.mxu0
    %v12114 = vadd.f32 %v12101, %v12113
    %v12115 = vpop.f32.mrf.mxu0
    %12116 = vdwg.mxu0
    %12117 = vmatpush.bf16.msra.mxu0 %v9855
    %12118 = vmatpush.bf16.msra.mxu0 %v9847
    %12119 = vmatpush.bf16.msra.mxu0 %v9839
    %12120 = vmatpush.bf16.msra.mxu0 %v9831
    %12121 = vmatpush.bf16.msra.mxu0 %v9823
    %12122 = vmatpush.bf16.msra.mxu0 %v9815
    %12123 = vmatpush.bf16.msra.mxu0 %v9807
    %12124 = vmatpush.bf16.msra.mxu0 %v9799
    %12125 = vmatmul.bf16.gmra.mxu0 %v5743
    %v12126 = vpop.f32.mrf.mxu0
    %v12127 = vadd.f32 %v12114, %v12126
    %v12128 = vpop.f32.mrf.mxu0
    %12129 = vdwg.mxu0
    %12130 = vmatpush.bf16.msra.mxu0 %v8896
    %12131 = vmatpush.bf16.msra.mxu0 %v8888
    %12132 = vmatpush.bf16.msra.mxu0 %v8880
    %12133 = vmatpush.bf16.msra.mxu0 %v8872
    %12134 = vmatpush.bf16.msra.mxu0 %v8864
    %12135 = vmatpush.bf16.msra.mxu0 %v8856
    %12136 = vmatpush.bf16.msra.mxu0 %v8848
    %12137 = vmatpush.bf16.msra.mxu0 %v8840
    %12138 = vmatmul.bf16.gmra.mxu0 %v5728
    %v12139 = vpop.f32.mrf.mxu0
    %v12140 = vadd.f32 %v5752, %v12139
    %v12141 = vpop.f32.mrf.mxu0
    %12142 = vdwg.mxu0
    %12143 = vmatpush.bf16.msra.mxu0 %v8960
    %12144 = vmatpush.bf16.msra.mxu0 %v8952
    %12145 = vmatpush.bf16.msra.mxu0 %v8944
    %12146 = vmatpush.bf16.msra.mxu0 %v8936
    %12147 = vmatpush.bf16.msra.mxu0 %v8928
    %12148 = vmatpush.bf16.msra.mxu0 %v8920
    %12149 = vmatpush.bf16.msra.mxu0 %v8912
    %12150 = vmatpush.bf16.msra.mxu0 %v8904
    %12151 = vmatmul.bf16.gmra.mxu0 %v5729
    %v12152 = vpop.f32.mrf.mxu0
    %v12153 = vadd.f32 %v12140, %v12152
    %v12154 = vpop.f32.mrf.mxu0
    %12155 = vdwg.mxu0
    %12156 = vmatpush.bf16.msra.mxu0 %v9024
    %12157 = vmatpush.bf16.msra.mxu0 %v9016
    %12158 = vmatpush.bf16.msra.mxu0 %v9008
    %12159 = vmatpush.bf16.msra.mxu0 %v9000
    %12160 = vmatpush.bf16.msra.mxu0 %v8992
    %12161 = vmatpush.bf16.msra.mxu0 %v8984
    %12162 = vmatpush.bf16.msra.mxu0 %v8976
    %12163 = vmatpush.bf16.msra.mxu0 %v8968
    %12164 = vmatmul.bf16.gmra.mxu0 %v5730
    %v12165 = vpop.f32.mrf.mxu0
    %v12166 = vadd.f32 %v12153, %v12165
    %v12167 = vpop.f32.mrf.mxu0
    %12168 = vdwg.mxu0
    %12169 = vmatpush.bf16.msra.mxu0 %v9088
    %12170 = vmatpush.bf16.msra.mxu0 %v9080
    %12171 = vmatpush.bf16.msra.mxu0 %v9072
    %12172 = vmatpush.bf16.msra.mxu0 %v9064
    %12173 = vmatpush.bf16.msra.mxu0 %v9056
    %12174 = vmatpush.bf16.msra.mxu0 %v9048
    %12175 = vmatpush.bf16.msra.mxu0 %v9040
    %12176 = vmatpush.bf16.msra.mxu0 %v9032
    %12177 = vmatmul.bf16.gmra.mxu0 %v5731
    %v12178 = vpop.f32.mrf.mxu0
    %v12179 = vadd.f32 %v12166, %v12178
    %v12180 = vpop.f32.mrf.mxu0
    %12181 = vdwg.mxu0
    %12182 = vmatpush.bf16.msra.mxu0 %v9152
    %12183 = vmatpush.bf16.msra.mxu0 %v9144
    %12184 = vmatpush.bf16.msra.mxu0 %v9136
    %12185 = vmatpush.bf16.msra.mxu0 %v9128
    %12186 = vmatpush.bf16.msra.mxu0 %v9120
    %12187 = vmatpush.bf16.msra.mxu0 %v9112
    %12188 = vmatpush.bf16.msra.mxu0 %v9104
    %12189 = vmatpush.bf16.msra.mxu0 %v9096
    %12190 = vmatmul.bf16.gmra.mxu0 %v5732
    %v12191 = vpop.f32.mrf.mxu0
    %v12192 = vadd.f32 %v12179, %v12191
    %v12193 = vpop.f32.mrf.mxu0
    %12194 = vdwg.mxu0
    %12195 = vmatpush.bf16.msra.mxu0 %v9216
    %12196 = vmatpush.bf16.msra.mxu0 %v9208
    %12197 = vmatpush.bf16.msra.mxu0 %v9200
    %12198 = vmatpush.bf16.msra.mxu0 %v9192
    %12199 = vmatpush.bf16.msra.mxu0 %v9184
    %12200 = vmatpush.bf16.msra.mxu0 %v9176
    %12201 = vmatpush.bf16.msra.mxu0 %v9168
    %12202 = vmatpush.bf16.msra.mxu0 %v9160
    %12203 = vmatmul.bf16.gmra.mxu0 %v5733
    %v12204 = vpop.f32.mrf.mxu0
    %v12205 = vadd.f32 %v12192, %v12204
    %v12206 = vpop.f32.mrf.mxu0
    %12207 = vdwg.mxu0
    %12208 = vmatpush.bf16.msra.mxu0 %v9280
    %12209 = vmatpush.bf16.msra.mxu0 %v9272
    %12210 = vmatpush.bf16.msra.mxu0 %v9264
    %12211 = vmatpush.bf16.msra.mxu0 %v9256
    %12212 = vmatpush.bf16.msra.mxu0 %v9248
    %12213 = vmatpush.bf16.msra.mxu0 %v9240
    %12214 = vmatpush.bf16.msra.mxu0 %v9232
    %12215 = vmatpush.bf16.msra.mxu0 %v9224
    %12216 = vmatmul.bf16.gmra.mxu0 %v5734
    %v12217 = vpop.f32.mrf.mxu0
    %v12218 = vadd.f32 %v12205, %v12217
    %v12219 = vpop.f32.mrf.mxu0
    %12220 = vdwg.mxu0
    %12221 = vmatpush.bf16.msra.mxu0 %v9344
    %12222 = vmatpush.bf16.msra.mxu0 %v9336
    %12223 = vmatpush.bf16.msra.mxu0 %v9328
    %12224 = vmatpush.bf16.msra.mxu0 %v9320
    %12225 = vmatpush.bf16.msra.mxu0 %v9312
    %12226 = vmatpush.bf16.msra.mxu0 %v9304
    %12227 = vmatpush.bf16.msra.mxu0 %v9296
    %12228 = vmatpush.bf16.msra.mxu0 %v9288
    %12229 = vmatmul.bf16.gmra.mxu0 %v5735
    %v12230 = vpop.f32.mrf.mxu0
    %v12231 = vadd.f32 %v12218, %v12230
    %v12232 = vpop.f32.mrf.mxu0
    %12233 = vdwg.mxu0
    %12234 = vmatpush.bf16.msra.mxu0 %v9408
    %12235 = vmatpush.bf16.msra.mxu0 %v9400
    %12236 = vmatpush.bf16.msra.mxu0 %v9392
    %12237 = vmatpush.bf16.msra.mxu0 %v9384
    %12238 = vmatpush.bf16.msra.mxu0 %v9376
    %12239 = vmatpush.bf16.msra.mxu0 %v9368
    %12240 = vmatpush.bf16.msra.mxu0 %v9360
    %12241 = vmatpush.bf16.msra.mxu0 %v9352
    %12242 = vmatmul.bf16.gmra.mxu0 %v5736
    %v12243 = vpop.f32.mrf.mxu0
    %v12244 = vadd.f32 %v12231, %v12243
    %v12245 = vpop.f32.mrf.mxu0
    %12246 = vdwg.mxu0
    %12247 = vmatpush.bf16.msra.mxu0 %v9472
    %12248 = vmatpush.bf16.msra.mxu0 %v9464
    %12249 = vmatpush.bf16.msra.mxu0 %v9456
    %12250 = vmatpush.bf16.msra.mxu0 %v9448
    %12251 = vmatpush.bf16.msra.mxu0 %v9440
    %12252 = vmatpush.bf16.msra.mxu0 %v9432
    %12253 = vmatpush.bf16.msra.mxu0 %v9424
    %12254 = vmatpush.bf16.msra.mxu0 %v9416
    %12255 = vmatmul.bf16.gmra.mxu0 %v5737
    %v12256 = vpop.f32.mrf.mxu0
    %v12257 = vadd.f32 %v12244, %v12256
    %v12258 = vpop.f32.mrf.mxu0
    %12259 = vdwg.mxu0
    %12260 = vmatpush.bf16.msra.mxu0 %v9536
    %12261 = vmatpush.bf16.msra.mxu0 %v9528
    %12262 = vmatpush.bf16.msra.mxu0 %v9520
    %12263 = vmatpush.bf16.msra.mxu0 %v9512
    %12264 = vmatpush.bf16.msra.mxu0 %v9504
    %12265 = vmatpush.bf16.msra.mxu0 %v9496
    %12266 = vmatpush.bf16.msra.mxu0 %v9488
    %12267 = vmatpush.bf16.msra.mxu0 %v9480
    %12268 = vmatmul.bf16.gmra.mxu0 %v5738
    %v12269 = vpop.f32.mrf.mxu0
    %v12270 = vadd.f32 %v12257, %v12269
    %v12271 = vpop.f32.mrf.mxu0
    %12272 = vdwg.mxu0
    %12273 = vmatpush.bf16.msra.mxu0 %v9600
    %12274 = vmatpush.bf16.msra.mxu0 %v9592
    %12275 = vmatpush.bf16.msra.mxu0 %v9584
    %12276 = vmatpush.bf16.msra.mxu0 %v9576
    %12277 = vmatpush.bf16.msra.mxu0 %v9568
    %12278 = vmatpush.bf16.msra.mxu0 %v9560
    %12279 = vmatpush.bf16.msra.mxu0 %v9552
    %12280 = vmatpush.bf16.msra.mxu0 %v9544
    %12281 = vmatmul.bf16.gmra.mxu0 %v5739
    %v12282 = vpop.f32.mrf.mxu0
    %v12283 = vadd.f32 %v12270, %v12282
    %v12284 = vpop.f32.mrf.mxu0
    %12285 = vdwg.mxu0
    %12286 = vmatpush.bf16.msra.mxu0 %v9664
    %12287 = vmatpush.bf16.msra.mxu0 %v9656
    %12288 = vmatpush.bf16.msra.mxu0 %v9648
    %12289 = vmatpush.bf16.msra.mxu0 %v9640
    %12290 = vmatpush.bf16.msra.mxu0 %v9632
    %12291 = vmatpush.bf16.msra.mxu0 %v9624
    %12292 = vmatpush.bf16.msra.mxu0 %v9616
    %12293 = vmatpush.bf16.msra.mxu0 %v9608
    %12294 = vmatmul.bf16.gmra.mxu0 %v5740
    %v12295 = vpop.f32.mrf.mxu0
    %v12296 = vadd.f32 %v12283, %v12295
    %v12297 = vpop.f32.mrf.mxu0
    %12298 = vdwg.mxu0
    %12299 = vmatpush.bf16.msra.mxu0 %v9728
    %12300 = vmatpush.bf16.msra.mxu0 %v9720
    %12301 = vmatpush.bf16.msra.mxu0 %v9712
    %12302 = vmatpush.bf16.msra.mxu0 %v9704
    %12303 = vmatpush.bf16.msra.mxu0 %v9696
    %12304 = vmatpush.bf16.msra.mxu0 %v9688
    %12305 = vmatpush.bf16.msra.mxu0 %v9680
    %12306 = vmatpush.bf16.msra.mxu0 %v9672
    %12307 = vmatmul.bf16.gmra.mxu0 %v5741
    %v12308 = vpop.f32.mrf.mxu0
    %v12309 = vadd.f32 %v12296, %v12308
    %v12310 = vpop.f32.mrf.mxu0
    %12311 = vdwg.mxu0
    %12312 = vmatpush.bf16.msra.mxu0 %v9792
    %12313 = vmatpush.bf16.msra.mxu0 %v9784
    %12314 = vmatpush.bf16.msra.mxu0 %v9776
    %12315 = vmatpush.bf16.msra.mxu0 %v9768
    %12316 = vmatpush.bf16.msra.mxu0 %v9760
    %12317 = vmatpush.bf16.msra.mxu0 %v9752
    %12318 = vmatpush.bf16.msra.mxu0 %v9744
    %12319 = vmatpush.bf16.msra.mxu0 %v9736
    %12320 = vmatmul.bf16.gmra.mxu0 %v5742
    %v12321 = vpop.f32.mrf.mxu0
    %v12322 = vadd.f32 %v12309, %v12321
    %v12323 = vpop.f32.mrf.mxu0
    %12324 = vdwg.mxu0
    %12325 = vmatpush.bf16.msra.mxu0 %v9856
    %12326 = vmatpush.bf16.msra.mxu0 %v9848
    %12327 = vmatpush.bf16.msra.mxu0 %v9840
    %12328 = vmatpush.bf16.msra.mxu0 %v9832
    %12329 = vmatpush.bf16.msra.mxu0 %v9824
    %12330 = vmatpush.bf16.msra.mxu0 %v9816
    %12331 = vmatpush.bf16.msra.mxu0 %v9808
    %12332 = vmatpush.bf16.msra.mxu0 %v9800
    %12333 = vmatmul.bf16.gmra.mxu0 %v5743
    %v12334 = vpop.f32.mrf.mxu0
    %v12335 = vadd.f32 %v12322, %v12334
    %v12336 = vpop.f32.mrf.mxu0
    %12337 = vdwg.mxu0
    %12338 = vmatpush.bf16.msra.mxu0 %v8897
    %12339 = vmatpush.bf16.msra.mxu0 %v8889
    %12340 = vmatpush.bf16.msra.mxu0 %v8881
    %12341 = vmatpush.bf16.msra.mxu0 %v8873
    %12342 = vmatpush.bf16.msra.mxu0 %v8865
    %12343 = vmatpush.bf16.msra.mxu0 %v8857
    %12344 = vmatpush.bf16.msra.mxu0 %v8849
    %12345 = vmatpush.bf16.msra.mxu0 %v8841
    %12346 = vmatmul.bf16.gmra.mxu0 %v5728
    %v12347 = vpop.f32.mrf.mxu0
    %v12348 = vadd.f32 %v5753, %v12347
    %v12349 = vpop.f32.mrf.mxu0
    %12350 = vdwg.mxu0
    %12351 = vmatpush.bf16.msra.mxu0 %v8961
    %12352 = vmatpush.bf16.msra.mxu0 %v8953
    %12353 = vmatpush.bf16.msra.mxu0 %v8945
    %12354 = vmatpush.bf16.msra.mxu0 %v8937
    %12355 = vmatpush.bf16.msra.mxu0 %v8929
    %12356 = vmatpush.bf16.msra.mxu0 %v8921
    %12357 = vmatpush.bf16.msra.mxu0 %v8913
    %12358 = vmatpush.bf16.msra.mxu0 %v8905
    %12359 = vmatmul.bf16.gmra.mxu0 %v5729
    %v12360 = vpop.f32.mrf.mxu0
    %v12361 = vadd.f32 %v12348, %v12360
    %v12362 = vpop.f32.mrf.mxu0
    %12363 = vdwg.mxu0
    %12364 = vmatpush.bf16.msra.mxu0 %v9025
    %12365 = vmatpush.bf16.msra.mxu0 %v9017
    %12366 = vmatpush.bf16.msra.mxu0 %v9009
    %12367 = vmatpush.bf16.msra.mxu0 %v9001
    %12368 = vmatpush.bf16.msra.mxu0 %v8993
    %12369 = vmatpush.bf16.msra.mxu0 %v8985
    %12370 = vmatpush.bf16.msra.mxu0 %v8977
    %12371 = vmatpush.bf16.msra.mxu0 %v8969
    %12372 = vmatmul.bf16.gmra.mxu0 %v5730
    %v12373 = vpop.f32.mrf.mxu0
    %v12374 = vadd.f32 %v12361, %v12373
    %v12375 = vpop.f32.mrf.mxu0
    %12376 = vdwg.mxu0
    %12377 = vmatpush.bf16.msra.mxu0 %v9089
    %12378 = vmatpush.bf16.msra.mxu0 %v9081
    %12379 = vmatpush.bf16.msra.mxu0 %v9073
    %12380 = vmatpush.bf16.msra.mxu0 %v9065
    %12381 = vmatpush.bf16.msra.mxu0 %v9057
    %12382 = vmatpush.bf16.msra.mxu0 %v9049
    %12383 = vmatpush.bf16.msra.mxu0 %v9041
    %12384 = vmatpush.bf16.msra.mxu0 %v9033
    %12385 = vmatmul.bf16.gmra.mxu0 %v5731
    %v12386 = vpop.f32.mrf.mxu0
    %v12387 = vadd.f32 %v12374, %v12386
    %v12388 = vpop.f32.mrf.mxu0
    %12389 = vdwg.mxu0
    %12390 = vmatpush.bf16.msra.mxu0 %v9153
    %12391 = vmatpush.bf16.msra.mxu0 %v9145
    %12392 = vmatpush.bf16.msra.mxu0 %v9137
    %12393 = vmatpush.bf16.msra.mxu0 %v9129
    %12394 = vmatpush.bf16.msra.mxu0 %v9121
    %12395 = vmatpush.bf16.msra.mxu0 %v9113
    %12396 = vmatpush.bf16.msra.mxu0 %v9105
    %12397 = vmatpush.bf16.msra.mxu0 %v9097
    %12398 = vmatmul.bf16.gmra.mxu0 %v5732
    %v12399 = vpop.f32.mrf.mxu0
    %v12400 = vadd.f32 %v12387, %v12399
    %v12401 = vpop.f32.mrf.mxu0
    %12402 = vdwg.mxu0
    %12403 = vmatpush.bf16.msra.mxu0 %v9217
    %12404 = vmatpush.bf16.msra.mxu0 %v9209
    %12405 = vmatpush.bf16.msra.mxu0 %v9201
    %12406 = vmatpush.bf16.msra.mxu0 %v9193
    %12407 = vmatpush.bf16.msra.mxu0 %v9185
    %12408 = vmatpush.bf16.msra.mxu0 %v9177
    %12409 = vmatpush.bf16.msra.mxu0 %v9169
    %12410 = vmatpush.bf16.msra.mxu0 %v9161
    %12411 = vmatmul.bf16.gmra.mxu0 %v5733
    %v12412 = vpop.f32.mrf.mxu0
    %v12413 = vadd.f32 %v12400, %v12412
    %v12414 = vpop.f32.mrf.mxu0
    %12415 = vdwg.mxu0
    %12416 = vmatpush.bf16.msra.mxu0 %v9281
    %12417 = vmatpush.bf16.msra.mxu0 %v9273
    %12418 = vmatpush.bf16.msra.mxu0 %v9265
    %12419 = vmatpush.bf16.msra.mxu0 %v9257
    %12420 = vmatpush.bf16.msra.mxu0 %v9249
    %12421 = vmatpush.bf16.msra.mxu0 %v9241
    %12422 = vmatpush.bf16.msra.mxu0 %v9233
    %12423 = vmatpush.bf16.msra.mxu0 %v9225
    %12424 = vmatmul.bf16.gmra.mxu0 %v5734
    %v12425 = vpop.f32.mrf.mxu0
    %v12426 = vadd.f32 %v12413, %v12425
    %v12427 = vpop.f32.mrf.mxu0
    %12428 = vdwg.mxu0
    %12429 = vmatpush.bf16.msra.mxu0 %v9345
    %12430 = vmatpush.bf16.msra.mxu0 %v9337
    %12431 = vmatpush.bf16.msra.mxu0 %v9329
    %12432 = vmatpush.bf16.msra.mxu0 %v9321
    %12433 = vmatpush.bf16.msra.mxu0 %v9313
    %12434 = vmatpush.bf16.msra.mxu0 %v9305
    %12435 = vmatpush.bf16.msra.mxu0 %v9297
    %12436 = vmatpush.bf16.msra.mxu0 %v9289
    %12437 = vmatmul.bf16.gmra.mxu0 %v5735
    %v12438 = vpop.f32.mrf.mxu0
    %v12439 = vadd.f32 %v12426, %v12438
    %v12440 = vpop.f32.mrf.mxu0
    %12441 = vdwg.mxu0
    %12442 = vmatpush.bf16.msra.mxu0 %v9409
    %12443 = vmatpush.bf16.msra.mxu0 %v9401
    %12444 = vmatpush.bf16.msra.mxu0 %v9393
    %12445 = vmatpush.bf16.msra.mxu0 %v9385
    %12446 = vmatpush.bf16.msra.mxu0 %v9377
    %12447 = vmatpush.bf16.msra.mxu0 %v9369
    %12448 = vmatpush.bf16.msra.mxu0 %v9361
    %12449 = vmatpush.bf16.msra.mxu0 %v9353
    %12450 = vmatmul.bf16.gmra.mxu0 %v5736
    %v12451 = vpop.f32.mrf.mxu0
    %v12452 = vadd.f32 %v12439, %v12451
    %v12453 = vpop.f32.mrf.mxu0
    %12454 = vdwg.mxu0
    %12455 = vmatpush.bf16.msra.mxu0 %v9473
    %12456 = vmatpush.bf16.msra.mxu0 %v9465
    %12457 = vmatpush.bf16.msra.mxu0 %v9457
    %12458 = vmatpush.bf16.msra.mxu0 %v9449
    %12459 = vmatpush.bf16.msra.mxu0 %v9441
    %12460 = vmatpush.bf16.msra.mxu0 %v9433
    %12461 = vmatpush.bf16.msra.mxu0 %v9425
    %12462 = vmatpush.bf16.msra.mxu0 %v9417
    %12463 = vmatmul.bf16.gmra.mxu0 %v5737
    %v12464 = vpop.f32.mrf.mxu0
    %v12465 = vadd.f32 %v12452, %v12464
    %v12466 = vpop.f32.mrf.mxu0
    %12467 = vdwg.mxu0
    %12468 = vmatpush.bf16.msra.mxu0 %v9537
    %12469 = vmatpush.bf16.msra.mxu0 %v9529
    %12470 = vmatpush.bf16.msra.mxu0 %v9521
    %12471 = vmatpush.bf16.msra.mxu0 %v9513
    %12472 = vmatpush.bf16.msra.mxu0 %v9505
    %12473 = vmatpush.bf16.msra.mxu0 %v9497
    %12474 = vmatpush.bf16.msra.mxu0 %v9489
    %12475 = vmatpush.bf16.msra.mxu0 %v9481
    %12476 = vmatmul.bf16.gmra.mxu0 %v5738
    %v12477 = vpop.f32.mrf.mxu0
    %v12478 = vadd.f32 %v12465, %v12477
    %v12479 = vpop.f32.mrf.mxu0
    %12480 = vdwg.mxu0
    %12481 = vmatpush.bf16.msra.mxu0 %v9601
    %12482 = vmatpush.bf16.msra.mxu0 %v9593
    %12483 = vmatpush.bf16.msra.mxu0 %v9585
    %12484 = vmatpush.bf16.msra.mxu0 %v9577
    %12485 = vmatpush.bf16.msra.mxu0 %v9569
    %12486 = vmatpush.bf16.msra.mxu0 %v9561
    %12487 = vmatpush.bf16.msra.mxu0 %v9553
    %12488 = vmatpush.bf16.msra.mxu0 %v9545
    %12489 = vmatmul.bf16.gmra.mxu0 %v5739
    %v12490 = vpop.f32.mrf.mxu0
    %v12491 = vadd.f32 %v12478, %v12490
    %v12492 = vpop.f32.mrf.mxu0
    %12493 = vdwg.mxu0
    %12494 = vmatpush.bf16.msra.mxu0 %v9665
    %12495 = vmatpush.bf16.msra.mxu0 %v9657
    %12496 = vmatpush.bf16.msra.mxu0 %v9649
    %12497 = vmatpush.bf16.msra.mxu0 %v9641
    %12498 = vmatpush.bf16.msra.mxu0 %v9633
    %12499 = vmatpush.bf16.msra.mxu0 %v9625
    %12500 = vmatpush.bf16.msra.mxu0 %v9617
    %12501 = vmatpush.bf16.msra.mxu0 %v9609
    %12502 = vmatmul.bf16.gmra.mxu0 %v5740
    %v12503 = vpop.f32.mrf.mxu0
    %v12504 = vadd.f32 %v12491, %v12503
    %v12505 = vpop.f32.mrf.mxu0
    %12506 = vdwg.mxu0
    %12507 = vmatpush.bf16.msra.mxu0 %v9729
    %12508 = vmatpush.bf16.msra.mxu0 %v9721
    %12509 = vmatpush.bf16.msra.mxu0 %v9713
    %12510 = vmatpush.bf16.msra.mxu0 %v9705
    %12511 = vmatpush.bf16.msra.mxu0 %v9697
    %12512 = vmatpush.bf16.msra.mxu0 %v9689
    %12513 = vmatpush.bf16.msra.mxu0 %v9681
    %12514 = vmatpush.bf16.msra.mxu0 %v9673
    %12515 = vmatmul.bf16.gmra.mxu0 %v5741
    %v12516 = vpop.f32.mrf.mxu0
    %v12517 = vadd.f32 %v12504, %v12516
    %v12518 = vpop.f32.mrf.mxu0
    %12519 = vdwg.mxu0
    %12520 = vmatpush.bf16.msra.mxu0 %v9793
    %12521 = vmatpush.bf16.msra.mxu0 %v9785
    %12522 = vmatpush.bf16.msra.mxu0 %v9777
    %12523 = vmatpush.bf16.msra.mxu0 %v9769
    %12524 = vmatpush.bf16.msra.mxu0 %v9761
    %12525 = vmatpush.bf16.msra.mxu0 %v9753
    %12526 = vmatpush.bf16.msra.mxu0 %v9745
    %12527 = vmatpush.bf16.msra.mxu0 %v9737
    %12528 = vmatmul.bf16.gmra.mxu0 %v5742
    %v12529 = vpop.f32.mrf.mxu0
    %v12530 = vadd.f32 %v12517, %v12529
    %v12531 = vpop.f32.mrf.mxu0
    %12532 = vdwg.mxu0
    %12533 = vmatpush.bf16.msra.mxu0 %v9857
    %12534 = vmatpush.bf16.msra.mxu0 %v9849
    %12535 = vmatpush.bf16.msra.mxu0 %v9841
    %12536 = vmatpush.bf16.msra.mxu0 %v9833
    %12537 = vmatpush.bf16.msra.mxu0 %v9825
    %12538 = vmatpush.bf16.msra.mxu0 %v9817
    %12539 = vmatpush.bf16.msra.mxu0 %v9809
    %12540 = vmatpush.bf16.msra.mxu0 %v9801
    %12541 = vmatmul.bf16.gmra.mxu0 %v5743
    %v12542 = vpop.f32.mrf.mxu0
    %v12543 = vadd.f32 %v12530, %v12542
    %v12544 = vpop.f32.mrf.mxu0
    %12545 = vdwg.mxu0
    %v12546 = vmax.f32 %v11087, 0.0
    %v12547 = vmax.f32 %v11295, 0.0
    %v12548 = vmax.f32 %v11503, 0.0
    %v12549 = vmax.f32 %v11711, 0.0
    %v12550 = vmax.f32 %v11919, 0.0
    %v12551 = vmax.f32 %v12127, 0.0
    %v12552 = vmax.f32 %v12335, 0.0
    %v12553 = vmax.f32 %v12543, 0.0
    %v12554 = vld [vmem:[%s16] sm:$0xf]
    %v12555 = vld [vmem:[%s16 + $0x4] sm:$0xf]
    %v12556 = vld [vmem:[%s16 + $0x8] sm:$0xf]
    %v12557 = vld [vmem:[%s16 + $0xc] sm:$0xf]
    %v12558 = vld [vmem:[%s16 + $0x10] sm:$0xf]
    %v12559 = vld [vmem:[%s16 + $0x14] sm:$0xf]
    %v12560 = vld [vmem:[%s16 + $0x18] sm:$0xf]
    %v12561 = vld [vmem:[%s16 + $0x1c] sm:$0xf]
    %v12562 = vld [vmem:[%s16 + $0x20] sm:$0xf]
    %v12563 = vld [vmem:[%s16 + $0x24] sm:$0xf]
    %v12564 = vld [vmem:[%s16 + $0x28] sm:$0xf]
    %v12565 = vld [vmem:[%s16 + $0x2c] sm:$0xf]
    %v12566 = vld [vmem:[%s16 + $0x30] sm:$0xf]
    %v12567 = vld [vmem:[%s16 + $0x34] sm:$0xf]
    %v12568 = vld [vmem:[%s16 + $0x38] sm:$0xf]
    %v12569 = vld [vmem:[%s16 + $0x3c] sm:$0xf]
    %v12570 = vld [vmem:[%s16 + $0x40] sm:$0xf]
    %v12571 = vld [vmem:[%s16 + $0x44] sm:$0xf]
    %v12572 = vld [vmem:[%s16 + $0x48] sm:$0xf]
    %v12573 = vld [vmem:[%s16 + $0x4c] sm:$0xf]
    %v12574 = vld [vmem:[%s16 + $0x50] sm:$0xf]
    %v12575 = vld [vmem:[%s16 + $0x54] sm:$0xf]
    %v12576 = vld [vmem:[%s16 + $0x58] sm:$0xf]
    %v12577 = vld [vmem:[%s16 + $0x5c] sm:$0xf]
    %v12578 = vld [vmem:[%s16 + $0x60] sm:$0xf]
    %v12579 = vld [vmem:[%s16 + $0x64] sm:$0xf]
    %v12580 = vld [vmem:[%s16 + $0x68] sm:$0xf]
    %v12581 = vld [vmem:[%s16 + $0x6c] sm:$0xf]
    %v12582 = vld [vmem:[%s16 + $0x70] sm:$0xf]
    %v12583 = vld [vmem:[%s16 + $0x74] sm:$0xf]
    %v12584 = vld [vmem:[%s16 + $0x78] sm:$0xf]
    %v12585 = vld [vmem:[%s16 + $0x7c] sm:$0xf]
    %v12586 = vld [vmem:[%s16 + $0x80] sm:$0xf]
    %v12587 = vld [vmem:[%s16 + $0x84] sm:$0xf]
    %v12588 = vld [vmem:[%s16 + $0x88] sm:$0xf]
    %v12589 = vld [vmem:[%s16 + $0x8c] sm:$0xf]
    %v12590 = vld [vmem:[%s16 + $0x90] sm:$0xf]
    %v12591 = vld [vmem:[%s16 + $0x94] sm:$0xf]
    %v12592 = vld [vmem:[%s16 + $0x98] sm:$0xf]
    %v12593 = vld [vmem:[%s16 + $0x9c] sm:$0xf]
    %v12594 = vld [vmem:[%s16 + $0xa0] sm:$0xf]
    %v12595 = vld [vmem:[%s16 + $0xa4] sm:$0xf]
    %v12596 = vld [vmem:[%s16 + $0xa8] sm:$0xf]
    %v12597 = vld [vmem:[%s16 + $0xac] sm:$0xf]
    %v12598 = vld [vmem:[%s16 + $0xb0] sm:$0xf]
    %v12599 = vld [vmem:[%s16 + $0xb4] sm:$0xf]
    %v12600 = vld [vmem:[%s16 + $0xb8] sm:$0xf]
    %v12601 = vld [vmem:[%s16 + $0xbc] sm:$0xf]
    %v12602 = vld [vmem:[%s16 + $0xc0] sm:$0xf]
    %v12603 = vld [vmem:[%s16 + $0xc4] sm:$0xf]
    %v12604 = vld [vmem:[%s16 + $0xc8] sm:$0xf]
    %v12605 = vld [vmem:[%s16 + $0xcc] sm:$0xf]
    %v12606 = vld [vmem:[%s16 + $0xd0] sm:$0xf]
    %v12607 = vld [vmem:[%s16 + $0xd4] sm:$0xf]
    %v12608 = vld [vmem:[%s16 + $0xd8] sm:$0xf]
    %v12609 = vld [vmem:[%s16 + $0xdc] sm:$0xf]
    %v12610 = vld [vmem:[%s16 + $0xe0] sm:$0xf]
    %v12611 = vld [vmem:[%s16 + $0xe4] sm:$0xf]
    %v12612 = vld [vmem:[%s16 + $0xe8] sm:$0xf]
    %v12613 = vld [vmem:[%s16 + $0xec] sm:$0xf]
    %v12614 = vld [vmem:[%s16 + $0xf0] sm:$0xf]
    %v12615 = vld [vmem:[%s16 + $0xf4] sm:$0xf]
    %v12616 = vld [vmem:[%s16 + $0xf8] sm:$0xf]
    %v12617 = vld [vmem:[%s16 + $0xfc] sm:$0xf]
    %v12618 = vld [vmem:[%s16 + $0x100] sm:$0xf]
    %v12619 = vld [vmem:[%s16 + $0x104] sm:$0xf]
    %v12620 = vld [vmem:[%s16 + $0x108] sm:$0xf]
    %v12621 = vld [vmem:[%s16 + $0x10c] sm:$0xf]
    %v12622 = vld [vmem:[%s16 + $0x110] sm:$0xf]
    %v12623 = vld [vmem:[%s16 + $0x114] sm:$0xf]
    %v12624 = vld [vmem:[%s16 + $0x118] sm:$0xf]
    %v12625 = vld [vmem:[%s16 + $0x11c] sm:$0xf]
    %v12626 = vld [vmem:[%s16 + $0x120] sm:$0xf]
    %v12627 = vld [vmem:[%s16 + $0x124] sm:$0xf]
    %v12628 = vld [vmem:[%s16 + $0x128] sm:$0xf]
    %v12629 = vld [vmem:[%s16 + $0x12c] sm:$0xf]
    %v12630 = vld [vmem:[%s16 + $0x130] sm:$0xf]
    %v12631 = vld [vmem:[%s16 + $0x134] sm:$0xf]
    %v12632 = vld [vmem:[%s16 + $0x138] sm:$0xf]
    %v12633 = vld [vmem:[%s16 + $0x13c] sm:$0xf]
    %v12634 = vld [vmem:[%s16 + $0x140] sm:$0xf]
    %v12635 = vld [vmem:[%s16 + $0x144] sm:$0xf]
    %v12636 = vld [vmem:[%s16 + $0x148] sm:$0xf]
    %v12637 = vld [vmem:[%s16 + $0x14c] sm:$0xf]
    %v12638 = vld [vmem:[%s16 + $0x150] sm:$0xf]
    %v12639 = vld [vmem:[%s16 + $0x154] sm:$0xf]
    %v12640 = vld [vmem:[%s16 + $0x158] sm:$0xf]
    %v12641 = vld [vmem:[%s16 + $0x15c] sm:$0xf]
    %v12642 = vld [vmem:[%s16 + $0x160] sm:$0xf]
    %v12643 = vld [vmem:[%s16 + $0x164] sm:$0xf]
    %v12644 = vld [vmem:[%s16 + $0x168] sm:$0xf]
    %v12645 = vld [vmem:[%s16 + $0x16c] sm:$0xf]
    %v12646 = vld [vmem:[%s16 + $0x170] sm:$0xf]
    %v12647 = vld [vmem:[%s16 + $0x174] sm:$0xf]
    %v12648 = vld [vmem:[%s16 + $0x178] sm:$0xf]
    %v12649 = vld [vmem:[%s16 + $0x17c] sm:$0xf]
    %v12650 = vld [vmem:[%s16 + $0x180] sm:$0xf]
    %v12651 = vld [vmem:[%s16 + $0x184] sm:$0xf]
    %v12652 = vld [vmem:[%s16 + $0x188] sm:$0xf]
    %v12653 = vld [vmem:[%s16 + $0x18c] sm:$0xf]
    %v12654 = vld [vmem:[%s16 + $0x190] sm:$0xf]
    %v12655 = vld [vmem:[%s16 + $0x194] sm:$0xf]
    %v12656 = vld [vmem:[%s16 + $0x198] sm:$0xf]
    %v12657 = vld [vmem:[%s16 + $0x19c] sm:$0xf]
    %v12658 = vld [vmem:[%s16 + $0x1a0] sm:$0xf]
    %v12659 = vld [vmem:[%s16 + $0x1a4] sm:$0xf]
    %v12660 = vld [vmem:[%s16 + $0x1a8] sm:$0xf]
    %v12661 = vld [vmem:[%s16 + $0x1ac] sm:$0xf]
    %v12662 = vld [vmem:[%s16 + $0x1b0] sm:$0xf]
    %v12663 = vld [vmem:[%s16 + $0x1b4] sm:$0xf]
    %v12664 = vld [vmem:[%s16 + $0x1b8] sm:$0xf]
    %v12665 = vld [vmem:[%s16 + $0x1bc] sm:$0xf]
    %v12666 = vld [vmem:[%s16 + $0x1c0] sm:$0xf]
    %v12667 = vld [vmem:[%s16 + $0x1c4] sm:$0xf]
    %v12668 = vld [vmem:[%s16 + $0x1c8] sm:$0xf]
    %v12669 = vld [vmem:[%s16 + $0x1cc] sm:$0xf]
    %v12670 = vld [vmem:[%s16 + $0x1d0] sm:$0xf]
    %v12671 = vld [vmem:[%s16 + $0x1d4] sm:$0xf]
    %v12672 = vld [vmem:[%s16 + $0x1d8] sm:$0xf]
    %v12673 = vld [vmem:[%s16 + $0x1dc] sm:$0xf]
    %v12674 = vld [vmem:[%s16 + $0x1e0] sm:$0xf]
    %v12675 = vld [vmem:[%s16 + $0x1e4] sm:$0xf]
    %v12676 = vld [vmem:[%s16 + $0x1e8] sm:$0xf]
    %v12677 = vld [vmem:[%s16 + $0x1ec] sm:$0xf]
    %v12678 = vld [vmem:[%s16 + $0x1f0] sm:$0xf]
    %v12679 = vld [vmem:[%s16 + $0x1f4] sm:$0xf]
    %v12680 = vld [vmem:[%s16 + $0x1f8] sm:$0xf]
    %v12681 = vld [vmem:[%s16 + $0x1fc] sm:$0xf]
    %v12682 = vpack.c.bf16 %v12546, %v12546
    %v12683 = vpack.c.bf16 %v12547, %v12547
    %v12684 = vpack.c.bf16 %v12548, %v12548
    %v12685 = vpack.c.bf16 %v12549, %v12549
    %v12686 = vpack.c.bf16 %v12550, %v12550
    %v12687 = vpack.c.bf16 %v12551, %v12551
    %v12688 = vpack.c.bf16 %v12552, %v12552
    %v12689 = vpack.c.bf16 %v12553, %v12553
    %v12690 = vld [vmem:[#allocation19] sm:$0x1]
    %v12692 = vperm.slane %v12690, 0
    %v12822 = vunpack.c.l.b16 %v12554
    %v12823 = vunpack.c.l.b16 %v12555
    %v12824 = vunpack.c.l.b16 %v12556
    %v12825 = vunpack.c.l.b16 %v12557
    %v12826 = vunpack.c.l.b16 %v12558
    %v12827 = vunpack.c.l.b16 %v12559
    %v12828 = vunpack.c.l.b16 %v12560
    %v12829 = vunpack.c.l.b16 %v12561
    %v12830 = vunpack.c.l.b16 %v12562
    %v12831 = vunpack.c.l.b16 %v12563
    %v12832 = vunpack.c.l.b16 %v12564
    %v12833 = vunpack.c.l.b16 %v12565
    %v12834 = vunpack.c.l.b16 %v12566
    %v12835 = vunpack.c.l.b16 %v12567
    %v12836 = vunpack.c.l.b16 %v12568
    %v12837 = vunpack.c.l.b16 %v12569
    %v12838 = vunpack.c.l.b16 %v12570
    %v12839 = vunpack.c.l.b16 %v12571
    %v12840 = vunpack.c.l.b16 %v12572
    %v12841 = vunpack.c.l.b16 %v12573
    %v12842 = vunpack.c.l.b16 %v12574
    %v12843 = vunpack.c.l.b16 %v12575
    %v12844 = vunpack.c.l.b16 %v12576
    %v12845 = vunpack.c.l.b16 %v12577
    %v12846 = vunpack.c.l.b16 %v12578
    %v12847 = vunpack.c.l.b16 %v12579
    %v12848 = vunpack.c.l.b16 %v12580
    %v12849 = vunpack.c.l.b16 %v12581
    %v12850 = vunpack.c.l.b16 %v12582
    %v12851 = vunpack.c.l.b16 %v12583
    %v12852 = vunpack.c.l.b16 %v12584
    %v12853 = vunpack.c.l.b16 %v12585
    %v12854 = vunpack.c.l.b16 %v12586
    %v12855 = vunpack.c.l.b16 %v12587
    %v12856 = vunpack.c.l.b16 %v12588
    %v12857 = vunpack.c.l.b16 %v12589
    %v12858 = vunpack.c.l.b16 %v12590
    %v12859 = vunpack.c.l.b16 %v12591
    %v12860 = vunpack.c.l.b16 %v12592
    %v12861 = vunpack.c.l.b16 %v12593
    %v12862 = vunpack.c.l.b16 %v12594
    %v12863 = vunpack.c.l.b16 %v12595
    %v12864 = vunpack.c.l.b16 %v12596
    %v12865 = vunpack.c.l.b16 %v12597
    %v12866 = vunpack.c.l.b16 %v12598
    %v12867 = vunpack.c.l.b16 %v12599
    %v12868 = vunpack.c.l.b16 %v12600
    %v12869 = vunpack.c.l.b16 %v12601
    %v12870 = vunpack.c.l.b16 %v12602
    %v12871 = vunpack.c.l.b16 %v12603
    %v12872 = vunpack.c.l.b16 %v12604
    %v12873 = vunpack.c.l.b16 %v12605
    %v12874 = vunpack.c.l.b16 %v12606
    %v12875 = vunpack.c.l.b16 %v12607
    %v12876 = vunpack.c.l.b16 %v12608
    %v12877 = vunpack.c.l.b16 %v12609
    %v12878 = vunpack.c.l.b16 %v12610
    %v12879 = vunpack.c.l.b16 %v12611
    %v12880 = vunpack.c.l.b16 %v12612
    %v12881 = vunpack.c.l.b16 %v12613
    %v12882 = vunpack.c.l.b16 %v12614
    %v12883 = vunpack.c.l.b16 %v12615
    %v12884 = vunpack.c.l.b16 %v12616
    %v12885 = vunpack.c.l.b16 %v12617
    %v12886 = vunpack.c.l.b16 %v12618
    %v12887 = vunpack.c.l.b16 %v12619
    %v12888 = vunpack.c.l.b16 %v12620
    %v12889 = vunpack.c.l.b16 %v12621
    %v12890 = vunpack.c.l.b16 %v12622
    %v12891 = vunpack.c.l.b16 %v12623
    %v12892 = vunpack.c.l.b16 %v12624
    %v12893 = vunpack.c.l.b16 %v12625
    %v12894 = vunpack.c.l.b16 %v12626
    %v12895 = vunpack.c.l.b16 %v12627
    %v12896 = vunpack.c.l.b16 %v12628
    %v12897 = vunpack.c.l.b16 %v12629
    %v12898 = vunpack.c.l.b16 %v12630
    %v12899 = vunpack.c.l.b16 %v12631
    %v12900 = vunpack.c.l.b16 %v12632
    %v12901 = vunpack.c.l.b16 %v12633
    %v12902 = vunpack.c.l.b16 %v12634
    %v12903 = vunpack.c.l.b16 %v12635
    %v12904 = vunpack.c.l.b16 %v12636
    %v12905 = vunpack.c.l.b16 %v12637
    %v12906 = vunpack.c.l.b16 %v12638
    %v12907 = vunpack.c.l.b16 %v12639
    %v12908 = vunpack.c.l.b16 %v12640
    %v12909 = vunpack.c.l.b16 %v12641
    %v12910 = vunpack.c.l.b16 %v12642
    %v12911 = vunpack.c.l.b16 %v12643
    %v12912 = vunpack.c.l.b16 %v12644
    %v12913 = vunpack.c.l.b16 %v12645
    %v12914 = vunpack.c.l.b16 %v12646
    %v12915 = vunpack.c.l.b16 %v12647
    %v12916 = vunpack.c.l.b16 %v12648
    %v12917 = vunpack.c.l.b16 %v12649
    %v12918 = vunpack.c.l.b16 %v12650
    %v12919 = vunpack.c.l.b16 %v12651
    %v12920 = vunpack.c.l.b16 %v12652
    %v12921 = vunpack.c.l.b16 %v12653
    %v12922 = vunpack.c.l.b16 %v12654
    %v12923 = vunpack.c.l.b16 %v12655
    %v12924 = vunpack.c.l.b16 %v12656
    %v12925 = vunpack.c.l.b16 %v12657
    %v12926 = vunpack.c.l.b16 %v12658
    %v12927 = vunpack.c.l.b16 %v12659
    %v12928 = vunpack.c.l.b16 %v12660
    %v12929 = vunpack.c.l.b16 %v12661
    %v12930 = vunpack.c.l.b16 %v12662
    %v12931 = vunpack.c.l.b16 %v12663
    %v12932 = vunpack.c.l.b16 %v12664
    %v12933 = vunpack.c.l.b16 %v12665
    %v12934 = vunpack.c.l.b16 %v12666
    %v12935 = vunpack.c.l.b16 %v12667
    %v12936 = vunpack.c.l.b16 %v12668
    %v12937 = vunpack.c.l.b16 %v12669
    %v12938 = vunpack.c.l.b16 %v12670
    %v12939 = vunpack.c.l.b16 %v12671
    %v12940 = vunpack.c.l.b16 %v12672
    %v12941 = vunpack.c.l.b16 %v12673
    %v12942 = vunpack.c.l.b16 %v12674
    %v12943 = vunpack.c.l.b16 %v12675
    %v12944 = vunpack.c.l.b16 %v12676
    %v12945 = vunpack.c.l.b16 %v12677
    %v12946 = vunpack.c.l.b16 %v12678
    %v12947 = vunpack.c.l.b16 %v12679
    %v12948 = vunpack.c.l.b16 %v12680
    %v12949 = vunpack.c.l.b16 %v12681
    %v12950 = vpack.c.b16 %v12823, %v12822
    %v12951 = vpack.c.b16 %v12825, %v12824
    %v12952 = vpack.c.b16 %v12827, %v12826
    %v12953 = vpack.c.b16 %v12829, %v12828
    %v12954 = vpack.c.b16 %v12831, %v12830
    %v12955 = vpack.c.b16 %v12833, %v12832
    %v12956 = vpack.c.b16 %v12835, %v12834
    %v12957 = vpack.c.b16 %v12837, %v12836
    %v12958 = vpack.c.b16 %v12839, %v12838
    %v12959 = vpack.c.b16 %v12841, %v12840
    %v12960 = vpack.c.b16 %v12843, %v12842
    %v12961 = vpack.c.b16 %v12845, %v12844
    %v12962 = vpack.c.b16 %v12847, %v12846
    %v12963 = vpack.c.b16 %v12849, %v12848
    %v12964 = vpack.c.b16 %v12851, %v12850
    %v12965 = vpack.c.b16 %v12853, %v12852
    %v12966 = vpack.c.b16 %v12855, %v12854
    %v12967 = vpack.c.b16 %v12857, %v12856
    %v12968 = vpack.c.b16 %v12859, %v12858
    %v12969 = vpack.c.b16 %v12861, %v12860
    %v12970 = vpack.c.b16 %v12863, %v12862
    %v12971 = vpack.c.b16 %v12865, %v12864
    %v12972 = vpack.c.b16 %v12867, %v12866
    %v12973 = vpack.c.b16 %v12869, %v12868
    %v12974 = vpack.c.b16 %v12871, %v12870
    %v12975 = vpack.c.b16 %v12873, %v12872
    %v12976 = vpack.c.b16 %v12875, %v12874
    %v12977 = vpack.c.b16 %v12877, %v12876
    %v12978 = vpack.c.b16 %v12879, %v12878
    %v12979 = vpack.c.b16 %v12881, %v12880
    %v12980 = vpack.c.b16 %v12883, %v12882
    %v12981 = vpack.c.b16 %v12885, %v12884
    %v12982 = vpack.c.b16 %v12887, %v12886
    %v12983 = vpack.c.b16 %v12889, %v12888
    %v12984 = vpack.c.b16 %v12891, %v12890
    %v12985 = vpack.c.b16 %v12893, %v12892
    %v12986 = vpack.c.b16 %v12895, %v12894
    %v12987 = vpack.c.b16 %v12897, %v12896
    %v12988 = vpack.c.b16 %v12899, %v12898
    %v12989 = vpack.c.b16 %v12901, %v12900
    %v12990 = vpack.c.b16 %v12903, %v12902
    %v12991 = vpack.c.b16 %v12905, %v12904
    %v12992 = vpack.c.b16 %v12907, %v12906
    %v12993 = vpack.c.b16 %v12909, %v12908
    %v12994 = vpack.c.b16 %v12911, %v12910
    %v12995 = vpack.c.b16 %v12913, %v12912
    %v12996 = vpack.c.b16 %v12915, %v12914
    %v12997 = vpack.c.b16 %v12917, %v12916
    %v12998 = vpack.c.b16 %v12919, %v12918
    %v12999 = vpack.c.b16 %v12921, %v12920
    %v13000 = vpack.c.b16 %v12923, %v12922
    %v13001 = vpack.c.b16 %v12925, %v12924
    %v13002 = vpack.c.b16 %v12927, %v12926
    %v13003 = vpack.c.b16 %v12929, %v12928
    %v13004 = vpack.c.b16 %v12931, %v12930
    %v13005 = vpack.c.b16 %v12933, %v12932
    %v13006 = vpack.c.b16 %v12935, %v12934
    %v13007 = vpack.c.b16 %v12937, %v12936
    %v13008 = vpack.c.b16 %v12939, %v12938
    %v13009 = vpack.c.b16 %v12941, %v12940
    %v13010 = vpack.c.b16 %v12943, %v12942
    %v13011 = vpack.c.b16 %v12945, %v12944
    %v13012 = vpack.c.b16 %v12947, %v12946
    %v13013 = vpack.c.b16 %v12949, %v12948
    %13078 = vmatpush.bf16.msra.mxu0 %v12957
    %13079 = vmatpush.bf16.msra.mxu0 %v12956
    %13080 = vmatpush.bf16.msra.mxu0 %v12955
    %13081 = vmatpush.bf16.msra.mxu0 %v12954
    %13082 = vmatpush.bf16.msra.mxu0 %v12953
    %13083 = vmatpush.bf16.msra.mxu0 %v12952
    %13084 = vmatpush.bf16.msra.mxu0 %v12951
    %13085 = vmatpush.bf16.msra.mxu0 %v12950
    %13086 = vmatmul.bf16.gmra.mxu0 %v12682
    %v13087 = vpop.f32.mrf.mxu0
    %v13088 = vadd.f32 %v12692, %v13087
    %v13089 = vpop.f32.mrf.mxu0
    %13090 = vdwg.mxu0
    %13091 = vmatpush.bf16.msra.mxu0 %v12965
    %13092 = vmatpush.bf16.msra.mxu0 %v12964
    %13093 = vmatpush.bf16.msra.mxu0 %v12963
    %13094 = vmatpush.bf16.msra.mxu0 %v12962
    %13095 = vmatpush.bf16.msra.mxu0 %v12961
    %13096 = vmatpush.bf16.msra.mxu0 %v12960
    %13097 = vmatpush.bf16.msra.mxu0 %v12959
    %13098 = vmatpush.bf16.msra.mxu0 %v12958
    %13099 = vmatmul.bf16.gmra.mxu0 %v12683
    %v13100 = vpop.f32.mrf.mxu0
    %v13101 = vadd.f32 %v13088, %v13100
    %v13102 = vpop.f32.mrf.mxu0
    %13103 = vdwg.mxu0
    %13104 = vmatpush.bf16.msra.mxu0 %v12973
    %13105 = vmatpush.bf16.msra.mxu0 %v12972
    %13106 = vmatpush.bf16.msra.mxu0 %v12971
    %13107 = vmatpush.bf16.msra.mxu0 %v12970
    %13108 = vmatpush.bf16.msra.mxu0 %v12969
    %13109 = vmatpush.bf16.msra.mxu0 %v12968
    %13110 = vmatpush.bf16.msra.mxu0 %v12967
    %13111 = vmatpush.bf16.msra.mxu0 %v12966
    %13112 = vmatmul.bf16.gmra.mxu0 %v12684
    %v13113 = vpop.f32.mrf.mxu0
    %v13114 = vadd.f32 %v13101, %v13113
    %v13115 = vpop.f32.mrf.mxu0
    %13116 = vdwg.mxu0
    %13117 = vmatpush.bf16.msra.mxu0 %v12981
    %13118 = vmatpush.bf16.msra.mxu0 %v12980
    %13119 = vmatpush.bf16.msra.mxu0 %v12979
    %13120 = vmatpush.bf16.msra.mxu0 %v12978
    %13121 = vmatpush.bf16.msra.mxu0 %v12977
    %13122 = vmatpush.bf16.msra.mxu0 %v12976
    %13123 = vmatpush.bf16.msra.mxu0 %v12975
    %13124 = vmatpush.bf16.msra.mxu0 %v12974
    %13125 = vmatmul.bf16.gmra.mxu0 %v12685
    %v13126 = vpop.f32.mrf.mxu0
    %v13127 = vadd.f32 %v13114, %v13126
    %v13128 = vpop.f32.mrf.mxu0
    %13129 = vdwg.mxu0
    %13130 = vmatpush.bf16.msra.mxu0 %v12989
    %13131 = vmatpush.bf16.msra.mxu0 %v12988
    %13132 = vmatpush.bf16.msra.mxu0 %v12987
    %13133 = vmatpush.bf16.msra.mxu0 %v12986
    %13134 = vmatpush.bf16.msra.mxu0 %v12985
    %13135 = vmatpush.bf16.msra.mxu0 %v12984
    %13136 = vmatpush.bf16.msra.mxu0 %v12983
    %13137 = vmatpush.bf16.msra.mxu0 %v12982
    %13138 = vmatmul.bf16.gmra.mxu0 %v12686
    %v13139 = vpop.f32.mrf.mxu0
    %v13140 = vadd.f32 %v13127, %v13139
    %v13141 = vpop.f32.mrf.mxu0
    %13142 = vdwg.mxu0
    %13143 = vmatpush.bf16.msra.mxu0 %v12997
    %13144 = vmatpush.bf16.msra.mxu0 %v12996
    %13145 = vmatpush.bf16.msra.mxu0 %v12995
    %13146 = vmatpush.bf16.msra.mxu0 %v12994
    %13147 = vmatpush.bf16.msra.mxu0 %v12993
    %13148 = vmatpush.bf16.msra.mxu0 %v12992
    %13149 = vmatpush.bf16.msra.mxu0 %v12991
    %13150 = vmatpush.bf16.msra.mxu0 %v12990
    %13151 = vmatmul.bf16.gmra.mxu0 %v12687
    %v13152 = vpop.f32.mrf.mxu0
    %v13153 = vadd.f32 %v13140, %v13152
    %v13154 = vpop.f32.mrf.mxu0
    %13155 = vdwg.mxu0
    %13156 = vmatpush.bf16.msra.mxu0 %v13005
    %13157 = vmatpush.bf16.msra.mxu0 %v13004
    %13158 = vmatpush.bf16.msra.mxu0 %v13003
    %13159 = vmatpush.bf16.msra.mxu0 %v13002
    %13160 = vmatpush.bf16.msra.mxu0 %v13001
    %13161 = vmatpush.bf16.msra.mxu0 %v13000
    %13162 = vmatpush.bf16.msra.mxu0 %v12999
    %13163 = vmatpush.bf16.msra.mxu0 %v12998
    %13164 = vmatmul.bf16.gmra.mxu0 %v12688
    %v13165 = vpop.f32.mrf.mxu0
    %v13166 = vadd.f32 %v13153, %v13165
    %v13167 = vpop.f32.mrf.mxu0
    %13168 = vdwg.mxu0
    %13169 = vmatpush.bf16.msra.mxu0 %v13013
    %13170 = vmatpush.bf16.msra.mxu0 %v13012
    %13171 = vmatpush.bf16.msra.mxu0 %v13011
    %13172 = vmatpush.bf16.msra.mxu0 %v13010
    %13173 = vmatpush.bf16.msra.mxu0 %v13009
    %13174 = vmatpush.bf16.msra.mxu0 %v13008
    %13175 = vmatpush.bf16.msra.mxu0 %v13007
    %13176 = vmatpush.bf16.msra.mxu0 %v13006
    %13177 = vmatmul.bf16.gmra.mxu0 %v12689
    %v13178 = vpop.f32.mrf.mxu0
    %v13179 = vadd.f32 %v13166, %v13178
    %v13180 = vpop.f32.mrf.mxu0
    %13181 = vdwg.mxu0
    %v13182 = vmax.f32 %v13179, 0.0
    %v13183 = vtanh.pop %v13182
    %vm13184 = vcmask 15360
    %13185 = vst.msk [vmem:[%s18] sm:$0xff] %vm13184, %v13183
    // Predicated region
    $region122: #{gmrt_cnn_forward.1} parent=1 // pred_check
      _
    $region123: #{gmrt_cnn_forward.1} parent=1 // pred_check_branch
      %13187 = sbr.rel (0) target = $region125
    $region124: #{gmrt_cnn_forward.1} parent=1 // pred_region
      _
    $region125: #{gmrt_cnn_forward.1} parent=1 // pred_fallthru
      _
    // Predicated region
    $region126: #{gmrt_cnn_forward.1} parent=1 // pred_check
      _
    $region127: #{gmrt_cnn_forward.1} parent=1 // pred_check_branch
      %13189 = sbr.rel (0) target = $region129
    $region128: #{gmrt_cnn_forward.1} parent=1 // pred_region
      _
    $region129: #{gmrt_cnn_forward.1} parent=1 // pred_fallthru
      _
    // Predicated region
    $region130: #{gmrt_cnn_forward.1} parent=1 // pred_check
      _
    $region131: #{gmrt_cnn_forward.1} parent=1 // pred_check_branch
      %13191 = sbr.rel (0) target = $region133
    $region132: #{gmrt_cnn_forward.1} parent=1 // pred_region
      _
    $region133: #{gmrt_cnn_forward.1} parent=1 // pred_fallthru
      _
    // Predicated region
    $region134: #{gmrt_cnn_forward.1} parent=1 // pred_check
      _
    $region135: #{gmrt_cnn_forward.1} parent=1 // pred_check_branch
      %13193 = sbr.rel (0) target = $region137
    $region136: #{gmrt_cnn_forward.1} parent=1 // pred_region
      _
    $region137: #{gmrt_cnn_forward.1} parent=1 // pred_fallthru
      _
    %13194 = vsyncpa [#allocation3], 1
    %13195 = vsyncpa [#allocation5], 1
    %13196 = vsyncpa [#allocation8], 1
    %13197 = vsyncpa [#allocation11], 1
    %13198 = vsyncpa [#allocation14], 1
    %13199 = vsyncpa [#allocation17], 1
    %13200 = vsyncpa [#allocation20], 1

</llo_original>
